<compile_context>
chip_gen: v7x
topology: tpu7x:2x2x1
jax: 0.10.0
libtpu: 0.0.40
codegen_flags: <defaults>
</compile_context>

<pallas_src>
import functools

import jax
import jax.numpy as jnp
from jax.experimental import pallas as pl
from jax.experimental.pallas import tpu as pltpu


# =============================================================================
# Pallas kernels
# =============================================================================
def _conv1x1_lrelu_add_kernel(x_ref, w_ref, b_ref, skip_ref, o_ref):
    """out = leaky_relu(x @ w + b, 0.01) + skip   (1x1 conv as a matmul).

    Activations are cast to bf16 in-register (MXU native path); accumulation
    and the skip add stay in f32.
    """
    x = x_ref[...].astype(jnp.bfloat16)
    y = jnp.dot(x, w_ref[...], preferred_element_type=jnp.float32)
    y = y + b_ref[...]                       # (1, Cout) broadcasts
    y = jnp.where(y > 0, y, 0.01 * y)        # leaky_relu(0.01)
    o_ref[...] = (y + skip_ref[...]).astype(o_ref.dtype)


def _decoder_kernel(*refs, th2, w_pairs, cin, with_skip):
    """Fused DecoderBlock row-tile.

    refs (with_skip=True):  xp_ref, w_ref, sb_ref, skip_ref, o_ref
    refs (with_skip=False): xp_ref, w_ref, sb_ref, o_ref

      xp_ref  : (1, H+2, W+2, Cin)     zero-padded *low-res* input (whole map,
                                       VMEM resident across the row tiles)
      w_ref   : (2, 6*Cin, Cout) bf16  column-parity folded conv weights
      sb_ref  : (2, 2*Cout)      f32   [scale; bias] duplicated for the paired
                                       (even|odd) output-column channel layout
      skip_ref: (1, th2, W, 2*Cout)    column-paired skip tile
      o_ref   : (1, th2, W, 2*Cout)    column-paired output tile
    """
    if with_skip:
        xp_ref, w_ref, sb_ref, skip_ref, o_ref = refs
    else:
        xp_ref, w_ref, sb_ref, o_ref = refs
        skip_ref = None

    th = th2 // 2                                  # low-res rows per tile
    t = pl.program_id(1)

    # ---- low-res rows (incl. 1-row halo on each side) needed by this tile ---
    r0 = pl.multiple_of(t * th, th)
    xin = xp_ref[0, pl.ds(r0, th + 2)].astype(jnp.bfloat16)   # (th+2, W+2, Cin)

    # ---- column pairing: zp[r, j] = [xpad[r, j], xpad[r, j+1]] --------------
    # After the x2 column upsample + pad-1, output column pair (2j, 2j+1) only
    # ever reads padded low-res columns j / j+1 / j+2, so the pair lives in the
    # (dense) channel axis and no sublane interleave is ever required.
    zp = jnp.concatenate([xin[:, :w_pairs + 1, :], xin[:, 1:, :]], axis=-1)
    # (th+2, W+1, 2*Cin)

    # ---- nearest x2 row upsample (leading-dim broadcast only) ---------------
    rows = jnp.broadcast_to(zp[:, None], (th + 2, 2, w_pairs + 1, 2 * cin))
    rows = rows.reshape(2 * th + 4, w_pairs + 1, 2 * cin)[1:th2 + 3]
    # (th2+2, W+1, 2*Cin) == pad-1 of the row-upsampled map, for this tile

    # ---- 3x3 conv as two fat contractions (K = 3 row taps x 2 cols x Cin) ---
    # even output col 2j  : reads xpad[j]   * w[:,0]  +  xpad[j+1] * (w[:,1]+w[:,2])
    # odd  output col 2j+1: reads xpad[j+1] * (w[:,0]+w[:,1]) + xpad[j+2] * w[:,2]
    ev = [rows[dy:dy + th2, :w_pairs, :] for dy in range(3)]   # pair j
    od = [rows[dy:dy + th2, 1:, :] for dy in range(3)]         # pair j+1
    lhs_e = jnp.concatenate(ev, axis=-1)        # (th2, W, 6*Cin) bf16
    lhs_o = jnp.concatenate(od, axis=-1)        # (th2, W, 6*Cin) bf16

    w_shape = tuple(w_ref.shape[1:])            # (6*Cin, Cout)
    w3e = jnp.broadcast_to(w_ref[0][None], (th2,) + w_shape)
    w3o = jnp.broadcast_to(w_ref[1][None], (th2,) + w_shape)
    y_e = jnp.einsum("rwk,rkc->rwc", lhs_e, w3e,
                     preferred_element_type=jnp.float32)
    y_o = jnp.einsum("rwk,rkc->rwc", lhs_o, w3o,
                     preferred_element_type=jnp.float32)
    y = jnp.concatenate([y_e, y_o], axis=-1)    # (th2, W, 2*Cout) paired cols

    # folded conv-bias + BatchNorm(eval) scale/bias, then ReLU (+ skip)
    y = y * sb_ref[0:1, :] + sb_ref[1:2, :]
    y = jnp.maximum(y, 0.0)
    if with_skip:
        y = y + skip_ref[0]
    o_ref[0] = y.astype(o_ref.dtype)


# =============================================================================
# Wrappers around pallas_call
# =============================================================================
def conv1x1_lrelu_add(x_nhwc, w, b, skip_nhwc, row_tile=256):
    """leaky_relu(Conv2d(k=1)(x)) + skip, NHWC in / NHWC out (f32)."""
    n, h, ww, cin = x_nhwc.shape
    cout = w.shape[1]
    m = n * h * ww
    tm = row_tile if (m > row_tile and m % row_tile == 0) else m
    xf = x_nhwc.reshape(m, cin)                 # free view of NHWC
    sf = skip_nhwc.reshape(m, cout)
    out = pl.pallas_call(
        _conv1x1_lrelu_add_kernel,
        out_shape=jax.ShapeDtypeStruct((m, cout), jnp.float32),
        grid=(m // tm,),
        in_specs=[
            pl.BlockSpec((tm, cin), lambda i: (i, 0)),
            pl.BlockSpec((cin, cout), lambda i: (0, 0)),
            pl.BlockSpec((1, cout), lambda i: (0, 0)),
            pl.BlockSpec((tm, cout), lambda i: (i, 0)),
        ],
        out_specs=pl.BlockSpec((tm, cout), lambda i: (i, 0)),
        compiler_params=pltpu.CompilerParams(
            dimension_semantics=("parallel",)),
    )(xf, w, b, sf)
    return out.reshape(n, h, ww, cout)


def decoder_block(x_nhwc, w_eo, sb, skip_nhwc=None, row_tile=16):
    """DecoderBlock: nearest-up x2 -> Conv2d(3x3,pad=1) -> BN(eval) -> ReLU
    (optionally + skip).   (N, H, W, Cin) f32 -> (N, 2H, 2W, Cout) f32."""
    n, h, w, cin = x_nhwc.shape
    cout = w_eo.shape[-1]
    h2, w2 = 2 * h, 2 * w
    th2 = min(row_tile, h2)
    assert h2 % th2 == 0 and th2 % 2 == 0, (h2, th2)
    n_t = h2 // th2

    # zero-pad the *low-res* map by 1; together with the in-kernel x2 nearest
    # upsample this reproduces exactly the pad-1 the 3x3 conv needs.
    xp = jnp.pad(x_nhwc, ((0, 0), (1, 1), (1, 1), (0, 0)))

    in_specs = [
        pl.BlockSpec((1, h + 2, w + 2, cin), lambda b, t: (b, 0, 0, 0)),
        pl.BlockSpec((2, 6 * cin, cout), lambda b, t: (0, 0, 0)),
        pl.BlockSpec((2, 2 * cout), lambda b, t: (0, 0)),
    ]
    args = [xp, w_eo, sb]
    if skip_nhwc is not None:
        # column-paired view of the skip: (N,2H,2W,Cout) == (N,2H,W,2*Cout)
        args.append(skip_nhwc.reshape(n, h2, w, 2 * cout))
        in_specs.append(
            pl.BlockSpec((1, th2, w, 2 * cout), lambda b, t: (b, t, 0, 0)))

    kernel = functools.partial(_decoder_kernel, th2=th2, w_pairs=w, cin=cin,
                               with_skip=skip_nhwc is not None)
    out = pl.pallas_call(
        kernel,
        out_shape=jax.ShapeDtypeStruct((n, h2, w, 2 * cout), jnp.float32),
        grid=(n, n_t),
        in_specs=in_specs,
        out_specs=pl.BlockSpec((1, th2, w, 2 * cout), lambda b, t: (b, t, 0, 0)),
        compiler_params=pltpu.CompilerParams(
            dimension_semantics=("parallel", "parallel"),
            # explicit VMEM budget with headroom for v7x's 64 MiB VMEM
            vmem_limit_bytes=32 * 1024 * 1024),
    )(*args)
    # column-paired layout back to NHWC (same bytes -> free reshape)
    return out.reshape(n, h2, w2, cout)


# =============================================================================
# Parameter construction (deterministic, synthetic)
# =============================================================================
def _conv1x1_params(key, cin, cout):
    kw, kb = jax.random.split(key)
    w = jax.random.normal(kw, (cin, cout), jnp.float32) * 0.1
    b = jax.random.normal(kb, (cout,), jnp.float32) * 0.1
    kparams = {"w": w.astype(jnp.bfloat16), "b": b.reshape(1, cout)}
    return kparams, {"w": w, "b": b}


def _decoder_params(key, cin, cout, eps=1e-5):
    k1, k2, k3, k4, k5 = jax.random.split(key, 5)
    # Conv2d(cin, cout, 3, padding=1) weight, HWIO layout (3, 3, Cin, Cout)
    w33 = jax.random.normal(k1, (3, 3, cin, cout), jnp.float32) * 0.1
    conv_b = jax.random.normal(k2, (cout,), jnp.float32) * 0.1
    gamma = 1.0 + 0.1 * jax.random.normal(k3, (cout,), jnp.float32)
    beta = 0.1 * jax.random.normal(k4, (cout,), jnp.float32)
    run_mean = 0.1 * jax.random.normal(k5, (cout,), jnp.float32)
    run_var = jnp.ones((cout,), jnp.float32)
    # fold conv bias + BatchNorm(eval): y = conv(x)*scale + bias
    scale = gamma / jnp.sqrt(run_var + eps)
    bias = beta + (conv_b - run_mean) * scale
    # column-parity folded weights (nearest-x2 upsample duplicates columns):
    #   even col: [w[:,0] ; w[:,1]+w[:,2]],  odd col: [w[:,0]+w[:,1] ; w[:,2]]
    w_e = jnp.stack([w33[:, 0], w33[:, 1] + w33[:, 2]], axis=1)  # (3,2,Cin,Cout)
    w_o = jnp.stack([w33[:, 0] + w33[:, 1], w33[:, 2]], axis=1)
    w_eo = jnp.stack([w_e.reshape(6 * cin, cout),
                      w_o.reshape(6 * cin, cout)]).astype(jnp.bfloat16)
    sb = jnp.stack([jnp.concatenate([scale, scale]),
                    jnp.concatenate([bias, bias])])               # (2, 2*Cout)
    kparams = {"w": w_eo, "sb": sb}
    return kparams, {"w": w33, "scale": scale, "bias": bias}


def init_unet_params(key, in_channels, filters):
    keys = jax.random.split(key, 6)
    specs = {
        "u_conv1": (_conv1x1_params, keys[0], in_channels, filters[3]),
        "u_conv2": (_conv1x1_params, keys[1], filters[1], filters[0]),
        "u_decoder4": (_decoder_params, keys[2], filters[3], filters[2]),
        "u_decoder3": (_decoder_params, keys[3], filters[2], filters[1]),
        "u_decoder2": (_decoder_params, keys[4], filters[0], filters[0]),
        "u_decoder1": (_decoder_params, keys[5], filters[0], filters[0]),
    }
    params, ref = {}, {}
    for name, (fn, k, cin, cout) in specs.items():
        params[name], ref[name] = fn(k, cin, cout)
    return params, ref


# =============================================================================
# Forward pass (mirrors Unet.forward)
# =============================================================================
@jax.jit
def unet_forward(params, x0, x1, x2, x3, x4):
    to_nhwc = lambda a: jnp.transpose(a, (0, 2, 3, 1))
    x0, x1, x2, x3, x4 = map(to_nhwc, (x0, x1, x2, x3, x4))

    # e = leaky_relu(u_conv1(x4)); d4_in = e + x3      (one fused kernel)
    d4_in = conv1x1_lrelu_add(x4, params["u_conv1"]["w"],
                              params["u_conv1"]["b"], x3)
    # d4 = u_decoder4(d4_in) + x2                      (skip fused in-kernel)
    d4 = decoder_block(d4_in, params["u_decoder4"]["w"],
                       params["u_decoder4"]["sb"], skip_nhwc=x2)
    # d3 = u_decoder3(d4) + x1
    d3 = decoder_block(d4, params["u_decoder3"]["w"],
                       params["u_decoder3"]["sb"], skip_nhwc=x1)
    # e = leaky_relu(u_conv2(d3)); d2_in = e + x0
    d2_in = conv1x1_lrelu_add(d3, params["u_conv2"]["w"],
                              params["u_conv2"]["b"], x0)
    d2 = decoder_block(d2_in, params["u_decoder2"]["w"],
                       params["u_decoder2"]["sb"])
    d1 = decoder_block(d2, params["u_decoder1"]["w"],
                       params["u_decoder1"]["sb"])
    # final leaky_relu is the identity on the (non-negative) ReLU output.
    return jnp.transpose(d1, (0, 3, 1, 2))             # NHWC -> NCHW


# -----------------------------------------------------------------------------
# Pure-JAX reference (validates the fused kernels)
# -----------------------------------------------------------------------------
def _ref_decoder(x, w, scale, bias, skip=None):
    x_up = jnp.repeat(jnp.repeat(x, 2, axis=1), 2, axis=2)
    y = jax.lax.conv_general_dilated(
        x_up, w, window_strides=(1, 1), padding="SAME",
        dimension_numbers=("NHWC", "HWIO", "NHWC"))
    y = jnp.maximum(y * scale + bias, 0.0)
    return y if skip is None else y + skip


@jax.jit
def unet_reference(ref, x0, x1, x2, x3, x4):
    to_nhwc = lambda a: jnp.transpose(a, (0, 2, 3, 1))
    x0, x1, x2, x3, x4 = map(to_nhwc, (x0, x1, x2, x3, x4))
    lrelu = lambda v: jnp.where(v > 0, v, 0.01 * v)

    e = lrelu(jnp.einsum("nhwc,cd->nhwd", x4, ref["u_conv1"]["w"])
              + ref["u_conv1"]["b"])
    d4 = _ref_decoder(e + x3, **ref["u_decoder4"], skip=x2)
    d3 = _ref_decoder(d4, **ref["u_decoder3"], skip=x1)
    e = lrelu(jnp.einsum("nhwc,cd->nhwd", d3, ref["u_conv2"]["w"])
              + ref["u_conv2"]["b"])
    d2 = _ref_decoder(e + x0, **ref["u_decoder2"])
    d1 = _ref_decoder(d2, **ref["u_decoder1"])
    return jnp.transpose(lrelu(d1), (0, 3, 1, 2))


# =============================================================================
# Main
# =============================================================================
if __name__ == "__main__":
    key = jax.random.PRNGKey(0)
    in_channels = 32
    filters = [8, 16, 32, 64]
    batch = 2
    h = 4  # spatial size of the deepest feature map

    k_par, k0, k1, k2, k3, k4 = jax.random.split(key, 6)
    params, ref_params = init_unet_params(k_par, in_channels, filters)

    # Encoder feature pyramid (PyTorch NCHW convention).
    x0 = jax.random.normal(k0, (batch, filters[0], 4 * h, 4 * h), jnp.float32)
    x1 = jax.random.normal(k1, (batch, filters[1], 4 * h, 4 * h), jnp.float32)
    x2 = jax.random.normal(k2, (batch, filters[2], 2 * h, 2 * h), jnp.float32)
    x3 = jax.random.normal(k3, (batch, filters[3], h, h), jnp.float32)
    x4 = jax.random.normal(k4, (batch, in_channels, h, h), jnp.float32)

    out = unet_forward(params, x0, x1, x2, x3, x4)
    out = jax.block_until_ready(out)

    expected_shape = (batch, filters[0], 16 * h, 16 * h)
    assert out.shape == expected_shape, (out.shape, expected_shape)
    assert bool(jnp.all(jnp.isfinite(out)))

    ref = unet_reference(ref_params, x0, x1, x2, x3, x4)
    rel_err = float(jnp.linalg.norm(out - ref) / jnp.linalg.norm(ref))
    assert rel_err < 5e-2, rel_err   # bf16 matmul operands, f32 accumulation

    print("KERNEL_OK")
</pallas_src>

<mosaic_0001>
module attributes {stable_mosaic.version = 11 : i64} {
  func.func @_conv1x1_lrelu_add_kernel(%arg0: i32, %arg1: memref<32x32xf32, #tpu.memory_space<vmem>>, %arg2: memref<32x64xbf16, #tpu.memory_space<vmem>>, %arg3: memref<1x64xf32, #tpu.memory_space<vmem>>, %arg4: memref<32x64xf32, #tpu.memory_space<vmem>>, %arg5: memref<32x64xf32, #tpu.memory_space<vmem>>) attributes {dimension_semantics = [#tpu.dimension_semantics<parallel>], iteration_bounds = array<i64: 1>, scalar_prefetch = 0 : i64, scratch_operands = 0 : i64, tpu.core_type = #tpu.core_type<tc>, window_params = [{transform_indices = @transform_0, window_bounds = array<i64: 32, 32>}, {pipeline_mode = #tpu.pipeline_mode<synchronous>, transform_indices = @transform_1, window_bounds = array<i64: 32, 64>}, {pipeline_mode = #tpu.pipeline_mode<synchronous>, transform_indices = @transform_2, window_bounds = array<i64: 1, 64>}, {transform_indices = @transform_3, window_bounds = array<i64: 32, 64>}, {transform_indices = @transform_4, window_bounds = array<i64: 32, 64>}]} {
    %c0 = arith.constant 0 : index
    %c0_0 = arith.constant 0 : index
    %0 = vector.load %arg1[%c0, %c0_0] : memref<32x32xf32, #tpu.memory_space<vmem>>, vector<32x32xf32>
    %1 = arith.truncf %0 : vector<32x32xf32> to vector<32x32xbf16>
    %c0_1 = arith.constant 0 : index
    %c0_2 = arith.constant 0 : index
    %2 = vector.load %arg2[%c0_1, %c0_2] : memref<32x64xbf16, #tpu.memory_space<vmem>>, vector<32x64xbf16>
    %cst = arith.constant dense<0.000000e+00> : vector<32x64xf32>
    %3 = tpu.matmul %1, %2, %cst {dimension_numbers = #tpu.dot_dimension_numbers<[1], [0], [0], [1], [0, 0, 1, 1], [], []>} : vector<32x32xbf16>, vector<32x64xbf16>, vector<32x64xf32> -> vector<32x64xf32>
    %c0_3 = arith.constant 0 : index
    %c0_4 = arith.constant 0 : index
    %4 = vector.load %arg3[%c0_3, %c0_4] : memref<1x64xf32, #tpu.memory_space<vmem>>, vector<1x64xf32>
    %5 = vector.broadcast %4 : vector<1x64xf32> to vector<32x64xf32>
    %6 = arith.addf %3, %5 : vector<32x64xf32>
    %cst_5 = arith.constant 0.000000e+00 : f32
    %7 = vector.broadcast %cst_5 : f32 to vector<32x64xf32>
    %8 = arith.cmpf ogt, %6, %7 : vector<32x64xf32>
    %cst_6 = arith.constant 0.00999999977 : f32
    %9 = vector.broadcast %cst_6 : f32 to vector<32x64xf32>
    %10 = arith.mulf %9, %6 : vector<32x64xf32>
    %11 = arith.select %8, %6, %10 : vector<32x64xi1>, vector<32x64xf32>
    %c0_7 = arith.constant 0 : index
    %c0_8 = arith.constant 0 : index
    %12 = vector.load %arg4[%c0_7, %c0_8] : memref<32x64xf32, #tpu.memory_space<vmem>>, vector<32x64xf32>
    %13 = arith.addf %11, %12 : vector<32x64xf32>
    %c0_9 = arith.constant 0 : index
    %c0_10 = arith.constant 0 : index
    %14 = vector.load %arg5[%c0_9, %c0_10] : memref<32x64xf32, #tpu.memory_space<vmem>>, vector<32x64xf32>
    tpu.vector_store %arg5[%c0_9, %c0_10], %13 {strides = array<i32>} : memref<32x64xf32, #tpu.memory_space<vmem>>, vector<32x64xf32>,
    return
  }
  func.func @transform_0(%arg0: i32) -> (i32, i32) {
    %c0_i32 = arith.constant 0 : i32
    %c0_i32_0 = arith.constant 0 : i32
    return %arg0, %c0_i32 : i32, i32
  }
  func.func @transform_1(%arg0: i32) -> (i32, i32) {
    %c0_i32 = arith.constant 0 : i32
    %c0_i32_0 = arith.constant 0 : i32
    %c0_i32_1 = arith.constant 0 : i32
    return %c0_i32, %c0_i32_0 : i32, i32
  }
  func.func @transform_2(%arg0: i32) -> (i32, i32) {
    %c0_i32 = arith.constant 0 : i32
    %c0_i32_0 = arith.constant 0 : i32
    %c0_i32_1 = arith.constant 0 : i32
    return %c0_i32, %c0_i32_0 : i32, i32
  }
  func.func @transform_3(%arg0: i32) -> (i32, i32) {
    %c0_i32 = arith.constant 0 : i32
    %c0_i32_0 = arith.constant 0 : i32
    return %arg0, %c0_i32 : i32, i32
  }
  func.func @transform_4(%arg0: i32) -> (i32, i32) {
    %c0_i32 = arith.constant 0 : i32
    %c0_i32_0 = arith.constant 0 : i32
    return %arg0, %c0_i32 : i32, i32
  }
}

module attributes {stable_mosaic.version = 11 : i64} {
  func.func @_decoder_kernel(%arg0: i32, %arg1: i32, %arg2: memref<1x6x6x64xf32, #tpu.memory_space<vmem>>, %arg3: memref<2x384x32xbf16, #tpu.memory_space<vmem>>, %arg4: memref<2x64xf32, #tpu.memory_space<vmem>>, %arg5: memref<1x8x4x64xf32, #tpu.memory_space<vmem>>, %arg6: memref<1x8x4x64xf32, #tpu.memory_space<vmem>>) attributes {dimension_semantics = [#tpu.dimension_semantics<parallel>, #tpu.dimension_semantics<parallel>], iteration_bounds = array<i64: 2, 1>, scalar_prefetch = 0 : i64, scratch_operands = 0 : i64, tpu.core_type = #tpu.core_type<tc>, window_params = [{transform_indices = @transform_0, window_bounds = array<i64: 1, 6, 6, 64>}, {pipeline_mode = #tpu.pipeline_mode<synchronous>, transform_indices = @transform_1, window_bounds = array<i64: 2, 384, 32>}, {pipeline_mode = #tpu.pipeline_mode<synchronous>, transform_indices = @transform_2, window_bounds = array<i64: 2, 64>}, {transform_indices = @transform_3, window_bounds = array<i64: 1, 8, 4, 64>}, {transform_indices = @transform_4, window_bounds = array<i64: 1, 8, 4, 64>}]} {
    %c4_i32 = arith.constant 4 : i32
    %0 = arith.muli %arg1, %c4_i32 : i32
    %1 = tpu.assume_multiple %0, 4 : i32
    %c0 = arith.constant 0 : index
    %2 = arith.index_cast %1 : i32 to index
    %c0_0 = arith.constant 0 : index
    %c0_1 = arith.constant 0 : index
    %3 = vector.load %arg2[%c0, %2, %c0_0, %c0_1] : memref<1x6x6x64xf32, #tpu.memory_space<vmem>>, vector<1x6x6x64xf32>
    %4 = vector.shape_cast %3 : vector<1x6x6x64xf32> to vector<6x6x64xf32>
    %5 = arith.truncf %4 : vector<6x6x64xf32> to vector<6x6x64xbf16>
    %6 = vector.extract_strided_slice %5 {offsets = [0, 0, 0], sizes = [6, 5, 64], strides = [1, 1, 1]} : vector<6x6x64xbf16> to vector<6x5x64xbf16>
    %7 = vector.extract_strided_slice %5 {offsets = [0, 1, 0], sizes = [6, 5, 64], strides = [1, 1, 1]} : vector<6x6x64xbf16> to vector<6x5x64xbf16>
    %8 = tpu.concatenate %6, %7 in 2 : vector<6x5x64xbf16>, vector<6x5x64xbf16> -> vector<6x5x128xbf16>
    %9 = vector.shape_cast %8 : vector<6x5x128xbf16> to vector<6x1x5x128xbf16>
    %10 = vector.shape_cast %9 : vector<6x1x5x128xbf16> to vector<6x1x5x128xbf16>
    %11 = vector.broadcast %10 : vector<6x1x5x128xbf16> to vector<6x2x5x128xbf16>
    %12 = vector.shape_cast %11 : vector<6x2x5x128xbf16> to vector<12x5x128xbf16>
    %13 = vector.extract_strided_slice %12 {offsets = [1, 0, 0], sizes = [10, 5, 128], strides = [1, 1, 1]} : vector<12x5x128xbf16> to vector<10x5x128xbf16>
    %14 = vector.extract_strided_slice %13 {offsets = [0, 0, 0], sizes = [8, 4, 128], strides = [1, 1, 1]} : vector<10x5x128xbf16> to vector<8x4x128xbf16>
    %15 = vector.extract_strided_slice %13 {offsets = [1, 0, 0], sizes = [8, 4, 128], strides = [1, 1, 1]} : vector<10x5x128xbf16> to vector<8x4x128xbf16>
    %16 = vector.extract_strided_slice %13 {offsets = [2, 0, 0], sizes = [8, 4, 128], strides = [1, 1, 1]} : vector<10x5x128xbf16> to vector<8x4x128xbf16>
    %17 = vector.extract_strided_slice %13 {offsets = [0, 1, 0], sizes = [8, 4, 128], strides = [1, 1, 1]} : vector<10x5x128xbf16> to vector<8x4x128xbf16>
    %18 = vector.extract_strided_slice %13 {offsets = [1, 1, 0], sizes = [8, 4, 128], strides = [1, 1, 1]} : vector<10x5x128xbf16> to vector<8x4x128xbf16>
    %19 = vector.extract_strided_slice %13 {offsets = [2, 1, 0], sizes = [8, 4, 128], strides = [1, 1, 1]} : vector<10x5x128xbf16> to vector<8x4x128xbf16>
    %20 = tpu.concatenate %14, %15, %16 in 2 : vector<8x4x128xbf16>, vector<8x4x128xbf16>, vector<8x4x128xbf16> -> vector<8x4x384xbf16>
    %21 = tpu.concatenate %17, %18, %19 in 2 : vector<8x4x128xbf16>, vector<8x4x128xbf16>, vector<8x4x128xbf16> -> vector<8x4x384xbf16>
    %c0_2 = arith.constant 0 : index
    %c0_3 = arith.constant 0 : index
    %c0_4 = arith.constant 0 : index
    %22 = vector.load %arg3[%c0_2, %c0_3, %c0_4] : memref<2x384x32xbf16, #tpu.memory_space<vmem>>, vector<1x384x32xbf16>
    %23 = vector.shape_cast %22 : vector<1x384x32xbf16> to vector<384x32xbf16>
    %24 = vector.shape_cast %23 : vector<384x32xbf16> to vector<1x384x32xbf16>
    %25 = vector.shape_cast %24 : vector<1x384x32xbf16> to vector<1x384x32xbf16>
    %26 = vector.broadcast %25 : vector<1x384x32xbf16> to vector<8x384x32xbf16>
    %c1 = arith.constant 1 : index
    %c0_5 = arith.constant 0 : index
    %c0_6 = arith.constant 0 : index
    %27 = vector.load %arg3[%c1, %c0_5, %c0_6] : memref<2x384x32xbf16, #tpu.memory_space<vmem>>, vector<1x384x32xbf16>
    %28 = vector.shape_cast %27 : vector<1x384x32xbf16> to vector<384x32xbf16>
    %29 = vector.shape_cast %28 : vector<384x32xbf16> to vector<1x384x32xbf16>
    %30 = vector.shape_cast %29 : vector<1x384x32xbf16> to vector<1x384x32xbf16>
    %31 = vector.broadcast %30 : vector<1x384x32xbf16> to vector<8x384x32xbf16>
    "tpu.trace_start"() <{level = 10 : i32, message = "rwk,rkc->rwc"}> : () -> ()
    %cst = arith.constant dense<0.000000e+00> : vector<8x4x32xf32>
    %32 = tpu.matmul %20, %26, %cst {dimension_numbers = #tpu.dot_dimension_numbers<[2], [1], [1], [2], [0, 0, 0, 1, 1, 2], [0], [0]>} : vector<8x4x384xbf16>, vector<8x384x32xbf16>, vector<8x4x32xf32> -> vector<8x4x32xf32>
    %cst_7 = arith.constant dense<0.000000e+00> : vector<8x4x32xf32>
    %33 = tpu.matmul %21, %31, %cst_7 {dimension_numbers = #tpu.dot_dimension_numbers<[2], [1], [1], [2], [0, 0, 0, 1, 1, 2], [0], [0]>} : vector<8x4x384xbf16>, vector<8x384x32xbf16>, vector<8x4x32xf32> -> vector<8x4x32xf32>
    "tpu.trace_stop"() : () -> ()
    %34 = tpu.concatenate %32, %33 in 2 : vector<8x4x32xf32>, vector<8x4x32xf32> -> vector<8x4x64xf32>
    %c0_8 = arith.constant 0 : index
    %c0_9 = arith.constant 0 : index
    %35 = vector.load %arg4[%c0_8, %c0_9] : memref<2x64xf32, #tpu.memory_space<vmem>>, vector<1x64xf32>
    %36 = vector.shape_cast %35 : vector<1x64xf32> to vector<1x1x64xf32>
    %37 = vector.broadcast %36 : vector<1x1x64xf32> to vector<8x4x64xf32>
    %38 = arith.mulf %34, %37 : vector<8x4x64xf32>
    %c1_10 = arith.constant 1 : index
    %c0_11 = arith.constant 0 : index
    %39 = vector.load %arg4[%c1_10, %c0_11] : memref<2x64xf32, #tpu.memory_space<vmem>>, vector<1x64xf32>
    %40 = vector.shape_cast %39 : vector<1x64xf32> to vector<1x1x64xf32>
    %41 = vector.broadcast %40 : vector<1x1x64xf32> to vector<8x4x64xf32>
    %42 = arith.addf %38, %41 : vector<8x4x64xf32>
    %cst_12 = arith.constant 0.000000e+00 : f32
    %43 = vector.broadcast %cst_12 : f32 to vector<8x4x64xf32>
    %44 = arith.maximumf %42, %43 : vector<8x4x64xf32>
    %c0_13 = arith.constant 0 : index
    %c0_14 = arith.constant 0 : index
    %c0_15 = arith.constant 0 : index
    %c0_16 = arith.constant 0 : index
    %45 = vector.load %arg5[%c0_13, %c0_14, %c0_15, %c0_16] : memref<1x8x4x64xf32, #tpu.memory_space<vmem>>, vector<1x8x4x64xf32>
    %46 = vector.shape_cast %45 : vector<1x8x4x64xf32> to vector<8x4x64xf32>
    %47 = arith.addf %44, %46 : vector<8x4x64xf32>
    %c0_17 = arith.constant 0 : index
    %c0_18 = arith.constant 0 : index
    %c0_19 = arith.constant 0 : index
    %c0_20 = arith.constant 0 : index
    %48 = vector.load %arg6[%c0_17, %c0_18, %c0_19, %c0_20] : memref<1x8x4x64xf32, #tpu.memory_space<vmem>>, vector<1x8x4x64xf32>
    %49 = vector.shape_cast %48 : vector<1x8x4x64xf32> to vector<8x4x64xf32>
    %50 = vector.shape_cast %47 : vector<8x4x64xf32> to vector<1x8x4x64xf32>
    tpu.vector_store %arg6[%c0_17, %c0_18, %c0_19, %c0_20], %50 {strides = array<i32>} : memref<1x8x4x64xf32, #tpu.memory_space<vmem>>, vector<1x8x4x64xf32>,
    return
  }
  func.func @transform_0(%arg0: i32, %arg1: i32) -> (i32, i32, i32, i32) {
    %c0_i32 = arith.constant 0 : i32
    %c0_i32_0 = arith.constant 0 : i32
    %c0_i32_1 = arith.constant 0 : i32
    %c0_i32_2 = arith.constant 0 : i32
    return %arg0, %c0_i32, %c0_i32_0, %c0_i32_1 : i32, i32, i32, i32
  }
  func.func @transform_1(%arg0: i32, %arg1: i32) -> (i32, i32, i32) {
    %c0_i32 = arith.constant 0 : i32
    %c0_i32_0 = arith.constant 0 : i32
    %c0_i32_1 = arith.constant 0 : i32
    %c0_i32_2 = arith.constant 0 : i32
    return %c0_i32, %c0_i32_0, %c0_i32_1 : i32, i32, i32
  }
  func.func @transform_2(%arg0: i32, %arg1: i32) -> (i32, i32) {
    %c0_i32 = arith.constant 0 : i32
    %c0_i32_0 = arith.constant 0 : i32
    %c0_i32_1 = arith.constant 0 : i32
    return %c0_i32, %c0_i32_0 : i32, i32
  }
  func.func @transform_3(%arg0: i32, %arg1: i32) -> (i32, i32, i32, i32) {
    %c0_i32 = arith.constant 0 : i32
    %c0_i32_0 = arith.constant 0 : i32
    %c0_i32_1 = arith.constant 0 : i32
    return %arg0, %arg1, %c0_i32, %c0_i32_0 : i32, i32, i32, i32
  }
  func.func @transform_4(%arg0: i32, %arg1: i32) -> (i32, i32, i32, i32) {
    %c0_i32 = arith.constant 0 : i32
    %c0_i32_0 = arith.constant 0 : i32
    %c0_i32_1 = arith.constant 0 : i32
    return %arg0, %arg1, %c0_i32, %c0_i32_0 : i32, i32, i32, i32
  }
}

module attributes {stable_mosaic.version = 11 : i64} {
  func.func @_decoder_kernel(%arg0: i32, %arg1: i32, %arg2: memref<1x10x10x32xf32, #tpu.memory_space<vmem>>, %arg3: memref<2x192x16xbf16, #tpu.memory_space<vmem>>, %arg4: memref<2x32xf32, #tpu.memory_space<vmem>>, %arg5: memref<1x16x8x32xf32, #tpu.memory_space<vmem>>, %arg6: memref<1x16x8x32xf32, #tpu.memory_space<vmem>>) attributes {dimension_semantics = [#tpu.dimension_semantics<parallel>, #tpu.dimension_semantics<parallel>], iteration_bounds = array<i64: 2, 1>, scalar_prefetch = 0 : i64, scratch_operands = 0 : i64, tpu.core_type = #tpu.core_type<tc>, window_params = [{transform_indices = @transform_0, window_bounds = array<i64: 1, 10, 10, 32>}, {pipeline_mode = #tpu.pipeline_mode<synchronous>, transform_indices = @transform_1, window_bounds = array<i64: 2, 192, 16>}, {pipeline_mode = #tpu.pipeline_mode<synchronous>, transform_indices = @transform_2, window_bounds = array<i64: 2, 32>}, {transform_indices = @transform_3, window_bounds = array<i64: 1, 16, 8, 32>}, {transform_indices = @transform_4, window_bounds = array<i64: 1, 16, 8, 32>}]} {
    %c8_i32 = arith.constant 8 : i32
    %0 = arith.muli %arg1, %c8_i32 : i32
    %1 = tpu.assume_multiple %0, 8 : i32
    %c0 = arith.constant 0 : index
    %2 = arith.index_cast %1 : i32 to index
    %c0_0 = arith.constant 0 : index
    %c0_1 = arith.constant 0 : index
    %3 = vector.load %arg2[%c0, %2, %c0_0, %c0_1] : memref<1x10x10x32xf32, #tpu.memory_space<vmem>>, vector<1x10x10x32xf32>
    %4 = vector.shape_cast %3 : vector<1x10x10x32xf32> to vector<10x10x32xf32>
    %5 = arith.truncf %4 : vector<10x10x32xf32> to vector<10x10x32xbf16>
    %6 = vector.extract_strided_slice %5 {offsets = [0, 0, 0], sizes = [10, 9, 32], strides = [1, 1, 1]} : vector<10x10x32xbf16> to vector<10x9x32xbf16>
    %7 = vector.extract_strided_slice %5 {offsets = [0, 1, 0], sizes = [10, 9, 32], strides = [1, 1, 1]} : vector<10x10x32xbf16> to vector<10x9x32xbf16>
    %8 = tpu.concatenate %6, %7 in 2 : vector<10x9x32xbf16>, vector<10x9x32xbf16> -> vector<10x9x64xbf16>
    %9 = vector.shape_cast %8 : vector<10x9x64xbf16> to vector<10x1x9x64xbf16>
    %10 = vector.shape_cast %9 : vector<10x1x9x64xbf16> to vector<10x1x9x64xbf16>
    %11 = vector.broadcast %10 : vector<10x1x9x64xbf16> to vector<10x2x9x64xbf16>
    %12 = vector.shape_cast %11 : vector<10x2x9x64xbf16> to vector<20x9x64xbf16>
    %13 = vector.extract_strided_slice %12 {offsets = [1, 0, 0], sizes = [18, 9, 64], strides = [1, 1, 1]} : vector<20x9x64xbf16> to vector<18x9x64xbf16>
    %14 = vector.extract_strided_slice %13 {offsets = [0, 0, 0], sizes = [16, 8, 64], strides = [1, 1, 1]} : vector<18x9x64xbf16> to vector<16x8x64xbf16>
    %15 = vector.extract_strided_slice %13 {offsets = [1, 0, 0], sizes = [16, 8, 64], strides = [1, 1, 1]} : vector<18x9x64xbf16> to vector<16x8x64xbf16>
    %16 = vector.extract_strided_slice %13 {offsets = [2, 0, 0], sizes = [16, 8, 64], strides = [1, 1, 1]} : vector<18x9x64xbf16> to vector<16x8x64xbf16>
    %17 = vector.extract_strided_slice %13 {offsets = [0, 1, 0], sizes = [16, 8, 64], strides = [1, 1, 1]} : vector<18x9x64xbf16> to vector<16x8x64xbf16>
    %18 = vector.extract_strided_slice %13 {offsets = [1, 1, 0], sizes = [16, 8, 64], strides = [1, 1, 1]} : vector<18x9x64xbf16> to vector<16x8x64xbf16>
    %19 = vector.extract_strided_slice %13 {offsets = [2, 1, 0], sizes = [16, 8, 64], strides = [1, 1, 1]} : vector<18x9x64xbf16> to vector<16x8x64xbf16>
    %20 = tpu.concatenate %14, %15, %16 in 2 : vector<16x8x64xbf16>, vector<16x8x64xbf16>, vector<16x8x64xbf16> -> vector<16x8x192xbf16>
    %21 = tpu.concatenate %17, %18, %19 in 2 : vector<16x8x64xbf16>, vector<16x8x64xbf16>, vector<16x8x64xbf16> -> vector<16x8x192xbf16>
    %c0_2 = arith.constant 0 : index
    %c0_3 = arith.constant 0 : index
    %c0_4 = arith.constant 0 : index
    %22 = vector.load %arg3[%c0_2, %c0_3, %c0_4] : memref<2x192x16xbf16, #tpu.memory_space<vmem>>, vector<1x192x16xbf16>
    %23 = vector.shape_cast %22 : vector<1x192x16xbf16> to vector<192x16xbf16>
    %24 = vector.shape_cast %23 : vector<192x16xbf16> to vector<1x192x16xbf16>
    %25 = vector.shape_cast %24 : vector<1x192x16xbf16> to vector<1x192x16xbf16>
    %26 = vector.broadcast %25 : vector<1x192x16xbf16> to vector<16x192x16xbf16>
    %c1 = arith.constant 1 : index
    %c0_5 = arith.constant 0 : index
    %c0_6 = arith.constant 0 : index
    %27 = vector.load %arg3[%c1, %c0_5, %c0_6] : memref<2x192x16xbf16, #tpu.memory_space<vmem>>, vector<1x192x16xbf16>
    %28 = vector.shape_cast %27 : vector<1x192x16xbf16> to vector<192x16xbf16>
    %29 = vector.shape_cast %28 : vector<192x16xbf16> to vector<1x192x16xbf16>
    %30 = vector.shape_cast %29 : vector<1x192x16xbf16> to vector<1x192x16xbf16>
    %31 = vector.broadcast %30 : vector<1x192x16xbf16> to vector<16x192x16xbf16>
    "tpu.trace_start"() <{level = 10 : i32, message = "rwk,rkc->rwc"}> : () -> ()
    %cst = arith.constant dense<0.000000e+00> : vector<16x8x16xf32>
    %32 = tpu.matmul %20, %26, %cst {dimension_numbers = #tpu.dot_dimension_numbers<[2], [1], [1], [2], [0, 0, 0, 1, 1, 2], [0], [0]>} : vector<16x8x192xbf16>, vector<16x192x16xbf16>, vector<16x8x16xf32> -> vector<16x8x16xf32>
    %cst_7 = arith.constant dense<0.000000e+00> : vector<16x8x16xf32>
    %33 = tpu.matmul %21, %31, %cst_7 {dimension_numbers = #tpu.dot_dimension_numbers<[2], [1], [1], [2], [0, 0, 0, 1, 1, 2], [0], [0]>} : vector<16x8x192xbf16>, vector<16x192x16xbf16>, vector<16x8x16xf32> -> vector<16x8x16xf32>
    "tpu.trace_stop"() : () -> ()
    %34 = tpu.concatenate %32, %33 in 2 : vector<16x8x16xf32>, vector<16x8x16xf32> -> vector<16x8x32xf32>
    %c0_8 = arith.constant 0 : index
    %c0_9 = arith.constant 0 : index
    %35 = vector.load %arg4[%c0_8, %c0_9] : memref<2x32xf32, #tpu.memory_space<vmem>>, vector<1x32xf32>
    %36 = vector.shape_cast %35 : vector<1x32xf32> to vector<1x1x32xf32>
    %37 = vector.broadcast %36 : vector<1x1x32xf32> to vector<16x8x32xf32>
    %38 = arith.mulf %34, %37 : vector<16x8x32xf32>
    %c1_10 = arith.constant 1 : index
    %c0_11 = arith.constant 0 : index
    %39 = vector.load %arg4[%c1_10, %c0_11] : memref<2x32xf32, #tpu.memory_space<vmem>>, vector<1x32xf32>
    %40 = vector.shape_cast %39 : vector<1x32xf32> to vector<1x1x32xf32>
    %41 = vector.broadcast %40 : vector<1x1x32xf32> to vector<16x8x32xf32>
    %42 = arith.addf %38, %41 : vector<16x8x32xf32>
    %cst_12 = arith.constant 0.000000e+00 : f32
    %43 = vector.broadcast %cst_12 : f32 to vector<16x8x32xf32>
    %44 = arith.maximumf %42, %43 : vector<16x8x32xf32>
    %c0_13 = arith.constant 0 : index
    %c0_14 = arith.constant 0 : index
    %c0_15 = arith.constant 0 : index
    %c0_16 = arith.constant 0 : index
    %45 = vector.load %arg5[%c0_13, %c0_14, %c0_15, %c0_16] : memref<1x16x8x32xf32, #tpu.memory_space<vmem>>, vector<1x16x8x32xf32>
    %46 = vector.shape_cast %45 : vector<1x16x8x32xf32> to vector<16x8x32xf32>
    %47 = arith.addf %44, %46 : vector<16x8x32xf32>
    %c0_17 = arith.constant 0 : index
    %c0_18 = arith.constant 0 : index
    %c0_19 = arith.constant 0 : index
    %c0_20 = arith.constant 0 : index
    %48 = vector.load %arg6[%c0_17, %c0_18, %c0_19, %c0_20] : memref<1x16x8x32xf32, #tpu.memory_space<vmem>>, vector<1x16x8x32xf32>
    %49 = vector.shape_cast %48 : vector<1x16x8x32xf32> to vector<16x8x32xf32>
    %50 = vector.shape_cast %47 : vector<16x8x32xf32> to vector<1x16x8x32xf32>
    tpu.vector_store %arg6[%c0_17, %c0_18, %c0_19, %c0_20], %50 {strides = array<i32>} : memref<1x16x8x32xf32, #tpu.memory_space<vmem>>, vector<1x16x8x32xf32>,
    return
  }
  func.func @transform_0(%arg0: i32, %arg1: i32) -> (i32, i32, i32, i32) {
    %c0_i32 = arith.constant 0 : i32
    %c0_i32_0 = arith.constant 0 : i32
    %c0_i32_1 = arith.constant 0 : i32
    %c0_i32_2 = arith.constant 0 : i32
    return %arg0, %c0_i32, %c0_i32_0, %c0_i32_1 : i32, i32, i32, i32
  }
  func.func @transform_1(%arg0: i32, %arg1: i32) -> (i32, i32, i32) {
    %c0_i32 = arith.constant 0 : i32
    %c0_i32_0 = arith.constant 0 : i32
    %c0_i32_1 = arith.constant 0 : i32
    %c0_i32_2 = arith.constant 0 : i32
    return %c0_i32, %c0_i32_0, %c0_i32_1 : i32, i32, i32
  }
  func.func @transform_2(%arg0: i32, %arg1: i32) -> (i32, i32) {
    %c0_i32 = arith.constant 0 : i32
    %c0_i32_0 = arith.constant 0 : i32
    %c0_i32_1 = arith.constant 0 : i32
    return %c0_i32, %c0_i32_0 : i32, i32
  }
  func.func @transform_3(%arg0: i32, %arg1: i32) -> (i32, i32, i32, i32) {
    %c0_i32 = arith.constant 0 : i32
    %c0_i32_0 = arith.constant 0 : i32
    %c0_i32_1 = arith.constant 0 : i32
    return %arg0, %arg1, %c0_i32, %c0_i32_0 : i32, i32, i32, i32
  }
  func.func @transform_4(%arg0: i32, %arg1: i32) -> (i32, i32, i32, i32) {
    %c0_i32 = arith.constant 0 : i32
    %c0_i32_0 = arith.constant 0 : i32
    %c0_i32_1 = arith.constant 0 : i32
    return %arg0, %arg1, %c0_i32, %c0_i32_0 : i32, i32, i32, i32
  }
}

module attributes {stable_mosaic.version = 11 : i64} {
  func.func @_conv1x1_lrelu_add_kernel(%arg0: i32, %arg1: memref<256x16xf32, #tpu.memory_space<vmem>>, %arg2: memref<16x8xbf16, #tpu.memory_space<vmem>>, %arg3: memref<1x8xf32, #tpu.memory_space<vmem>>, %arg4: memref<256x8xf32, #tpu.memory_space<vmem>>, %arg5: memref<256x8xf32, #tpu.memory_space<vmem>>) attributes {dimension_semantics = [#tpu.dimension_semantics<parallel>], iteration_bounds = array<i64: 2>, scalar_prefetch = 0 : i64, scratch_operands = 0 : i64, tpu.core_type = #tpu.core_type<tc>, window_params = [{transform_indices = @transform_0, window_bounds = array<i64: 256, 16>}, {pipeline_mode = #tpu.pipeline_mode<synchronous>, transform_indices = @transform_1, window_bounds = array<i64: 16, 8>}, {pipeline_mode = #tpu.pipeline_mode<synchronous>, transform_indices = @transform_2, window_bounds = array<i64: 1, 8>}, {transform_indices = @transform_3, window_bounds = array<i64: 256, 8>}, {transform_indices = @transform_4, window_bounds = array<i64: 256, 8>}]} {
    %c0 = arith.constant 0 : index
    %c0_0 = arith.constant 0 : index
    %0 = vector.load %arg1[%c0, %c0_0] : memref<256x16xf32, #tpu.memory_space<vmem>>, vector<256x16xf32>
    %1 = arith.truncf %0 : vector<256x16xf32> to vector<256x16xbf16>
    %c0_1 = arith.constant 0 : index
    %c0_2 = arith.constant 0 : index
    %2 = vector.load %arg2[%c0_1, %c0_2] : memref<16x8xbf16, #tpu.memory_space<vmem>>, vector<16x8xbf16>
    %cst = arith.constant dense<0.000000e+00> : vector<256x8xf32>
    %3 = tpu.matmul %1, %2, %cst {dimension_numbers = #tpu.dot_dimension_numbers<[1], [0], [0], [1], [0, 0, 1, 1], [], []>} : vector<256x16xbf16>, vector<16x8xbf16>, vector<256x8xf32> -> vector<256x8xf32>
    %c0_3 = arith.constant 0 : index
    %c0_4 = arith.constant 0 : index
    %4 = vector.load %arg3[%c0_3, %c0_4] : memref<1x8xf32, #tpu.memory_space<vmem>>, vector<1x8xf32>
    %5 = vector.broadcast %4 : vector<1x8xf32> to vector<256x8xf32>
    %6 = arith.addf %3, %5 : vector<256x8xf32>
    %cst_5 = arith.constant 0.000000e+00 : f32
    %7 = vector.broadcast %cst_5 : f32 to vector<256x8xf32>
    %8 = arith.cmpf ogt, %6, %7 : vector<256x8xf32>
    %cst_6 = arith.constant 0.00999999977 : f32
    %9 = vector.broadcast %cst_6 : f32 to vector<256x8xf32>
    %10 = arith.mulf %9, %6 : vector<256x8xf32>
    %11 = arith.select %8, %6, %10 : vector<256x8xi1>, vector<256x8xf32>
    %c0_7 = arith.constant 0 : index
    %c0_8 = arith.constant 0 : index
    %12 = vector.load %arg4[%c0_7, %c0_8] : memref<256x8xf32, #tpu.memory_space<vmem>>, vector<256x8xf32>
    %13 = arith.addf %11, %12 : vector<256x8xf32>
    %c0_9 = arith.constant 0 : index
    %c0_10 = arith.constant 0 : index
    %14 = vector.load %arg5[%c0_9, %c0_10] : memref<256x8xf32, #tpu.memory_space<vmem>>, vector<256x8xf32>
    tpu.vector_store %arg5[%c0_9, %c0_10], %13 {strides = array<i32>} : memref<256x8xf32, #tpu.memory_space<vmem>>, vector<256x8xf32>,
    return
  }
  func.func @transform_0(%arg0: i32) -> (i32, i32) {
    %c0_i32 = arith.constant 0 : i32
    %c0_i32_0 = arith.constant 0 : i32
    return %arg0, %c0_i32 : i32, i32
  }
  func.func @transform_1(%arg0: i32) -> (i32, i32) {
    %c0_i32 = arith.constant 0 : i32
    %c0_i32_0 = arith.constant 0 : i32
    %c0_i32_1 = arith.constant 0 : i32
    return %c0_i32, %c0_i32_0 : i32, i32
  }
  func.func @transform_2(%arg0: i32) -> (i32, i32) {
    %c0_i32 = arith.constant 0 : i32
    %c0_i32_0 = arith.constant 0 : i32
    %c0_i32_1 = arith.constant 0 : i32
    return %c0_i32, %c0_i32_0 : i32, i32
  }
  func.func @transform_3(%arg0: i32) -> (i32, i32) {
    %c0_i32 = arith.constant 0 : i32
    %c0_i32_0 = arith.constant 0 : i32
    return %arg0, %c0_i32 : i32, i32
  }
  func.func @transform_4(%arg0: i32) -> (i32, i32) {
    %c0_i32 = arith.constant 0 : i32
    %c0_i32_0 = arith.constant 0 : i32
    return %arg0, %c0_i32 : i32, i32
  }
}

module attributes {stable_mosaic.version = 11 : i64} {
  func.func @_decoder_kernel(%arg0: i32, %arg1: i32, %arg2: memref<1x18x18x8xf32, #tpu.memory_space<vmem>>, %arg3: memref<2x48x8xbf16, #tpu.memory_space<vmem>>, %arg4: memref<2x16xf32, #tpu.memory_space<vmem>>, %arg5: memref<1x16x16x16xf32, #tpu.memory_space<vmem>>) attributes {dimension_semantics = [#tpu.dimension_semantics<parallel>, #tpu.dimension_semantics<parallel>], iteration_bounds = array<i64: 2, 2>, scalar_prefetch = 0 : i64, scratch_operands = 0 : i64, tpu.core_type = #tpu.core_type<tc>, window_params = [{transform_indices = @transform_0, window_bounds = array<i64: 1, 18, 18, 8>}, {pipeline_mode = #tpu.pipeline_mode<synchronous>, transform_indices = @transform_1, window_bounds = array<i64: 2, 48, 8>}, {pipeline_mode = #tpu.pipeline_mode<synchronous>, transform_indices = @transform_2, window_bounds = array<i64: 2, 16>}, {transform_indices = @transform_3, window_bounds = array<i64: 1, 16, 16, 16>}]} {
    %c8_i32 = arith.constant 8 : i32
    %0 = arith.muli %arg1, %c8_i32 : i32
    %1 = tpu.assume_multiple %0, 8 : i32
    %c0 = arith.constant 0 : index
    %2 = arith.index_cast %1 : i32 to index
    %c0_0 = arith.constant 0 : index
    %c0_1 = arith.constant 0 : index
    %3 = vector.load %arg2[%c0, %2, %c0_0, %c0_1] : memref<1x18x18x8xf32, #tpu.memory_space<vmem>>, vector<1x10x18x8xf32>
    %4 = vector.shape_cast %3 : vector<1x10x18x8xf32> to vector<10x18x8xf32>
    %5 = arith.truncf %4 : vector<10x18x8xf32> to vector<10x18x8xbf16>
    %6 = vector.extract_strided_slice %5 {offsets = [0, 0, 0], sizes = [10, 17, 8], strides = [1, 1, 1]} : vector<10x18x8xbf16> to vector<10x17x8xbf16>
    %7 = vector.extract_strided_slice %5 {offsets = [0, 1, 0], sizes = [10, 17, 8], strides = [1, 1, 1]} : vector<10x18x8xbf16> to vector<10x17x8xbf16>
    %8 = tpu.concatenate %6, %7 in 2 : vector<10x17x8xbf16>, vector<10x17x8xbf16> -> vector<10x17x16xbf16>
    %9 = vector.shape_cast %8 : vector<10x17x16xbf16> to vector<10x1x17x16xbf16>
    %10 = vector.shape_cast %9 : vector<10x1x17x16xbf16> to vector<10x1x17x16xbf16>
    %11 = vector.broadcast %10 : vector<10x1x17x16xbf16> to vector<10x2x17x16xbf16>
    %12 = vector.shape_cast %11 : vector<10x2x17x16xbf16> to vector<20x17x16xbf16>
    %13 = vector.extract_strided_slice %12 {offsets = [1, 0, 0], sizes = [18, 17, 16], strides = [1, 1, 1]} : vector<20x17x16xbf16> to vector<18x17x16xbf16>
    %14 = vector.extract_strided_slice %13 {offsets = [0, 0, 0], sizes = [16, 16, 16], strides = [1, 1, 1]} : vector<18x17x16xbf16> to vector<16x16x16xbf16>
    %15 = vector.extract_strided_slice %13 {offsets = [1, 0, 0], sizes = [16, 16, 16], strides = [1, 1, 1]} : vector<18x17x16xbf16> to vector<16x16x16xbf16>
    %16 = vector.extract_strided_slice %13 {offsets = [2, 0, 0], sizes = [16, 16, 16], strides = [1, 1, 1]} : vector<18x17x16xbf16> to vector<16x16x16xbf16>
    %17 = vector.extract_strided_slice %13 {offsets = [0, 1, 0], sizes = [16, 16, 16], strides = [1, 1, 1]} : vector<18x17x16xbf16> to vector<16x16x16xbf16>
    %18 = vector.extract_strided_slice %13 {offsets = [1, 1, 0], sizes = [16, 16, 16], strides = [1, 1, 1]} : vector<18x17x16xbf16> to vector<16x16x16xbf16>
    %19 = vector.extract_strided_slice %13 {offsets = [2, 1, 0], sizes = [16, 16, 16], strides = [1, 1, 1]} : vector<18x17x16xbf16> to vector<16x16x16xbf16>
    %20 = tpu.concatenate %14, %15, %16 in 2 : vector<16x16x16xbf16>, vector<16x16x16xbf16>, vector<16x16x16xbf16> -> vector<16x16x48xbf16>
    %21 = tpu.concatenate %17, %18, %19 in 2 : vector<16x16x16xbf16>, vector<16x16x16xbf16>, vector<16x16x16xbf16> -> vector<16x16x48xbf16>
    %c0_2 = arith.constant 0 : index
    %c0_3 = arith.constant 0 : index
    %c0_4 = arith.constant 0 : index
    %22 = vector.load %arg3[%c0_2, %c0_3, %c0_4] : memref<2x48x8xbf16, #tpu.memory_space<vmem>>, vector<1x48x8xbf16>
    %23 = vector.shape_cast %22 : vector<1x48x8xbf16> to vector<48x8xbf16>
    %24 = vector.shape_cast %23 : vector<48x8xbf16> to vector<1x48x8xbf16>
    %25 = vector.shape_cast %24 : vector<1x48x8xbf16> to vector<1x48x8xbf16>
    %26 = vector.broadcast %25 : vector<1x48x8xbf16> to vector<16x48x8xbf16>
    %c1 = arith.constant 1 : index
    %c0_5 = arith.constant 0 : index
    %c0_6 = arith.constant 0 : index
    %27 = vector.load %arg3[%c1, %c0_5, %c0_6] : memref<2x48x8xbf16, #tpu.memory_space<vmem>>, vector<1x48x8xbf16>
    %28 = vector.shape_cast %27 : vector<1x48x8xbf16> to vector<48x8xbf16>
    %29 = vector.shape_cast %28 : vector<48x8xbf16> to vector<1x48x8xbf16>
    %30 = vector.shape_cast %29 : vector<1x48x8xbf16> to vector<1x48x8xbf16>
    %31 = vector.broadcast %30 : vector<1x48x8xbf16> to vector<16x48x8xbf16>
    "tpu.trace_start"() <{level = 10 : i32, message = "rwk,rkc->rwc"}> : () -> ()
    %cst = arith.constant dense<0.000000e+00> : vector<16x16x8xf32>
    %32 = tpu.matmul %20, %26, %cst {dimension_numbers = #tpu.dot_dimension_numbers<[2], [1], [1], [2], [0, 0, 0, 1, 1, 2], [0], [0]>} : vector<16x16x48xbf16>, vector<16x48x8xbf16>, vector<16x16x8xf32> -> vector<16x16x8xf32>
    %cst_7 = arith.constant dense<0.000000e+00> : vector<16x16x8xf32>
    %33 = tpu.matmul %21, %31, %cst_7 {dimension_numbers = #tpu.dot_dimension_numbers<[2], [1], [1], [2], [0, 0, 0, 1, 1, 2], [0], [0]>} : vector<16x16x48xbf16>, vector<16x48x8xbf16>, vector<16x16x8xf32> -> vector<16x16x8xf32>
    "tpu.trace_stop"() : () -> ()
    %34 = tpu.concatenate %32, %33 in 2 : vector<16x16x8xf32>, vector<16x16x8xf32> -> vector<16x16x16xf32>
    %c0_8 = arith.constant 0 : index
    %c0_9 = arith.constant 0 : index
    %35 = vector.load %arg4[%c0_8, %c0_9] : memref<2x16xf32, #tpu.memory_space<vmem>>, vector<1x16xf32>
    %36 = vector.shape_cast %35 : vector<1x16xf32> to vector<1x1x16xf32>
    %37 = vector.broadcast %36 : vector<1x1x16xf32> to vector<16x16x16xf32>
    %38 = arith.mulf %34, %37 : vector<16x16x16xf32>
    %c1_10 = arith.constant 1 : index
    %c0_11 = arith.constant 0 : index
    %39 = vector.load %arg4[%c1_10, %c0_11] : memref<2x16xf32, #tpu.memory_space<vmem>>, vector<1x16xf32>
    %40 = vector.shape_cast %39 : vector<1x16xf32> to vector<1x1x16xf32>
    %41 = vector.broadcast %40 : vector<1x1x16xf32> to vector<16x16x16xf32>
    %42 = arith.addf %38, %41 : vector<16x16x16xf32>
    %cst_12 = arith.constant 0.000000e+00 : f32
    %43 = vector.broadcast %cst_12 : f32 to vector<16x16x16xf32>
    %44 = arith.maximumf %42, %43 : vector<16x16x16xf32>
    %c0_13 = arith.constant 0 : index
    %c0_14 = arith.constant 0 : index
    %c0_15 = arith.constant 0 : index
    %c0_16 = arith.constant 0 : index
    %45 = vector.load %arg5[%c0_13, %c0_14, %c0_15, %c0_16] : memref<1x16x16x16xf32, #tpu.memory_space<vmem>>, vector<1x16x16x16xf32>
    %46 = vector.shape_cast %45 : vector<1x16x16x16xf32> to vector<16x16x16xf32>
    %47 = vector.shape_cast %44 : vector<16x16x16xf32> to vector<1x16x16x16xf32>
    tpu.vector_store %arg5[%c0_13, %c0_14, %c0_15, %c0_16], %47 {strides = array<i32>} : memref<1x16x16x16xf32, #tpu.memory_space<vmem>>, vector<1x16x16x16xf32>,
    return
  }
  func.func @transform_0(%arg0: i32, %arg1: i32) -> (i32, i32, i32, i32) {
    %c0_i32 = arith.constant 0 : i32
    %c0_i32_0 = arith.constant 0 : i32
    %c0_i32_1 = arith.constant 0 : i32
    %c0_i32_2 = arith.constant 0 : i32
    return %arg0, %c0_i32, %c0_i32_0, %c0_i32_1 : i32, i32, i32, i32
  }
  func.func @transform_1(%arg0: i32, %arg1: i32) -> (i32, i32, i32) {
    %c0_i32 = arith.constant 0 : i32
    %c0_i32_0 = arith.constant 0 : i32
    %c0_i32_1 = arith.constant 0 : i32
    %c0_i32_2 = arith.constant 0 : i32
    return %c0_i32, %c0_i32_0, %c0_i32_1 : i32, i32, i32
  }
  func.func @transform_2(%arg0: i32, %arg1: i32) -> (i32, i32) {
    %c0_i32 = arith.constant 0 : i32
    %c0_i32_0 = arith.constant 0 : i32
    %c0_i32_1 = arith.constant 0 : i32
    return %c0_i32, %c0_i32_0 : i32, i32
  }
  func.func @transform_3(%arg0: i32, %arg1: i32) -> (i32, i32, i32, i32) {
    %c0_i32 = arith.constant 0 : i32
    %c0_i32_0 = arith.constant 0 : i32
    %c0_i32_1 = arith.constant 0 : i32
    return %arg0, %arg1, %c0_i32, %c0_i32_0 : i32, i32, i32, i32
  }
}

module attributes {stable_mosaic.version = 11 : i64} {
  func.func @_decoder_kernel(%arg0: i32, %arg1: i32, %arg2: memref<1x34x34x8xf32, #tpu.memory_space<vmem>>, %arg3: memref<2x48x8xbf16, #tpu.memory_space<vmem>>, %arg4: memref<2x16xf32, #tpu.memory_space<vmem>>, %arg5: memref<1x16x32x16xf32, #tpu.memory_space<vmem>>) attributes {dimension_semantics = [#tpu.dimension_semantics<parallel>, #tpu.dimension_semantics<parallel>], iteration_bounds = array<i64: 2, 4>, scalar_prefetch = 0 : i64, scratch_operands = 0 : i64, tpu.core_type = #tpu.core_type<tc>, window_params = [{transform_indices = @transform_0, window_bounds = array<i64: 1, 34, 34, 8>}, {pipeline_mode = #tpu.pipeline_mode<synchronous>, transform_indices = @transform_1, window_bounds = array<i64: 2, 48, 8>}, {pipeline_mode = #tpu.pipeline_mode<synchronous>, transform_indices = @transform_2, window_bounds = array<i64: 2, 16>}, {transform_indices = @transform_3, window_bounds = array<i64: 1, 16, 32, 16>}]} {
    %c8_i32 = arith.constant 8 : i32
    %0 = arith.muli %arg1, %c8_i32 : i32
    %1 = tpu.assume_multiple %0, 8 : i32
    %c0 = arith.constant 0 : index
    %2 = arith.index_cast %1 : i32 to index
    %c0_0 = arith.constant 0 : index
    %c0_1 = arith.constant 0 : index
    %3 = vector.load %arg2[%c0, %2, %c0_0, %c0_1] : memref<1x34x34x8xf32, #tpu.memory_space<vmem>>, vector<1x10x34x8xf32>
    %4 = vector.shape_cast %3 : vector<1x10x34x8xf32> to vector<10x34x8xf32>
    %5 = arith.truncf %4 : vector<10x34x8xf32> to vector<10x34x8xbf16>
    %6 = vector.extract_strided_slice %5 {offsets = [0, 0, 0], sizes = [10, 33, 8], strides = [1, 1, 1]} : vector<10x34x8xbf16> to vector<10x33x8xbf16>
    %7 = vector.extract_strided_slice %5 {offsets = [0, 1, 0], sizes = [10, 33, 8], strides = [1, 1, 1]} : vector<10x34x8xbf16> to vector<10x33x8xbf16>
    %8 = tpu.concatenate %6, %7 in 2 : vector<10x33x8xbf16>, vector<10x33x8xbf16> -> vector<10x33x16xbf16>
    %9 = vector.shape_cast %8 : vector<10x33x16xbf16> to vector<10x1x33x16xbf16>
    %10 = vector.shape_cast %9 : vector<10x1x33x16xbf16> to vector<10x1x33x16xbf16>
    %11 = vector.broadcast %10 : vector<10x1x33x16xbf16> to vector<10x2x33x16xbf16>
    %12 = vector.shape_cast %11 : vector<10x2x33x16xbf16> to vector<20x33x16xbf16>
    %13 = vector.extract_strided_slice %12 {offsets = [1, 0, 0], sizes = [18, 33, 16], strides = [1, 1, 1]} : vector<20x33x16xbf16> to vector<18x33x16xbf16>
    %14 = vector.extract_strided_slice %13 {offsets = [0, 0, 0], sizes = [16, 32, 16], strides = [1, 1, 1]} : vector<18x33x16xbf16> to vector<16x32x16xbf16>
    %15 = vector.extract_strided_slice %13 {offsets = [1, 0, 0], sizes = [16, 32, 16], strides = [1, 1, 1]} : vector<18x33x16xbf16> to vector<16x32x16xbf16>
    %16 = vector.extract_strided_slice %13 {offsets = [2, 0, 0], sizes = [16, 32, 16], strides = [1, 1, 1]} : vector<18x33x16xbf16> to vector<16x32x16xbf16>
    %17 = vector.extract_strided_slice %13 {offsets = [0, 1, 0], sizes = [16, 32, 16], strides = [1, 1, 1]} : vector<18x33x16xbf16> to vector<16x32x16xbf16>
    %18 = vector.extract_strided_slice %13 {offsets = [1, 1, 0], sizes = [16, 32, 16], strides = [1, 1, 1]} : vector<18x33x16xbf16> to vector<16x32x16xbf16>
    %19 = vector.extract_strided_slice %13 {offsets = [2, 1, 0], sizes = [16, 32, 16], strides = [1, 1, 1]} : vector<18x33x16xbf16> to vector<16x32x16xbf16>
    %20 = tpu.concatenate %14, %15, %16 in 2 : vector<16x32x16xbf16>, vector<16x32x16xbf16>, vector<16x32x16xbf16> -> vector<16x32x48xbf16>
    %21 = tpu.concatenate %17, %18, %19 in 2 : vector<16x32x16xbf16>, vector<16x32x16xbf16>, vector<16x32x16xbf16> -> vector<16x32x48xbf16>
    %c0_2 = arith.constant 0 : index
    %c0_3 = arith.constant 0 : index
    %c0_4 = arith.constant 0 : index
    %22 = vector.load %arg3[%c0_2, %c0_3, %c0_4] : memref<2x48x8xbf16, #tpu.memory_space<vmem>>, vector<1x48x8xbf16>
    %23 = vector.shape_cast %22 : vector<1x48x8xbf16> to vector<48x8xbf16>
    %24 = vector.shape_cast %23 : vector<48x8xbf16> to vector<1x48x8xbf16>
    %25 = vector.shape_cast %24 : vector<1x48x8xbf16> to vector<1x48x8xbf16>
    %26 = vector.broadcast %25 : vector<1x48x8xbf16> to vector<16x48x8xbf16>
    %c1 = arith.constant 1 : index
    %c0_5 = arith.constant 0 : index
    %c0_6 = arith.constant 0 : index
    %27 = vector.load %arg3[%c1, %c0_5, %c0_6] : memref<2x48x8xbf16, #tpu.memory_space<vmem>>, vector<1x48x8xbf16>
    %28 = vector.shape_cast %27 : vector<1x48x8xbf16> to vector<48x8xbf16>
    %29 = vector.shape_cast %28 : vector<48x8xbf16> to vector<1x48x8xbf16>
    %30 = vector.shape_cast %29 : vector<1x48x8xbf16> to vector<1x48x8xbf16>
    %31 = vector.broadcast %30 : vector<1x48x8xbf16> to vector<16x48x8xbf16>
    "tpu.trace_start"() <{level = 10 : i32, message = "rwk,rkc->rwc"}> : () -> ()
    %cst = arith.constant dense<0.000000e+00> : vector<16x32x8xf32>
    %32 = tpu.matmul %20, %26, %cst {dimension_numbers = #tpu.dot_dimension_numbers<[2], [1], [1], [2], [0, 0, 0, 1, 1, 2], [0], [0]>} : vector<16x32x48xbf16>, vector<16x48x8xbf16>, vector<16x32x8xf32> -> vector<16x32x8xf32>
    %cst_7 = arith.constant dense<0.000000e+00> : vector<16x32x8xf32>
    %33 = tpu.matmul %21, %31, %cst_7 {dimension_numbers = #tpu.dot_dimension_numbers<[2], [1], [1], [2], [0, 0, 0, 1, 1, 2], [0], [0]>} : vector<16x32x48xbf16>, vector<16x48x8xbf16>, vector<16x32x8xf32> -> vector<16x32x8xf32>
    "tpu.trace_stop"() : () -> ()
    %34 = tpu.concatenate %32, %33 in 2 : vector<16x32x8xf32>, vector<16x32x8xf32> -> vector<16x32x16xf32>
    %c0_8 = arith.constant 0 : index
    %c0_9 = arith.constant 0 : index
    %35 = vector.load %arg4[%c0_8, %c0_9] : memref<2x16xf32, #tpu.memory_space<vmem>>, vector<1x16xf32>
    %36 = vector.shape_cast %35 : vector<1x16xf32> to vector<1x1x16xf32>
    %37 = vector.broadcast %36 : vector<1x1x16xf32> to vector<16x32x16xf32>
    %38 = arith.mulf %34, %37 : vector<16x32x16xf32>
    %c1_10 = arith.constant 1 : index
    %c0_11 = arith.constant 0 : index
    %39 = vector.load %arg4[%c1_10, %c0_11] : memref<2x16xf32, #tpu.memory_space<vmem>>, vector<1x16xf32>
    %40 = vector.shape_cast %39 : vector<1x16xf32> to vector<1x1x16xf32>
    %41 = vector.broadcast %40 : vector<1x1x16xf32> to vector<16x32x16xf32>
    %42 = arith.addf %38, %41 : vector<16x32x16xf32>
    %cst_12 = arith.constant 0.000000e+00 : f32
    %43 = vector.broadcast %cst_12 : f32 to vector<16x32x16xf32>
    %44 = arith.maximumf %42, %43 : vector<16x32x16xf32>
    %c0_13 = arith.constant 0 : index
    %c0_14 = arith.constant 0 : index
    %c0_15 = arith.constant 0 : index
    %c0_16 = arith.constant 0 : index
    %45 = vector.load %arg5[%c0_13, %c0_14, %c0_15, %c0_16] : memref<1x16x32x16xf32, #tpu.memory_space<vmem>>, vector<1x16x32x16xf32>
    %46 = vector.shape_cast %45 : vector<1x16x32x16xf32> to vector<16x32x16xf32>
    %47 = vector.shape_cast %44 : vector<16x32x16xf32> to vector<1x16x32x16xf32>
    tpu.vector_store %arg5[%c0_13, %c0_14, %c0_15, %c0_16], %47 {strides = array<i32>} : memref<1x16x32x16xf32, #tpu.memory_space<vmem>>, vector<1x16x32x16xf32>,
    return
  }
  func.func @transform_0(%arg0: i32, %arg1: i32) -> (i32, i32, i32, i32) {
    %c0_i32 = arith.constant 0 : i32
    %c0_i32_0 = arith.constant 0 : i32
    %c0_i32_1 = arith.constant 0 : i32
    %c0_i32_2 = arith.constant 0 : i32
    return %arg0, %c0_i32, %c0_i32_0, %c0_i32_1 : i32, i32, i32, i32
  }
  func.func @transform_1(%arg0: i32, %arg1: i32) -> (i32, i32, i32) {
    %c0_i32 = arith.constant 0 : i32
    %c0_i32_0 = arith.constant 0 : i32
    %c0_i32_1 = arith.constant 0 : i32
    %c0_i32_2 = arith.constant 0 : i32
    return %c0_i32, %c0_i32_0, %c0_i32_1 : i32, i32, i32
  }
  func.func @transform_2(%arg0: i32, %arg1: i32) -> (i32, i32) {
    %c0_i32 = arith.constant 0 : i32
    %c0_i32_0 = arith.constant 0 : i32
    %c0_i32_1 = arith.constant 0 : i32
    return %c0_i32, %c0_i32_0 : i32, i32
  }
  func.func @transform_3(%arg0: i32, %arg1: i32) -> (i32, i32, i32, i32) {
    %c0_i32 = arith.constant 0 : i32
    %c0_i32_0 = arith.constant 0 : i32
    %c0_i32_1 = arith.constant 0 : i32
    return %arg0, %arg1, %c0_i32, %c0_i32_0 : i32, i32, i32, i32
  }
}

</mosaic_0001>

<llo_original>
// kernel: unet_forward.6
$region0: #{unet_forward.6}
  #allocation0 [shape = 'u32[]', space=smem, size = 0x4, offset = 0x4, fixed_abs, tag = 'smem constant byte address 0x4 - core index']
  #allocation1 [shape = 'u32[144,128]{1,0:T(1,128)}', space=vmem, size = 0x12000, scoped, tag = 'internal scratch']
  %s0 = inlined_call_operand.hbm [shape: f32[32,32], index: 0, kind: input, shape index: {}]
  %s1 = inlined_call_operand.hbm [shape: bf16[32,64], index: 1, kind: input, shape index: {}]
  %s2 = inlined_call_operand.hbm [shape: f32[1,64], index: 2, kind: input, shape index: {}]
  %s3 = inlined_call_operand.hbm [shape: f32[32,64], index: 3, kind: input, shape index: {}]
  %s4 = inlined_call_operand.vmem [shape: f32[32,64], index: 4, kind: output, shape index: {}]
  %s5 = sld [smem:[#allocation0]]
  $region42: #{unet_forward.6} parent=0
    _
  %s7 = ssub.s32 1, %s5
  %s8 = scalar_select 0, %s7, %s5
  $region1: #{unet_forward.6} parent=0
    #allocation2 [shape = 'u8[16384]{0}', space=vmem, size = 0x4000, scoped, tag = 'input window, operand 0, single buffered']
    #allocation3 [shape = 's32[1]{0}', space=sflag, size = 0x4, scoped, tag = 'scoped memory for unet_forward.6']
    #allocation4 [shape = 'u8[8192]{0}', space=vmem, size = 0x2000, scoped, tag = 'input window, operand 1, single buffered']
    #allocation5 [shape = 's32[1]{0}', space=sflag, size = 0x4, scoped, tag = 'scoped memory for unet_forward.6']
    #allocation6 [shape = 'u8[512]{0}', space=vmem, size = 0x400, scoped, tag = 'input window, operand 2, single buffered']
    #allocation7 [shape = 'u8[16384]{0}', space=vmem, size = 0x4000, scoped, tag = 'input window, operand 3, single buffered']
    #allocation8 [shape = 's32[1]{0}', space=sflag, size = 0x4, scoped, tag = 'scoped memory for unet_forward.6']
    %9 = vsyncpa [#allocation3], 0
    %10 = vsyncpa [#allocation5], 0
    %11 = vsyncpa [#allocation8], 0
    // Predicated region
    $region2: #{unet_forward.6} parent=1 // pred_check
      _
    $region3: #{unet_forward.6} parent=1 // pred_check_branch
      %13 = sbr.rel (0) target = $region5
    $region4: #{unet_forward.6} parent=1 // pred_region
      %s15 = ssub.s32 512, 512
      %16 = vsyncadd [#allocation3], %s15
      %s17 = sshll.u32 [#allocation2], 4
      %s18 = int_to_ptr.vmem [resolvable:$true] %s17
      %23 = dma.hbm_to_vmem [thread:$0]  %s0, 512, %s18, [#allocation3], 128, 128, 8
    $region5: #{unet_forward.6} parent=1 // pred_fallthru
      _
    // Predicated region
    $region6: #{unet_forward.6} parent=1 // pred_check
      _
    $region7: #{unet_forward.6} parent=1 // pred_check_branch
      %25 = sbr.rel (0) target = $region9
    $region8: #{unet_forward.6} parent=1 // pred_region
      %s27 = ssub.s32 256, 256
      %28 = vsyncadd [#allocation5], %s27
      %s29 = sshll.u32 [#allocation4], 4
      %s30 = int_to_ptr.vmem [resolvable:$true] %s29
      %35 = dma.hbm_to_vmem [thread:$0]  %s1, 256, %s30, [#allocation5], 64, 64, 4
    $region9: #{unet_forward.6} parent=1 // pred_fallthru
      _
    // Predicated region
    $region10: #{unet_forward.6} parent=1 // pred_check
      _
    $region11: #{unet_forward.6} parent=1 // pred_check_branch
      %37 = sbr.rel (0) target = $region13
    $region12: #{unet_forward.6} parent=1 // pred_region
      %s39 = ssub.s32 16, 16
      %40 = vsyncadd [#allocation5], %s39
      %s42 = sshll.u32 [#allocation6], 4
      %s43 = int_to_ptr.vmem [resolvable:$true] %s42
      %45 = dma.hbm_to_vmem [thread:$0]  %s2, 16, %s43, [#allocation5]
    $region13: #{unet_forward.6} parent=1 // pred_fallthru
      _
    // Predicated region
    $region14: #{unet_forward.6} parent=1 // pred_check
      _
    $region15: #{unet_forward.6} parent=1 // pred_check_branch
      %47 = sbr.rel (0) target = $region17
    $region16: #{unet_forward.6} parent=1 // pred_region
      %s49 = ssub.s32 512, 512
      %50 = vsyncadd [#allocation8], %s49
      %s51 = sshll.u32 [#allocation7], 4
      %s52 = int_to_ptr.vmem [resolvable:$true] %s51
      %57 = dma.hbm_to_vmem [thread:$0]  %s3, 512, %s52, [#allocation8], 128, 128, 8
    $region17: #{unet_forward.6} parent=1 // pred_fallthru
      _
    // Predicated region
    $region18: #{unet_forward.6} parent=1 // pred_check
      _
    $region19: #{unet_forward.6} parent=1 // pred_check_branch
      %59 = sbr.rel (0) target = $region21
    $region20: #{unet_forward.6} parent=1 // pred_region
      %60 = dma.done [#allocation3], 512
    $region21: #{unet_forward.6} parent=1 // pred_fallthru
      _
    // Predicated region
    $region22: #{unet_forward.6} parent=1 // pred_check
      _
    $region23: #{unet_forward.6} parent=1 // pred_check_branch
      %62 = sbr.rel (0) target = $region25
    $region24: #{unet_forward.6} parent=1 // pred_region
      %63 = dma.done [#allocation5], 256
    $region25: #{unet_forward.6} parent=1 // pred_fallthru
      _
    // Predicated region
    $region26: #{unet_forward.6} parent=1 // pred_check
      _
    $region27: #{unet_forward.6} parent=1 // pred_check_branch
      %65 = sbr.rel (0) target = $region29
    $region28: #{unet_forward.6} parent=1 // pred_region
      %66 = dma.done [#allocation5], 16
    $region29: #{unet_forward.6} parent=1 // pred_fallthru
      _
    // Predicated region
    $region30: #{unet_forward.6} parent=1 // pred_check
      _
    $region31: #{unet_forward.6} parent=1 // pred_check_branch
      %68 = sbr.rel (0) target = $region33
    $region32: #{unet_forward.6} parent=1 // pred_region
      %69 = dma.done [#allocation8], 512
    $region33: #{unet_forward.6} parent=1 // pred_fallthru
      _
    %v71 = vld [vmem:[#allocation2] sm:$0xff]
    %v72 = vld [vmem:[#allocation2 + $0x8] sm:$0xff]
    %v73 = vld [vmem:[#allocation2 + $0x10] sm:$0xff]
    %v74 = vld [vmem:[#allocation2 + $0x18] sm:$0xff]
    %v75 = vpack.c.bf16 %v72, %v71
    %v76 = vpack.c.bf16 %v74, %v73
    %v77 = vld [vmem:[#allocation4] sm:$0xf]
    %v78 = vld [vmem:[#allocation4 + $0x4] sm:$0xf]
    %v79 = vld [vmem:[#allocation4 + $0x8] sm:$0xf]
    %v80 = vld [vmem:[#allocation4 + $0xc] sm:$0xf]
    %v81 = vld [vmem:[#allocation6] sm:$0x1]
    %v83 = vlaneseq
    %v84 = vshrl.u32 %v83, 7
    %v85 = vsub.s32 0, %v84
    %v86 = vrot.slane %v81, %v85
    %v92 = vunpack.c.l.b16 %v77
    %v93 = vunpack.c.l.b16 %v78
    %v94 = vunpack.c.l.b16 %v79
    %v95 = vunpack.c.l.b16 %v80
    %v96 = vpack.c.b16 %v93, %v92
    %v97 = vpack.c.b16 %v95, %v94
    %vm100 = vcmask 261120
    %v102 = vsel %vm100, %v75, 0
    %v105 = vsel %vm100, %v76, 0
    %107 = vmatprep.subr.bf16.mxu0 0
    %108 = vmatpush1.bf16.msra.mxu0 %v96
    %109 = vmatprep.subr.bf16.mxu0 0
    %110 = vmatpush1.bf16.msra.mxu0 %v97
    %111 = vmatprep.subr.bf16.mxu0 0
    %112 = vmatpush1.bf16.msra.mxu0 0
    %113 = vmatprep.subr.bf16.mxu0 0
    %114 = vmatpush1.bf16.msra.mxu0 0
    %115 = vmatprep.subr.bf16.mxu0 0
    %116 = vmatpush1.bf16.msra.mxu0 0
    %117 = vmatprep.subr.bf16.mxu0 0
    %118 = vmatpush1.bf16.msra.mxu0 0
    %119 = vmatprep.subr.bf16.mxu0 0
    %120 = vmatpush1.bf16.msra.mxu0 0
    %121 = vmatprep.subr.bf16.mxu0 0
    %122 = vmatpush1.bf16.msra.mxu0 0
    %123 = vmatprep.subr.bf16.mxu0 0
    %124 = vmatpush1.bf16.msra.mxu0 0
    %125 = vmatprep.subr.bf16.mxu0 0
    %126 = vmatpush1.bf16.msra.mxu0 0
    %127 = vmatprep.subr.bf16.mxu0 0
    %128 = vmatpush1.bf16.msra.mxu0 0
    %129 = vmatprep.subr.bf16.mxu0 0
    %130 = vmatpush1.bf16.msra.mxu0 0
    %131 = vmatprep.subr.bf16.mxu0 0
    %132 = vmatpush1.bf16.msra.mxu0 0
    %133 = vmatprep.subr.bf16.mxu0 0
    %134 = vmatpush1.bf16.msra.mxu0 0
    %135 = vmatprep.subr.bf16.mxu0 0
    %136 = vmatpush1.bf16.msra.mxu0 0
    %137 = vmatprep.subr.bf16.mxu0 0
    %138 = vmatpush1.bf16.msra.mxu0 0
    %139 = vmatprep.mubr.bf16.mxu0 0
    %140 = vmatmul.mubr.bf16.gmra.mrb[0].mxu0 %v102
    %v141 = vpop.f32.mrb[0].mxu0
    %v142 = vadd.f32 %v86, %v141
    %v143 = vpop.f32.mrb[0].mxu0
    %v144 = vpop.f32.mrb[0].mxu0
    %v145 = vadd.f32 %v86, %v144
    %v146 = vpop.f32.mrb[0].mxu0
    %147 = vmatprep.mubr.bf16.mxu0 0
    %148 = vmatmul.mubr.bf16.gmra.mrb[0].mxu0 %v105
    %v149 = vpop.f32.mrb[0].mxu0
    %v150 = vadd.f32 %v86, %v149
    %v151 = vpop.f32.mrb[0].mxu0
    %v152 = vpop.f32.mrb[0].mxu0
    %v153 = vadd.f32 %v86, %v152
    %v154 = vpop.f32.mrb[0].mxu0
    %155 = vdwg.mxu0
    %vm156 = vcmp.gt.f32.partialorder %v142, 0.0
    %vm157 = vcmp.gt.f32.partialorder %v145, 0.0
    %vm158 = vcmp.gt.f32.partialorder %v150, 0.0
    %vm159 = vcmp.gt.f32.partialorder %v153, 0.0
    %v160 = vmul.f32 %v142, 0.01
    %v161 = vmul.f32 %v145, 0.01
    %v162 = vmul.f32 %v150, 0.01
    %v163 = vmul.f32 %v153, 0.01
    %v164 = vsel %vm156, %v142, %v160
    %v165 = vsel %vm157, %v145, %v161
    %v166 = vsel %vm158, %v150, %v162
    %v167 = vsel %vm159, %v153, %v163
    %v168 = vld [vmem:[#allocation7] sm:$0xff]
    %v169 = vld [vmem:[#allocation7 + $0x8] sm:$0xff]
    %v170 = vld [vmem:[#allocation7 + $0x10] sm:$0xff]
    %v171 = vld [vmem:[#allocation7 + $0x18] sm:$0xff]
    %v172 = vadd.f32 %v164, %v168
    %v173 = vadd.f32 %v165, %v169
    %v174 = vadd.f32 %v166, %v170
    %v175 = vadd.f32 %v167, %v171
    %vm176 = vcmask 523264
    %177 = vst.msk [vmem:[%s4] sm:$0xff] %vm176, %v172
    %178 = vst.msk [vmem:[%s4 + $0x8] sm:$0xff] %vm176, %v173
    %179 = vst.msk [vmem:[%s4 + $0x10] sm:$0xff] %vm176, %v174
    %180 = vst.msk [vmem:[%s4 + $0x18] sm:$0xff] %vm176, %v175
    // Predicated region
    $region34: #{unet_forward.6} parent=1 // pred_check
      _
    $region35: #{unet_forward.6} parent=1 // pred_check_branch
      %182 = sbr.rel (0) target = $region37
    $region36: #{unet_forward.6} parent=1 // pred_region
      _
    $region37: #{unet_forward.6} parent=1 // pred_fallthru
      _
    // Predicated region
    $region38: #{unet_forward.6} parent=1 // pred_check
      _
    $region39: #{unet_forward.6} parent=1 // pred_check_branch
      %184 = sbr.rel (0) target = $region41
    $region40: #{unet_forward.6} parent=1 // pred_region
      _
    $region41: #{unet_forward.6} parent=1 // pred_fallthru
      _
    %185 = vsyncpa [#allocation3], 1
    %186 = vsyncpa [#allocation5], 1
    %187 = vsyncpa [#allocation8], 1

// kernel: unet_forward.7
$region0: #{unet_forward.7}
  #allocation0 [shape = 'u32[]', space=smem, size = 0x4, offset = 0x4, fixed_abs, tag = 'smem constant byte address 0x4 - core index']
  #allocation1 [shape = 'u32[144,128]{1,0:T(1,128)}', space=vmem, size = 0x12000, scoped, tag = 'internal scratch']
  %s0 = inlined_call_operand.vmem [shape: f32[2,6,6,64], index: 0, kind: input, shape index: {}]
  %s1 = inlined_call_operand.vmem [shape: bf16[2,384,32], index: 1, kind: input, shape index: {}]
  %s2 = inlined_call_operand.hbm [shape: f32[2,64], index: 2, kind: input, shape index: {}]
  %s3 = inlined_call_operand.vmem [shape: f32[2,8,4,64], index: 3, kind: input, shape index: {}]
  %s4 = inlined_call_operand.vmem [shape: f32[2,8,4,64], index: 4, kind: output, shape index: {}]
  %s5 = sld [smem:[#allocation0]]
  $region53: #{unet_forward.7} parent=0
    _
  %s7 = ssub.s32 1, %s5
  %s8 = scalar_select 0, %s7, %s5
  $region1: #{unet_forward.7} parent=0
    #allocation2 [shape = 'u8[1024]{0}', space=vmem, size = 0x400, scoped, tag = 'input window, operand 2, single buffered']
    #allocation3 [shape = 's32[2]{0}', space=sflag, size = 0x8, scoped, tag = 'scoped memory for unet_forward.7']
    %9 = vsyncpa [#allocation3], 0
    loop: start=0, step=1, limit=4
    $region2: #{unet_forward.7} parent=1 // loop_pre_header
      _
    $region3: #{unet_forward.7} parent=1 // loop_header
      %s11 = sphi 0, %s15
      %p12 = scmp.ge.s32.totalorder %s11, 4
      %s18 = sphi 0, %s30
      %s19 = sphi 0, %s26
      %s20 = sphi 0, %s18
      %s21 = sphi 0, %s19
      %s22 = sphi 0, %s20
      %s23 = sphi 0, %s21
      %s33 = sphi 0, %s35
      %s36 = sphi 0, %s33
      %s37 = sphi 0, %s36
      %s53 = sphi 0, %s37
      %s57 = sphi 0, %s57
      %s59 = sphi 0, %s57
      %s60 = sphi 0, %s59
      %s74 = sphi 0, %s60
      %s78 = sphi 0, %s78
      %s80 = sphi 0, %s78
      %s81 = sphi 0, %s80
      %s95 = sphi 0, %s81
      %s103 = sphi 0, %s105
      %s106 = sphi 0, %s103
      %s107 = sphi 0, %s106
      %s123 = sphi 0, %s107
      %s131 = sphi 0, %s133
      %s134 = sphi 0, %s131
      %s135 = sphi 0, %s134
      %s151 = sphi 0, %s135
    $region4: #{unet_forward.7} parent=1 // loop_header_branch
      %14 = sbr.rel (%p12) target = $region8
    $region5: #{unet_forward.7} parent=1 // loop_body
      %s16 = ssub.s32 %s11, 1
      %s17 = ssub.s32 %s11, 2
      %s24 = sadd.s32 1, %s19
      %p25 = scmp.ge.s32.totalorder %s24, 1
      %s26 = scalar_select %p25, 0, %s24
      %s27 = sadd.s32 1, %s18
      %s28 = scalar_select %p25, %s27, %s18
      %p29 = scmp.ge.s32.totalorder %s28, 2
      %s30 = scalar_select %p29, 0, %s28
      %s31 = ssub.s32 %s18, %s30
      %p32 = scmp.eq.s32.totalorder %s31, 0
      %s34 = sadd.s32 %s33, 1
      %s35 = scalar_select %p32, %s33, %s34
      %p38 = pneg %p32
      %p39 = scmp.eq.s32.totalorder %s11, 1
      %p40 = por %p38, %p39
      %p41 = scmp.ne.s32.totalorder %s33, %s36
      %p42 = scmp.eq.s32.totalorder %s11, 0
      %p43 = por %p41, %p42
      %p44 = scmp.ne.s32.totalorder %s33, %s36
      %p45 = scmp.eq.s32.totalorder %s16, 1
      %p46 = por %p44, %p45
      %p47 = scmp.ne.s32.totalorder %s36, %s37
      %p48 = scmp.eq.s32.totalorder %s16, 0
      %p49 = por %p47, %p48
      %p50 = scmp.ne.s32.totalorder %s36, %s37
      %p51 = scmp.eq.s32.totalorder %s17, 1
      %p52 = por %p50, %p51
      %p54 = scmp.ne.s32.totalorder %s37, %s53
      %p55 = scmp.eq.s32.totalorder %s17, 0
      %p56 = por %p54, %p55
      %s58 = sadd.s32 %s57, 1
      %p61 = scmp.eq.s32.totalorder %s11, 1
      %p62 = scmp.ne.s32.totalorder %s57, %s59
      %p63 = scmp.eq.s32.totalorder %s11, 0
      %p64 = por %p62, %p63
      %p65 = scmp.ne.s32.totalorder %s57, %s59
      %p66 = scmp.eq.s32.totalorder %s16, 1
      %p67 = por %p65, %p66
      %p68 = scmp.ne.s32.totalorder %s59, %s60
      %p69 = scmp.eq.s32.totalorder %s16, 0
      %p70 = por %p68, %p69
      %p71 = scmp.ne.s32.totalorder %s59, %s60
      %p72 = scmp.eq.s32.totalorder %s17, 1
      %p73 = por %p71, %p72
      %p75 = scmp.ne.s32.totalorder %s60, %s74
      %p76 = scmp.eq.s32.totalorder %s17, 0
      %p77 = por %p75, %p76
      %s79 = sadd.s32 %s78, 1
      %p82 = scmp.eq.s32.totalorder %s11, 1
      %p83 = scmp.ne.s32.totalorder %s78, %s80
      %p84 = scmp.eq.s32.totalorder %s11, 0
      %p85 = por %p83, %p84
      %p86 = scmp.ne.s32.totalorder %s78, %s80
      %p87 = scmp.eq.s32.totalorder %s16, 1
      %p88 = por %p86, %p87
      %p89 = scmp.ne.s32.totalorder %s80, %s81
      %p90 = scmp.eq.s32.totalorder %s16, 0
      %p91 = por %p89, %p90
      %p92 = scmp.ne.s32.totalorder %s80, %s81
      %p93 = scmp.eq.s32.totalorder %s17, 1
      %p94 = por %p92, %p93
      %p96 = scmp.ne.s32.totalorder %s81, %s95
      %p97 = scmp.eq.s32.totalorder %s17, 0
      %p98 = por %p96, %p97
      %s99 = ssub.s32 %s18, %s30
      %s100 = ssub.s32 %s19, %s26
      %s101 = sor.u32 %s99, %s100
      %p102 = scmp.eq.s32.totalorder %s101, 0
      %s104 = sadd.s32 %s103, 1
      %s105 = scalar_select %p102, %s103, %s104
      %p108 = pneg %p102
      %p109 = scmp.eq.s32.totalorder %s11, 1
      %p110 = por %p108, %p109
      %p111 = scmp.ne.s32.totalorder %s103, %s106
      %p112 = scmp.eq.s32.totalorder %s11, 0
      %p113 = por %p111, %p112
      %p114 = scmp.ne.s32.totalorder %s103, %s106
      %p115 = scmp.eq.s32.totalorder %s16, 1
      %p116 = por %p114, %p115
      %p117 = scmp.ne.s32.totalorder %s106, %s107
      %p118 = scmp.eq.s32.totalorder %s16, 0
      %p119 = por %p117, %p118
      %p120 = scmp.ne.s32.totalorder %s106, %s107
      %p121 = scmp.eq.s32.totalorder %s17, 1
      %p122 = por %p120, %p121
      %p124 = scmp.ne.s32.totalorder %s107, %s123
      %p125 = scmp.eq.s32.totalorder %s17, 0
      %p126 = por %p124, %p125
      %s127 = ssub.s32 %s18, %s30
      %s128 = ssub.s32 %s19, %s26
      %s129 = sor.u32 %s127, %s128
      %p130 = scmp.eq.s32.totalorder %s129, 0
      %s132 = sadd.s32 %s131, 1
      %s133 = scalar_select %p130, %s131, %s132
      %p136 = pneg %p130
      %p137 = scmp.eq.s32.totalorder %s11, 1
      %p138 = por %p136, %p137
      %p139 = scmp.ne.s32.totalorder %s131, %s134
      %p140 = scmp.eq.s32.totalorder %s11, 0
      %p141 = por %p139, %p140
      %p142 = scmp.ne.s32.totalorder %s131, %s134
      %p143 = scmp.eq.s32.totalorder %s16, 1
      %p144 = por %p142, %p143
      %p145 = scmp.ne.s32.totalorder %s134, %s135
      %p146 = scmp.eq.s32.totalorder %s16, 0
      %p147 = por %p145, %p146
      %p148 = scmp.ne.s32.totalorder %s134, %s135
      %p149 = scmp.eq.s32.totalorder %s17, 1
      %p150 = por %p148, %p149
      %p152 = scmp.ne.s32.totalorder %s135, %s151
      %p153 = scmp.eq.s32.totalorder %s17, 0
      %p154 = por %p152, %p153
      %p155 = scmp.le.s32.totalorder 1, %s11
      %p156 = scmp.lt.s32.totalorder %s11, 3
      %p157 = pnand %p155, %p156
      %p158 = pneg %p157
      // Predicated region
      $region9: #{unet_forward.7} parent=5 // pred_check
        _
      $region10: #{unet_forward.7} parent=5 // pred_check_branch
        %160 = sbr.rel (%p157) target = $region12
      $region11: #{unet_forward.7} parent=5 // pred_region
        %s161 = ssub.s32 %s11, 1
        // Predicated region
        $region13: #{unet_forward.7} parent=11 // pred_check
          %p162 = pneg %p70
        $region14: #{unet_forward.7} parent=11 // pred_check_branch
          %164 = sbr.rel (%p162) target = $region16
        $region15: #{unet_forward.7} parent=11 // pred_region
          _
        $region16: #{unet_forward.7} parent=11 // pred_fallthru
          _
        // Predicated region
        $region17: #{unet_forward.7} parent=11 // pred_check
          %p165 = pneg %p91
        $region18: #{unet_forward.7} parent=11 // pred_check_branch
          %167 = sbr.rel (%p165) target = $region20
        $region19: #{unet_forward.7} parent=11 // pred_region
          %s169 = ssub.s32 32, 32
          %170 = vsyncadd [#allocation3], %s169
          %s172 = sshll.u32 [#allocation2], 4
          %s173 = int_to_ptr.vmem [resolvable:$true] %s172
          %175 = dma.hbm_to_vmem [thread:$0]  %s2, 32, %s173, [#allocation3]
        $region20: #{unet_forward.7} parent=11 // pred_fallthru
          _
      $region12: #{unet_forward.7} parent=5 // pred_fallthru
        _
      %p176 = scmp.lt.s32.totalorder %s11, 2
      // Predicated region
      $region21: #{unet_forward.7} parent=5 // pred_check
        %p177 = pneg %p176
      $region22: #{unet_forward.7} parent=5 // pred_check_branch
        %179 = sbr.rel (%p177) target = $region24
      $region23: #{unet_forward.7} parent=5 // pred_region
        // Predicated region
        $region25: #{unet_forward.7} parent=23 // pred_check
          %p180 = pneg %p43
        $region26: #{unet_forward.7} parent=23 // pred_check_branch
          %182 = sbr.rel (%p180) target = $region28
        $region27: #{unet_forward.7} parent=23 // pred_region
          %p183 = scmp.lt.s32.totalorder %s18, 1
          %s184 = scalar_select %p183, %s18, 1
          %s185 = smul.addr %s184, 6
          %s186 = smul.addr %s185, 8
          %s187 = scalar_lea.vmem %s0, %s186
        $region28: #{unet_forward.7} parent=23 // pred_fallthru
          _
        // Predicated region
        $region29: #{unet_forward.7} parent=23 // pred_check
          %p188 = pneg %p113
        $region30: #{unet_forward.7} parent=23 // pred_check_branch
          %190 = sbr.rel (%p188) target = $region32
        $region31: #{unet_forward.7} parent=23 // pred_region
          %s191 = smul.u32 8, %s19
          %p192 = scmp.lt.s32.totalorder %s18, 1
          %s193 = scalar_select %p192, %s18, 1
          %p194 = scmp.lt.s32.totalorder %s191, 7
          %s195 = scalar_select %p194, %s191, 7
          %s196 = smul.addr %s193, 8
          %s197 = sadd.s32 %s195, %s196
          %s198 = smul.addr %s197, 4
          %s199 = scalar_lea.vmem %s3, %s198
          %s200 = smul.u32 8, %s19
        $region32: #{unet_forward.7} parent=23 // pred_fallthru
          _
      $region24: #{unet_forward.7} parent=5 // pred_fallthru
        _
      %p201 = scmp.le.s32.totalorder 1, %s11
      %p202 = scmp.lt.s32.totalorder %s11, 3
      %p203 = pnand %p201, %p202
      %p204 = pneg %p203
      // Predicated region
      $region33: #{unet_forward.7} parent=5 // pred_check
        _
      $region34: #{unet_forward.7} parent=5 // pred_check_branch
        %206 = sbr.rel (%p203) target = $region36
      $region35: #{unet_forward.7} parent=5 // pred_region
        %s207 = ssub.s32 %s11, 1
        // Predicated region
        $region37: #{unet_forward.7} parent=35 // pred_check
          %p208 = pneg %p91
        $region38: #{unet_forward.7} parent=35 // pred_check_branch
          %210 = sbr.rel (%p208) target = $region40
        $region39: #{unet_forward.7} parent=35 // pred_region
          %211 = dma.done [#allocation3], 32
        $region40: #{unet_forward.7} parent=35 // pred_fallthru
          _
        %p212 = scmp.lt.s32.totalorder %s20, 1
        %s213 = scalar_select %p212, %s20, 1
        %s214 = smul.addr %s213, 6
        %s215 = smul.addr %s214, 8
        %s216 = scalar_lea.vmem %s0, %s215
        %p217 = pneg %p49
        %p218 = pneg %p46
        %p219 = pneg %p70
        %p220 = pneg %p67
        %p221 = pneg %p91
        %p222 = pneg %p88
        %s223 = smul.u32 8, %s21
        %p224 = scmp.lt.s32.totalorder %s20, 1
        %s225 = scalar_select %p224, %s20, 1
        %p226 = scmp.lt.s32.totalorder %s223, 7
        %s227 = scalar_select %p226, %s223, 7
        %s228 = smul.addr %s225, 8
        %s229 = sadd.s32 %s227, %s228
        %s230 = smul.addr %s229, 4
        %s231 = scalar_lea.vmem %s3, %s230
        %p232 = pneg %p119
        %p233 = pneg %p116
        %p234 = pneg %p147
        %p235 = pneg %p144
        %s236 = smul.u32 8, %s21
        %p237 = scmp.lt.s32.totalorder %s20, 1
        %s238 = scalar_select %p237, %s20, 1
        %p239 = scmp.lt.s32.totalorder %s236, 7
        %s240 = scalar_select %p239, %s236, 7
        %s241 = smul.addr %s238, 8
        %s242 = sadd.s32 %s240, %s241
        %s243 = smul.addr %s242, 4
        %s244 = scalar_lea.vmem %s4, %s243
        %p245 = scmp.lt.s32.totalorder %s20, 1
        %s246 = scalar_select %p245, %s20, 1
        %s247 = smul.addr %s246, 6
        %s248 = smul.addr %s247, 8
        %s249 = scalar_lea.vmem %s0, %s248
        %s250 = smul.u32 8, %s21
        %p251 = scmp.lt.s32.totalorder %s20, 1
        %s252 = scalar_select %p251, %s20, 1
        %p253 = scmp.lt.s32.totalorder %s250, 7
        %s254 = scalar_select %p253, %s250, 7
        %s255 = smul.addr %s252, 8
        %s256 = sadd.s32 %s254, %s255
        %s257 = smul.addr %s256, 4
        %s258 = scalar_lea.vmem %s3, %s257
        %s259 = smul.u32 8, %s21
        %s260 = smul.u32 8, %s21
        %p261 = scmp.lt.s32.totalorder %s20, 1
        %s262 = scalar_select %p261, %s20, 1
        %p263 = scmp.lt.s32.totalorder %s260, 7
        %s264 = scalar_select %p263, %s260, 7
        %s265 = smul.addr %s262, 8
        %s266 = sadd.s32 %s264, %s265
        %s267 = smul.addr %s266, 4
        %s268 = scalar_lea.vmem %s4, %s267
        %s269 = smul.u32 8, %s21
        %s271 = smul.u32 %s21, 4
        %s272 = smul.u32 %s271, 8
        %s273 = scalar_lea.vmem %s249, %s272
        %v274 = vld [vmem:[%s273] sm:$0x3f]
        %v275 = vld [vmem:[%s273 + $0x8] sm:$0x3f]
        %v276 = vld [vmem:[%s273 + $0x10] sm:$0x3f]
        %v277 = vld [vmem:[%s273 + $0x18] sm:$0x3f]
        %v278 = vld [vmem:[%s273 + $0x20] sm:$0x3f]
        %v279 = vld [vmem:[%s273 + $0x28] sm:$0x3f]
        %v280 = vpack.c.bf16 %v274, %v274
        %v281 = vpack.c.bf16 %v275, %v275
        %v282 = vpack.c.bf16 %v276, %v276
        %v283 = vpack.c.bf16 %v277, %v277
        %v284 = vpack.c.bf16 %v278, %v278
        %v285 = vpack.c.bf16 %v279, %v279
        %v287 = vshrl.u32 %v280, 16
        %v289 = vshll.u32 %v280, 16
        %v291 = vrot.slane %v289, 1
        %v292 = vor.u32 %v287, %v291
        %v294 = vshrl.u32 %v281, 16
        %v296 = vshll.u32 %v281, 16
        %v298 = vrot.slane %v296, 1
        %v299 = vor.u32 %v294, %v298
        %v301 = vshrl.u32 %v282, 16
        %v303 = vshll.u32 %v282, 16
        %v305 = vrot.slane %v303, 1
        %v306 = vor.u32 %v301, %v305
        %v308 = vshrl.u32 %v283, 16
        %v310 = vshll.u32 %v283, 16
        %v312 = vrot.slane %v310, 1
        %v313 = vor.u32 %v308, %v312
        %v315 = vshrl.u32 %v284, 16
        %v317 = vshll.u32 %v284, 16
        %v319 = vrot.slane %v317, 1
        %v320 = vor.u32 %v315, %v319
        %v322 = vshrl.u32 %v285, 16
        %v324 = vshll.u32 %v285, 16
        %v326 = vrot.slane %v324, 1
        %v327 = vor.u32 %v322, %v326
        %328 = vrot.lane.b32.xlu0 %v292, 64
        %v329 = vpop.permute.xlu0 %328
        %330 = vrot.lane.b32.xlu0 %v299, 64
        %v331 = vpop.permute.xlu0 %330
        %332 = vrot.lane.b32.xlu0 %v306, 64
        %v333 = vpop.permute.xlu0 %332
        %334 = vrot.lane.b32.xlu0 %v313, 64
        %v335 = vpop.permute.xlu0 %334
        %336 = vrot.lane.b32.xlu0 %v320, 64
        %v337 = vpop.permute.xlu0 %336
        %338 = vrot.lane.b32.xlu0 %v327, 64
        %v339 = vpop.permute.xlu0 %338
        %vm340 = vcmask 523264
        %v342 = vsel %vm340, %v280, %v329
        %v345 = vsel %vm340, %v281, %v331
        %v348 = vsel %vm340, %v282, %v333
        %v351 = vsel %vm340, %v283, %v335
        %v354 = vsel %vm340, %v284, %v337
        %v357 = vsel %vm340, %v285, %v339
        %v359 = vld [vmem:[%s1] sm:$0xf]
        %v360 = vld [vmem:[%s1 + $0x4] sm:$0xf]
        %v361 = vld [vmem:[%s1 + $0x8] sm:$0xf]
        %v362 = vld [vmem:[%s1 + $0xc] sm:$0xf]
        %v363 = vld [vmem:[%s1 + $0x10] sm:$0xf]
        %v364 = vld [vmem:[%s1 + $0x14] sm:$0xf]
        %v365 = vld [vmem:[%s1 + $0x18] sm:$0xf]
        %v366 = vld [vmem:[%s1 + $0x1c] sm:$0xf]
        %v367 = vld [vmem:[%s1 + $0x20] sm:$0xf]
        %v368 = vld [vmem:[%s1 + $0x24] sm:$0xf]
        %v369 = vld [vmem:[%s1 + $0x28] sm:$0xf]
        %v370 = vld [vmem:[%s1 + $0x2c] sm:$0xf]
        %v371 = vld [vmem:[%s1 + $0x30] sm:$0xf]
        %v372 = vld [vmem:[%s1 + $0x34] sm:$0xf]
        %v373 = vld [vmem:[%s1 + $0x38] sm:$0xf]
        %v374 = vld [vmem:[%s1 + $0x3c] sm:$0xf]
        %v375 = vld [vmem:[%s1 + $0x40] sm:$0xf]
        %v376 = vld [vmem:[%s1 + $0x44] sm:$0xf]
        %v377 = vld [vmem:[%s1 + $0x48] sm:$0xf]
        %v378 = vld [vmem:[%s1 + $0x4c] sm:$0xf]
        %v379 = vld [vmem:[%s1 + $0x50] sm:$0xf]
        %v380 = vld [vmem:[%s1 + $0x54] sm:$0xf]
        %v381 = vld [vmem:[%s1 + $0x58] sm:$0xf]
        %v382 = vld [vmem:[%s1 + $0x5c] sm:$0xf]
        %v383 = vld [vmem:[%s1 + $0x60] sm:$0xf]
        %v384 = vld [vmem:[%s1 + $0x64] sm:$0xf]
        %v385 = vld [vmem:[%s1 + $0x68] sm:$0xf]
        %v386 = vld [vmem:[%s1 + $0x6c] sm:$0xf]
        %v387 = vld [vmem:[%s1 + $0x70] sm:$0xf]
        %v388 = vld [vmem:[%s1 + $0x74] sm:$0xf]
        %v389 = vld [vmem:[%s1 + $0x78] sm:$0xf]
        %v390 = vld [vmem:[%s1 + $0x7c] sm:$0xf]
        %v391 = vld [vmem:[%s1 + $0x80] sm:$0xf]
        %v392 = vld [vmem:[%s1 + $0x84] sm:$0xf]
        %v393 = vld [vmem:[%s1 + $0x88] sm:$0xf]
        %v394 = vld [vmem:[%s1 + $0x8c] sm:$0xf]
        %v395 = vld [vmem:[%s1 + $0x90] sm:$0xf]
        %v396 = vld [vmem:[%s1 + $0x94] sm:$0xf]
        %v397 = vld [vmem:[%s1 + $0x98] sm:$0xf]
        %v398 = vld [vmem:[%s1 + $0x9c] sm:$0xf]
        %v399 = vld [vmem:[%s1 + $0xa0] sm:$0xf]
        %v400 = vld [vmem:[%s1 + $0xa4] sm:$0xf]
        %v401 = vld [vmem:[%s1 + $0xa8] sm:$0xf]
        %v402 = vld [vmem:[%s1 + $0xac] sm:$0xf]
        %v403 = vld [vmem:[%s1 + $0xb0] sm:$0xf]
        %v404 = vld [vmem:[%s1 + $0xb4] sm:$0xf]
        %v405 = vld [vmem:[%s1 + $0xb8] sm:$0xf]
        %v406 = vld [vmem:[%s1 + $0xbc] sm:$0xf]
        %s407 = scalar_lea.vmem %s1, 192
        %v408 = vld [vmem:[%s407] sm:$0xf]
        %v409 = vld [vmem:[%s407 + $0x4] sm:$0xf]
        %v410 = vld [vmem:[%s407 + $0x8] sm:$0xf]
        %v411 = vld [vmem:[%s407 + $0xc] sm:$0xf]
        %v412 = vld [vmem:[%s407 + $0x10] sm:$0xf]
        %v413 = vld [vmem:[%s407 + $0x14] sm:$0xf]
        %v414 = vld [vmem:[%s407 + $0x18] sm:$0xf]
        %v415 = vld [vmem:[%s407 + $0x1c] sm:$0xf]
        %v416 = vld [vmem:[%s407 + $0x20] sm:$0xf]
        %v417 = vld [vmem:[%s407 + $0x24] sm:$0xf]
        %v418 = vld [vmem:[%s407 + $0x28] sm:$0xf]
        %v419 = vld [vmem:[%s407 + $0x2c] sm:$0xf]
        %v420 = vld [vmem:[%s407 + $0x30] sm:$0xf]
        %v421 = vld [vmem:[%s407 + $0x34] sm:$0xf]
        %v422 = vld [vmem:[%s407 + $0x38] sm:$0xf]
        %v423 = vld [vmem:[%s407 + $0x3c] sm:$0xf]
        %v424 = vld [vmem:[%s407 + $0x40] sm:$0xf]
        %v425 = vld [vmem:[%s407 + $0x44] sm:$0xf]
        %v426 = vld [vmem:[%s407 + $0x48] sm:$0xf]
        %v427 = vld [vmem:[%s407 + $0x4c] sm:$0xf]
        %v428 = vld [vmem:[%s407 + $0x50] sm:$0xf]
        %v429 = vld [vmem:[%s407 + $0x54] sm:$0xf]
        %v430 = vld [vmem:[%s407 + $0x58] sm:$0xf]
        %v431 = vld [vmem:[%s407 + $0x5c] sm:$0xf]
        %v432 = vld [vmem:[%s407 + $0x60] sm:$0xf]
        %v433 = vld [vmem:[%s407 + $0x64] sm:$0xf]
        %v434 = vld [vmem:[%s407 + $0x68] sm:$0xf]
        %v435 = vld [vmem:[%s407 + $0x6c] sm:$0xf]
        %v436 = vld [vmem:[%s407 + $0x70] sm:$0xf]
        %v437 = vld [vmem:[%s407 + $0x74] sm:$0xf]
        %v438 = vld [vmem:[%s407 + $0x78] sm:$0xf]
        %v439 = vld [vmem:[%s407 + $0x7c] sm:$0xf]
        %v440 = vld [vmem:[%s407 + $0x80] sm:$0xf]
        %v441 = vld [vmem:[%s407 + $0x84] sm:$0xf]
        %v442 = vld [vmem:[%s407 + $0x88] sm:$0xf]
        %v443 = vld [vmem:[%s407 + $0x8c] sm:$0xf]
        %v444 = vld [vmem:[%s407 + $0x90] sm:$0xf]
        %v445 = vld [vmem:[%s407 + $0x94] sm:$0xf]
        %v446 = vld [vmem:[%s407 + $0x98] sm:$0xf]
        %v447 = vld [vmem:[%s407 + $0x9c] sm:$0xf]
        %v448 = vld [vmem:[%s407 + $0xa0] sm:$0xf]
        %v449 = vld [vmem:[%s407 + $0xa4] sm:$0xf]
        %v450 = vld [vmem:[%s407 + $0xa8] sm:$0xf]
        %v451 = vld [vmem:[%s407 + $0xac] sm:$0xf]
        %v452 = vld [vmem:[%s407 + $0xb0] sm:$0xf]
        %v453 = vld [vmem:[%s407 + $0xb4] sm:$0xf]
        %v454 = vld [vmem:[%s407 + $0xb8] sm:$0xf]
        %v455 = vld [vmem:[%s407 + $0xbc] sm:$0xf]
        %v504 = vunpack.c.l.b16 %v359
        %v505 = vunpack.c.l.b16 %v360
        %v506 = vunpack.c.l.b16 %v361
        %v507 = vunpack.c.l.b16 %v362
        %v508 = vunpack.c.l.b16 %v363
        %v509 = vunpack.c.l.b16 %v364
        %v510 = vunpack.c.l.b16 %v365
        %v511 = vunpack.c.l.b16 %v366
        %v512 = vunpack.c.l.b16 %v367
        %v513 = vunpack.c.l.b16 %v368
        %v514 = vunpack.c.l.b16 %v369
        %v515 = vunpack.c.l.b16 %v370
        %v516 = vunpack.c.l.b16 %v371
        %v517 = vunpack.c.l.b16 %v372
        %v518 = vunpack.c.l.b16 %v373
        %v519 = vunpack.c.l.b16 %v374
        %v520 = vunpack.c.l.b16 %v375
        %v521 = vunpack.c.l.b16 %v376
        %v522 = vunpack.c.l.b16 %v377
        %v523 = vunpack.c.l.b16 %v378
        %v524 = vunpack.c.l.b16 %v379
        %v525 = vunpack.c.l.b16 %v380
        %v526 = vunpack.c.l.b16 %v381
        %v527 = vunpack.c.l.b16 %v382
        %v528 = vunpack.c.l.b16 %v383
        %v529 = vunpack.c.l.b16 %v384
        %v530 = vunpack.c.l.b16 %v385
        %v531 = vunpack.c.l.b16 %v386
        %v532 = vunpack.c.l.b16 %v387
        %v533 = vunpack.c.l.b16 %v388
        %v534 = vunpack.c.l.b16 %v389
        %v535 = vunpack.c.l.b16 %v390
        %v536 = vunpack.c.l.b16 %v391
        %v537 = vunpack.c.l.b16 %v392
        %v538 = vunpack.c.l.b16 %v393
        %v539 = vunpack.c.l.b16 %v394
        %v540 = vunpack.c.l.b16 %v395
        %v541 = vunpack.c.l.b16 %v396
        %v542 = vunpack.c.l.b16 %v397
        %v543 = vunpack.c.l.b16 %v398
        %v544 = vunpack.c.l.b16 %v399
        %v545 = vunpack.c.l.b16 %v400
        %v546 = vunpack.c.l.b16 %v401
        %v547 = vunpack.c.l.b16 %v402
        %v548 = vunpack.c.l.b16 %v403
        %v549 = vunpack.c.l.b16 %v404
        %v550 = vunpack.c.l.b16 %v405
        %v551 = vunpack.c.l.b16 %v406
        %v552 = vpack.c.b16 %v505, %v504
        %v553 = vpack.c.b16 %v507, %v506
        %v554 = vpack.c.b16 %v509, %v508
        %v555 = vpack.c.b16 %v511, %v510
        %v556 = vpack.c.b16 %v513, %v512
        %v557 = vpack.c.b16 %v515, %v514
        %v558 = vpack.c.b16 %v517, %v516
        %v559 = vpack.c.b16 %v519, %v518
        %v560 = vpack.c.b16 %v521, %v520
        %v561 = vpack.c.b16 %v523, %v522
        %v562 = vpack.c.b16 %v525, %v524
        %v563 = vpack.c.b16 %v527, %v526
        %v564 = vpack.c.b16 %v529, %v528
        %v565 = vpack.c.b16 %v531, %v530
        %v566 = vpack.c.b16 %v533, %v532
        %v567 = vpack.c.b16 %v535, %v534
        %v568 = vpack.c.b16 %v537, %v536
        %v569 = vpack.c.b16 %v539, %v538
        %v570 = vpack.c.b16 %v541, %v540
        %v571 = vpack.c.b16 %v543, %v542
        %v572 = vpack.c.b16 %v545, %v544
        %v573 = vpack.c.b16 %v547, %v546
        %v574 = vpack.c.b16 %v549, %v548
        %v575 = vpack.c.b16 %v551, %v550
        %600 = vmatprep.subr.bf16.mxu0 0
        %601 = vmatpush1.bf16.msra.mxu0 %v552
        %602 = vmatprep.subr.bf16.mxu0 0
        %603 = vmatpush1.bf16.msra.mxu0 %v553
        %604 = vmatprep.subr.bf16.mxu0 0
        %605 = vmatpush1.bf16.msra.mxu0 %v554
        %606 = vmatprep.subr.bf16.mxu0 0
        %607 = vmatpush1.bf16.msra.mxu0 %v555
        %608 = vmatprep.subr.bf16.mxu0 0
        %609 = vmatpush1.bf16.msra.mxu0 %v556
        %610 = vmatprep.subr.bf16.mxu0 0
        %611 = vmatpush1.bf16.msra.mxu0 %v557
        %612 = vmatprep.subr.bf16.mxu0 0
        %613 = vmatpush1.bf16.msra.mxu0 %v558
        %614 = vmatprep.subr.bf16.mxu0 0
        %615 = vmatpush1.bf16.msra.mxu0 %v559
        %616 = vmatprep.subr.bf16.mxu0 0
        %617 = vmatpush1.bf16.msra.mxu0 %v560
        %618 = vmatprep.subr.bf16.mxu0 0
        %619 = vmatpush1.bf16.msra.mxu0 %v561
        %620 = vmatprep.subr.bf16.mxu0 0
        %621 = vmatpush1.bf16.msra.mxu0 %v562
        %622 = vmatprep.subr.bf16.mxu0 0
        %623 = vmatpush1.bf16.msra.mxu0 %v563
        %624 = vmatprep.subr.bf16.mxu0 0
        %625 = vmatpush1.bf16.msra.mxu0 %v564
        %626 = vmatprep.subr.bf16.mxu0 0
        %627 = vmatpush1.bf16.msra.mxu0 %v565
        %628 = vmatprep.subr.bf16.mxu0 0
        %629 = vmatpush1.bf16.msra.mxu0 %v566
        %630 = vmatprep.subr.bf16.mxu0 0
        %631 = vmatpush1.bf16.msra.mxu0 %v567
        %632 = vmatprep.mubr.bf16.mxu0 %v345
        %633 = vmatmul.mubr.bf16.gmra.mrb[0].mxu0 %v342
        %v634 = vpop.f32.mrb[0].mxu0
        %v635 = vadd.f32 0.0, %v634
        %v636 = vpop.f32.mrb[0].mxu0
        %v637 = vpop.f32.mrb[0].mxu0
        %v638 = vpop.f32.mrb[0].mxu0
        %639 = vdwg.mxu0
        %640 = vmatprep.subr.bf16.mxu0 0
        %641 = vmatpush1.bf16.msra.mxu0 %v568
        %642 = vmatprep.subr.bf16.mxu0 0
        %643 = vmatpush1.bf16.msra.mxu0 %v569
        %644 = vmatprep.subr.bf16.mxu0 0
        %645 = vmatpush1.bf16.msra.mxu0 %v570
        %646 = vmatprep.subr.bf16.mxu0 0
        %647 = vmatpush1.bf16.msra.mxu0 %v571
        %648 = vmatprep.subr.bf16.mxu0 0
        %649 = vmatpush1.bf16.msra.mxu0 %v572
        %650 = vmatprep.subr.bf16.mxu0 0
        %651 = vmatpush1.bf16.msra.mxu0 %v573
        %652 = vmatprep.subr.bf16.mxu0 0
        %653 = vmatpush1.bf16.msra.mxu0 %v574
        %654 = vmatprep.subr.bf16.mxu0 0
        %655 = vmatpush1.bf16.msra.mxu0 %v575
        %656 = vmatprep.subr.bf16.mxu0 0
        %657 = vmatpush1.bf16.msra.mxu0 0
        %658 = vmatprep.subr.bf16.mxu0 0
        %659 = vmatpush1.bf16.msra.mxu0 0
        %660 = vmatprep.subr.bf16.mxu0 0
        %661 = vmatpush1.bf16.msra.mxu0 0
        %662 = vmatprep.subr.bf16.mxu0 0
        %663 = vmatpush1.bf16.msra.mxu0 0
        %664 = vmatprep.subr.bf16.mxu0 0
        %665 = vmatpush1.bf16.msra.mxu0 0
        %666 = vmatprep.subr.bf16.mxu0 0
        %667 = vmatpush1.bf16.msra.mxu0 0
        %668 = vmatprep.subr.bf16.mxu0 0
        %669 = vmatpush1.bf16.msra.mxu0 0
        %670 = vmatprep.subr.bf16.mxu0 0
        %671 = vmatpush1.bf16.msra.mxu0 0
        %672 = vmatprep.mubr.bf16.mxu0 0
        %673 = vmatmul.mubr.bf16.gmra.mrb[0].mxu0 %v345
        %v674 = vpop.f32.mrb[0].mxu0
        %v675 = vadd.f32 %v635, %v674
        %v676 = vpop.f32.mrb[0].mxu0
        %v677 = vpop.f32.mrb[0].mxu0
        %v678 = vpop.f32.mrb[0].mxu0
        %679 = vdwg.mxu0
        %680 = vmatprep.subr.bf16.mxu0 0
        %681 = vmatpush1.bf16.msra.mxu0 %v552
        %682 = vmatprep.subr.bf16.mxu0 0
        %683 = vmatpush1.bf16.msra.mxu0 %v553
        %684 = vmatprep.subr.bf16.mxu0 0
        %685 = vmatpush1.bf16.msra.mxu0 %v554
        %686 = vmatprep.subr.bf16.mxu0 0
        %687 = vmatpush1.bf16.msra.mxu0 %v555
        %688 = vmatprep.subr.bf16.mxu0 0
        %689 = vmatpush1.bf16.msra.mxu0 %v556
        %690 = vmatprep.subr.bf16.mxu0 0
        %691 = vmatpush1.bf16.msra.mxu0 %v557
        %692 = vmatprep.subr.bf16.mxu0 0
        %693 = vmatpush1.bf16.msra.mxu0 %v558
        %694 = vmatprep.subr.bf16.mxu0 0
        %695 = vmatpush1.bf16.msra.mxu0 %v559
        %696 = vmatprep.subr.bf16.mxu0 0
        %697 = vmatpush1.bf16.msra.mxu0 %v560
        %698 = vmatprep.subr.bf16.mxu0 0
        %699 = vmatpush1.bf16.msra.mxu0 %v561
        %700 = vmatprep.subr.bf16.mxu0 0
        %701 = vmatpush1.bf16.msra.mxu0 %v562
        %702 = vmatprep.subr.bf16.mxu0 0
        %703 = vmatpush1.bf16.msra.mxu0 %v563
        %704 = vmatprep.subr.bf16.mxu0 0
        %705 = vmatpush1.bf16.msra.mxu0 %v564
        %706 = vmatprep.subr.bf16.mxu0 0
        %707 = vmatpush1.bf16.msra.mxu0 %v565
        %708 = vmatprep.subr.bf16.mxu0 0
        %709 = vmatpush1.bf16.msra.mxu0 %v566
        %710 = vmatprep.subr.bf16.mxu0 0
        %711 = vmatpush1.bf16.msra.mxu0 %v567
        %712 = vmatprep.mubr.bf16.mxu0 %v345
        %713 = vmatmul.mubr.bf16.gmra.mrb[0].mxu0 %v345
        %v714 = vpop.f32.mrb[0].mxu0
        %v715 = vadd.f32 0.0, %v714
        %v716 = vpop.f32.mrb[0].mxu0
        %v717 = vpop.f32.mrb[0].mxu0
        %v718 = vpop.f32.mrb[0].mxu0
        %719 = vdwg.mxu0
        %720 = vmatprep.subr.bf16.mxu0 0
        %721 = vmatpush1.bf16.msra.mxu0 %v568
        %722 = vmatprep.subr.bf16.mxu0 0
        %723 = vmatpush1.bf16.msra.mxu0 %v569
        %724 = vmatprep.subr.bf16.mxu0 0
        %725 = vmatpush1.bf16.msra.mxu0 %v570
        %726 = vmatprep.subr.bf16.mxu0 0
        %727 = vmatpush1.bf16.msra.mxu0 %v571
        %728 = vmatprep.subr.bf16.mxu0 0
        %729 = vmatpush1.bf16.msra.mxu0 %v572
        %730 = vmatprep.subr.bf16.mxu0 0
        %731 = vmatpush1.bf16.msra.mxu0 %v573
        %732 = vmatprep.subr.bf16.mxu0 0
        %733 = vmatpush1.bf16.msra.mxu0 %v574
        %734 = vmatprep.subr.bf16.mxu0 0
        %735 = vmatpush1.bf16.msra.mxu0 %v575
        %736 = vmatprep.subr.bf16.mxu0 0
        %737 = vmatpush1.bf16.msra.mxu0 0
        %738 = vmatprep.subr.bf16.mxu0 0
        %739 = vmatpush1.bf16.msra.mxu0 0
        %740 = vmatprep.subr.bf16.mxu0 0
        %741 = vmatpush1.bf16.msra.mxu0 0
        %742 = vmatprep.subr.bf16.mxu0 0
        %743 = vmatpush1.bf16.msra.mxu0 0
        %744 = vmatprep.subr.bf16.mxu0 0
        %745 = vmatpush1.bf16.msra.mxu0 0
        %746 = vmatprep.subr.bf16.mxu0 0
        %747 = vmatpush1.bf16.msra.mxu0 0
        %748 = vmatprep.subr.bf16.mxu0 0
        %749 = vmatpush1.bf16.msra.mxu0 0
        %750 = vmatprep.subr.bf16.mxu0 0
        %751 = vmatpush1.bf16.msra.mxu0 0
        %752 = vmatprep.mubr.bf16.mxu0 0
        %753 = vmatmul.mubr.bf16.gmra.mrb[0].mxu0 %v348
        %v754 = vpop.f32.mrb[0].mxu0
        %v755 = vadd.f32 %v715, %v754
        %v756 = vpop.f32.mrb[0].mxu0
        %v757 = vpop.f32.mrb[0].mxu0
        %v758 = vpop.f32.mrb[0].mxu0
        %759 = vdwg.mxu0
        %760 = vmatprep.subr.bf16.mxu0 0
        %761 = vmatpush1.bf16.msra.mxu0 %v552
        %762 = vmatprep.subr.bf16.mxu0 0
        %763 = vmatpush1.bf16.msra.mxu0 %v553
        %764 = vmatprep.subr.bf16.mxu0 0
        %765 = vmatpush1.bf16.msra.mxu0 %v554
        %766 = vmatprep.subr.bf16.mxu0 0
        %767 = vmatpush1.bf16.msra.mxu0 %v555
        %768 = vmatprep.subr.bf16.mxu0 0
        %769 = vmatpush1.bf16.msra.mxu0 %v556
        %770 = vmatprep.subr.bf16.mxu0 0
        %771 = vmatpush1.bf16.msra.mxu0 %v557
        %772 = vmatprep.subr.bf16.mxu0 0
        %773 = vmatpush1.bf16.msra.mxu0 %v558
        %774 = vmatprep.subr.bf16.mxu0 0
        %775 = vmatpush1.bf16.msra.mxu0 %v559
        %776 = vmatprep.subr.bf16.mxu0 0
        %777 = vmatpush1.bf16.msra.mxu0 %v560
        %778 = vmatprep.subr.bf16.mxu0 0
        %779 = vmatpush1.bf16.msra.mxu0 %v561
        %780 = vmatprep.subr.bf16.mxu0 0
        %781 = vmatpush1.bf16.msra.mxu0 %v562
        %782 = vmatprep.subr.bf16.mxu0 0
        %783 = vmatpush1.bf16.msra.mxu0 %v563
        %784 = vmatprep.subr.bf16.mxu0 0
        %785 = vmatpush1.bf16.msra.mxu0 %v564
        %786 = vmatprep.subr.bf16.mxu0 0
        %787 = vmatpush1.bf16.msra.mxu0 %v565
        %788 = vmatprep.subr.bf16.mxu0 0
        %789 = vmatpush1.bf16.msra.mxu0 %v566
        %790 = vmatprep.subr.bf16.mxu0 0
        %791 = vmatpush1.bf16.msra.mxu0 %v567
        %792 = vmatprep.mubr.bf16.mxu0 %v348
        %793 = vmatmul.mubr.bf16.gmra.mrb[0].mxu0 %v345
        %v794 = vpop.f32.mrb[0].mxu0
        %v795 = vadd.f32 0.0, %v794
        %v796 = vpop.f32.mrb[0].mxu0
        %v797 = vpop.f32.mrb[0].mxu0
        %v798 = vpop.f32.mrb[0].mxu0
        %799 = vdwg.mxu0
        %800 = vmatprep.subr.bf16.mxu0 0
        %801 = vmatpush1.bf16.msra.mxu0 %v568
        %802 = vmatprep.subr.bf16.mxu0 0
        %803 = vmatpush1.bf16.msra.mxu0 %v569
        %804 = vmatprep.subr.bf16.mxu0 0
        %805 = vmatpush1.bf16.msra.mxu0 %v570
        %806 = vmatprep.subr.bf16.mxu0 0
        %807 = vmatpush1.bf16.msra.mxu0 %v571
        %808 = vmatprep.subr.bf16.mxu0 0
        %809 = vmatpush1.bf16.msra.mxu0 %v572
        %810 = vmatprep.subr.bf16.mxu0 0
        %811 = vmatpush1.bf16.msra.mxu0 %v573
        %812 = vmatprep.subr.bf16.mxu0 0
        %813 = vmatpush1.bf16.msra.mxu0 %v574
        %814 = vmatprep.subr.bf16.mxu0 0
        %815 = vmatpush1.bf16.msra.mxu0 %v575
        %816 = vmatprep.subr.bf16.mxu0 0
        %817 = vmatpush1.bf16.msra.mxu0 0
        %818 = vmatprep.subr.bf16.mxu0 0
        %819 = vmatpush1.bf16.msra.mxu0 0
        %820 = vmatprep.subr.bf16.mxu0 0
        %821 = vmatpush1.bf16.msra.mxu0 0
        %822 = vmatprep.subr.bf16.mxu0 0
        %823 = vmatpush1.bf16.msra.mxu0 0
        %824 = vmatprep.subr.bf16.mxu0 0
        %825 = vmatpush1.bf16.msra.mxu0 0
        %826 = vmatprep.subr.bf16.mxu0 0
        %827 = vmatpush1.bf16.msra.mxu0 0
        %828 = vmatprep.subr.bf16.mxu0 0
        %829 = vmatpush1.bf16.msra.mxu0 0
        %830 = vmatprep.subr.bf16.mxu0 0
        %831 = vmatpush1.bf16.msra.mxu0 0
        %832 = vmatprep.mubr.bf16.mxu0 0
        %833 = vmatmul.mubr.bf16.gmra.mrb[0].mxu0 %v348
        %v834 = vpop.f32.mrb[0].mxu0
        %v835 = vadd.f32 %v795, %v834
        %v836 = vpop.f32.mrb[0].mxu0
        %v837 = vpop.f32.mrb[0].mxu0
        %v838 = vpop.f32.mrb[0].mxu0
        %839 = vdwg.mxu0
        %840 = vmatprep.subr.bf16.mxu0 0
        %841 = vmatpush1.bf16.msra.mxu0 %v552
        %842 = vmatprep.subr.bf16.mxu0 0
        %843 = vmatpush1.bf16.msra.mxu0 %v553
        %844 = vmatprep.subr.bf16.mxu0 0
        %845 = vmatpush1.bf16.msra.mxu0 %v554
        %846 = vmatprep.subr.bf16.mxu0 0
        %847 = vmatpush1.bf16.msra.mxu0 %v555
        %848 = vmatprep.subr.bf16.mxu0 0
        %849 = vmatpush1.bf16.msra.mxu0 %v556
        %850 = vmatprep.subr.bf16.mxu0 0
        %851 = vmatpush1.bf16.msra.mxu0 %v557
        %852 = vmatprep.subr.bf16.mxu0 0
        %853 = vmatpush1.bf16.msra.mxu0 %v558
        %854 = vmatprep.subr.bf16.mxu0 0
        %855 = vmatpush1.bf16.msra.mxu0 %v559
        %856 = vmatprep.subr.bf16.mxu0 0
        %857 = vmatpush1.bf16.msra.mxu0 %v560
        %858 = vmatprep.subr.bf16.mxu0 0
        %859 = vmatpush1.bf16.msra.mxu0 %v561
        %860 = vmatprep.subr.bf16.mxu0 0
        %861 = vmatpush1.bf16.msra.mxu0 %v562
        %862 = vmatprep.subr.bf16.mxu0 0
        %863 = vmatpush1.bf16.msra.mxu0 %v563
        %864 = vmatprep.subr.bf16.mxu0 0
        %865 = vmatpush1.bf16.msra.mxu0 %v564
        %866 = vmatprep.subr.bf16.mxu0 0
        %867 = vmatpush1.bf16.msra.mxu0 %v565
        %868 = vmatprep.subr.bf16.mxu0 0
        %869 = vmatpush1.bf16.msra.mxu0 %v566
        %870 = vmatprep.subr.bf16.mxu0 0
        %871 = vmatpush1.bf16.msra.mxu0 %v567
        %872 = vmatprep.mubr.bf16.mxu0 %v348
        %873 = vmatmul.mubr.bf16.gmra.mrb[0].mxu0 %v348
        %v874 = vpop.f32.mrb[0].mxu0
        %v875 = vadd.f32 0.0, %v874
        %v876 = vpop.f32.mrb[0].mxu0
        %v877 = vpop.f32.mrb[0].mxu0
        %v878 = vpop.f32.mrb[0].mxu0
        %879 = vdwg.mxu0
        %880 = vmatprep.subr.bf16.mxu0 0
        %881 = vmatpush1.bf16.msra.mxu0 %v568
        %882 = vmatprep.subr.bf16.mxu0 0
        %883 = vmatpush1.bf16.msra.mxu0 %v569
        %884 = vmatprep.subr.bf16.mxu0 0
        %885 = vmatpush1.bf16.msra.mxu0 %v570
        %886 = vmatprep.subr.bf16.mxu0 0
        %887 = vmatpush1.bf16.msra.mxu0 %v571
        %888 = vmatprep.subr.bf16.mxu0 0
        %889 = vmatpush1.bf16.msra.mxu0 %v572
        %890 = vmatprep.subr.bf16.mxu0 0
        %891 = vmatpush1.bf16.msra.mxu0 %v573
        %892 = vmatprep.subr.bf16.mxu0 0
        %893 = vmatpush1.bf16.msra.mxu0 %v574
        %894 = vmatprep.subr.bf16.mxu0 0
        %895 = vmatpush1.bf16.msra.mxu0 %v575
        %896 = vmatprep.subr.bf16.mxu0 0
        %897 = vmatpush1.bf16.msra.mxu0 0
        %898 = vmatprep.subr.bf16.mxu0 0
        %899 = vmatpush1.bf16.msra.mxu0 0
        %900 = vmatprep.subr.bf16.mxu0 0
        %901 = vmatpush1.bf16.msra.mxu0 0
        %902 = vmatprep.subr.bf16.mxu0 0
        %903 = vmatpush1.bf16.msra.mxu0 0
        %904 = vmatprep.subr.bf16.mxu0 0
        %905 = vmatpush1.bf16.msra.mxu0 0
        %906 = vmatprep.subr.bf16.mxu0 0
        %907 = vmatpush1.bf16.msra.mxu0 0
        %908 = vmatprep.subr.bf16.mxu0 0
        %909 = vmatpush1.bf16.msra.mxu0 0
        %910 = vmatprep.subr.bf16.mxu0 0
        %911 = vmatpush1.bf16.msra.mxu0 0
        %912 = vmatprep.mubr.bf16.mxu0 0
        %913 = vmatmul.mubr.bf16.gmra.mrb[0].mxu0 %v351
        %v914 = vpop.f32.mrb[0].mxu0
        %v915 = vadd.f32 %v875, %v914
        %v916 = vpop.f32.mrb[0].mxu0
        %v917 = vpop.f32.mrb[0].mxu0
        %v918 = vpop.f32.mrb[0].mxu0
        %919 = vdwg.mxu0
        %920 = vmatprep.subr.bf16.mxu0 0
        %921 = vmatpush1.bf16.msra.mxu0 %v552
        %922 = vmatprep.subr.bf16.mxu0 0
        %923 = vmatpush1.bf16.msra.mxu0 %v553
        %924 = vmatprep.subr.bf16.mxu0 0
        %925 = vmatpush1.bf16.msra.mxu0 %v554
        %926 = vmatprep.subr.bf16.mxu0 0
        %927 = vmatpush1.bf16.msra.mxu0 %v555
        %928 = vmatprep.subr.bf16.mxu0 0
        %929 = vmatpush1.bf16.msra.mxu0 %v556
        %930 = vmatprep.subr.bf16.mxu0 0
        %931 = vmatpush1.bf16.msra.mxu0 %v557
        %932 = vmatprep.subr.bf16.mxu0 0
        %933 = vmatpush1.bf16.msra.mxu0 %v558
        %934 = vmatprep.subr.bf16.mxu0 0
        %935 = vmatpush1.bf16.msra.mxu0 %v559
        %936 = vmatprep.subr.bf16.mxu0 0
        %937 = vmatpush1.bf16.msra.mxu0 %v560
        %938 = vmatprep.subr.bf16.mxu0 0
        %939 = vmatpush1.bf16.msra.mxu0 %v561
        %940 = vmatprep.subr.bf16.mxu0 0
        %941 = vmatpush1.bf16.msra.mxu0 %v562
        %942 = vmatprep.subr.bf16.mxu0 0
        %943 = vmatpush1.bf16.msra.mxu0 %v563
        %944 = vmatprep.subr.bf16.mxu0 0
        %945 = vmatpush1.bf16.msra.mxu0 %v564
        %946 = vmatprep.subr.bf16.mxu0 0
        %947 = vmatpush1.bf16.msra.mxu0 %v565
        %948 = vmatprep.subr.bf16.mxu0 0
        %949 = vmatpush1.bf16.msra.mxu0 %v566
        %950 = vmatprep.subr.bf16.mxu0 0
        %951 = vmatpush1.bf16.msra.mxu0 %v567
        %952 = vmatprep.mubr.bf16.mxu0 %v351
        %953 = vmatmul.mubr.bf16.gmra.mrb[0].mxu0 %v348
        %v954 = vpop.f32.mrb[0].mxu0
        %v955 = vadd.f32 0.0, %v954
        %v956 = vpop.f32.mrb[0].mxu0
        %v957 = vpop.f32.mrb[0].mxu0
        %v958 = vpop.f32.mrb[0].mxu0
        %959 = vdwg.mxu0
        %960 = vmatprep.subr.bf16.mxu0 0
        %961 = vmatpush1.bf16.msra.mxu0 %v568
        %962 = vmatprep.subr.bf16.mxu0 0
        %963 = vmatpush1.bf16.msra.mxu0 %v569
        %964 = vmatprep.subr.bf16.mxu0 0
        %965 = vmatpush1.bf16.msra.mxu0 %v570
        %966 = vmatprep.subr.bf16.mxu0 0
        %967 = vmatpush1.bf16.msra.mxu0 %v571
        %968 = vmatprep.subr.bf16.mxu0 0
        %969 = vmatpush1.bf16.msra.mxu0 %v572
        %970 = vmatprep.subr.bf16.mxu0 0
        %971 = vmatpush1.bf16.msra.mxu0 %v573
        %972 = vmatprep.subr.bf16.mxu0 0
        %973 = vmatpush1.bf16.msra.mxu0 %v574
        %974 = vmatprep.subr.bf16.mxu0 0
        %975 = vmatpush1.bf16.msra.mxu0 %v575
        %976 = vmatprep.subr.bf16.mxu0 0
        %977 = vmatpush1.bf16.msra.mxu0 0
        %978 = vmatprep.subr.bf16.mxu0 0
        %979 = vmatpush1.bf16.msra.mxu0 0
        %980 = vmatprep.subr.bf16.mxu0 0
        %981 = vmatpush1.bf16.msra.mxu0 0
        %982 = vmatprep.subr.bf16.mxu0 0
        %983 = vmatpush1.bf16.msra.mxu0 0
        %984 = vmatprep.subr.bf16.mxu0 0
        %985 = vmatpush1.bf16.msra.mxu0 0
        %986 = vmatprep.subr.bf16.mxu0 0
        %987 = vmatpush1.bf16.msra.mxu0 0
        %988 = vmatprep.subr.bf16.mxu0 0
        %989 = vmatpush1.bf16.msra.mxu0 0
        %990 = vmatprep.subr.bf16.mxu0 0
        %991 = vmatpush1.bf16.msra.mxu0 0
        %992 = vmatprep.mubr.bf16.mxu0 0
        %993 = vmatmul.mubr.bf16.gmra.mrb[0].mxu0 %v351
        %v994 = vpop.f32.mrb[0].mxu0
        %v995 = vadd.f32 %v955, %v994
        %v996 = vpop.f32.mrb[0].mxu0
        %v997 = vpop.f32.mrb[0].mxu0
        %v998 = vpop.f32.mrb[0].mxu0
        %999 = vdwg.mxu0
        %1000 = vmatprep.subr.bf16.mxu0 0
        %1001 = vmatpush1.bf16.msra.mxu0 %v552
        %1002 = vmatprep.subr.bf16.mxu0 0
        %1003 = vmatpush1.bf16.msra.mxu0 %v553
        %1004 = vmatprep.subr.bf16.mxu0 0
        %1005 = vmatpush1.bf16.msra.mxu0 %v554
        %1006 = vmatprep.subr.bf16.mxu0 0
        %1007 = vmatpush1.bf16.msra.mxu0 %v555
        %1008 = vmatprep.subr.bf16.mxu0 0
        %1009 = vmatpush1.bf16.msra.mxu0 %v556
        %1010 = vmatprep.subr.bf16.mxu0 0
        %1011 = vmatpush1.bf16.msra.mxu0 %v557
        %1012 = vmatprep.subr.bf16.mxu0 0
        %1013 = vmatpush1.bf16.msra.mxu0 %v558
        %1014 = vmatprep.subr.bf16.mxu0 0
        %1015 = vmatpush1.bf16.msra.mxu0 %v559
        %1016 = vmatprep.subr.bf16.mxu0 0
        %1017 = vmatpush1.bf16.msra.mxu0 %v560
        %1018 = vmatprep.subr.bf16.mxu0 0
        %1019 = vmatpush1.bf16.msra.mxu0 %v561
        %1020 = vmatprep.subr.bf16.mxu0 0
        %1021 = vmatpush1.bf16.msra.mxu0 %v562
        %1022 = vmatprep.subr.bf16.mxu0 0
        %1023 = vmatpush1.bf16.msra.mxu0 %v563
        %1024 = vmatprep.subr.bf16.mxu0 0
        %1025 = vmatpush1.bf16.msra.mxu0 %v564
        %1026 = vmatprep.subr.bf16.mxu0 0
        %1027 = vmatpush1.bf16.msra.mxu0 %v565
        %1028 = vmatprep.subr.bf16.mxu0 0
        %1029 = vmatpush1.bf16.msra.mxu0 %v566
        %1030 = vmatprep.subr.bf16.mxu0 0
        %1031 = vmatpush1.bf16.msra.mxu0 %v567
        %1032 = vmatprep.mubr.bf16.mxu0 %v351
        %1033 = vmatmul.mubr.bf16.gmra.mrb[0].mxu0 %v351
        %v1034 = vpop.f32.mrb[0].mxu0
        %v1035 = vadd.f32 0.0, %v1034
        %v1036 = vpop.f32.mrb[0].mxu0
        %v1037 = vpop.f32.mrb[0].mxu0
        %v1038 = vpop.f32.mrb[0].mxu0
        %1039 = vdwg.mxu0
        %1040 = vmatprep.subr.bf16.mxu0 0
        %1041 = vmatpush1.bf16.msra.mxu0 %v568
        %1042 = vmatprep.subr.bf16.mxu0 0
        %1043 = vmatpush1.bf16.msra.mxu0 %v569
        %1044 = vmatprep.subr.bf16.mxu0 0
        %1045 = vmatpush1.bf16.msra.mxu0 %v570
        %1046 = vmatprep.subr.bf16.mxu0 0
        %1047 = vmatpush1.bf16.msra.mxu0 %v571
        %1048 = vmatprep.subr.bf16.mxu0 0
        %1049 = vmatpush1.bf16.msra.mxu0 %v572
        %1050 = vmatprep.subr.bf16.mxu0 0
        %1051 = vmatpush1.bf16.msra.mxu0 %v573
        %1052 = vmatprep.subr.bf16.mxu0 0
        %1053 = vmatpush1.bf16.msra.mxu0 %v574
        %1054 = vmatprep.subr.bf16.mxu0 0
        %1055 = vmatpush1.bf16.msra.mxu0 %v575
        %1056 = vmatprep.subr.bf16.mxu0 0
        %1057 = vmatpush1.bf16.msra.mxu0 0
        %1058 = vmatprep.subr.bf16.mxu0 0
        %1059 = vmatpush1.bf16.msra.mxu0 0
        %1060 = vmatprep.subr.bf16.mxu0 0
        %1061 = vmatpush1.bf16.msra.mxu0 0
        %1062 = vmatprep.subr.bf16.mxu0 0
        %1063 = vmatpush1.bf16.msra.mxu0 0
        %1064 = vmatprep.subr.bf16.mxu0 0
        %1065 = vmatpush1.bf16.msra.mxu0 0
        %1066 = vmatprep.subr.bf16.mxu0 0
        %1067 = vmatpush1.bf16.msra.mxu0 0
        %1068 = vmatprep.subr.bf16.mxu0 0
        %1069 = vmatpush1.bf16.msra.mxu0 0
        %1070 = vmatprep.subr.bf16.mxu0 0
        %1071 = vmatpush1.bf16.msra.mxu0 0
        %1072 = vmatprep.mubr.bf16.mxu0 0
        %1073 = vmatmul.mubr.bf16.gmra.mrb[0].mxu0 %v354
        %v1074 = vpop.f32.mrb[0].mxu0
        %v1075 = vadd.f32 %v1035, %v1074
        %v1076 = vpop.f32.mrb[0].mxu0
        %v1077 = vpop.f32.mrb[0].mxu0
        %v1078 = vpop.f32.mrb[0].mxu0
        %1079 = vdwg.mxu0
        %1080 = vmatprep.subr.bf16.mxu0 0
        %1081 = vmatpush1.bf16.msra.mxu0 %v552
        %1082 = vmatprep.subr.bf16.mxu0 0
        %1083 = vmatpush1.bf16.msra.mxu0 %v553
        %1084 = vmatprep.subr.bf16.mxu0 0
        %1085 = vmatpush1.bf16.msra.mxu0 %v554
        %1086 = vmatprep.subr.bf16.mxu0 0
        %1087 = vmatpush1.bf16.msra.mxu0 %v555
        %1088 = vmatprep.subr.bf16.mxu0 0
        %1089 = vmatpush1.bf16.msra.mxu0 %v556
        %1090 = vmatprep.subr.bf16.mxu0 0
        %1091 = vmatpush1.bf16.msra.mxu0 %v557
        %1092 = vmatprep.subr.bf16.mxu0 0
        %1093 = vmatpush1.bf16.msra.mxu0 %v558
        %1094 = vmatprep.subr.bf16.mxu0 0
        %1095 = vmatpush1.bf16.msra.mxu0 %v559
        %1096 = vmatprep.subr.bf16.mxu0 0
        %1097 = vmatpush1.bf16.msra.mxu0 %v560
        %1098 = vmatprep.subr.bf16.mxu0 0
        %1099 = vmatpush1.bf16.msra.mxu0 %v561
        %1100 = vmatprep.subr.bf16.mxu0 0
        %1101 = vmatpush1.bf16.msra.mxu0 %v562
        %1102 = vmatprep.subr.bf16.mxu0 0
        %1103 = vmatpush1.bf16.msra.mxu0 %v563
        %1104 = vmatprep.subr.bf16.mxu0 0
        %1105 = vmatpush1.bf16.msra.mxu0 %v564
        %1106 = vmatprep.subr.bf16.mxu0 0
        %1107 = vmatpush1.bf16.msra.mxu0 %v565
        %1108 = vmatprep.subr.bf16.mxu0 0
        %1109 = vmatpush1.bf16.msra.mxu0 %v566
        %1110 = vmatprep.subr.bf16.mxu0 0
        %1111 = vmatpush1.bf16.msra.mxu0 %v567
        %1112 = vmatprep.mubr.bf16.mxu0 %v354
        %1113 = vmatmul.mubr.bf16.gmra.mrb[0].mxu0 %v351
        %v1114 = vpop.f32.mrb[0].mxu0
        %v1115 = vadd.f32 0.0, %v1114
        %v1116 = vpop.f32.mrb[0].mxu0
        %v1117 = vpop.f32.mrb[0].mxu0
        %v1118 = vpop.f32.mrb[0].mxu0
        %1119 = vdwg.mxu0
        %1120 = vmatprep.subr.bf16.mxu0 0
        %1121 = vmatpush1.bf16.msra.mxu0 %v568
        %1122 = vmatprep.subr.bf16.mxu0 0
        %1123 = vmatpush1.bf16.msra.mxu0 %v569
        %1124 = vmatprep.subr.bf16.mxu0 0
        %1125 = vmatpush1.bf16.msra.mxu0 %v570
        %1126 = vmatprep.subr.bf16.mxu0 0
        %1127 = vmatpush1.bf16.msra.mxu0 %v571
        %1128 = vmatprep.subr.bf16.mxu0 0
        %1129 = vmatpush1.bf16.msra.mxu0 %v572
        %1130 = vmatprep.subr.bf16.mxu0 0
        %1131 = vmatpush1.bf16.msra.mxu0 %v573
        %1132 = vmatprep.subr.bf16.mxu0 0
        %1133 = vmatpush1.bf16.msra.mxu0 %v574
        %1134 = vmatprep.subr.bf16.mxu0 0
        %1135 = vmatpush1.bf16.msra.mxu0 %v575
        %1136 = vmatprep.subr.bf16.mxu0 0
        %1137 = vmatpush1.bf16.msra.mxu0 0
        %1138 = vmatprep.subr.bf16.mxu0 0
        %1139 = vmatpush1.bf16.msra.mxu0 0
        %1140 = vmatprep.subr.bf16.mxu0 0
        %1141 = vmatpush1.bf16.msra.mxu0 0
        %1142 = vmatprep.subr.bf16.mxu0 0
        %1143 = vmatpush1.bf16.msra.mxu0 0
        %1144 = vmatprep.subr.bf16.mxu0 0
        %1145 = vmatpush1.bf16.msra.mxu0 0
        %1146 = vmatprep.subr.bf16.mxu0 0
        %1147 = vmatpush1.bf16.msra.mxu0 0
        %1148 = vmatprep.subr.bf16.mxu0 0
        %1149 = vmatpush1.bf16.msra.mxu0 0
        %1150 = vmatprep.subr.bf16.mxu0 0
        %1151 = vmatpush1.bf16.msra.mxu0 0
        %1152 = vmatprep.mubr.bf16.mxu0 0
        %1153 = vmatmul.mubr.bf16.gmra.mrb[0].mxu0 %v354
        %v1154 = vpop.f32.mrb[0].mxu0
        %v1155 = vadd.f32 %v1115, %v1154
        %v1156 = vpop.f32.mrb[0].mxu0
        %v1157 = vpop.f32.mrb[0].mxu0
        %v1158 = vpop.f32.mrb[0].mxu0
        %1159 = vdwg.mxu0
        %1160 = vmatprep.subr.bf16.mxu0 0
        %1161 = vmatpush1.bf16.msra.mxu0 %v552
        %1162 = vmatprep.subr.bf16.mxu0 0
        %1163 = vmatpush1.bf16.msra.mxu0 %v553
        %1164 = vmatprep.subr.bf16.mxu0 0
        %1165 = vmatpush1.bf16.msra.mxu0 %v554
        %1166 = vmatprep.subr.bf16.mxu0 0
        %1167 = vmatpush1.bf16.msra.mxu0 %v555
        %1168 = vmatprep.subr.bf16.mxu0 0
        %1169 = vmatpush1.bf16.msra.mxu0 %v556
        %1170 = vmatprep.subr.bf16.mxu0 0
        %1171 = vmatpush1.bf16.msra.mxu0 %v557
        %1172 = vmatprep.subr.bf16.mxu0 0
        %1173 = vmatpush1.bf16.msra.mxu0 %v558
        %1174 = vmatprep.subr.bf16.mxu0 0
        %1175 = vmatpush1.bf16.msra.mxu0 %v559
        %1176 = vmatprep.subr.bf16.mxu0 0
        %1177 = vmatpush1.bf16.msra.mxu0 %v560
        %1178 = vmatprep.subr.bf16.mxu0 0
        %1179 = vmatpush1.bf16.msra.mxu0 %v561
        %1180 = vmatprep.subr.bf16.mxu0 0
        %1181 = vmatpush1.bf16.msra.mxu0 %v562
        %1182 = vmatprep.subr.bf16.mxu0 0
        %1183 = vmatpush1.bf16.msra.mxu0 %v563
        %1184 = vmatprep.subr.bf16.mxu0 0
        %1185 = vmatpush1.bf16.msra.mxu0 %v564
        %1186 = vmatprep.subr.bf16.mxu0 0
        %1187 = vmatpush1.bf16.msra.mxu0 %v565
        %1188 = vmatprep.subr.bf16.mxu0 0
        %1189 = vmatpush1.bf16.msra.mxu0 %v566
        %1190 = vmatprep.subr.bf16.mxu0 0
        %1191 = vmatpush1.bf16.msra.mxu0 %v567
        %1192 = vmatprep.mubr.bf16.mxu0 %v354
        %1193 = vmatmul.mubr.bf16.gmra.mrb[0].mxu0 %v354
        %v1194 = vpop.f32.mrb[0].mxu0
        %v1195 = vadd.f32 0.0, %v1194
        %v1196 = vpop.f32.mrb[0].mxu0
        %v1197 = vpop.f32.mrb[0].mxu0
        %v1198 = vpop.f32.mrb[0].mxu0
        %1199 = vdwg.mxu0
        %1200 = vmatprep.subr.bf16.mxu0 0
        %1201 = vmatpush1.bf16.msra.mxu0 %v568
        %1202 = vmatprep.subr.bf16.mxu0 0
        %1203 = vmatpush1.bf16.msra.mxu0 %v569
        %1204 = vmatprep.subr.bf16.mxu0 0
        %1205 = vmatpush1.bf16.msra.mxu0 %v570
        %1206 = vmatprep.subr.bf16.mxu0 0
        %1207 = vmatpush1.bf16.msra.mxu0 %v571
        %1208 = vmatprep.subr.bf16.mxu0 0
        %1209 = vmatpush1.bf16.msra.mxu0 %v572
        %1210 = vmatprep.subr.bf16.mxu0 0
        %1211 = vmatpush1.bf16.msra.mxu0 %v573
        %1212 = vmatprep.subr.bf16.mxu0 0
        %1213 = vmatpush1.bf16.msra.mxu0 %v574
        %1214 = vmatprep.subr.bf16.mxu0 0
        %1215 = vmatpush1.bf16.msra.mxu0 %v575
        %1216 = vmatprep.subr.bf16.mxu0 0
        %1217 = vmatpush1.bf16.msra.mxu0 0
        %1218 = vmatprep.subr.bf16.mxu0 0
        %1219 = vmatpush1.bf16.msra.mxu0 0
        %1220 = vmatprep.subr.bf16.mxu0 0
        %1221 = vmatpush1.bf16.msra.mxu0 0
        %1222 = vmatprep.subr.bf16.mxu0 0
        %1223 = vmatpush1.bf16.msra.mxu0 0
        %1224 = vmatprep.subr.bf16.mxu0 0
        %1225 = vmatpush1.bf16.msra.mxu0 0
        %1226 = vmatprep.subr.bf16.mxu0 0
        %1227 = vmatpush1.bf16.msra.mxu0 0
        %1228 = vmatprep.subr.bf16.mxu0 0
        %1229 = vmatpush1.bf16.msra.mxu0 0
        %1230 = vmatprep.subr.bf16.mxu0 0
        %1231 = vmatpush1.bf16.msra.mxu0 0
        %1232 = vmatprep.mubr.bf16.mxu0 0
        %1233 = vmatmul.mubr.bf16.gmra.mrb[0].mxu0 %v357
        %v1234 = vpop.f32.mrb[0].mxu0
        %v1235 = vadd.f32 %v1195, %v1234
        %v1236 = vpop.f32.mrb[0].mxu0
        %v1237 = vpop.f32.mrb[0].mxu0
        %v1238 = vpop.f32.mrb[0].mxu0
        %1239 = vdwg.mxu0
        %v1240 = vshrl.u32 %v342, 16
        %v1242 = vshll.u32 %v342, 16
        %v1244 = vrot.slane %v1242, 1
        %v1245 = vor.u32 %v1240, %v1244
        %v1246 = vshrl.u32 %v345, 16
        %v1248 = vshll.u32 %v345, 16
        %v1250 = vrot.slane %v1248, 1
        %v1251 = vor.u32 %v1246, %v1250
        %v1302 = vunpack.c.l.b16 %v408
        %v1303 = vunpack.c.l.b16 %v409
        %v1304 = vunpack.c.l.b16 %v410
        %v1305 = vunpack.c.l.b16 %v411
        %v1306 = vunpack.c.l.b16 %v412
        %v1307 = vunpack.c.l.b16 %v413
        %v1308 = vunpack.c.l.b16 %v414
        %v1309 = vunpack.c.l.b16 %v415
        %v1310 = vunpack.c.l.b16 %v416
        %v1311 = vunpack.c.l.b16 %v417
        %v1312 = vunpack.c.l.b16 %v418
        %v1313 = vunpack.c.l.b16 %v419
        %v1314 = vunpack.c.l.b16 %v420
        %v1315 = vunpack.c.l.b16 %v421
        %v1316 = vunpack.c.l.b16 %v422
        %v1317 = vunpack.c.l.b16 %v423
        %v1318 = vunpack.c.l.b16 %v424
        %v1319 = vunpack.c.l.b16 %v425
        %v1320 = vunpack.c.l.b16 %v426
        %v1321 = vunpack.c.l.b16 %v427
        %v1322 = vunpack.c.l.b16 %v428
        %v1323 = vunpack.c.l.b16 %v429
        %v1324 = vunpack.c.l.b16 %v430
        %v1325 = vunpack.c.l.b16 %v431
        %v1326 = vunpack.c.l.b16 %v432
        %v1327 = vunpack.c.l.b16 %v433
        %v1328 = vunpack.c.l.b16 %v434
        %v1329 = vunpack.c.l.b16 %v435
        %v1330 = vunpack.c.l.b16 %v436
        %v1331 = vunpack.c.l.b16 %v437
        %v1332 = vunpack.c.l.b16 %v438
        %v1333 = vunpack.c.l.b16 %v439
        %v1334 = vunpack.c.l.b16 %v440
        %v1335 = vunpack.c.l.b16 %v441
        %v1336 = vunpack.c.l.b16 %v442
        %v1337 = vunpack.c.l.b16 %v443
        %v1338 = vunpack.c.l.b16 %v444
        %v1339 = vunpack.c.l.b16 %v445
        %v1340 = vunpack.c.l.b16 %v446
        %v1341 = vunpack.c.l.b16 %v447
        %v1342 = vunpack.c.l.b16 %v448
        %v1343 = vunpack.c.l.b16 %v449
        %v1344 = vunpack.c.l.b16 %v450
        %v1345 = vunpack.c.l.b16 %v451
        %v1346 = vunpack.c.l.b16 %v452
        %v1347 = vunpack.c.l.b16 %v453
        %v1348 = vunpack.c.l.b16 %v454
        %v1349 = vunpack.c.l.b16 %v455
        %v1350 = vpack.c.b16 %v1303, %v1302
        %v1351 = vpack.c.b16 %v1305, %v1304
        %v1352 = vpack.c.b16 %v1307, %v1306
        %v1353 = vpack.c.b16 %v1309, %v1308
        %v1354 = vpack.c.b16 %v1311, %v1310
        %v1355 = vpack.c.b16 %v1313, %v1312
        %v1356 = vpack.c.b16 %v1315, %v1314
        %v1357 = vpack.c.b16 %v1317, %v1316
        %v1358 = vpack.c.b16 %v1319, %v1318
        %v1359 = vpack.c.b16 %v1321, %v1320
        %v1360 = vpack.c.b16 %v1323, %v1322
        %v1361 = vpack.c.b16 %v1325, %v1324
        %v1362 = vpack.c.b16 %v1327, %v1326
        %v1363 = vpack.c.b16 %v1329, %v1328
        %v1364 = vpack.c.b16 %v1331, %v1330
        %v1365 = vpack.c.b16 %v1333, %v1332
        %v1366 = vpack.c.b16 %v1335, %v1334
        %v1367 = vpack.c.b16 %v1337, %v1336
        %v1368 = vpack.c.b16 %v1339, %v1338
        %v1369 = vpack.c.b16 %v1341, %v1340
        %v1370 = vpack.c.b16 %v1343, %v1342
        %v1371 = vpack.c.b16 %v1345, %v1344
        %v1372 = vpack.c.b16 %v1347, %v1346
        %v1373 = vpack.c.b16 %v1349, %v1348
        %1398 = vmatprep.subr.bf16.mxu0 0
        %1399 = vmatpush1.bf16.msra.mxu0 %v1350
        %1400 = vmatprep.subr.bf16.mxu0 0
        %1401 = vmatpush1.bf16.msra.mxu0 %v1351
        %1402 = vmatprep.subr.bf16.mxu0 0
        %1403 = vmatpush1.bf16.msra.mxu0 %v1352
        %1404 = vmatprep.subr.bf16.mxu0 0
        %1405 = vmatpush1.bf16.msra.mxu0 %v1353
        %1406 = vmatprep.subr.bf16.mxu0 0
        %1407 = vmatpush1.bf16.msra.mxu0 %v1354
        %1408 = vmatprep.subr.bf16.mxu0 0
        %1409 = vmatpush1.bf16.msra.mxu0 %v1355
        %1410 = vmatprep.subr.bf16.mxu0 0
        %1411 = vmatpush1.bf16.msra.mxu0 %v1356
        %1412 = vmatprep.subr.bf16.mxu0 0
        %1413 = vmatpush1.bf16.msra.mxu0 %v1357
        %1414 = vmatprep.subr.bf16.mxu0 0
        %1415 = vmatpush1.bf16.msra.mxu0 %v1358
        %1416 = vmatprep.subr.bf16.mxu0 0
        %1417 = vmatpush1.bf16.msra.mxu0 %v1359
        %1418 = vmatprep.subr.bf16.mxu0 0
        %1419 = vmatpush1.bf16.msra.mxu0 %v1360
        %1420 = vmatprep.subr.bf16.mxu0 0
        %1421 = vmatpush1.bf16.msra.mxu0 %v1361
        %1422 = vmatprep.subr.bf16.mxu0 0
        %1423 = vmatpush1.bf16.msra.mxu0 %v1362
        %1424 = vmatprep.subr.bf16.mxu0 0
        %1425 = vmatpush1.bf16.msra.mxu0 %v1363
        %1426 = vmatprep.subr.bf16.mxu0 0
        %1427 = vmatpush1.bf16.msra.mxu0 %v1364
        %1428 = vmatprep.subr.bf16.mxu0 0
        %1429 = vmatpush1.bf16.msra.mxu0 %v1365
        %1430 = vmatprep.mubr.bf16.mxu0 %v1251
        %1431 = vmatmul.mubr.bf16.gmra.mrb[0].mxu0 %v1245
        %v1432 = vpop.f32.mrb[0].mxu0
        %v1433 = vadd.f32 0.0, %v1432
        %v1434 = vpop.f32.mrb[0].mxu0
        %v1435 = vpop.f32.mrb[0].mxu0
        %v1436 = vpop.f32.mrb[0].mxu0
        %1437 = vdwg.mxu0
        %1438 = vmatprep.subr.bf16.mxu0 0
        %1439 = vmatpush1.bf16.msra.mxu0 %v1366
        %1440 = vmatprep.subr.bf16.mxu0 0
        %1441 = vmatpush1.bf16.msra.mxu0 %v1367
        %1442 = vmatprep.subr.bf16.mxu0 0
        %1443 = vmatpush1.bf16.msra.mxu0 %v1368
        %1444 = vmatprep.subr.bf16.mxu0 0
        %1445 = vmatpush1.bf16.msra.mxu0 %v1369
        %1446 = vmatprep.subr.bf16.mxu0 0
        %1447 = vmatpush1.bf16.msra.mxu0 %v1370
        %1448 = vmatprep.subr.bf16.mxu0 0
        %1449 = vmatpush1.bf16.msra.mxu0 %v1371
        %1450 = vmatprep.subr.bf16.mxu0 0
        %1451 = vmatpush1.bf16.msra.mxu0 %v1372
        %1452 = vmatprep.subr.bf16.mxu0 0
        %1453 = vmatpush1.bf16.msra.mxu0 %v1373
        %1454 = vmatprep.subr.bf16.mxu0 0
        %1455 = vmatpush1.bf16.msra.mxu0 0
        %1456 = vmatprep.subr.bf16.mxu0 0
        %1457 = vmatpush1.bf16.msra.mxu0 0
        %1458 = vmatprep.subr.bf16.mxu0 0
        %1459 = vmatpush1.bf16.msra.mxu0 0
        %1460 = vmatprep.subr.bf16.mxu0 0
        %1461 = vmatpush1.bf16.msra.mxu0 0
        %1462 = vmatprep.subr.bf16.mxu0 0
        %1463 = vmatpush1.bf16.msra.mxu0 0
        %1464 = vmatprep.subr.bf16.mxu0 0
        %1465 = vmatpush1.bf16.msra.mxu0 0
        %1466 = vmatprep.subr.bf16.mxu0 0
        %1467 = vmatpush1.bf16.msra.mxu0 0
        %1468 = vmatprep.subr.bf16.mxu0 0
        %1469 = vmatpush1.bf16.msra.mxu0 0
        %1470 = vmatprep.mubr.bf16.mxu0 0
        %1471 = vmatmul.mubr.bf16.gmra.mrb[0].mxu0 %v1251
        %v1472 = vpop.f32.mrb[0].mxu0
        %v1473 = vadd.f32 %v1433, %v1472
        %v1474 = vpop.f32.mrb[0].mxu0
        %v1475 = vpop.f32.mrb[0].mxu0
        %v1476 = vpop.f32.mrb[0].mxu0
        %1477 = vdwg.mxu0
        %v1478 = vshrl.u32 %v348, 16
        %v1480 = vshll.u32 %v348, 16
        %v1482 = vrot.slane %v1480, 1
        %v1483 = vor.u32 %v1478, %v1482
        %1485 = vmatprep.subr.bf16.mxu0 0
        %1486 = vmatpush1.bf16.msra.mxu0 %v1350
        %1487 = vmatprep.subr.bf16.mxu0 0
        %1488 = vmatpush1.bf16.msra.mxu0 %v1351
        %1489 = vmatprep.subr.bf16.mxu0 0
        %1490 = vmatpush1.bf16.msra.mxu0 %v1352
        %1491 = vmatprep.subr.bf16.mxu0 0
        %1492 = vmatpush1.bf16.msra.mxu0 %v1353
        %1493 = vmatprep.subr.bf16.mxu0 0
        %1494 = vmatpush1.bf16.msra.mxu0 %v1354
        %1495 = vmatprep.subr.bf16.mxu0 0
        %1496 = vmatpush1.bf16.msra.mxu0 %v1355
        %1497 = vmatprep.subr.bf16.mxu0 0
        %1498 = vmatpush1.bf16.msra.mxu0 %v1356
        %1499 = vmatprep.subr.bf16.mxu0 0
        %1500 = vmatpush1.bf16.msra.mxu0 %v1357
        %1501 = vmatprep.subr.bf16.mxu0 0
        %1502 = vmatpush1.bf16.msra.mxu0 %v1358
        %1503 = vmatprep.subr.bf16.mxu0 0
        %1504 = vmatpush1.bf16.msra.mxu0 %v1359
        %1505 = vmatprep.subr.bf16.mxu0 0
        %1506 = vmatpush1.bf16.msra.mxu0 %v1360
        %1507 = vmatprep.subr.bf16.mxu0 0
        %1508 = vmatpush1.bf16.msra.mxu0 %v1361
        %1509 = vmatprep.subr.bf16.mxu0 0
        %1510 = vmatpush1.bf16.msra.mxu0 %v1362
        %1511 = vmatprep.subr.bf16.mxu0 0
        %1512 = vmatpush1.bf16.msra.mxu0 %v1363
        %1513 = vmatprep.subr.bf16.mxu0 0
        %1514 = vmatpush1.bf16.msra.mxu0 %v1364
        %1515 = vmatprep.subr.bf16.mxu0 0
        %1516 = vmatpush1.bf16.msra.mxu0 %v1365
        %1517 = vmatprep.mubr.bf16.mxu0 %v1251
        %1518 = vmatmul.mubr.bf16.gmra.mrb[0].mxu0 %v1251
        %v1519 = vpop.f32.mrb[0].mxu0
        %v1520 = vadd.f32 0.0, %v1519
        %v1521 = vpop.f32.mrb[0].mxu0
        %v1522 = vpop.f32.mrb[0].mxu0
        %v1523 = vpop.f32.mrb[0].mxu0
        %1524 = vdwg.mxu0
        %1525 = vmatprep.subr.bf16.mxu0 0
        %1526 = vmatpush1.bf16.msra.mxu0 %v1366
        %1527 = vmatprep.subr.bf16.mxu0 0
        %1528 = vmatpush1.bf16.msra.mxu0 %v1367
        %1529 = vmatprep.subr.bf16.mxu0 0
        %1530 = vmatpush1.bf16.msra.mxu0 %v1368
        %1531 = vmatprep.subr.bf16.mxu0 0
        %1532 = vmatpush1.bf16.msra.mxu0 %v1369
        %1533 = vmatprep.subr.bf16.mxu0 0
        %1534 = vmatpush1.bf16.msra.mxu0 %v1370
        %1535 = vmatprep.subr.bf16.mxu0 0
        %1536 = vmatpush1.bf16.msra.mxu0 %v1371
        %1537 = vmatprep.subr.bf16.mxu0 0
        %1538 = vmatpush1.bf16.msra.mxu0 %v1372
        %1539 = vmatprep.subr.bf16.mxu0 0
        %1540 = vmatpush1.bf16.msra.mxu0 %v1373
        %1541 = vmatprep.subr.bf16.mxu0 0
        %1542 = vmatpush1.bf16.msra.mxu0 0
        %1543 = vmatprep.subr.bf16.mxu0 0
        %1544 = vmatpush1.bf16.msra.mxu0 0
        %1545 = vmatprep.subr.bf16.mxu0 0
        %1546 = vmatpush1.bf16.msra.mxu0 0
        %1547 = vmatprep.subr.bf16.mxu0 0
        %1548 = vmatpush1.bf16.msra.mxu0 0
        %1549 = vmatprep.subr.bf16.mxu0 0
        %1550 = vmatpush1.bf16.msra.mxu0 0
        %1551 = vmatprep.subr.bf16.mxu0 0
        %1552 = vmatpush1.bf16.msra.mxu0 0
        %1553 = vmatprep.subr.bf16.mxu0 0
        %1554 = vmatpush1.bf16.msra.mxu0 0
        %1555 = vmatprep.subr.bf16.mxu0 0
        %1556 = vmatpush1.bf16.msra.mxu0 0
        %1557 = vmatprep.mubr.bf16.mxu0 0
        %1558 = vmatmul.mubr.bf16.gmra.mrb[0].mxu0 %v1483
        %v1559 = vpop.f32.mrb[0].mxu0
        %v1560 = vadd.f32 %v1520, %v1559
        %v1561 = vpop.f32.mrb[0].mxu0
        %v1562 = vpop.f32.mrb[0].mxu0
        %v1563 = vpop.f32.mrb[0].mxu0
        %1564 = vdwg.mxu0
        %1565 = vmatprep.subr.bf16.mxu0 0
        %1566 = vmatpush1.bf16.msra.mxu0 %v1350
        %1567 = vmatprep.subr.bf16.mxu0 0
        %1568 = vmatpush1.bf16.msra.mxu0 %v1351
        %1569 = vmatprep.subr.bf16.mxu0 0
        %1570 = vmatpush1.bf16.msra.mxu0 %v1352
        %1571 = vmatprep.subr.bf16.mxu0 0
        %1572 = vmatpush1.bf16.msra.mxu0 %v1353
        %1573 = vmatprep.subr.bf16.mxu0 0
        %1574 = vmatpush1.bf16.msra.mxu0 %v1354
        %1575 = vmatprep.subr.bf16.mxu0 0
        %1576 = vmatpush1.bf16.msra.mxu0 %v1355
        %1577 = vmatprep.subr.bf16.mxu0 0
        %1578 = vmatpush1.bf16.msra.mxu0 %v1356
        %1579 = vmatprep.subr.bf16.mxu0 0
        %1580 = vmatpush1.bf16.msra.mxu0 %v1357
        %1581 = vmatprep.subr.bf16.mxu0 0
        %1582 = vmatpush1.bf16.msra.mxu0 %v1358
        %1583 = vmatprep.subr.bf16.mxu0 0
        %1584 = vmatpush1.bf16.msra.mxu0 %v1359
        %1585 = vmatprep.subr.bf16.mxu0 0
        %1586 = vmatpush1.bf16.msra.mxu0 %v1360
        %1587 = vmatprep.subr.bf16.mxu0 0
        %1588 = vmatpush1.bf16.msra.mxu0 %v1361
        %1589 = vmatprep.subr.bf16.mxu0 0
        %1590 = vmatpush1.bf16.msra.mxu0 %v1362
        %1591 = vmatprep.subr.bf16.mxu0 0
        %1592 = vmatpush1.bf16.msra.mxu0 %v1363
        %1593 = vmatprep.subr.bf16.mxu0 0
        %1594 = vmatpush1.bf16.msra.mxu0 %v1364
        %1595 = vmatprep.subr.bf16.mxu0 0
        %1596 = vmatpush1.bf16.msra.mxu0 %v1365
        %1597 = vmatprep.mubr.bf16.mxu0 %v1483
        %1598 = vmatmul.mubr.bf16.gmra.mrb[0].mxu0 %v1251
        %v1599 = vpop.f32.mrb[0].mxu0
        %v1600 = vadd.f32 0.0, %v1599
        %v1601 = vpop.f32.mrb[0].mxu0
        %v1602 = vpop.f32.mrb[0].mxu0
        %v1603 = vpop.f32.mrb[0].mxu0
        %1604 = vdwg.mxu0
        %1605 = vmatprep.subr.bf16.mxu0 0
        %1606 = vmatpush1.bf16.msra.mxu0 %v1366
        %1607 = vmatprep.subr.bf16.mxu0 0
        %1608 = vmatpush1.bf16.msra.mxu0 %v1367
        %1609 = vmatprep.subr.bf16.mxu0 0
        %1610 = vmatpush1.bf16.msra.mxu0 %v1368
        %1611 = vmatprep.subr.bf16.mxu0 0
        %1612 = vmatpush1.bf16.msra.mxu0 %v1369
        %1613 = vmatprep.subr.bf16.mxu0 0
        %1614 = vmatpush1.bf16.msra.mxu0 %v1370
        %1615 = vmatprep.subr.bf16.mxu0 0
        %1616 = vmatpush1.bf16.msra.mxu0 %v1371
        %1617 = vmatprep.subr.bf16.mxu0 0
        %1618 = vmatpush1.bf16.msra.mxu0 %v1372
        %1619 = vmatprep.subr.bf16.mxu0 0
        %1620 = vmatpush1.bf16.msra.mxu0 %v1373
        %1621 = vmatprep.subr.bf16.mxu0 0
        %1622 = vmatpush1.bf16.msra.mxu0 0
        %1623 = vmatprep.subr.bf16.mxu0 0
        %1624 = vmatpush1.bf16.msra.mxu0 0
        %1625 = vmatprep.subr.bf16.mxu0 0
        %1626 = vmatpush1.bf16.msra.mxu0 0
        %1627 = vmatprep.subr.bf16.mxu0 0
        %1628 = vmatpush1.bf16.msra.mxu0 0
        %1629 = vmatprep.subr.bf16.mxu0 0
        %1630 = vmatpush1.bf16.msra.mxu0 0
        %1631 = vmatprep.subr.bf16.mxu0 0
        %1632 = vmatpush1.bf16.msra.mxu0 0
        %1633 = vmatprep.subr.bf16.mxu0 0
        %1634 = vmatpush1.bf16.msra.mxu0 0
        %1635 = vmatprep.subr.bf16.mxu0 0
        %1636 = vmatpush1.bf16.msra.mxu0 0
        %1637 = vmatprep.mubr.bf16.mxu0 0
        %1638 = vmatmul.mubr.bf16.gmra.mrb[0].mxu0 %v1483
        %v1639 = vpop.f32.mrb[0].mxu0
        %v1640 = vadd.f32 %v1600, %v1639
        %v1641 = vpop.f32.mrb[0].mxu0
        %v1642 = vpop.f32.mrb[0].mxu0
        %v1643 = vpop.f32.mrb[0].mxu0
        %1644 = vdwg.mxu0
        %v1645 = vshrl.u32 %v351, 16
        %v1647 = vshll.u32 %v351, 16
        %v1649 = vrot.slane %v1647, 1
        %v1650 = vor.u32 %v1645, %v1649
        %1652 = vmatprep.subr.bf16.mxu0 0
        %1653 = vmatpush1.bf16.msra.mxu0 %v1350
        %1654 = vmatprep.subr.bf16.mxu0 0
        %1655 = vmatpush1.bf16.msra.mxu0 %v1351
        %1656 = vmatprep.subr.bf16.mxu0 0
        %1657 = vmatpush1.bf16.msra.mxu0 %v1352
        %1658 = vmatprep.subr.bf16.mxu0 0
        %1659 = vmatpush1.bf16.msra.mxu0 %v1353
        %1660 = vmatprep.subr.bf16.mxu0 0
        %1661 = vmatpush1.bf16.msra.mxu0 %v1354
        %1662 = vmatprep.subr.bf16.mxu0 0
        %1663 = vmatpush1.bf16.msra.mxu0 %v1355
        %1664 = vmatprep.subr.bf16.mxu0 0
        %1665 = vmatpush1.bf16.msra.mxu0 %v1356
        %1666 = vmatprep.subr.bf16.mxu0 0
        %1667 = vmatpush1.bf16.msra.mxu0 %v1357
        %1668 = vmatprep.subr.bf16.mxu0 0
        %1669 = vmatpush1.bf16.msra.mxu0 %v1358
        %1670 = vmatprep.subr.bf16.mxu0 0
        %1671 = vmatpush1.bf16.msra.mxu0 %v1359
        %1672 = vmatprep.subr.bf16.mxu0 0
        %1673 = vmatpush1.bf16.msra.mxu0 %v1360
        %1674 = vmatprep.subr.bf16.mxu0 0
        %1675 = vmatpush1.bf16.msra.mxu0 %v1361
        %1676 = vmatprep.subr.bf16.mxu0 0
        %1677 = vmatpush1.bf16.msra.mxu0 %v1362
        %1678 = vmatprep.subr.bf16.mxu0 0
        %1679 = vmatpush1.bf16.msra.mxu0 %v1363
        %1680 = vmatprep.subr.bf16.mxu0 0
        %1681 = vmatpush1.bf16.msra.mxu0 %v1364
        %1682 = vmatprep.subr.bf16.mxu0 0
        %1683 = vmatpush1.bf16.msra.mxu0 %v1365
        %1684 = vmatprep.mubr.bf16.mxu0 %v1483
        %1685 = vmatmul.mubr.bf16.gmra.mrb[0].mxu0 %v1483
        %v1686 = vpop.f32.mrb[0].mxu0
        %v1687 = vadd.f32 0.0, %v1686
        %v1688 = vpop.f32.mrb[0].mxu0
        %v1689 = vpop.f32.mrb[0].mxu0
        %v1690 = vpop.f32.mrb[0].mxu0
        %1691 = vdwg.mxu0
        %1692 = vmatprep.subr.bf16.mxu0 0
        %1693 = vmatpush1.bf16.msra.mxu0 %v1366
        %1694 = vmatprep.subr.bf16.mxu0 0
        %1695 = vmatpush1.bf16.msra.mxu0 %v1367
        %1696 = vmatprep.subr.bf16.mxu0 0
        %1697 = vmatpush1.bf16.msra.mxu0 %v1368
        %1698 = vmatprep.subr.bf16.mxu0 0
        %1699 = vmatpush1.bf16.msra.mxu0 %v1369
        %1700 = vmatprep.subr.bf16.mxu0 0
        %1701 = vmatpush1.bf16.msra.mxu0 %v1370
        %1702 = vmatprep.subr.bf16.mxu0 0
        %1703 = vmatpush1.bf16.msra.mxu0 %v1371
        %1704 = vmatprep.subr.bf16.mxu0 0
        %1705 = vmatpush1.bf16.msra.mxu0 %v1372
        %1706 = vmatprep.subr.bf16.mxu0 0
        %1707 = vmatpush1.bf16.msra.mxu0 %v1373
        %1708 = vmatprep.subr.bf16.mxu0 0
        %1709 = vmatpush1.bf16.msra.mxu0 0
        %1710 = vmatprep.subr.bf16.mxu0 0
        %1711 = vmatpush1.bf16.msra.mxu0 0
        %1712 = vmatprep.subr.bf16.mxu0 0
        %1713 = vmatpush1.bf16.msra.mxu0 0
        %1714 = vmatprep.subr.bf16.mxu0 0
        %1715 = vmatpush1.bf16.msra.mxu0 0
        %1716 = vmatprep.subr.bf16.mxu0 0
        %1717 = vmatpush1.bf16.msra.mxu0 0
        %1718 = vmatprep.subr.bf16.mxu0 0
        %1719 = vmatpush1.bf16.msra.mxu0 0
        %1720 = vmatprep.subr.bf16.mxu0 0
        %1721 = vmatpush1.bf16.msra.mxu0 0
        %1722 = vmatprep.subr.bf16.mxu0 0
        %1723 = vmatpush1.bf16.msra.mxu0 0
        %1724 = vmatprep.mubr.bf16.mxu0 0
        %1725 = vmatmul.mubr.bf16.gmra.mrb[0].mxu0 %v1650
        %v1726 = vpop.f32.mrb[0].mxu0
        %v1727 = vadd.f32 %v1687, %v1726
        %v1728 = vpop.f32.mrb[0].mxu0
        %v1729 = vpop.f32.mrb[0].mxu0
        %v1730 = vpop.f32.mrb[0].mxu0
        %1731 = vdwg.mxu0
        %1732 = vmatprep.subr.bf16.mxu0 0
        %1733 = vmatpush1.bf16.msra.mxu0 %v1350
        %1734 = vmatprep.subr.bf16.mxu0 0
        %1735 = vmatpush1.bf16.msra.mxu0 %v1351
        %1736 = vmatprep.subr.bf16.mxu0 0
        %1737 = vmatpush1.bf16.msra.mxu0 %v1352
        %1738 = vmatprep.subr.bf16.mxu0 0
        %1739 = vmatpush1.bf16.msra.mxu0 %v1353
        %1740 = vmatprep.subr.bf16.mxu0 0
        %1741 = vmatpush1.bf16.msra.mxu0 %v1354
        %1742 = vmatprep.subr.bf16.mxu0 0
        %1743 = vmatpush1.bf16.msra.mxu0 %v1355
        %1744 = vmatprep.subr.bf16.mxu0 0
        %1745 = vmatpush1.bf16.msra.mxu0 %v1356
        %1746 = vmatprep.subr.bf16.mxu0 0
        %1747 = vmatpush1.bf16.msra.mxu0 %v1357
        %1748 = vmatprep.subr.bf16.mxu0 0
        %1749 = vmatpush1.bf16.msra.mxu0 %v1358
        %1750 = vmatprep.subr.bf16.mxu0 0
        %1751 = vmatpush1.bf16.msra.mxu0 %v1359
        %1752 = vmatprep.subr.bf16.mxu0 0
        %1753 = vmatpush1.bf16.msra.mxu0 %v1360
        %1754 = vmatprep.subr.bf16.mxu0 0
        %1755 = vmatpush1.bf16.msra.mxu0 %v1361
        %1756 = vmatprep.subr.bf16.mxu0 0
        %1757 = vmatpush1.bf16.msra.mxu0 %v1362
        %1758 = vmatprep.subr.bf16.mxu0 0
        %1759 = vmatpush1.bf16.msra.mxu0 %v1363
        %1760 = vmatprep.subr.bf16.mxu0 0
        %1761 = vmatpush1.bf16.msra.mxu0 %v1364
        %1762 = vmatprep.subr.bf16.mxu0 0
        %1763 = vmatpush1.bf16.msra.mxu0 %v1365
        %1764 = vmatprep.mubr.bf16.mxu0 %v1650
        %1765 = vmatmul.mubr.bf16.gmra.mrb[0].mxu0 %v1483
        %v1766 = vpop.f32.mrb[0].mxu0
        %v1767 = vadd.f32 0.0, %v1766
        %v1768 = vpop.f32.mrb[0].mxu0
        %v1769 = vpop.f32.mrb[0].mxu0
        %v1770 = vpop.f32.mrb[0].mxu0
        %1771 = vdwg.mxu0
        %1772 = vmatprep.subr.bf16.mxu0 0
        %1773 = vmatpush1.bf16.msra.mxu0 %v1366
        %1774 = vmatprep.subr.bf16.mxu0 0
        %1775 = vmatpush1.bf16.msra.mxu0 %v1367
        %1776 = vmatprep.subr.bf16.mxu0 0
        %1777 = vmatpush1.bf16.msra.mxu0 %v1368
        %1778 = vmatprep.subr.bf16.mxu0 0
        %1779 = vmatpush1.bf16.msra.mxu0 %v1369
        %1780 = vmatprep.subr.bf16.mxu0 0
        %1781 = vmatpush1.bf16.msra.mxu0 %v1370
        %1782 = vmatprep.subr.bf16.mxu0 0
        %1783 = vmatpush1.bf16.msra.mxu0 %v1371
        %1784 = vmatprep.subr.bf16.mxu0 0
        %1785 = vmatpush1.bf16.msra.mxu0 %v1372
        %1786 = vmatprep.subr.bf16.mxu0 0
        %1787 = vmatpush1.bf16.msra.mxu0 %v1373
        %1788 = vmatprep.subr.bf16.mxu0 0
        %1789 = vmatpush1.bf16.msra.mxu0 0
        %1790 = vmatprep.subr.bf16.mxu0 0
        %1791 = vmatpush1.bf16.msra.mxu0 0
        %1792 = vmatprep.subr.bf16.mxu0 0
        %1793 = vmatpush1.bf16.msra.mxu0 0
        %1794 = vmatprep.subr.bf16.mxu0 0
        %1795 = vmatpush1.bf16.msra.mxu0 0
        %1796 = vmatprep.subr.bf16.mxu0 0
        %1797 = vmatpush1.bf16.msra.mxu0 0
        %1798 = vmatprep.subr.bf16.mxu0 0
        %1799 = vmatpush1.bf16.msra.mxu0 0
        %1800 = vmatprep.subr.bf16.mxu0 0
        %1801 = vmatpush1.bf16.msra.mxu0 0
        %1802 = vmatprep.subr.bf16.mxu0 0
        %1803 = vmatpush1.bf16.msra.mxu0 0
        %1804 = vmatprep.mubr.bf16.mxu0 0
        %1805 = vmatmul.mubr.bf16.gmra.mrb[0].mxu0 %v1650
        %v1806 = vpop.f32.mrb[0].mxu0
        %v1807 = vadd.f32 %v1767, %v1806
        %v1808 = vpop.f32.mrb[0].mxu0
        %v1809 = vpop.f32.mrb[0].mxu0
        %v1810 = vpop.f32.mrb[0].mxu0
        %1811 = vdwg.mxu0
        %v1812 = vshrl.u32 %v354, 16
        %v1814 = vshll.u32 %v354, 16
        %v1816 = vrot.slane %v1814, 1
        %v1817 = vor.u32 %v1812, %v1816
        %1819 = vmatprep.subr.bf16.mxu0 0
        %1820 = vmatpush1.bf16.msra.mxu0 %v1350
        %1821 = vmatprep.subr.bf16.mxu0 0
        %1822 = vmatpush1.bf16.msra.mxu0 %v1351
        %1823 = vmatprep.subr.bf16.mxu0 0
        %1824 = vmatpush1.bf16.msra.mxu0 %v1352
        %1825 = vmatprep.subr.bf16.mxu0 0
        %1826 = vmatpush1.bf16.msra.mxu0 %v1353
        %1827 = vmatprep.subr.bf16.mxu0 0
        %1828 = vmatpush1.bf16.msra.mxu0 %v1354
        %1829 = vmatprep.subr.bf16.mxu0 0
        %1830 = vmatpush1.bf16.msra.mxu0 %v1355
        %1831 = vmatprep.subr.bf16.mxu0 0
        %1832 = vmatpush1.bf16.msra.mxu0 %v1356
        %1833 = vmatprep.subr.bf16.mxu0 0
        %1834 = vmatpush1.bf16.msra.mxu0 %v1357
        %1835 = vmatprep.subr.bf16.mxu0 0
        %1836 = vmatpush1.bf16.msra.mxu0 %v1358
        %1837 = vmatprep.subr.bf16.mxu0 0
        %1838 = vmatpush1.bf16.msra.mxu0 %v1359
        %1839 = vmatprep.subr.bf16.mxu0 0
        %1840 = vmatpush1.bf16.msra.mxu0 %v1360
        %1841 = vmatprep.subr.bf16.mxu0 0
        %1842 = vmatpush1.bf16.msra.mxu0 %v1361
        %1843 = vmatprep.subr.bf16.mxu0 0
        %1844 = vmatpush1.bf16.msra.mxu0 %v1362
        %1845 = vmatprep.subr.bf16.mxu0 0
        %1846 = vmatpush1.bf16.msra.mxu0 %v1363
        %1847 = vmatprep.subr.bf16.mxu0 0
        %1848 = vmatpush1.bf16.msra.mxu0 %v1364
        %1849 = vmatprep.subr.bf16.mxu0 0
        %1850 = vmatpush1.bf16.msra.mxu0 %v1365
        %1851 = vmatprep.mubr.bf16.mxu0 %v1650
        %1852 = vmatmul.mubr.bf16.gmra.mrb[0].mxu0 %v1650
        %v1853 = vpop.f32.mrb[0].mxu0
        %v1854 = vadd.f32 0.0, %v1853
        %v1855 = vpop.f32.mrb[0].mxu0
        %v1856 = vpop.f32.mrb[0].mxu0
        %v1857 = vpop.f32.mrb[0].mxu0
        %1858 = vdwg.mxu0
        %1859 = vmatprep.subr.bf16.mxu0 0
        %1860 = vmatpush1.bf16.msra.mxu0 %v1366
        %1861 = vmatprep.subr.bf16.mxu0 0
        %1862 = vmatpush1.bf16.msra.mxu0 %v1367
        %1863 = vmatprep.subr.bf16.mxu0 0
        %1864 = vmatpush1.bf16.msra.mxu0 %v1368
        %1865 = vmatprep.subr.bf16.mxu0 0
        %1866 = vmatpush1.bf16.msra.mxu0 %v1369
        %1867 = vmatprep.subr.bf16.mxu0 0
        %1868 = vmatpush1.bf16.msra.mxu0 %v1370
        %1869 = vmatprep.subr.bf16.mxu0 0
        %1870 = vmatpush1.bf16.msra.mxu0 %v1371
        %1871 = vmatprep.subr.bf16.mxu0 0
        %1872 = vmatpush1.bf16.msra.mxu0 %v1372
        %1873 = vmatprep.subr.bf16.mxu0 0
        %1874 = vmatpush1.bf16.msra.mxu0 %v1373
        %1875 = vmatprep.subr.bf16.mxu0 0
        %1876 = vmatpush1.bf16.msra.mxu0 0
        %1877 = vmatprep.subr.bf16.mxu0 0
        %1878 = vmatpush1.bf16.msra.mxu0 0
        %1879 = vmatprep.subr.bf16.mxu0 0
        %1880 = vmatpush1.bf16.msra.mxu0 0
        %1881 = vmatprep.subr.bf16.mxu0 0
        %1882 = vmatpush1.bf16.msra.mxu0 0
        %1883 = vmatprep.subr.bf16.mxu0 0
        %1884 = vmatpush1.bf16.msra.mxu0 0
        %1885 = vmatprep.subr.bf16.mxu0 0
        %1886 = vmatpush1.bf16.msra.mxu0 0
        %1887 = vmatprep.subr.bf16.mxu0 0
        %1888 = vmatpush1.bf16.msra.mxu0 0
        %1889 = vmatprep.subr.bf16.mxu0 0
        %1890 = vmatpush1.bf16.msra.mxu0 0
        %1891 = vmatprep.mubr.bf16.mxu0 0
        %1892 = vmatmul.mubr.bf16.gmra.mrb[0].mxu0 %v1817
        %v1893 = vpop.f32.mrb[0].mxu0
        %v1894 = vadd.f32 %v1854, %v1893
        %v1895 = vpop.f32.mrb[0].mxu0
        %v1896 = vpop.f32.mrb[0].mxu0
        %v1897 = vpop.f32.mrb[0].mxu0
        %1898 = vdwg.mxu0
        %1899 = vmatprep.subr.bf16.mxu0 0
        %1900 = vmatpush1.bf16.msra.mxu0 %v1350
        %1901 = vmatprep.subr.bf16.mxu0 0
        %1902 = vmatpush1.bf16.msra.mxu0 %v1351
        %1903 = vmatprep.subr.bf16.mxu0 0
        %1904 = vmatpush1.bf16.msra.mxu0 %v1352
        %1905 = vmatprep.subr.bf16.mxu0 0
        %1906 = vmatpush1.bf16.msra.mxu0 %v1353
        %1907 = vmatprep.subr.bf16.mxu0 0
        %1908 = vmatpush1.bf16.msra.mxu0 %v1354
        %1909 = vmatprep.subr.bf16.mxu0 0
        %1910 = vmatpush1.bf16.msra.mxu0 %v1355
        %1911 = vmatprep.subr.bf16.mxu0 0
        %1912 = vmatpush1.bf16.msra.mxu0 %v1356
        %1913 = vmatprep.subr.bf16.mxu0 0
        %1914 = vmatpush1.bf16.msra.mxu0 %v1357
        %1915 = vmatprep.subr.bf16.mxu0 0
        %1916 = vmatpush1.bf16.msra.mxu0 %v1358
        %1917 = vmatprep.subr.bf16.mxu0 0
        %1918 = vmatpush1.bf16.msra.mxu0 %v1359
        %1919 = vmatprep.subr.bf16.mxu0 0
        %1920 = vmatpush1.bf16.msra.mxu0 %v1360
        %1921 = vmatprep.subr.bf16.mxu0 0
        %1922 = vmatpush1.bf16.msra.mxu0 %v1361
        %1923 = vmatprep.subr.bf16.mxu0 0
        %1924 = vmatpush1.bf16.msra.mxu0 %v1362
        %1925 = vmatprep.subr.bf16.mxu0 0
        %1926 = vmatpush1.bf16.msra.mxu0 %v1363
        %1927 = vmatprep.subr.bf16.mxu0 0
        %1928 = vmatpush1.bf16.msra.mxu0 %v1364
        %1929 = vmatprep.subr.bf16.mxu0 0
        %1930 = vmatpush1.bf16.msra.mxu0 %v1365
        %1931 = vmatprep.mubr.bf16.mxu0 %v1817
        %1932 = vmatmul.mubr.bf16.gmra.mrb[0].mxu0 %v1650
        %v1933 = vpop.f32.mrb[0].mxu0
        %v1934 = vadd.f32 0.0, %v1933
        %v1935 = vpop.f32.mrb[0].mxu0
        %v1936 = vpop.f32.mrb[0].mxu0
        %v1937 = vpop.f32.mrb[0].mxu0
        %1938 = vdwg.mxu0
        %1939 = vmatprep.subr.bf16.mxu0 0
        %1940 = vmatpush1.bf16.msra.mxu0 %v1366
        %1941 = vmatprep.subr.bf16.mxu0 0
        %1942 = vmatpush1.bf16.msra.mxu0 %v1367
        %1943 = vmatprep.subr.bf16.mxu0 0
        %1944 = vmatpush1.bf16.msra.mxu0 %v1368
        %1945 = vmatprep.subr.bf16.mxu0 0
        %1946 = vmatpush1.bf16.msra.mxu0 %v1369
        %1947 = vmatprep.subr.bf16.mxu0 0
        %1948 = vmatpush1.bf16.msra.mxu0 %v1370
        %1949 = vmatprep.subr.bf16.mxu0 0
        %1950 = vmatpush1.bf16.msra.mxu0 %v1371
        %1951 = vmatprep.subr.bf16.mxu0 0
        %1952 = vmatpush1.bf16.msra.mxu0 %v1372
        %1953 = vmatprep.subr.bf16.mxu0 0
        %1954 = vmatpush1.bf16.msra.mxu0 %v1373
        %1955 = vmatprep.subr.bf16.mxu0 0
        %1956 = vmatpush1.bf16.msra.mxu0 0
        %1957 = vmatprep.subr.bf16.mxu0 0
        %1958 = vmatpush1.bf16.msra.mxu0 0
        %1959 = vmatprep.subr.bf16.mxu0 0
        %1960 = vmatpush1.bf16.msra.mxu0 0
        %1961 = vmatprep.subr.bf16.mxu0 0
        %1962 = vmatpush1.bf16.msra.mxu0 0
        %1963 = vmatprep.subr.bf16.mxu0 0
        %1964 = vmatpush1.bf16.msra.mxu0 0
        %1965 = vmatprep.subr.bf16.mxu0 0
        %1966 = vmatpush1.bf16.msra.mxu0 0
        %1967 = vmatprep.subr.bf16.mxu0 0
        %1968 = vmatpush1.bf16.msra.mxu0 0
        %1969 = vmatprep.subr.bf16.mxu0 0
        %1970 = vmatpush1.bf16.msra.mxu0 0
        %1971 = vmatprep.mubr.bf16.mxu0 0
        %1972 = vmatmul.mubr.bf16.gmra.mrb[0].mxu0 %v1817
        %v1973 = vpop.f32.mrb[0].mxu0
        %v1974 = vadd.f32 %v1934, %v1973
        %v1975 = vpop.f32.mrb[0].mxu0
        %v1976 = vpop.f32.mrb[0].mxu0
        %v1977 = vpop.f32.mrb[0].mxu0
        %1978 = vdwg.mxu0
        %v1979 = vshrl.u32 %v357, 16
        %v1981 = vshll.u32 %v357, 16
        %v1983 = vrot.slane %v1981, 1
        %v1984 = vor.u32 %v1979, %v1983
        %1986 = vmatprep.subr.bf16.mxu0 0
        %1987 = vmatpush1.bf16.msra.mxu0 %v1350
        %1988 = vmatprep.subr.bf16.mxu0 0
        %1989 = vmatpush1.bf16.msra.mxu0 %v1351
        %1990 = vmatprep.subr.bf16.mxu0 0
        %1991 = vmatpush1.bf16.msra.mxu0 %v1352
        %1992 = vmatprep.subr.bf16.mxu0 0
        %1993 = vmatpush1.bf16.msra.mxu0 %v1353
        %1994 = vmatprep.subr.bf16.mxu0 0
        %1995 = vmatpush1.bf16.msra.mxu0 %v1354
        %1996 = vmatprep.subr.bf16.mxu0 0
        %1997 = vmatpush1.bf16.msra.mxu0 %v1355
        %1998 = vmatprep.subr.bf16.mxu0 0
        %1999 = vmatpush1.bf16.msra.mxu0 %v1356
        %2000 = vmatprep.subr.bf16.mxu0 0
        %2001 = vmatpush1.bf16.msra.mxu0 %v1357
        %2002 = vmatprep.subr.bf16.mxu0 0
        %2003 = vmatpush1.bf16.msra.mxu0 %v1358
        %2004 = vmatprep.subr.bf16.mxu0 0
        %2005 = vmatpush1.bf16.msra.mxu0 %v1359
        %2006 = vmatprep.subr.bf16.mxu0 0
        %2007 = vmatpush1.bf16.msra.mxu0 %v1360
        %2008 = vmatprep.subr.bf16.mxu0 0
        %2009 = vmatpush1.bf16.msra.mxu0 %v1361
        %2010 = vmatprep.subr.bf16.mxu0 0
        %2011 = vmatpush1.bf16.msra.mxu0 %v1362
        %2012 = vmatprep.subr.bf16.mxu0 0
        %2013 = vmatpush1.bf16.msra.mxu0 %v1363
        %2014 = vmatprep.subr.bf16.mxu0 0
        %2015 = vmatpush1.bf16.msra.mxu0 %v1364
        %2016 = vmatprep.subr.bf16.mxu0 0
        %2017 = vmatpush1.bf16.msra.mxu0 %v1365
        %2018 = vmatprep.mubr.bf16.mxu0 %v1817
        %2019 = vmatmul.mubr.bf16.gmra.mrb[0].mxu0 %v1817
        %v2020 = vpop.f32.mrb[0].mxu0
        %v2021 = vadd.f32 0.0, %v2020
        %v2022 = vpop.f32.mrb[0].mxu0
        %v2023 = vpop.f32.mrb[0].mxu0
        %v2024 = vpop.f32.mrb[0].mxu0
        %2025 = vdwg.mxu0
        %2026 = vmatprep.subr.bf16.mxu0 0
        %2027 = vmatpush1.bf16.msra.mxu0 %v1366
        %2028 = vmatprep.subr.bf16.mxu0 0
        %2029 = vmatpush1.bf16.msra.mxu0 %v1367
        %2030 = vmatprep.subr.bf16.mxu0 0
        %2031 = vmatpush1.bf16.msra.mxu0 %v1368
        %2032 = vmatprep.subr.bf16.mxu0 0
        %2033 = vmatpush1.bf16.msra.mxu0 %v1369
        %2034 = vmatprep.subr.bf16.mxu0 0
        %2035 = vmatpush1.bf16.msra.mxu0 %v1370
        %2036 = vmatprep.subr.bf16.mxu0 0
        %2037 = vmatpush1.bf16.msra.mxu0 %v1371
        %2038 = vmatprep.subr.bf16.mxu0 0
        %2039 = vmatpush1.bf16.msra.mxu0 %v1372
        %2040 = vmatprep.subr.bf16.mxu0 0
        %2041 = vmatpush1.bf16.msra.mxu0 %v1373
        %2042 = vmatprep.subr.bf16.mxu0 0
        %2043 = vmatpush1.bf16.msra.mxu0 0
        %2044 = vmatprep.subr.bf16.mxu0 0
        %2045 = vmatpush1.bf16.msra.mxu0 0
        %2046 = vmatprep.subr.bf16.mxu0 0
        %2047 = vmatpush1.bf16.msra.mxu0 0
        %2048 = vmatprep.subr.bf16.mxu0 0
        %2049 = vmatpush1.bf16.msra.mxu0 0
        %2050 = vmatprep.subr.bf16.mxu0 0
        %2051 = vmatpush1.bf16.msra.mxu0 0
        %2052 = vmatprep.subr.bf16.mxu0 0
        %2053 = vmatpush1.bf16.msra.mxu0 0
        %2054 = vmatprep.subr.bf16.mxu0 0
        %2055 = vmatpush1.bf16.msra.mxu0 0
        %2056 = vmatprep.subr.bf16.mxu0 0
        %2057 = vmatpush1.bf16.msra.mxu0 0
        %2058 = vmatprep.mubr.bf16.mxu0 0
        %2059 = vmatmul.mubr.bf16.gmra.mrb[0].mxu0 %v1984
        %v2060 = vpop.f32.mrb[0].mxu0
        %v2061 = vadd.f32 %v2021, %v2060
        %v2062 = vpop.f32.mrb[0].mxu0
        %v2063 = vpop.f32.mrb[0].mxu0
        %v2064 = vpop.f32.mrb[0].mxu0
        %2065 = vdwg.mxu0
        %2074 = vrot.lane.b32.xlu0 %v1473, 32
        %v2075 = vpop.permute.xlu0 %2074
        %2076 = vrot.lane.b32.xlu0 %v1560, 32
        %v2077 = vpop.permute.xlu0 %2076
        %2078 = vrot.lane.b32.xlu0 %v1640, 32
        %v2079 = vpop.permute.xlu0 %2078
        %2080 = vrot.lane.b32.xlu0 %v1727, 32
        %v2081 = vpop.permute.xlu0 %2080
        %2082 = vrot.lane.b32.xlu0 %v1807, 32
        %v2083 = vpop.permute.xlu0 %2082
        %2084 = vrot.lane.b32.xlu0 %v1894, 32
        %v2085 = vpop.permute.xlu0 %2084
        %2086 = vrot.lane.b32.xlu0 %v1974, 32
        %v2087 = vpop.permute.xlu0 %2086
        %2088 = vrot.lane.b32.xlu0 %v2061, 32
        %v2089 = vpop.permute.xlu0 %2088
        %vm2098 = vcmask 261120
        %v2099 = vsel %vm2098, %v675, %v2075
        %v2100 = vsel %vm2098, %v755, %v2077
        %v2101 = vsel %vm2098, %v835, %v2079
        %v2102 = vsel %vm2098, %v915, %v2081
        %v2103 = vsel %vm2098, %v995, %v2083
        %v2104 = vsel %vm2098, %v1075, %v2085
        %v2105 = vsel %vm2098, %v1155, %v2087
        %v2106 = vsel %vm2098, %v1235, %v2089
        %v2107 = vld [vmem:[#allocation2] sm:$0x1]
        %v2108 = vlaneseq
        %v2109 = vshrl.u32 %v2108, 7
        %v2110 = vsub.s32 0, %v2109
        %v2111 = vrot.slane %v2107, %v2110
        %v2112 = vmul.f32 %v2099, %v2111
        %v2113 = vmul.f32 %v2100, %v2111
        %v2114 = vmul.f32 %v2101, %v2111
        %v2115 = vmul.f32 %v2102, %v2111
        %v2116 = vmul.f32 %v2103, %v2111
        %v2117 = vmul.f32 %v2104, %v2111
        %v2118 = vmul.f32 %v2105, %v2111
        %v2119 = vmul.f32 %v2106, %v2111
        %v2120 = vld [vmem:[#allocation2 + $0x1] sm:$0x1]
        %v2121 = vlaneseq
        %v2122 = vshrl.u32 %v2121, 7
        %v2123 = vsub.s32 0, %v2122
        %v2124 = vrot.slane %v2120, %v2123
        %v2125 = vadd.f32 %v2112, %v2124
        %v2126 = vadd.f32 %v2113, %v2124
        %v2127 = vadd.f32 %v2114, %v2124
        %v2128 = vadd.f32 %v2115, %v2124
        %v2129 = vadd.f32 %v2116, %v2124
        %v2130 = vadd.f32 %v2117, %v2124
        %v2131 = vadd.f32 %v2118, %v2124
        %v2132 = vadd.f32 %v2119, %v2124
        %v2133 = vmax.f32 %v2125, 0.0
        %v2134 = vmax.f32 %v2126, 0.0
        %v2135 = vmax.f32 %v2127, 0.0
        %v2136 = vmax.f32 %v2128, 0.0
        %v2137 = vmax.f32 %v2129, 0.0
        %v2138 = vmax.f32 %v2130, 0.0
        %v2139 = vmax.f32 %v2131, 0.0
        %v2140 = vmax.f32 %v2132, 0.0
        %v2141 = vld [vmem:[%s258] sm:$0xf]
        %v2142 = vld [vmem:[%s258 + $0x4] sm:$0xf]
        %v2143 = vld [vmem:[%s258 + $0x8] sm:$0xf]
        %v2144 = vld [vmem:[%s258 + $0xc] sm:$0xf]
        %v2145 = vld [vmem:[%s258 + $0x10] sm:$0xf]
        %v2146 = vld [vmem:[%s258 + $0x14] sm:$0xf]
        %v2147 = vld [vmem:[%s258 + $0x18] sm:$0xf]
        %v2148 = vld [vmem:[%s258 + $0x1c] sm:$0xf]
        %v2149 = vadd.f32 %v2133, %v2141
        %v2150 = vadd.f32 %v2134, %v2142
        %v2151 = vadd.f32 %v2135, %v2143
        %v2152 = vadd.f32 %v2136, %v2144
        %v2153 = vadd.f32 %v2137, %v2145
        %v2154 = vadd.f32 %v2138, %v2146
        %v2155 = vadd.f32 %v2139, %v2147
        %v2156 = vadd.f32 %v2140, %v2148
        %vm2157 = vcmask 519168
        %2158 = vst.msk [vmem:[%s268] sm:$0xf] %vm2157, %v2149
        %2159 = vst.msk [vmem:[%s268 + $0x4] sm:$0xf] %vm2157, %v2150
        %2160 = vst.msk [vmem:[%s268 + $0x8] sm:$0xf] %vm2157, %v2151
        %2161 = vst.msk [vmem:[%s268 + $0xc] sm:$0xf] %vm2157, %v2152
        %2162 = vst.msk [vmem:[%s268 + $0x10] sm:$0xf] %vm2157, %v2153
        %2163 = vst.msk [vmem:[%s268 + $0x14] sm:$0xf] %vm2157, %v2154
        %2164 = vst.msk [vmem:[%s268 + $0x18] sm:$0xf] %vm2157, %v2155
        %2165 = vst.msk [vmem:[%s268 + $0x1c] sm:$0xf] %vm2157, %v2156
        %s2166 = smul.u32 8, %s21
        %p2167 = scmp.lt.s32.totalorder %s20, 1
        %s2168 = scalar_select %p2167, %s20, 1
        %p2169 = scmp.lt.s32.totalorder %s2166, 7
        %s2170 = scalar_select %p2169, %s2166, 7
        %s2171 = smul.addr %s2168, 8
        %s2172 = sadd.s32 %s2170, %s2171
        %s2173 = smul.addr %s2172, 4
        %s2174 = scalar_lea.vmem %s4, %s2173
        // Predicated region
        $region41: #{unet_forward.7} parent=35 // pred_check
          %p2175 = pneg %p144
        $region42: #{unet_forward.7} parent=35 // pred_check_branch
          %2177 = sbr.rel (%p2175) target = $region44
        $region43: #{unet_forward.7} parent=35 // pred_region
          %s2178 = smul.u32 8, %s21
        $region44: #{unet_forward.7} parent=35 // pred_fallthru
          _
      $region36: #{unet_forward.7} parent=5 // pred_fallthru
        _
      %p2179 = scmp.le.s32.totalorder 2, %s11
      // Predicated region
      $region45: #{unet_forward.7} parent=5 // pred_check
        %p2180 = pneg %p2179
      $region46: #{unet_forward.7} parent=5 // pred_check_branch
        %2182 = sbr.rel (%p2180) target = $region48
      $region47: #{unet_forward.7} parent=5 // pred_region
        %s2183 = ssub.s32 %s11, 2
        // Predicated region
        $region49: #{unet_forward.7} parent=47 // pred_check
          %p2184 = pneg %p150
        $region50: #{unet_forward.7} parent=47 // pred_check_branch
          %2186 = sbr.rel (%p2184) target = $region52
        $region51: #{unet_forward.7} parent=47 // pred_region
          %s2187 = smul.u32 8, %s23
          %p2188 = scmp.lt.s32.totalorder %s22, 1
          %s2189 = scalar_select %p2188, %s22, 1
          %p2190 = scmp.lt.s32.totalorder %s2187, 7
          %s2191 = scalar_select %p2190, %s2187, 7
          %s2192 = smul.addr %s2189, 8
          %s2193 = sadd.s32 %s2191, %s2192
          %s2194 = smul.addr %s2193, 4
          %s2195 = scalar_lea.vmem %s4, %s2194
        $region52: #{unet_forward.7} parent=47 // pred_fallthru
          _
      $region48: #{unet_forward.7} parent=5 // pred_fallthru
        _
    $region6: #{unet_forward.7} parent=1 // loop_footer
      %s15 = sadd.s32 1, %s11
    $region7: #{unet_forward.7} parent=1 // loop_footer_branch
      %10 = sbr.rel target = $region3
    $region8: #{unet_forward.7} parent=1 // loop_exit
      _
    %2196 = vsyncpa [#allocation3], 1
    %s2197 = scalar_lea.sflag [#allocation3], 1
    %2198 = vsyncpa %s2197, 1

// kernel: unet_forward.9
$region0: #{unet_forward.9}
  #allocation0 [shape = 'u32[]', space=smem, size = 0x4, offset = 0x4, fixed_abs, tag = 'smem constant byte address 0x4 - core index']
  #allocation1 [shape = 'u32[144,128]{1,0:T(1,128)}', space=vmem, size = 0x12000, scoped, tag = 'internal scratch']
  %s0 = inlined_call_operand.vmem [shape: f32[512,16], index: 0, kind: input, shape index: {}]
  %s1 = inlined_call_operand.vmem [shape: bf16[16,8], index: 1, kind: input, shape index: {}]
  %s2 = inlined_call_operand.vmem [shape: f32[1,8], index: 2, kind: input, shape index: {}]
  %s3 = inlined_call_operand.vmem [shape: f32[512,8], index: 3, kind: input, shape index: {}]
  %s4 = inlined_call_operand.vmem [shape: f32[512,8], index: 4, kind: output, shape index: {}]
  %s5 = sld [smem:[#allocation0]]
  $region49: #{unet_forward.9} parent=0
    _
  %s7 = ssub.s32 1, %s5
  %s8 = scalar_select 0, %s7, %s5
  loop: start=0, step=1, limit=4
  $region2: #{unet_forward.9} parent=0 // loop_pre_header
    _
  $region3: #{unet_forward.9} parent=0 // loop_header
    %s10 = sphi 0, %s14
    %p11 = scmp.ge.s32.totalorder %s10, 4
    %s20 = sphi 0, %s22
    %s23 = sphi 0, %s20
    %s24 = sphi 0, %s23
    %s40 = sphi 0, %s24
    %s44 = sphi 0, %s44
    %s46 = sphi 0, %s44
    %s47 = sphi 0, %s46
    %s61 = sphi 0, %s47
    %s65 = sphi 0, %s65
    %s67 = sphi 0, %s65
    %s68 = sphi 0, %s67
    %s82 = sphi 0, %s68
    %s88 = sphi 0, %s90
    %s91 = sphi 0, %s88
    %s92 = sphi 0, %s91
    %s108 = sphi 0, %s92
    %s114 = sphi 0, %s116
    %s117 = sphi 0, %s114
    %s118 = sphi 0, %s117
    %s134 = sphi 0, %s118
  $region4: #{unet_forward.9} parent=0 // loop_header_branch
    %13 = sbr.rel (%p11) target = $region8
  $region5: #{unet_forward.9} parent=0 // loop_body
    %s15 = ssub.s32 %s10, 1
    %s16 = ssub.s32 %s10, 2
    %s17 = sadd.s32 %s10, 1
    %s18 = ssub.s32 %s10, %s17
    %p19 = scmp.eq.s32.totalorder %s18, 0
    %s21 = sadd.s32 %s20, 1
    %s22 = scalar_select %p19, %s20, %s21
    %p25 = pneg %p19
    %p26 = scmp.eq.s32.totalorder %s10, 1
    %p27 = por %p25, %p26
    %p28 = scmp.ne.s32.totalorder %s20, %s23
    %p29 = scmp.eq.s32.totalorder %s10, 0
    %p30 = por %p28, %p29
    %p31 = scmp.ne.s32.totalorder %s20, %s23
    %p32 = scmp.eq.s32.totalorder %s15, 1
    %p33 = por %p31, %p32
    %p34 = scmp.ne.s32.totalorder %s23, %s24
    %p35 = scmp.eq.s32.totalorder %s15, 0
    %p36 = por %p34, %p35
    %p37 = scmp.ne.s32.totalorder %s23, %s24
    %p38 = scmp.eq.s32.totalorder %s16, 1
    %p39 = por %p37, %p38
    %p41 = scmp.ne.s32.totalorder %s24, %s40
    %p42 = scmp.eq.s32.totalorder %s16, 0
    %p43 = por %p41, %p42
    %s45 = sadd.s32 %s44, 1
    %p48 = scmp.eq.s32.totalorder %s10, 1
    %p49 = scmp.ne.s32.totalorder %s44, %s46
    %p50 = scmp.eq.s32.totalorder %s10, 0
    %p51 = por %p49, %p50
    %p52 = scmp.ne.s32.totalorder %s44, %s46
    %p53 = scmp.eq.s32.totalorder %s15, 1
    %p54 = por %p52, %p53
    %p55 = scmp.ne.s32.totalorder %s46, %s47
    %p56 = scmp.eq.s32.totalorder %s15, 0
    %p57 = por %p55, %p56
    %p58 = scmp.ne.s32.totalorder %s46, %s47
    %p59 = scmp.eq.s32.totalorder %s16, 1
    %p60 = por %p58, %p59
    %p62 = scmp.ne.s32.totalorder %s47, %s61
    %p63 = scmp.eq.s32.totalorder %s16, 0
    %p64 = por %p62, %p63
    %s66 = sadd.s32 %s65, 1
    %p69 = scmp.eq.s32.totalorder %s10, 1
    %p70 = scmp.ne.s32.totalorder %s65, %s67
    %p71 = scmp.eq.s32.totalorder %s10, 0
    %p72 = por %p70, %p71
    %p73 = scmp.ne.s32.totalorder %s65, %s67
    %p74 = scmp.eq.s32.totalorder %s15, 1
    %p75 = por %p73, %p74
    %p76 = scmp.ne.s32.totalorder %s67, %s68
    %p77 = scmp.eq.s32.totalorder %s15, 0
    %p78 = por %p76, %p77
    %p79 = scmp.ne.s32.totalorder %s67, %s68
    %p80 = scmp.eq.s32.totalorder %s16, 1
    %p81 = por %p79, %p80
    %p83 = scmp.ne.s32.totalorder %s68, %s82
    %p84 = scmp.eq.s32.totalorder %s16, 0
    %p85 = por %p83, %p84
    %s86 = ssub.s32 %s10, %s17
    %p87 = scmp.eq.s32.totalorder %s86, 0
    %s89 = sadd.s32 %s88, 1
    %s90 = scalar_select %p87, %s88, %s89
    %p93 = pneg %p87
    %p94 = scmp.eq.s32.totalorder %s10, 1
    %p95 = por %p93, %p94
    %p96 = scmp.ne.s32.totalorder %s88, %s91
    %p97 = scmp.eq.s32.totalorder %s10, 0
    %p98 = por %p96, %p97
    %p99 = scmp.ne.s32.totalorder %s88, %s91
    %p100 = scmp.eq.s32.totalorder %s15, 1
    %p101 = por %p99, %p100
    %p102 = scmp.ne.s32.totalorder %s91, %s92
    %p103 = scmp.eq.s32.totalorder %s15, 0
    %p104 = por %p102, %p103
    %p105 = scmp.ne.s32.totalorder %s91, %s92
    %p106 = scmp.eq.s32.totalorder %s16, 1
    %p107 = por %p105, %p106
    %p109 = scmp.ne.s32.totalorder %s92, %s108
    %p110 = scmp.eq.s32.totalorder %s16, 0
    %p111 = por %p109, %p110
    %s112 = ssub.s32 %s10, %s17
    %p113 = scmp.eq.s32.totalorder %s112, 0
    %s115 = sadd.s32 %s114, 1
    %s116 = scalar_select %p113, %s114, %s115
    %p119 = pneg %p113
    %p120 = scmp.eq.s32.totalorder %s10, 1
    %p121 = por %p119, %p120
    %p122 = scmp.ne.s32.totalorder %s114, %s117
    %p123 = scmp.eq.s32.totalorder %s10, 0
    %p124 = por %p122, %p123
    %p125 = scmp.ne.s32.totalorder %s114, %s117
    %p126 = scmp.eq.s32.totalorder %s15, 1
    %p127 = por %p125, %p126
    %p128 = scmp.ne.s32.totalorder %s117, %s118
    %p129 = scmp.eq.s32.totalorder %s15, 0
    %p130 = por %p128, %p129
    %p131 = scmp.ne.s32.totalorder %s117, %s118
    %p132 = scmp.eq.s32.totalorder %s16, 1
    %p133 = por %p131, %p132
    %p135 = scmp.ne.s32.totalorder %s118, %s134
    %p136 = scmp.eq.s32.totalorder %s16, 0
    %p137 = por %p135, %p136
    %p138 = scmp.le.s32.totalorder 1, %s10
    %p139 = scmp.lt.s32.totalorder %s10, 3
    %p140 = pnand %p138, %p139
    %p141 = pneg %p140
    // Predicated region
    $region9: #{unet_forward.9} parent=5 // pred_check
      _
    $region10: #{unet_forward.9} parent=5 // pred_check_branch
      %143 = sbr.rel (%p140) target = $region12
    $region11: #{unet_forward.9} parent=5 // pred_region
      %s144 = ssub.s32 %s10, 1
      // Predicated region
      $region13: #{unet_forward.9} parent=11 // pred_check
        %p145 = pneg %p57
      $region14: #{unet_forward.9} parent=11 // pred_check_branch
        %147 = sbr.rel (%p145) target = $region16
      $region15: #{unet_forward.9} parent=11 // pred_region
        _
      $region16: #{unet_forward.9} parent=11 // pred_fallthru
        _
      // Predicated region
      $region17: #{unet_forward.9} parent=11 // pred_check
        %p148 = pneg %p78
      $region18: #{unet_forward.9} parent=11 // pred_check_branch
        %150 = sbr.rel (%p148) target = $region20
      $region19: #{unet_forward.9} parent=11 // pred_region
        _
      $region20: #{unet_forward.9} parent=11 // pred_fallthru
        _
    $region12: #{unet_forward.9} parent=5 // pred_fallthru
      _
    %p151 = scmp.lt.s32.totalorder %s10, 2
    // Predicated region
    $region21: #{unet_forward.9} parent=5 // pred_check
      %p152 = pneg %p151
    $region22: #{unet_forward.9} parent=5 // pred_check_branch
      %154 = sbr.rel (%p152) target = $region24
    $region23: #{unet_forward.9} parent=5 // pred_region
      // Predicated region
      $region25: #{unet_forward.9} parent=23 // pred_check
        %p155 = pneg %p30
      $region26: #{unet_forward.9} parent=23 // pred_check_branch
        %157 = sbr.rel (%p155) target = $region28
      $region27: #{unet_forward.9} parent=23 // pred_region
        %s158 = smul.u32 32, %s10
        %p159 = scmp.lt.s32.totalorder %s158, 63
        %s160 = scalar_select %p159, %s158, 63
        %s161 = smul.addr %s160, 8
        %s162 = scalar_lea.vmem %s0, %s161
        %s163 = smul.u32 32, %s10
      $region28: #{unet_forward.9} parent=23 // pred_fallthru
        _
      // Predicated region
      $region29: #{unet_forward.9} parent=23 // pred_check
        %p164 = pneg %p98
      $region30: #{unet_forward.9} parent=23 // pred_check_branch
        %166 = sbr.rel (%p164) target = $region32
      $region31: #{unet_forward.9} parent=23 // pred_region
        %s167 = smul.u32 32, %s10
        %p168 = scmp.lt.s32.totalorder %s167, 63
        %s169 = scalar_select %p168, %s167, 63
        %s170 = smul.addr %s169, 8
        %s171 = scalar_lea.vmem %s3, %s170
        %s172 = smul.u32 32, %s10
      $region32: #{unet_forward.9} parent=23 // pred_fallthru
        _
    $region24: #{unet_forward.9} parent=5 // pred_fallthru
      _
    %p173 = scmp.le.s32.totalorder 1, %s10
    %p174 = scmp.lt.s32.totalorder %s10, 3
    %p175 = pnand %p173, %p174
    %p176 = pneg %p175
    // Predicated region
    $region33: #{unet_forward.9} parent=5 // pred_check
      _
    $region34: #{unet_forward.9} parent=5 // pred_check_branch
      %178 = sbr.rel (%p175) target = $region36
    $region35: #{unet_forward.9} parent=5 // pred_region
      %s179 = ssub.s32 %s10, 1
      %s180 = smul.u32 32, %s15
      %p181 = scmp.lt.s32.totalorder %s180, 63
      %s182 = scalar_select %p181, %s180, 63
      %s183 = smul.addr %s182, 8
      %s184 = scalar_lea.vmem %s0, %s183
      %p185 = pneg %p36
      %p186 = pneg %p33
      %p187 = pneg %p57
      %p188 = pneg %p54
      %p189 = pneg %p78
      %p190 = pneg %p75
      %s191 = smul.u32 32, %s15
      %p192 = scmp.lt.s32.totalorder %s191, 63
      %s193 = scalar_select %p192, %s191, 63
      %s194 = smul.addr %s193, 8
      %s195 = scalar_lea.vmem %s3, %s194
      %p196 = pneg %p104
      %p197 = pneg %p101
      %p198 = pneg %p130
      %p199 = pneg %p127
      %s200 = smul.u32 32, %s15
      %p201 = scmp.lt.s32.totalorder %s200, 63
      %s202 = scalar_select %p201, %s200, 63
      %s203 = smul.addr %s202, 8
      %s204 = scalar_lea.vmem %s4, %s203
      %s205 = smul.u32 32, %s15
      %p206 = scmp.lt.s32.totalorder %s205, 63
      %s207 = scalar_select %p206, %s205, 63
      %s208 = smul.addr %s207, 8
      %s209 = scalar_lea.vmem %s0, %s208
      %s210 = smul.u32 32, %s15
      %s211 = smul.u32 32, %s15
      %p212 = scmp.lt.s32.totalorder %s211, 63
      %s213 = scalar_select %p212, %s211, 63
      %s214 = smul.addr %s213, 8
      %s215 = scalar_lea.vmem %s3, %s214
      %s216 = smul.u32 32, %s15
      %s217 = smul.u32 32, %s15
      %p218 = scmp.lt.s32.totalorder %s217, 63
      %s219 = scalar_select %p218, %s217, 63
      %s220 = smul.addr %s219, 8
      %s221 = scalar_lea.vmem %s4, %s220
      %s222 = smul.u32 32, %s15
      %v224 = vld [vmem:[%s209] sm:$0xff]
      %v225 = vld [vmem:[%s209 + $0x8] sm:$0xff]
      %v226 = vld [vmem:[%s209 + $0x10] sm:$0xff]
      %v227 = vld [vmem:[%s209 + $0x18] sm:$0xff]
      %v228 = vld [vmem:[%s209 + $0x20] sm:$0xff]
      %v229 = vld [vmem:[%s209 + $0x28] sm:$0xff]
      %v230 = vld [vmem:[%s209 + $0x30] sm:$0xff]
      %v231 = vld [vmem:[%s209 + $0x38] sm:$0xff]
      %v232 = vld [vmem:[%s209 + $0x40] sm:$0xff]
      %v233 = vld [vmem:[%s209 + $0x48] sm:$0xff]
      %v234 = vld [vmem:[%s209 + $0x50] sm:$0xff]
      %v235 = vld [vmem:[%s209 + $0x58] sm:$0xff]
      %v236 = vld [vmem:[%s209 + $0x60] sm:$0xff]
      %v237 = vld [vmem:[%s209 + $0x68] sm:$0xff]
      %v238 = vld [vmem:[%s209 + $0x70] sm:$0xff]
      %v239 = vld [vmem:[%s209 + $0x78] sm:$0xff]
      %v240 = vld [vmem:[%s209 + $0x80] sm:$0xff]
      %v241 = vld [vmem:[%s209 + $0x88] sm:$0xff]
      %v242 = vld [vmem:[%s209 + $0x90] sm:$0xff]
      %v243 = vld [vmem:[%s209 + $0x98] sm:$0xff]
      %v244 = vld [vmem:[%s209 + $0xa0] sm:$0xff]
      %v245 = vld [vmem:[%s209 + $0xa8] sm:$0xff]
      %v246 = vld [vmem:[%s209 + $0xb0] sm:$0xff]
      %v247 = vld [vmem:[%s209 + $0xb8] sm:$0xff]
      %v248 = vld [vmem:[%s209 + $0xc0] sm:$0xff]
      %v249 = vld [vmem:[%s209 + $0xc8] sm:$0xff]
      %v250 = vld [vmem:[%s209 + $0xd0] sm:$0xff]
      %v251 = vld [vmem:[%s209 + $0xd8] sm:$0xff]
      %v252 = vld [vmem:[%s209 + $0xe0] sm:$0xff]
      %v253 = vld [vmem:[%s209 + $0xe8] sm:$0xff]
      %v254 = vld [vmem:[%s209 + $0xf0] sm:$0xff]
      %v255 = vld [vmem:[%s209 + $0xf8] sm:$0xff]
      %v256 = vpack.c.bf16 %v225, %v224
      %v257 = vpack.c.bf16 %v227, %v226
      %v258 = vpack.c.bf16 %v229, %v228
      %v259 = vpack.c.bf16 %v231, %v230
      %v260 = vpack.c.bf16 %v233, %v232
      %v261 = vpack.c.bf16 %v235, %v234
      %v262 = vpack.c.bf16 %v237, %v236
      %v263 = vpack.c.bf16 %v239, %v238
      %v264 = vpack.c.bf16 %v241, %v240
      %v265 = vpack.c.bf16 %v243, %v242
      %v266 = vpack.c.bf16 %v245, %v244
      %v267 = vpack.c.bf16 %v247, %v246
      %v268 = vpack.c.bf16 %v249, %v248
      %v269 = vpack.c.bf16 %v251, %v250
      %v270 = vpack.c.bf16 %v253, %v252
      %v271 = vpack.c.bf16 %v255, %v254
      %v272 = vld [vmem:[%s1] sm:$0xf]
      %v273 = vld [vmem:[%s1 + $0x4] sm:$0xf]
      %v274 = vld [vmem:[%s2] sm:$0x1]
      %v276 = vlaneseq
      %v277 = vshrl.u32 %v276, 7
      %v278 = vsub.s32 0, %v277
      %v279 = vrot.slane %v274, %v278
      %v283 = vunpack.c.l.b16 %v272
      %v284 = vunpack.c.l.b16 %v273
      %v285 = vpack.c.b16 %v284, %v283
      %vm287 = vcmask 130048
      %v289 = vsel %vm287, %v256, 0
      %v292 = vsel %vm287, %v257, 0
      %v295 = vsel %vm287, %v258, 0
      %v298 = vsel %vm287, %v259, 0
      %v301 = vsel %vm287, %v260, 0
      %v304 = vsel %vm287, %v261, 0
      %v307 = vsel %vm287, %v262, 0
      %v310 = vsel %vm287, %v263, 0
      %v313 = vsel %vm287, %v264, 0
      %v316 = vsel %vm287, %v265, 0
      %v319 = vsel %vm287, %v266, 0
      %v322 = vsel %vm287, %v267, 0
      %v325 = vsel %vm287, %v268, 0
      %v328 = vsel %vm287, %v269, 0
      %v331 = vsel %vm287, %v270, 0
      %v334 = vsel %vm287, %v271, 0
      %336 = vmatprep.subr.bf16.mxu0 0
      %337 = vmatpush1.bf16.msra.mxu0 %v285
      %338 = vmatprep.subr.bf16.mxu0 0
      %339 = vmatpush1.bf16.msra.mxu0 0
      %340 = vmatprep.subr.bf16.mxu0 0
      %341 = vmatpush1.bf16.msra.mxu0 0
      %342 = vmatprep.subr.bf16.mxu0 0
      %343 = vmatpush1.bf16.msra.mxu0 0
      %344 = vmatprep.subr.bf16.mxu0 0
      %345 = vmatpush1.bf16.msra.mxu0 0
      %346 = vmatprep.subr.bf16.mxu0 0
      %347 = vmatpush1.bf16.msra.mxu0 0
      %348 = vmatprep.subr.bf16.mxu0 0
      %349 = vmatpush1.bf16.msra.mxu0 0
      %350 = vmatprep.subr.bf16.mxu0 0
      %351 = vmatpush1.bf16.msra.mxu0 0
      %352 = vmatprep.subr.bf16.mxu0 0
      %353 = vmatpush1.bf16.msra.mxu0 0
      %354 = vmatprep.subr.bf16.mxu0 0
      %355 = vmatpush1.bf16.msra.mxu0 0
      %356 = vmatprep.subr.bf16.mxu0 0
      %357 = vmatpush1.bf16.msra.mxu0 0
      %358 = vmatprep.subr.bf16.mxu0 0
      %359 = vmatpush1.bf16.msra.mxu0 0
      %360 = vmatprep.subr.bf16.mxu0 0
      %361 = vmatpush1.bf16.msra.mxu0 0
      %362 = vmatprep.subr.bf16.mxu0 0
      %363 = vmatpush1.bf16.msra.mxu0 0
      %364 = vmatprep.subr.bf16.mxu0 0
      %365 = vmatpush1.bf16.msra.mxu0 0
      %366 = vmatprep.subr.bf16.mxu0 0
      %367 = vmatpush1.bf16.msra.mxu0 0
      %368 = vmatprep.mubr.bf16.mxu0 0
      %369 = vmatmul.mubr.bf16.gmra.mrb[0].mxu0 %v289
      %v370 = vpop.f32.mrb[0].mxu0
      %v371 = vadd.f32 %v279, %v370
      %v372 = vpop.f32.mrb[0].mxu0
      %v373 = vpop.f32.mrb[0].mxu0
      %v374 = vadd.f32 %v279, %v373
      %v375 = vpop.f32.mrb[0].mxu0
      %376 = vmatprep.mubr.bf16.mxu0 0
      %377 = vmatmul.mubr.bf16.gmra.mrb[0].mxu0 %v292
      %v378 = vpop.f32.mrb[0].mxu0
      %v379 = vadd.f32 %v279, %v378
      %v380 = vpop.f32.mrb[0].mxu0
      %v381 = vpop.f32.mrb[0].mxu0
      %v382 = vadd.f32 %v279, %v381
      %v383 = vpop.f32.mrb[0].mxu0
      %384 = vmatprep.mubr.bf16.mxu0 0
      %385 = vmatmul.mubr.bf16.gmra.mrb[0].mxu0 %v295
      %v386 = vpop.f32.mrb[0].mxu0
      %v387 = vadd.f32 %v279, %v386
      %v388 = vpop.f32.mrb[0].mxu0
      %v389 = vpop.f32.mrb[0].mxu0
      %v390 = vadd.f32 %v279, %v389
      %v391 = vpop.f32.mrb[0].mxu0
      %392 = vmatprep.mubr.bf16.mxu0 0
      %393 = vmatmul.mubr.bf16.gmra.mrb[0].mxu0 %v298
      %v394 = vpop.f32.mrb[0].mxu0
      %v395 = vadd.f32 %v279, %v394
      %v396 = vpop.f32.mrb[0].mxu0
      %v397 = vpop.f32.mrb[0].mxu0
      %v398 = vadd.f32 %v279, %v397
      %v399 = vpop.f32.mrb[0].mxu0
      %400 = vmatprep.mubr.bf16.mxu0 0
      %401 = vmatmul.mubr.bf16.gmra.mrb[0].mxu0 %v301
      %v402 = vpop.f32.mrb[0].mxu0
      %v403 = vadd.f32 %v279, %v402
      %v404 = vpop.f32.mrb[0].mxu0
      %v405 = vpop.f32.mrb[0].mxu0
      %v406 = vadd.f32 %v279, %v405
      %v407 = vpop.f32.mrb[0].mxu0
      %408 = vmatprep.mubr.bf16.mxu0 0
      %409 = vmatmul.mubr.bf16.gmra.mrb[0].mxu0 %v304
      %v410 = vpop.f32.mrb[0].mxu0
      %v411 = vadd.f32 %v279, %v410
      %v412 = vpop.f32.mrb[0].mxu0
      %v413 = vpop.f32.mrb[0].mxu0
      %v414 = vadd.f32 %v279, %v413
      %v415 = vpop.f32.mrb[0].mxu0
      %416 = vmatprep.mubr.bf16.mxu0 0
      %417 = vmatmul.mubr.bf16.gmra.mrb[0].mxu0 %v307
      %v418 = vpop.f32.mrb[0].mxu0
      %v419 = vadd.f32 %v279, %v418
      %v420 = vpop.f32.mrb[0].mxu0
      %v421 = vpop.f32.mrb[0].mxu0
      %v422 = vadd.f32 %v279, %v421
      %v423 = vpop.f32.mrb[0].mxu0
      %424 = vmatprep.mubr.bf16.mxu0 0
      %425 = vmatmul.mubr.bf16.gmra.mrb[0].mxu0 %v310
      %v426 = vpop.f32.mrb[0].mxu0
      %v427 = vadd.f32 %v279, %v426
      %v428 = vpop.f32.mrb[0].mxu0
      %v429 = vpop.f32.mrb[0].mxu0
      %v430 = vadd.f32 %v279, %v429
      %v431 = vpop.f32.mrb[0].mxu0
      %432 = vmatprep.mubr.bf16.mxu0 0
      %433 = vmatmul.mubr.bf16.gmra.mrb[0].mxu0 %v313
      %v434 = vpop.f32.mrb[0].mxu0
      %v435 = vadd.f32 %v279, %v434
      %v436 = vpop.f32.mrb[0].mxu0
      %v437 = vpop.f32.mrb[0].mxu0
      %v438 = vadd.f32 %v279, %v437
      %v439 = vpop.f32.mrb[0].mxu0
      %440 = vmatprep.mubr.bf16.mxu0 0
      %441 = vmatmul.mubr.bf16.gmra.mrb[0].mxu0 %v316
      %v442 = vpop.f32.mrb[0].mxu0
      %v443 = vadd.f32 %v279, %v442
      %v444 = vpop.f32.mrb[0].mxu0
      %v445 = vpop.f32.mrb[0].mxu0
      %v446 = vadd.f32 %v279, %v445
      %v447 = vpop.f32.mrb[0].mxu0
      %448 = vmatprep.mubr.bf16.mxu0 0
      %449 = vmatmul.mubr.bf16.gmra.mrb[0].mxu0 %v319
      %v450 = vpop.f32.mrb[0].mxu0
      %v451 = vadd.f32 %v279, %v450
      %v452 = vpop.f32.mrb[0].mxu0
      %v453 = vpop.f32.mrb[0].mxu0
      %v454 = vadd.f32 %v279, %v453
      %v455 = vpop.f32.mrb[0].mxu0
      %456 = vmatprep.mubr.bf16.mxu0 0
      %457 = vmatmul.mubr.bf16.gmra.mrb[0].mxu0 %v322
      %v458 = vpop.f32.mrb[0].mxu0
      %v459 = vadd.f32 %v279, %v458
      %v460 = vpop.f32.mrb[0].mxu0
      %v461 = vpop.f32.mrb[0].mxu0
      %v462 = vadd.f32 %v279, %v461
      %v463 = vpop.f32.mrb[0].mxu0
      %464 = vmatprep.mubr.bf16.mxu0 0
      %465 = vmatmul.mubr.bf16.gmra.mrb[0].mxu0 %v325
      %v466 = vpop.f32.mrb[0].mxu0
      %v467 = vadd.f32 %v279, %v466
      %v468 = vpop.f32.mrb[0].mxu0
      %v469 = vpop.f32.mrb[0].mxu0
      %v470 = vadd.f32 %v279, %v469
      %v471 = vpop.f32.mrb[0].mxu0
      %472 = vmatprep.mubr.bf16.mxu0 0
      %473 = vmatmul.mubr.bf16.gmra.mrb[0].mxu0 %v328
      %v474 = vpop.f32.mrb[0].mxu0
      %v475 = vadd.f32 %v279, %v474
      %v476 = vpop.f32.mrb[0].mxu0
      %v477 = vpop.f32.mrb[0].mxu0
      %v478 = vadd.f32 %v279, %v477
      %v479 = vpop.f32.mrb[0].mxu0
      %480 = vmatprep.mubr.bf16.mxu0 0
      %481 = vmatmul.mubr.bf16.gmra.mrb[0].mxu0 %v331
      %v482 = vpop.f32.mrb[0].mxu0
      %v483 = vadd.f32 %v279, %v482
      %v484 = vpop.f32.mrb[0].mxu0
      %v485 = vpop.f32.mrb[0].mxu0
      %v486 = vadd.f32 %v279, %v485
      %v487 = vpop.f32.mrb[0].mxu0
      %488 = vmatprep.mubr.bf16.mxu0 0
      %489 = vmatmul.mubr.bf16.gmra.mrb[0].mxu0 %v334
      %v490 = vpop.f32.mrb[0].mxu0
      %v491 = vadd.f32 %v279, %v490
      %v492 = vpop.f32.mrb[0].mxu0
      %v493 = vpop.f32.mrb[0].mxu0
      %v494 = vadd.f32 %v279, %v493
      %v495 = vpop.f32.mrb[0].mxu0
      %496 = vdwg.mxu0
      %vm497 = vcmp.gt.f32.partialorder %v371, 0.0
      %vm498 = vcmp.gt.f32.partialorder %v374, 0.0
      %vm499 = vcmp.gt.f32.partialorder %v379, 0.0
      %vm500 = vcmp.gt.f32.partialorder %v382, 0.0
      %vm501 = vcmp.gt.f32.partialorder %v387, 0.0
      %vm502 = vcmp.gt.f32.partialorder %v390, 0.0
      %vm503 = vcmp.gt.f32.partialorder %v395, 0.0
      %vm504 = vcmp.gt.f32.partialorder %v398, 0.0
      %vm505 = vcmp.gt.f32.partialorder %v403, 0.0
      %vm506 = vcmp.gt.f32.partialorder %v406, 0.0
      %vm507 = vcmp.gt.f32.partialorder %v411, 0.0
      %vm508 = vcmp.gt.f32.partialorder %v414, 0.0
      %vm509 = vcmp.gt.f32.partialorder %v419, 0.0
      %vm510 = vcmp.gt.f32.partialorder %v422, 0.0
      %vm511 = vcmp.gt.f32.partialorder %v427, 0.0
      %vm512 = vcmp.gt.f32.partialorder %v430, 0.0
      %vm513 = vcmp.gt.f32.partialorder %v435, 0.0
      %vm514 = vcmp.gt.f32.partialorder %v438, 0.0
      %vm515 = vcmp.gt.f32.partialorder %v443, 0.0
      %vm516 = vcmp.gt.f32.partialorder %v446, 0.0
      %vm517 = vcmp.gt.f32.partialorder %v451, 0.0
      %vm518 = vcmp.gt.f32.partialorder %v454, 0.0
      %vm519 = vcmp.gt.f32.partialorder %v459, 0.0
      %vm520 = vcmp.gt.f32.partialorder %v462, 0.0
      %vm521 = vcmp.gt.f32.partialorder %v467, 0.0
      %vm522 = vcmp.gt.f32.partialorder %v470, 0.0
      %vm523 = vcmp.gt.f32.partialorder %v475, 0.0
      %vm524 = vcmp.gt.f32.partialorder %v478, 0.0
      %vm525 = vcmp.gt.f32.partialorder %v483, 0.0
      %vm526 = vcmp.gt.f32.partialorder %v486, 0.0
      %vm527 = vcmp.gt.f32.partialorder %v491, 0.0
      %vm528 = vcmp.gt.f32.partialorder %v494, 0.0
      %v529 = vmul.f32 %v371, 0.01
      %v530 = vmul.f32 %v374, 0.01
      %v531 = vmul.f32 %v379, 0.01
      %v532 = vmul.f32 %v382, 0.01
      %v533 = vmul.f32 %v387, 0.01
      %v534 = vmul.f32 %v390, 0.01
      %v535 = vmul.f32 %v395, 0.01
      %v536 = vmul.f32 %v398, 0.01
      %v537 = vmul.f32 %v403, 0.01
      %v538 = vmul.f32 %v406, 0.01
      %v539 = vmul.f32 %v411, 0.01
      %v540 = vmul.f32 %v414, 0.01
      %v541 = vmul.f32 %v419, 0.01
      %v542 = vmul.f32 %v422, 0.01
      %v543 = vmul.f32 %v427, 0.01
      %v544 = vmul.f32 %v430, 0.01
      %v545 = vmul.f32 %v435, 0.01
      %v546 = vmul.f32 %v438, 0.01
      %v547 = vmul.f32 %v443, 0.01
      %v548 = vmul.f32 %v446, 0.01
      %v549 = vmul.f32 %v451, 0.01
      %v550 = vmul.f32 %v454, 0.01
      %v551 = vmul.f32 %v459, 0.01
      %v552 = vmul.f32 %v462, 0.01
      %v553 = vmul.f32 %v467, 0.01
      %v554 = vmul.f32 %v470, 0.01
      %v555 = vmul.f32 %v475, 0.01
      %v556 = vmul.f32 %v478, 0.01
      %v557 = vmul.f32 %v483, 0.01
      %v558 = vmul.f32 %v486, 0.01
      %v559 = vmul.f32 %v491, 0.01
      %v560 = vmul.f32 %v494, 0.01
      %v561 = vsel %vm497, %v371, %v529
      %v562 = vsel %vm498, %v374, %v530
      %v563 = vsel %vm499, %v379, %v531
      %v564 = vsel %vm500, %v382, %v532
      %v565 = vsel %vm501, %v387, %v533
      %v566 = vsel %vm502, %v390, %v534
      %v567 = vsel %vm503, %v395, %v535
      %v568 = vsel %vm504, %v398, %v536
      %v569 = vsel %vm505, %v403, %v537
      %v570 = vsel %vm506, %v406, %v538
      %v571 = vsel %vm507, %v411, %v539
      %v572 = vsel %vm508, %v414, %v540
      %v573 = vsel %vm509, %v419, %v541
      %v574 = vsel %vm510, %v422, %v542
      %v575 = vsel %vm511, %v427, %v543
      %v576 = vsel %vm512, %v430, %v544
      %v577 = vsel %vm513, %v435, %v545
      %v578 = vsel %vm514, %v438, %v546
      %v579 = vsel %vm515, %v443, %v547
      %v580 = vsel %vm516, %v446, %v548
      %v581 = vsel %vm517, %v451, %v549
      %v582 = vsel %vm518, %v454, %v550
      %v583 = vsel %vm519, %v459, %v551
      %v584 = vsel %vm520, %v462, %v552
      %v585 = vsel %vm521, %v467, %v553
      %v586 = vsel %vm522, %v470, %v554
      %v587 = vsel %vm523, %v475, %v555
      %v588 = vsel %vm524, %v478, %v556
      %v589 = vsel %vm525, %v483, %v557
      %v590 = vsel %vm526, %v486, %v558
      %v591 = vsel %vm527, %v491, %v559
      %v592 = vsel %vm528, %v494, %v560
      %v593 = vld [vmem:[%s215] sm:$0xff]
      %v594 = vld [vmem:[%s215 + $0x8] sm:$0xff]
      %v595 = vld [vmem:[%s215 + $0x10] sm:$0xff]
      %v596 = vld [vmem:[%s215 + $0x18] sm:$0xff]
      %v597 = vld [vmem:[%s215 + $0x20] sm:$0xff]
      %v598 = vld [vmem:[%s215 + $0x28] sm:$0xff]
      %v599 = vld [vmem:[%s215 + $0x30] sm:$0xff]
      %v600 = vld [vmem:[%s215 + $0x38] sm:$0xff]
      %v601 = vld [vmem:[%s215 + $0x40] sm:$0xff]
      %v602 = vld [vmem:[%s215 + $0x48] sm:$0xff]
      %v603 = vld [vmem:[%s215 + $0x50] sm:$0xff]
      %v604 = vld [vmem:[%s215 + $0x58] sm:$0xff]
      %v605 = vld [vmem:[%s215 + $0x60] sm:$0xff]
      %v606 = vld [vmem:[%s215 + $0x68] sm:$0xff]
      %v607 = vld [vmem:[%s215 + $0x70] sm:$0xff]
      %v608 = vld [vmem:[%s215 + $0x78] sm:$0xff]
      %v609 = vld [vmem:[%s215 + $0x80] sm:$0xff]
      %v610 = vld [vmem:[%s215 + $0x88] sm:$0xff]
      %v611 = vld [vmem:[%s215 + $0x90] sm:$0xff]
      %v612 = vld [vmem:[%s215 + $0x98] sm:$0xff]
      %v613 = vld [vmem:[%s215 + $0xa0] sm:$0xff]
      %v614 = vld [vmem:[%s215 + $0xa8] sm:$0xff]
      %v615 = vld [vmem:[%s215 + $0xb0] sm:$0xff]
      %v616 = vld [vmem:[%s215 + $0xb8] sm:$0xff]
      %v617 = vld [vmem:[%s215 + $0xc0] sm:$0xff]
      %v618 = vld [vmem:[%s215 + $0xc8] sm:$0xff]
      %v619 = vld [vmem:[%s215 + $0xd0] sm:$0xff]
      %v620 = vld [vmem:[%s215 + $0xd8] sm:$0xff]
      %v621 = vld [vmem:[%s215 + $0xe0] sm:$0xff]
      %v622 = vld [vmem:[%s215 + $0xe8] sm:$0xff]
      %v623 = vld [vmem:[%s215 + $0xf0] sm:$0xff]
      %v624 = vld [vmem:[%s215 + $0xf8] sm:$0xff]
      %v625 = vadd.f32 %v561, %v593
      %v626 = vadd.f32 %v562, %v594
      %v627 = vadd.f32 %v563, %v595
      %v628 = vadd.f32 %v564, %v596
      %v629 = vadd.f32 %v565, %v597
      %v630 = vadd.f32 %v566, %v598
      %v631 = vadd.f32 %v567, %v599
      %v632 = vadd.f32 %v568, %v600
      %v633 = vadd.f32 %v569, %v601
      %v634 = vadd.f32 %v570, %v602
      %v635 = vadd.f32 %v571, %v603
      %v636 = vadd.f32 %v572, %v604
      %v637 = vadd.f32 %v573, %v605
      %v638 = vadd.f32 %v574, %v606
      %v639 = vadd.f32 %v575, %v607
      %v640 = vadd.f32 %v576, %v608
      %v641 = vadd.f32 %v577, %v609
      %v642 = vadd.f32 %v578, %v610
      %v643 = vadd.f32 %v579, %v611
      %v644 = vadd.f32 %v580, %v612
      %v645 = vadd.f32 %v581, %v613
      %v646 = vadd.f32 %v582, %v614
      %v647 = vadd.f32 %v583, %v615
      %v648 = vadd.f32 %v584, %v616
      %v649 = vadd.f32 %v585, %v617
      %v650 = vadd.f32 %v586, %v618
      %v651 = vadd.f32 %v587, %v619
      %v652 = vadd.f32 %v588, %v620
      %v653 = vadd.f32 %v589, %v621
      %v654 = vadd.f32 %v590, %v622
      %v655 = vadd.f32 %v591, %v623
      %v656 = vadd.f32 %v592, %v624
      %vm657 = vcmask 64512
      %658 = vst.msk [vmem:[%s221] sm:$0xff] %vm657, %v625
      %659 = vst.msk [vmem:[%s221 + $0x8] sm:$0xff] %vm657, %v626
      %660 = vst.msk [vmem:[%s221 + $0x10] sm:$0xff] %vm657, %v627
      %661 = vst.msk [vmem:[%s221 + $0x18] sm:$0xff] %vm657, %v628
      %662 = vst.msk [vmem:[%s221 + $0x20] sm:$0xff] %vm657, %v629
      %663 = vst.msk [vmem:[%s221 + $0x28] sm:$0xff] %vm657, %v630
      %664 = vst.msk [vmem:[%s221 + $0x30] sm:$0xff] %vm657, %v631
      %665 = vst.msk [vmem:[%s221 + $0x38] sm:$0xff] %vm657, %v632
      %666 = vst.msk [vmem:[%s221 + $0x40] sm:$0xff] %vm657, %v633
      %667 = vst.msk [vmem:[%s221 + $0x48] sm:$0xff] %vm657, %v634
      %668 = vst.msk [vmem:[%s221 + $0x50] sm:$0xff] %vm657, %v635
      %669 = vst.msk [vmem:[%s221 + $0x58] sm:$0xff] %vm657, %v636
      %670 = vst.msk [vmem:[%s221 + $0x60] sm:$0xff] %vm657, %v637
      %671 = vst.msk [vmem:[%s221 + $0x68] sm:$0xff] %vm657, %v638
      %672 = vst.msk [vmem:[%s221 + $0x70] sm:$0xff] %vm657, %v639
      %673 = vst.msk [vmem:[%s221 + $0x78] sm:$0xff] %vm657, %v640
      %674 = vst.msk [vmem:[%s221 + $0x80] sm:$0xff] %vm657, %v641
      %675 = vst.msk [vmem:[%s221 + $0x88] sm:$0xff] %vm657, %v642
      %676 = vst.msk [vmem:[%s221 + $0x90] sm:$0xff] %vm657, %v643
      %677 = vst.msk [vmem:[%s221 + $0x98] sm:$0xff] %vm657, %v644
      %678 = vst.msk [vmem:[%s221 + $0xa0] sm:$0xff] %vm657, %v645
      %679 = vst.msk [vmem:[%s221 + $0xa8] sm:$0xff] %vm657, %v646
      %680 = vst.msk [vmem:[%s221 + $0xb0] sm:$0xff] %vm657, %v647
      %681 = vst.msk [vmem:[%s221 + $0xb8] sm:$0xff] %vm657, %v648
      %682 = vst.msk [vmem:[%s221 + $0xc0] sm:$0xff] %vm657, %v649
      %683 = vst.msk [vmem:[%s221 + $0xc8] sm:$0xff] %vm657, %v650
      %684 = vst.msk [vmem:[%s221 + $0xd0] sm:$0xff] %vm657, %v651
      %685 = vst.msk [vmem:[%s221 + $0xd8] sm:$0xff] %vm657, %v652
      %686 = vst.msk [vmem:[%s221 + $0xe0] sm:$0xff] %vm657, %v653
      %687 = vst.msk [vmem:[%s221 + $0xe8] sm:$0xff] %vm657, %v654
      %688 = vst.msk [vmem:[%s221 + $0xf0] sm:$0xff] %vm657, %v655
      %689 = vst.msk [vmem:[%s221 + $0xf8] sm:$0xff] %vm657, %v656
      %s690 = smul.u32 32, %s15
      %p691 = scmp.lt.s32.totalorder %s690, 63
      %s692 = scalar_select %p691, %s690, 63
      %s693 = smul.addr %s692, 8
      %s694 = scalar_lea.vmem %s4, %s693
      // Predicated region
      $region37: #{unet_forward.9} parent=35 // pred_check
        %p695 = pneg %p127
      $region38: #{unet_forward.9} parent=35 // pred_check_branch
        %697 = sbr.rel (%p695) target = $region40
      $region39: #{unet_forward.9} parent=35 // pred_region
        %s698 = smul.u32 32, %s15
      $region40: #{unet_forward.9} parent=35 // pred_fallthru
        _
    $region36: #{unet_forward.9} parent=5 // pred_fallthru
      _
    %p699 = scmp.le.s32.totalorder 2, %s10
    // Predicated region
    $region41: #{unet_forward.9} parent=5 // pred_check
      %p700 = pneg %p699
    $region42: #{unet_forward.9} parent=5 // pred_check_branch
      %702 = sbr.rel (%p700) target = $region44
    $region43: #{unet_forward.9} parent=5 // pred_region
      %s703 = ssub.s32 %s10, 2
      // Predicated region
      $region45: #{unet_forward.9} parent=43 // pred_check
        %p704 = pneg %p133
      $region46: #{unet_forward.9} parent=43 // pred_check_branch
        %706 = sbr.rel (%p704) target = $region48
      $region47: #{unet_forward.9} parent=43 // pred_region
        %s707 = smul.u32 32, %s16
        %p708 = scmp.lt.s32.totalorder %s707, 63
        %s709 = scalar_select %p708, %s707, 63
        %s710 = smul.addr %s709, 8
        %s711 = scalar_lea.vmem %s4, %s710
      $region48: #{unet_forward.9} parent=43 // pred_fallthru
        _
    $region44: #{unet_forward.9} parent=5 // pred_fallthru
      _
  $region6: #{unet_forward.9} parent=0 // loop_footer
    %s14 = sadd.s32 1, %s10
  $region7: #{unet_forward.9} parent=0 // loop_footer_branch
    %9 = sbr.rel target = $region3
  $region8: #{unet_forward.9} parent=0 // loop_exit
    _

// kernel: unet_forward.8
$region0: #{unet_forward.8}
  #allocation0 [shape = 'u32[]', space=smem, size = 0x4, offset = 0x4, fixed_abs, tag = 'smem constant byte address 0x4 - core index']
  #allocation1 [shape = 'u32[144,128]{1,0:T(1,128)}', space=vmem, size = 0x12000, scoped, tag = 'internal scratch']
  %s0 = inlined_call_operand.vmem [shape: f32[2,10,10,32], index: 0, kind: input, shape index: {}]
  %s1 = inlined_call_operand.vmem [shape: bf16[2,192,16], index: 1, kind: input, shape index: {}]
  %s2 = inlined_call_operand.vmem [shape: f32[2,32], index: 2, kind: input, shape index: {}]
  %s3 = inlined_call_operand.vmem [shape: f32[2,16,8,32], index: 3, kind: input, shape index: {}]
  %s4 = inlined_call_operand.vmem [shape: f32[2,16,8,32], index: 4, kind: output, shape index: {}]
  %s5 = sld [smem:[#allocation0]]
  $region49: #{unet_forward.8} parent=0
    _
  %s7 = ssub.s32 1, %s5
  %s8 = scalar_select 0, %s7, %s5
  loop: start=0, step=1, limit=4
  $region2: #{unet_forward.8} parent=0 // loop_pre_header
    _
  $region3: #{unet_forward.8} parent=0 // loop_header
    %s10 = sphi 0, %s14
    %p11 = scmp.ge.s32.totalorder %s10, 4
    %s17 = sphi 0, %s29
    %s18 = sphi 0, %s25
    %s19 = sphi 0, %s17
    %s20 = sphi 0, %s18
    %s21 = sphi 0, %s19
    %s22 = sphi 0, %s20
    %s32 = sphi 0, %s34
    %s35 = sphi 0, %s32
    %s36 = sphi 0, %s35
    %s52 = sphi 0, %s36
    %s56 = sphi 0, %s56
    %s58 = sphi 0, %s56
    %s59 = sphi 0, %s58
    %s73 = sphi 0, %s59
    %s77 = sphi 0, %s77
    %s79 = sphi 0, %s77
    %s80 = sphi 0, %s79
    %s94 = sphi 0, %s80
    %s102 = sphi 0, %s104
    %s105 = sphi 0, %s102
    %s106 = sphi 0, %s105
    %s122 = sphi 0, %s106
    %s130 = sphi 0, %s132
    %s133 = sphi 0, %s130
    %s134 = sphi 0, %s133
    %s150 = sphi 0, %s134
  $region4: #{unet_forward.8} parent=0 // loop_header_branch
    %13 = sbr.rel (%p11) target = $region8
  $region5: #{unet_forward.8} parent=0 // loop_body
    %s15 = ssub.s32 %s10, 1
    %s16 = ssub.s32 %s10, 2
    %s23 = sadd.s32 1, %s18
    %p24 = scmp.ge.s32.totalorder %s23, 1
    %s25 = scalar_select %p24, 0, %s23
    %s26 = sadd.s32 1, %s17
    %s27 = scalar_select %p24, %s26, %s17
    %p28 = scmp.ge.s32.totalorder %s27, 2
    %s29 = scalar_select %p28, 0, %s27
    %s30 = ssub.s32 %s17, %s29
    %p31 = scmp.eq.s32.totalorder %s30, 0
    %s33 = sadd.s32 %s32, 1
    %s34 = scalar_select %p31, %s32, %s33
    %p37 = pneg %p31
    %p38 = scmp.eq.s32.totalorder %s10, 1
    %p39 = por %p37, %p38
    %p40 = scmp.ne.s32.totalorder %s32, %s35
    %p41 = scmp.eq.s32.totalorder %s10, 0
    %p42 = por %p40, %p41
    %p43 = scmp.ne.s32.totalorder %s32, %s35
    %p44 = scmp.eq.s32.totalorder %s15, 1
    %p45 = por %p43, %p44
    %p46 = scmp.ne.s32.totalorder %s35, %s36
    %p47 = scmp.eq.s32.totalorder %s15, 0
    %p48 = por %p46, %p47
    %p49 = scmp.ne.s32.totalorder %s35, %s36
    %p50 = scmp.eq.s32.totalorder %s16, 1
    %p51 = por %p49, %p50
    %p53 = scmp.ne.s32.totalorder %s36, %s52
    %p54 = scmp.eq.s32.totalorder %s16, 0
    %p55 = por %p53, %p54
    %s57 = sadd.s32 %s56, 1
    %p60 = scmp.eq.s32.totalorder %s10, 1
    %p61 = scmp.ne.s32.totalorder %s56, %s58
    %p62 = scmp.eq.s32.totalorder %s10, 0
    %p63 = por %p61, %p62
    %p64 = scmp.ne.s32.totalorder %s56, %s58
    %p65 = scmp.eq.s32.totalorder %s15, 1
    %p66 = por %p64, %p65
    %p67 = scmp.ne.s32.totalorder %s58, %s59
    %p68 = scmp.eq.s32.totalorder %s15, 0
    %p69 = por %p67, %p68
    %p70 = scmp.ne.s32.totalorder %s58, %s59
    %p71 = scmp.eq.s32.totalorder %s16, 1
    %p72 = por %p70, %p71
    %p74 = scmp.ne.s32.totalorder %s59, %s73
    %p75 = scmp.eq.s32.totalorder %s16, 0
    %p76 = por %p74, %p75
    %s78 = sadd.s32 %s77, 1
    %p81 = scmp.eq.s32.totalorder %s10, 1
    %p82 = scmp.ne.s32.totalorder %s77, %s79
    %p83 = scmp.eq.s32.totalorder %s10, 0
    %p84 = por %p82, %p83
    %p85 = scmp.ne.s32.totalorder %s77, %s79
    %p86 = scmp.eq.s32.totalorder %s15, 1
    %p87 = por %p85, %p86
    %p88 = scmp.ne.s32.totalorder %s79, %s80
    %p89 = scmp.eq.s32.totalorder %s15, 0
    %p90 = por %p88, %p89
    %p91 = scmp.ne.s32.totalorder %s79, %s80
    %p92 = scmp.eq.s32.totalorder %s16, 1
    %p93 = por %p91, %p92
    %p95 = scmp.ne.s32.totalorder %s80, %s94
    %p96 = scmp.eq.s32.totalorder %s16, 0
    %p97 = por %p95, %p96
    %s98 = ssub.s32 %s17, %s29
    %s99 = ssub.s32 %s18, %s25
    %s100 = sor.u32 %s98, %s99
    %p101 = scmp.eq.s32.totalorder %s100, 0
    %s103 = sadd.s32 %s102, 1
    %s104 = scalar_select %p101, %s102, %s103
    %p107 = pneg %p101
    %p108 = scmp.eq.s32.totalorder %s10, 1
    %p109 = por %p107, %p108
    %p110 = scmp.ne.s32.totalorder %s102, %s105
    %p111 = scmp.eq.s32.totalorder %s10, 0
    %p112 = por %p110, %p111
    %p113 = scmp.ne.s32.totalorder %s102, %s105
    %p114 = scmp.eq.s32.totalorder %s15, 1
    %p115 = por %p113, %p114
    %p116 = scmp.ne.s32.totalorder %s105, %s106
    %p117 = scmp.eq.s32.totalorder %s15, 0
    %p118 = por %p116, %p117
    %p119 = scmp.ne.s32.totalorder %s105, %s106
    %p120 = scmp.eq.s32.totalorder %s16, 1
    %p121 = por %p119, %p120
    %p123 = scmp.ne.s32.totalorder %s106, %s122
    %p124 = scmp.eq.s32.totalorder %s16, 0
    %p125 = por %p123, %p124
    %s126 = ssub.s32 %s17, %s29
    %s127 = ssub.s32 %s18, %s25
    %s128 = sor.u32 %s126, %s127
    %p129 = scmp.eq.s32.totalorder %s128, 0
    %s131 = sadd.s32 %s130, 1
    %s132 = scalar_select %p129, %s130, %s131
    %p135 = pneg %p129
    %p136 = scmp.eq.s32.totalorder %s10, 1
    %p137 = por %p135, %p136
    %p138 = scmp.ne.s32.totalorder %s130, %s133
    %p139 = scmp.eq.s32.totalorder %s10, 0
    %p140 = por %p138, %p139
    %p141 = scmp.ne.s32.totalorder %s130, %s133
    %p142 = scmp.eq.s32.totalorder %s15, 1
    %p143 = por %p141, %p142
    %p144 = scmp.ne.s32.totalorder %s133, %s134
    %p145 = scmp.eq.s32.totalorder %s15, 0
    %p146 = por %p144, %p145
    %p147 = scmp.ne.s32.totalorder %s133, %s134
    %p148 = scmp.eq.s32.totalorder %s16, 1
    %p149 = por %p147, %p148
    %p151 = scmp.ne.s32.totalorder %s134, %s150
    %p152 = scmp.eq.s32.totalorder %s16, 0
    %p153 = por %p151, %p152
    %p154 = scmp.le.s32.totalorder 1, %s10
    %p155 = scmp.lt.s32.totalorder %s10, 3
    %p156 = pnand %p154, %p155
    %p157 = pneg %p156
    // Predicated region
    $region9: #{unet_forward.8} parent=5 // pred_check
      _
    $region10: #{unet_forward.8} parent=5 // pred_check_branch
      %159 = sbr.rel (%p156) target = $region12
    $region11: #{unet_forward.8} parent=5 // pred_region
      %s160 = ssub.s32 %s10, 1
      // Predicated region
      $region13: #{unet_forward.8} parent=11 // pred_check
        %p161 = pneg %p69
      $region14: #{unet_forward.8} parent=11 // pred_check_branch
        %163 = sbr.rel (%p161) target = $region16
      $region15: #{unet_forward.8} parent=11 // pred_region
        _
      $region16: #{unet_forward.8} parent=11 // pred_fallthru
        _
      // Predicated region
      $region17: #{unet_forward.8} parent=11 // pred_check
        %p164 = pneg %p90
      $region18: #{unet_forward.8} parent=11 // pred_check_branch
        %166 = sbr.rel (%p164) target = $region20
      $region19: #{unet_forward.8} parent=11 // pred_region
        _
      $region20: #{unet_forward.8} parent=11 // pred_fallthru
        _
    $region12: #{unet_forward.8} parent=5 // pred_fallthru
      _
    %p167 = scmp.lt.s32.totalorder %s10, 2
    // Predicated region
    $region21: #{unet_forward.8} parent=5 // pred_check
      %p168 = pneg %p167
    $region22: #{unet_forward.8} parent=5 // pred_check_branch
      %170 = sbr.rel (%p168) target = $region24
    $region23: #{unet_forward.8} parent=5 // pred_region
      // Predicated region
      $region25: #{unet_forward.8} parent=23 // pred_check
        %p171 = pneg %p42
      $region26: #{unet_forward.8} parent=23 // pred_check_branch
        %173 = sbr.rel (%p171) target = $region28
      $region27: #{unet_forward.8} parent=23 // pred_region
        %p174 = scmp.lt.s32.totalorder %s17, 1
        %s175 = scalar_select %p174, %s17, 1
        %s176 = smul.addr %s175, 20
        %s177 = smul.addr %s176, 8
        %s178 = scalar_lea.vmem %s0, %s177
      $region28: #{unet_forward.8} parent=23 // pred_fallthru
        _
      // Predicated region
      $region29: #{unet_forward.8} parent=23 // pred_check
        %p179 = pneg %p112
      $region30: #{unet_forward.8} parent=23 // pred_check_branch
        %181 = sbr.rel (%p179) target = $region32
      $region31: #{unet_forward.8} parent=23 // pred_region
        %s182 = smul.u32 16, %s18
        %p183 = scmp.lt.s32.totalorder %s17, 1
        %s184 = scalar_select %p183, %s17, 1
        %p185 = scmp.lt.s32.totalorder %s182, 15
        %s186 = scalar_select %p185, %s182, 15
        %s187 = smul.addr %s184, 16
        %s188 = sadd.s32 %s186, %s187
        %s189 = smul.addr %s188, 8
        %s190 = scalar_lea.vmem %s3, %s189
        %s191 = smul.u32 16, %s18
      $region32: #{unet_forward.8} parent=23 // pred_fallthru
        _
    $region24: #{unet_forward.8} parent=5 // pred_fallthru
      _
    %p192 = scmp.le.s32.totalorder 1, %s10
    %p193 = scmp.lt.s32.totalorder %s10, 3
    %p194 = pnand %p192, %p193
    %p195 = pneg %p194
    // Predicated region
    $region33: #{unet_forward.8} parent=5 // pred_check
      _
    $region34: #{unet_forward.8} parent=5 // pred_check_branch
      %197 = sbr.rel (%p194) target = $region36
    $region35: #{unet_forward.8} parent=5 // pred_region
      %s198 = ssub.s32 %s10, 1
      %p199 = scmp.lt.s32.totalorder %s19, 1
      %s200 = scalar_select %p199, %s19, 1
      %s201 = smul.addr %s200, 20
      %s202 = smul.addr %s201, 8
      %s203 = scalar_lea.vmem %s0, %s202
      %p204 = pneg %p48
      %p205 = pneg %p45
      %p206 = pneg %p69
      %p207 = pneg %p66
      %p208 = pneg %p90
      %p209 = pneg %p87
      %s210 = smul.u32 16, %s20
      %p211 = scmp.lt.s32.totalorder %s19, 1
      %s212 = scalar_select %p211, %s19, 1
      %p213 = scmp.lt.s32.totalorder %s210, 15
      %s214 = scalar_select %p213, %s210, 15
      %s215 = smul.addr %s212, 16
      %s216 = sadd.s32 %s214, %s215
      %s217 = smul.addr %s216, 8
      %s218 = scalar_lea.vmem %s3, %s217
      %p219 = pneg %p118
      %p220 = pneg %p115
      %p221 = pneg %p146
      %p222 = pneg %p143
      %s223 = smul.u32 16, %s20
      %p224 = scmp.lt.s32.totalorder %s19, 1
      %s225 = scalar_select %p224, %s19, 1
      %p226 = scmp.lt.s32.totalorder %s223, 15
      %s227 = scalar_select %p226, %s223, 15
      %s228 = smul.addr %s225, 16
      %s229 = sadd.s32 %s227, %s228
      %s230 = smul.addr %s229, 8
      %s231 = scalar_lea.vmem %s4, %s230
      %p232 = scmp.lt.s32.totalorder %s19, 1
      %s233 = scalar_select %p232, %s19, 1
      %s234 = smul.addr %s233, 20
      %s235 = smul.addr %s234, 8
      %s236 = scalar_lea.vmem %s0, %s235
      %s237 = smul.u32 16, %s20
      %p238 = scmp.lt.s32.totalorder %s19, 1
      %s239 = scalar_select %p238, %s19, 1
      %p240 = scmp.lt.s32.totalorder %s237, 15
      %s241 = scalar_select %p240, %s237, 15
      %s242 = smul.addr %s239, 16
      %s243 = sadd.s32 %s241, %s242
      %s244 = smul.addr %s243, 8
      %s245 = scalar_lea.vmem %s3, %s244
      %s246 = smul.u32 16, %s20
      %s247 = smul.u32 16, %s20
      %p248 = scmp.lt.s32.totalorder %s19, 1
      %s249 = scalar_select %p248, %s19, 1
      %p250 = scmp.lt.s32.totalorder %s247, 15
      %s251 = scalar_select %p250, %s247, 15
      %s252 = smul.addr %s249, 16
      %s253 = sadd.s32 %s251, %s252
      %s254 = smul.addr %s253, 8
      %s255 = scalar_lea.vmem %s4, %s254
      %s256 = smul.u32 16, %s20
      %s258 = smul.u32 %s20, 8
      %s259 = smul.u32 %s258, 16
      %s260 = scalar_lea.vmem %s236, %s259
      %v261 = vld [vmem:[%s260] sm:$0xff]
      %v262 = vld [vmem:[%s260 + $0x8] sm:$0x3]
      %v263 = vld [vmem:[%s260 + $0x10] sm:$0xff]
      %v264 = vld [vmem:[%s260 + $0x18] sm:$0x3]
      %v265 = vld [vmem:[%s260 + $0x20] sm:$0xff]
      %v266 = vld [vmem:[%s260 + $0x28] sm:$0x3]
      %v267 = vld [vmem:[%s260 + $0x30] sm:$0xff]
      %v268 = vld [vmem:[%s260 + $0x38] sm:$0x3]
      %v269 = vld [vmem:[%s260 + $0x40] sm:$0xff]
      %v270 = vld [vmem:[%s260 + $0x48] sm:$0x3]
      %v271 = vld [vmem:[%s260 + $0x50] sm:$0xff]
      %v272 = vld [vmem:[%s260 + $0x58] sm:$0x3]
      %v273 = vld [vmem:[%s260 + $0x60] sm:$0xff]
      %v274 = vld [vmem:[%s260 + $0x68] sm:$0x3]
      %v275 = vld [vmem:[%s260 + $0x70] sm:$0xff]
      %v276 = vld [vmem:[%s260 + $0x78] sm:$0x3]
      %v277 = vld [vmem:[%s260 + $0x80] sm:$0xff]
      %v278 = vld [vmem:[%s260 + $0x88] sm:$0x3]
      %v279 = vld [vmem:[%s260 + $0x90] sm:$0xff]
      %v280 = vld [vmem:[%s260 + $0x98] sm:$0x3]
      %v281 = vpack.c.bf16 %v262, %v261
      %v282 = vpack.c.bf16 %v264, %v263
      %v283 = vpack.c.bf16 %v266, %v265
      %v284 = vpack.c.bf16 %v268, %v267
      %v285 = vpack.c.bf16 %v270, %v269
      %v286 = vpack.c.bf16 %v272, %v271
      %v287 = vpack.c.bf16 %v274, %v273
      %v288 = vpack.c.bf16 %v276, %v275
      %v289 = vpack.c.bf16 %v278, %v277
      %v290 = vpack.c.bf16 %v280, %v279
      %v292 = vshrl.u32 %v281, 16
      %v294 = vshll.u32 %v281, 16
      %v296 = vrot.slane %v294, 1
      %v297 = vor.u32 %v292, %v296
      %v299 = vshrl.u32 %v282, 16
      %v301 = vshll.u32 %v282, 16
      %v303 = vrot.slane %v301, 1
      %v304 = vor.u32 %v299, %v303
      %v306 = vshrl.u32 %v283, 16
      %v308 = vshll.u32 %v283, 16
      %v310 = vrot.slane %v308, 1
      %v311 = vor.u32 %v306, %v310
      %v313 = vshrl.u32 %v284, 16
      %v315 = vshll.u32 %v284, 16
      %v317 = vrot.slane %v315, 1
      %v318 = vor.u32 %v313, %v317
      %v320 = vshrl.u32 %v285, 16
      %v322 = vshll.u32 %v285, 16
      %v324 = vrot.slane %v322, 1
      %v325 = vor.u32 %v320, %v324
      %v327 = vshrl.u32 %v286, 16
      %v329 = vshll.u32 %v286, 16
      %v331 = vrot.slane %v329, 1
      %v332 = vor.u32 %v327, %v331
      %v334 = vshrl.u32 %v287, 16
      %v336 = vshll.u32 %v287, 16
      %v338 = vrot.slane %v336, 1
      %v339 = vor.u32 %v334, %v338
      %v341 = vshrl.u32 %v288, 16
      %v343 = vshll.u32 %v288, 16
      %v345 = vrot.slane %v343, 1
      %v346 = vor.u32 %v341, %v345
      %v348 = vshrl.u32 %v289, 16
      %v350 = vshll.u32 %v289, 16
      %v352 = vrot.slane %v350, 1
      %v353 = vor.u32 %v348, %v352
      %v355 = vshrl.u32 %v290, 16
      %v357 = vshll.u32 %v290, 16
      %v359 = vrot.slane %v357, 1
      %v360 = vor.u32 %v355, %v359
      %361 = vrot.lane.b32.xlu0 %v297, 32
      %v362 = vpop.permute.xlu0 %361
      %363 = vrot.lane.b32.xlu0 %v304, 32
      %v364 = vpop.permute.xlu0 %363
      %365 = vrot.lane.b32.xlu0 %v311, 32
      %v366 = vpop.permute.xlu0 %365
      %367 = vrot.lane.b32.xlu0 %v318, 32
      %v368 = vpop.permute.xlu0 %367
      %369 = vrot.lane.b32.xlu0 %v325, 32
      %v370 = vpop.permute.xlu0 %369
      %371 = vrot.lane.b32.xlu0 %v332, 32
      %v372 = vpop.permute.xlu0 %371
      %373 = vrot.lane.b32.xlu0 %v339, 32
      %v374 = vpop.permute.xlu0 %373
      %375 = vrot.lane.b32.xlu0 %v346, 32
      %v376 = vpop.permute.xlu0 %375
      %377 = vrot.lane.b32.xlu0 %v353, 32
      %v378 = vpop.permute.xlu0 %377
      %379 = vrot.lane.b32.xlu0 %v360, 32
      %v380 = vpop.permute.xlu0 %379
      %vm381 = vcmask 261120
      %v383 = vsel %vm381, %v281, %v362
      %v385 = vsel %vm381, %v282, %v364
      %v387 = vsel %vm381, %v283, %v366
      %v389 = vsel %vm381, %v284, %v368
      %v391 = vsel %vm381, %v285, %v370
      %v393 = vsel %vm381, %v286, %v372
      %v395 = vsel %vm381, %v287, %v374
      %v397 = vsel %vm381, %v288, %v376
      %v399 = vsel %vm381, %v289, %v378
      %v401 = vsel %vm381, %v290, %v380
      %410 = vrot.lane.b32.xlu0 %v385, 64
      %v411 = vpop.permute.xlu0 %410
      %412 = vrot.lane.b32.xlu0 %v387, 64
      %v413 = vpop.permute.xlu0 %412
      %414 = vrot.lane.b32.xlu0 %v389, 64
      %v415 = vpop.permute.xlu0 %414
      %416 = vrot.lane.b32.xlu0 %v391, 64
      %v417 = vpop.permute.xlu0 %416
      %418 = vrot.lane.b32.xlu0 %v393, 64
      %v419 = vpop.permute.xlu0 %418
      %420 = vrot.lane.b32.xlu0 %v395, 64
      %v421 = vpop.permute.xlu0 %420
      %422 = vrot.lane.b32.xlu0 %v397, 64
      %v423 = vpop.permute.xlu0 %422
      %424 = vrot.lane.b32.xlu0 %v399, 64
      %v425 = vpop.permute.xlu0 %424
      %vm426 = vcmask 523264
      %v428 = vsel %vm426, %v383, %v411
      %v430 = vsel %vm426, %v385, %v411
      %v433 = vsel %vm426, %v385, %v413
      %v435 = vsel %vm426, %v387, %v413
      %v438 = vsel %vm426, %v387, %v415
      %v440 = vsel %vm426, %v389, %v415
      %v443 = vsel %vm426, %v389, %v417
      %v445 = vsel %vm426, %v391, %v417
      %v448 = vsel %vm426, %v391, %v419
      %v450 = vsel %vm426, %v393, %v419
      %v453 = vsel %vm426, %v393, %v421
      %v455 = vsel %vm426, %v395, %v421
      %v458 = vsel %vm426, %v395, %v423
      %v460 = vsel %vm426, %v397, %v423
      %v463 = vsel %vm426, %v397, %v425
      %v465 = vsel %vm426, %v399, %v425
      %v467 = vld [vmem:[%s1] sm:$0xf]
      %v468 = vld [vmem:[%s1 + $0x4] sm:$0xf]
      %v469 = vld [vmem:[%s1 + $0x8] sm:$0xf]
      %v470 = vld [vmem:[%s1 + $0xc] sm:$0xf]
      %v471 = vld [vmem:[%s1 + $0x10] sm:$0xf]
      %v472 = vld [vmem:[%s1 + $0x14] sm:$0xf]
      %v473 = vld [vmem:[%s1 + $0x18] sm:$0xf]
      %v474 = vld [vmem:[%s1 + $0x1c] sm:$0xf]
      %v475 = vld [vmem:[%s1 + $0x20] sm:$0xf]
      %v476 = vld [vmem:[%s1 + $0x24] sm:$0xf]
      %v477 = vld [vmem:[%s1 + $0x28] sm:$0xf]
      %v478 = vld [vmem:[%s1 + $0x2c] sm:$0xf]
      %v479 = vld [vmem:[%s1 + $0x30] sm:$0xf]
      %v480 = vld [vmem:[%s1 + $0x34] sm:$0xf]
      %v481 = vld [vmem:[%s1 + $0x38] sm:$0xf]
      %v482 = vld [vmem:[%s1 + $0x3c] sm:$0xf]
      %v483 = vld [vmem:[%s1 + $0x40] sm:$0xf]
      %v484 = vld [vmem:[%s1 + $0x44] sm:$0xf]
      %v485 = vld [vmem:[%s1 + $0x48] sm:$0xf]
      %v486 = vld [vmem:[%s1 + $0x4c] sm:$0xf]
      %v487 = vld [vmem:[%s1 + $0x50] sm:$0xf]
      %v488 = vld [vmem:[%s1 + $0x54] sm:$0xf]
      %v489 = vld [vmem:[%s1 + $0x58] sm:$0xf]
      %v490 = vld [vmem:[%s1 + $0x5c] sm:$0xf]
      %s491 = scalar_lea.vmem %s1, 96
      %v492 = vld [vmem:[%s491] sm:$0xf]
      %v493 = vld [vmem:[%s491 + $0x4] sm:$0xf]
      %v494 = vld [vmem:[%s491 + $0x8] sm:$0xf]
      %v495 = vld [vmem:[%s491 + $0xc] sm:$0xf]
      %v496 = vld [vmem:[%s491 + $0x10] sm:$0xf]
      %v497 = vld [vmem:[%s491 + $0x14] sm:$0xf]
      %v498 = vld [vmem:[%s491 + $0x18] sm:$0xf]
      %v499 = vld [vmem:[%s491 + $0x1c] sm:$0xf]
      %v500 = vld [vmem:[%s491 + $0x20] sm:$0xf]
      %v501 = vld [vmem:[%s491 + $0x24] sm:$0xf]
      %v502 = vld [vmem:[%s491 + $0x28] sm:$0xf]
      %v503 = vld [vmem:[%s491 + $0x2c] sm:$0xf]
      %v504 = vld [vmem:[%s491 + $0x30] sm:$0xf]
      %v505 = vld [vmem:[%s491 + $0x34] sm:$0xf]
      %v506 = vld [vmem:[%s491 + $0x38] sm:$0xf]
      %v507 = vld [vmem:[%s491 + $0x3c] sm:$0xf]
      %v508 = vld [vmem:[%s491 + $0x40] sm:$0xf]
      %v509 = vld [vmem:[%s491 + $0x44] sm:$0xf]
      %v510 = vld [vmem:[%s491 + $0x48] sm:$0xf]
      %v511 = vld [vmem:[%s491 + $0x4c] sm:$0xf]
      %v512 = vld [vmem:[%s491 + $0x50] sm:$0xf]
      %v513 = vld [vmem:[%s491 + $0x54] sm:$0xf]
      %v514 = vld [vmem:[%s491 + $0x58] sm:$0xf]
      %v515 = vld [vmem:[%s491 + $0x5c] sm:$0xf]
      %v540 = vunpack.c.l.b16 %v467
      %v541 = vunpack.c.l.b16 %v468
      %v542 = vunpack.c.l.b16 %v469
      %v543 = vunpack.c.l.b16 %v470
      %v544 = vunpack.c.l.b16 %v471
      %v545 = vunpack.c.l.b16 %v472
      %v546 = vunpack.c.l.b16 %v473
      %v547 = vunpack.c.l.b16 %v474
      %v548 = vunpack.c.l.b16 %v475
      %v549 = vunpack.c.l.b16 %v476
      %v550 = vunpack.c.l.b16 %v477
      %v551 = vunpack.c.l.b16 %v478
      %v552 = vunpack.c.l.b16 %v479
      %v553 = vunpack.c.l.b16 %v480
      %v554 = vunpack.c.l.b16 %v481
      %v555 = vunpack.c.l.b16 %v482
      %v556 = vunpack.c.l.b16 %v483
      %v557 = vunpack.c.l.b16 %v484
      %v558 = vunpack.c.l.b16 %v485
      %v559 = vunpack.c.l.b16 %v486
      %v560 = vunpack.c.l.b16 %v487
      %v561 = vunpack.c.l.b16 %v488
      %v562 = vunpack.c.l.b16 %v489
      %v563 = vunpack.c.l.b16 %v490
      %v564 = vpack.c.b16 %v541, %v540
      %v565 = vpack.c.b16 %v543, %v542
      %v566 = vpack.c.b16 %v545, %v544
      %v567 = vpack.c.b16 %v547, %v546
      %v568 = vpack.c.b16 %v549, %v548
      %v569 = vpack.c.b16 %v551, %v550
      %v570 = vpack.c.b16 %v553, %v552
      %v571 = vpack.c.b16 %v555, %v554
      %v572 = vpack.c.b16 %v557, %v556
      %v573 = vpack.c.b16 %v559, %v558
      %v574 = vpack.c.b16 %v561, %v560
      %v575 = vpack.c.b16 %v563, %v562
      %v588 = vsel %vm426, %v385, 0
      %590 = vmatprep.subr.bf16.mxu0 0
      %591 = vmatpush1.bf16.msra.mxu0 %v564
      %592 = vmatprep.subr.bf16.mxu0 0
      %593 = vmatpush1.bf16.msra.mxu0 %v565
      %594 = vmatprep.subr.bf16.mxu0 0
      %595 = vmatpush1.bf16.msra.mxu0 %v566
      %596 = vmatprep.subr.bf16.mxu0 0
      %597 = vmatpush1.bf16.msra.mxu0 %v567
      %598 = vmatprep.subr.bf16.mxu0 0
      %599 = vmatpush1.bf16.msra.mxu0 %v568
      %600 = vmatprep.subr.bf16.mxu0 0
      %601 = vmatpush1.bf16.msra.mxu0 %v569
      %602 = vmatprep.subr.bf16.mxu0 0
      %603 = vmatpush1.bf16.msra.mxu0 %v570
      %604 = vmatprep.subr.bf16.mxu0 0
      %605 = vmatpush1.bf16.msra.mxu0 %v571
      %606 = vmatprep.subr.bf16.mxu0 0
      %607 = vmatpush1.bf16.msra.mxu0 %v572
      %608 = vmatprep.subr.bf16.mxu0 0
      %609 = vmatpush1.bf16.msra.mxu0 %v573
      %610 = vmatprep.subr.bf16.mxu0 0
      %611 = vmatpush1.bf16.msra.mxu0 %v574
      %612 = vmatprep.subr.bf16.mxu0 0
      %613 = vmatpush1.bf16.msra.mxu0 %v575
      %614 = vmatprep.subr.bf16.mxu0 0
      %615 = vmatpush1.bf16.msra.mxu0 0
      %616 = vmatprep.subr.bf16.mxu0 0
      %617 = vmatpush1.bf16.msra.mxu0 0
      %618 = vmatprep.subr.bf16.mxu0 0
      %619 = vmatpush1.bf16.msra.mxu0 0
      %620 = vmatprep.subr.bf16.mxu0 0
      %621 = vmatpush1.bf16.msra.mxu0 0
      %622 = vmatprep.mubr.bf16.mxu0 %v588
      %623 = vmatmul.mubr.bf16.gmra.mrb[0].mxu0 %v428
      %v624 = vpop.f32.mrb[0].mxu0
      %v625 = vadd.f32 0.0, %v624
      %v626 = vpop.f32.mrb[0].mxu0
      %v627 = vpop.f32.mrb[0].mxu0
      %v628 = vpop.f32.mrb[0].mxu0
      %629 = vdwg.mxu0
      %v630 = vsel %vm426, %v387, 0
      %632 = vmatprep.subr.bf16.mxu0 0
      %633 = vmatpush1.bf16.msra.mxu0 %v564
      %634 = vmatprep.subr.bf16.mxu0 0
      %635 = vmatpush1.bf16.msra.mxu0 %v565
      %636 = vmatprep.subr.bf16.mxu0 0
      %637 = vmatpush1.bf16.msra.mxu0 %v566
      %638 = vmatprep.subr.bf16.mxu0 0
      %639 = vmatpush1.bf16.msra.mxu0 %v567
      %640 = vmatprep.subr.bf16.mxu0 0
      %641 = vmatpush1.bf16.msra.mxu0 %v568
      %642 = vmatprep.subr.bf16.mxu0 0
      %643 = vmatpush1.bf16.msra.mxu0 %v569
      %644 = vmatprep.subr.bf16.mxu0 0
      %645 = vmatpush1.bf16.msra.mxu0 %v570
      %646 = vmatprep.subr.bf16.mxu0 0
      %647 = vmatpush1.bf16.msra.mxu0 %v571
      %648 = vmatprep.subr.bf16.mxu0 0
      %649 = vmatpush1.bf16.msra.mxu0 %v572
      %650 = vmatprep.subr.bf16.mxu0 0
      %651 = vmatpush1.bf16.msra.mxu0 %v573
      %652 = vmatprep.subr.bf16.mxu0 0
      %653 = vmatpush1.bf16.msra.mxu0 %v574
      %654 = vmatprep.subr.bf16.mxu0 0
      %655 = vmatpush1.bf16.msra.mxu0 %v575
      %656 = vmatprep.subr.bf16.mxu0 0
      %657 = vmatpush1.bf16.msra.mxu0 0
      %658 = vmatprep.subr.bf16.mxu0 0
      %659 = vmatpush1.bf16.msra.mxu0 0
      %660 = vmatprep.subr.bf16.mxu0 0
      %661 = vmatpush1.bf16.msra.mxu0 0
      %662 = vmatprep.subr.bf16.mxu0 0
      %663 = vmatpush1.bf16.msra.mxu0 0
      %664 = vmatprep.mubr.bf16.mxu0 %v630
      %665 = vmatmul.mubr.bf16.gmra.mrb[0].mxu0 %v430
      %v666 = vpop.f32.mrb[0].mxu0
      %v667 = vadd.f32 0.0, %v666
      %v668 = vpop.f32.mrb[0].mxu0
      %v669 = vpop.f32.mrb[0].mxu0
      %v670 = vpop.f32.mrb[0].mxu0
      %671 = vdwg.mxu0
      %672 = vmatprep.subr.bf16.mxu0 0
      %673 = vmatpush1.bf16.msra.mxu0 %v564
      %674 = vmatprep.subr.bf16.mxu0 0
      %675 = vmatpush1.bf16.msra.mxu0 %v565
      %676 = vmatprep.subr.bf16.mxu0 0
      %677 = vmatpush1.bf16.msra.mxu0 %v566
      %678 = vmatprep.subr.bf16.mxu0 0
      %679 = vmatpush1.bf16.msra.mxu0 %v567
      %680 = vmatprep.subr.bf16.mxu0 0
      %681 = vmatpush1.bf16.msra.mxu0 %v568
      %682 = vmatprep.subr.bf16.mxu0 0
      %683 = vmatpush1.bf16.msra.mxu0 %v569
      %684 = vmatprep.subr.bf16.mxu0 0
      %685 = vmatpush1.bf16.msra.mxu0 %v570
      %686 = vmatprep.subr.bf16.mxu0 0
      %687 = vmatpush1.bf16.msra.mxu0 %v571
      %688 = vmatprep.subr.bf16.mxu0 0
      %689 = vmatpush1.bf16.msra.mxu0 %v572
      %690 = vmatprep.subr.bf16.mxu0 0
      %691 = vmatpush1.bf16.msra.mxu0 %v573
      %692 = vmatprep.subr.bf16.mxu0 0
      %693 = vmatpush1.bf16.msra.mxu0 %v574
      %694 = vmatprep.subr.bf16.mxu0 0
      %695 = vmatpush1.bf16.msra.mxu0 %v575
      %696 = vmatprep.subr.bf16.mxu0 0
      %697 = vmatpush1.bf16.msra.mxu0 0
      %698 = vmatprep.subr.bf16.mxu0 0
      %699 = vmatpush1.bf16.msra.mxu0 0
      %700 = vmatprep.subr.bf16.mxu0 0
      %701 = vmatpush1.bf16.msra.mxu0 0
      %702 = vmatprep.subr.bf16.mxu0 0
      %703 = vmatpush1.bf16.msra.mxu0 0
      %704 = vmatprep.mubr.bf16.mxu0 %v630
      %705 = vmatmul.mubr.bf16.gmra.mrb[0].mxu0 %v433
      %v706 = vpop.f32.mrb[0].mxu0
      %v707 = vadd.f32 0.0, %v706
      %v708 = vpop.f32.mrb[0].mxu0
      %v709 = vpop.f32.mrb[0].mxu0
      %v710 = vpop.f32.mrb[0].mxu0
      %711 = vdwg.mxu0
      %v712 = vsel %vm426, %v389, 0
      %714 = vmatprep.subr.bf16.mxu0 0
      %715 = vmatpush1.bf16.msra.mxu0 %v564
      %716 = vmatprep.subr.bf16.mxu0 0
      %717 = vmatpush1.bf16.msra.mxu0 %v565
      %718 = vmatprep.subr.bf16.mxu0 0
      %719 = vmatpush1.bf16.msra.mxu0 %v566
      %720 = vmatprep.subr.bf16.mxu0 0
      %721 = vmatpush1.bf16.msra.mxu0 %v567
      %722 = vmatprep.subr.bf16.mxu0 0
      %723 = vmatpush1.bf16.msra.mxu0 %v568
      %724 = vmatprep.subr.bf16.mxu0 0
      %725 = vmatpush1.bf16.msra.mxu0 %v569
      %726 = vmatprep.subr.bf16.mxu0 0
      %727 = vmatpush1.bf16.msra.mxu0 %v570
      %728 = vmatprep.subr.bf16.mxu0 0
      %729 = vmatpush1.bf16.msra.mxu0 %v571
      %730 = vmatprep.subr.bf16.mxu0 0
      %731 = vmatpush1.bf16.msra.mxu0 %v572
      %732 = vmatprep.subr.bf16.mxu0 0
      %733 = vmatpush1.bf16.msra.mxu0 %v573
      %734 = vmatprep.subr.bf16.mxu0 0
      %735 = vmatpush1.bf16.msra.mxu0 %v574
      %736 = vmatprep.subr.bf16.mxu0 0
      %737 = vmatpush1.bf16.msra.mxu0 %v575
      %738 = vmatprep.subr.bf16.mxu0 0
      %739 = vmatpush1.bf16.msra.mxu0 0
      %740 = vmatprep.subr.bf16.mxu0 0
      %741 = vmatpush1.bf16.msra.mxu0 0
      %742 = vmatprep.subr.bf16.mxu0 0
      %743 = vmatpush1.bf16.msra.mxu0 0
      %744 = vmatprep.subr.bf16.mxu0 0
      %745 = vmatpush1.bf16.msra.mxu0 0
      %746 = vmatprep.mubr.bf16.mxu0 %v712
      %747 = vmatmul.mubr.bf16.gmra.mrb[0].mxu0 %v435
      %v748 = vpop.f32.mrb[0].mxu0
      %v749 = vadd.f32 0.0, %v748
      %v750 = vpop.f32.mrb[0].mxu0
      %v751 = vpop.f32.mrb[0].mxu0
      %v752 = vpop.f32.mrb[0].mxu0
      %753 = vdwg.mxu0
      %754 = vmatprep.subr.bf16.mxu0 0
      %755 = vmatpush1.bf16.msra.mxu0 %v564
      %756 = vmatprep.subr.bf16.mxu0 0
      %757 = vmatpush1.bf16.msra.mxu0 %v565
      %758 = vmatprep.subr.bf16.mxu0 0
      %759 = vmatpush1.bf16.msra.mxu0 %v566
      %760 = vmatprep.subr.bf16.mxu0 0
      %761 = vmatpush1.bf16.msra.mxu0 %v567
      %762 = vmatprep.subr.bf16.mxu0 0
      %763 = vmatpush1.bf16.msra.mxu0 %v568
      %764 = vmatprep.subr.bf16.mxu0 0
      %765 = vmatpush1.bf16.msra.mxu0 %v569
      %766 = vmatprep.subr.bf16.mxu0 0
      %767 = vmatpush1.bf16.msra.mxu0 %v570
      %768 = vmatprep.subr.bf16.mxu0 0
      %769 = vmatpush1.bf16.msra.mxu0 %v571
      %770 = vmatprep.subr.bf16.mxu0 0
      %771 = vmatpush1.bf16.msra.mxu0 %v572
      %772 = vmatprep.subr.bf16.mxu0 0
      %773 = vmatpush1.bf16.msra.mxu0 %v573
      %774 = vmatprep.subr.bf16.mxu0 0
      %775 = vmatpush1.bf16.msra.mxu0 %v574
      %776 = vmatprep.subr.bf16.mxu0 0
      %777 = vmatpush1.bf16.msra.mxu0 %v575
      %778 = vmatprep.subr.bf16.mxu0 0
      %779 = vmatpush1.bf16.msra.mxu0 0
      %780 = vmatprep.subr.bf16.mxu0 0
      %781 = vmatpush1.bf16.msra.mxu0 0
      %782 = vmatprep.subr.bf16.mxu0 0
      %783 = vmatpush1.bf16.msra.mxu0 0
      %784 = vmatprep.subr.bf16.mxu0 0
      %785 = vmatpush1.bf16.msra.mxu0 0
      %786 = vmatprep.mubr.bf16.mxu0 %v712
      %787 = vmatmul.mubr.bf16.gmra.mrb[0].mxu0 %v438
      %v788 = vpop.f32.mrb[0].mxu0
      %v789 = vadd.f32 0.0, %v788
      %v790 = vpop.f32.mrb[0].mxu0
      %v791 = vpop.f32.mrb[0].mxu0
      %v792 = vpop.f32.mrb[0].mxu0
      %793 = vdwg.mxu0
      %v794 = vsel %vm426, %v391, 0
      %796 = vmatprep.subr.bf16.mxu0 0
      %797 = vmatpush1.bf16.msra.mxu0 %v564
      %798 = vmatprep.subr.bf16.mxu0 0
      %799 = vmatpush1.bf16.msra.mxu0 %v565
      %800 = vmatprep.subr.bf16.mxu0 0
      %801 = vmatpush1.bf16.msra.mxu0 %v566
      %802 = vmatprep.subr.bf16.mxu0 0
      %803 = vmatpush1.bf16.msra.mxu0 %v567
      %804 = vmatprep.subr.bf16.mxu0 0
      %805 = vmatpush1.bf16.msra.mxu0 %v568
      %806 = vmatprep.subr.bf16.mxu0 0
      %807 = vmatpush1.bf16.msra.mxu0 %v569
      %808 = vmatprep.subr.bf16.mxu0 0
      %809 = vmatpush1.bf16.msra.mxu0 %v570
      %810 = vmatprep.subr.bf16.mxu0 0
      %811 = vmatpush1.bf16.msra.mxu0 %v571
      %812 = vmatprep.subr.bf16.mxu0 0
      %813 = vmatpush1.bf16.msra.mxu0 %v572
      %814 = vmatprep.subr.bf16.mxu0 0
      %815 = vmatpush1.bf16.msra.mxu0 %v573
      %816 = vmatprep.subr.bf16.mxu0 0
      %817 = vmatpush1.bf16.msra.mxu0 %v574
      %818 = vmatprep.subr.bf16.mxu0 0
      %819 = vmatpush1.bf16.msra.mxu0 %v575
      %820 = vmatprep.subr.bf16.mxu0 0
      %821 = vmatpush1.bf16.msra.mxu0 0
      %822 = vmatprep.subr.bf16.mxu0 0
      %823 = vmatpush1.bf16.msra.mxu0 0
      %824 = vmatprep.subr.bf16.mxu0 0
      %825 = vmatpush1.bf16.msra.mxu0 0
      %826 = vmatprep.subr.bf16.mxu0 0
      %827 = vmatpush1.bf16.msra.mxu0 0
      %828 = vmatprep.mubr.bf16.mxu0 %v794
      %829 = vmatmul.mubr.bf16.gmra.mrb[0].mxu0 %v440
      %v830 = vpop.f32.mrb[0].mxu0
      %v831 = vadd.f32 0.0, %v830
      %v832 = vpop.f32.mrb[0].mxu0
      %v833 = vpop.f32.mrb[0].mxu0
      %v834 = vpop.f32.mrb[0].mxu0
      %835 = vdwg.mxu0
      %836 = vmatprep.subr.bf16.mxu0 0
      %837 = vmatpush1.bf16.msra.mxu0 %v564
      %838 = vmatprep.subr.bf16.mxu0 0
      %839 = vmatpush1.bf16.msra.mxu0 %v565
      %840 = vmatprep.subr.bf16.mxu0 0
      %841 = vmatpush1.bf16.msra.mxu0 %v566
      %842 = vmatprep.subr.bf16.mxu0 0
      %843 = vmatpush1.bf16.msra.mxu0 %v567
      %844 = vmatprep.subr.bf16.mxu0 0
      %845 = vmatpush1.bf16.msra.mxu0 %v568
      %846 = vmatprep.subr.bf16.mxu0 0
      %847 = vmatpush1.bf16.msra.mxu0 %v569
      %848 = vmatprep.subr.bf16.mxu0 0
      %849 = vmatpush1.bf16.msra.mxu0 %v570
      %850 = vmatprep.subr.bf16.mxu0 0
      %851 = vmatpush1.bf16.msra.mxu0 %v571
      %852 = vmatprep.subr.bf16.mxu0 0
      %853 = vmatpush1.bf16.msra.mxu0 %v572
      %854 = vmatprep.subr.bf16.mxu0 0
      %855 = vmatpush1.bf16.msra.mxu0 %v573
      %856 = vmatprep.subr.bf16.mxu0 0
      %857 = vmatpush1.bf16.msra.mxu0 %v574
      %858 = vmatprep.subr.bf16.mxu0 0
      %859 = vmatpush1.bf16.msra.mxu0 %v575
      %860 = vmatprep.subr.bf16.mxu0 0
      %861 = vmatpush1.bf16.msra.mxu0 0
      %862 = vmatprep.subr.bf16.mxu0 0
      %863 = vmatpush1.bf16.msra.mxu0 0
      %864 = vmatprep.subr.bf16.mxu0 0
      %865 = vmatpush1.bf16.msra.mxu0 0
      %866 = vmatprep.subr.bf16.mxu0 0
      %867 = vmatpush1.bf16.msra.mxu0 0
      %868 = vmatprep.mubr.bf16.mxu0 %v794
      %869 = vmatmul.mubr.bf16.gmra.mrb[0].mxu0 %v443
      %v870 = vpop.f32.mrb[0].mxu0
      %v871 = vadd.f32 0.0, %v870
      %v872 = vpop.f32.mrb[0].mxu0
      %v873 = vpop.f32.mrb[0].mxu0
      %v874 = vpop.f32.mrb[0].mxu0
      %875 = vdwg.mxu0
      %v876 = vsel %vm426, %v393, 0
      %878 = vmatprep.subr.bf16.mxu0 0
      %879 = vmatpush1.bf16.msra.mxu0 %v564
      %880 = vmatprep.subr.bf16.mxu0 0
      %881 = vmatpush1.bf16.msra.mxu0 %v565
      %882 = vmatprep.subr.bf16.mxu0 0
      %883 = vmatpush1.bf16.msra.mxu0 %v566
      %884 = vmatprep.subr.bf16.mxu0 0
      %885 = vmatpush1.bf16.msra.mxu0 %v567
      %886 = vmatprep.subr.bf16.mxu0 0
      %887 = vmatpush1.bf16.msra.mxu0 %v568
      %888 = vmatprep.subr.bf16.mxu0 0
      %889 = vmatpush1.bf16.msra.mxu0 %v569
      %890 = vmatprep.subr.bf16.mxu0 0
      %891 = vmatpush1.bf16.msra.mxu0 %v570
      %892 = vmatprep.subr.bf16.mxu0 0
      %893 = vmatpush1.bf16.msra.mxu0 %v571
      %894 = vmatprep.subr.bf16.mxu0 0
      %895 = vmatpush1.bf16.msra.mxu0 %v572
      %896 = vmatprep.subr.bf16.mxu0 0
      %897 = vmatpush1.bf16.msra.mxu0 %v573
      %898 = vmatprep.subr.bf16.mxu0 0
      %899 = vmatpush1.bf16.msra.mxu0 %v574
      %900 = vmatprep.subr.bf16.mxu0 0
      %901 = vmatpush1.bf16.msra.mxu0 %v575
      %902 = vmatprep.subr.bf16.mxu0 0
      %903 = vmatpush1.bf16.msra.mxu0 0
      %904 = vmatprep.subr.bf16.mxu0 0
      %905 = vmatpush1.bf16.msra.mxu0 0
      %906 = vmatprep.subr.bf16.mxu0 0
      %907 = vmatpush1.bf16.msra.mxu0 0
      %908 = vmatprep.subr.bf16.mxu0 0
      %909 = vmatpush1.bf16.msra.mxu0 0
      %910 = vmatprep.mubr.bf16.mxu0 %v876
      %911 = vmatmul.mubr.bf16.gmra.mrb[0].mxu0 %v445
      %v912 = vpop.f32.mrb[0].mxu0
      %v913 = vadd.f32 0.0, %v912
      %v914 = vpop.f32.mrb[0].mxu0
      %v915 = vpop.f32.mrb[0].mxu0
      %v916 = vpop.f32.mrb[0].mxu0
      %917 = vdwg.mxu0
      %918 = vmatprep.subr.bf16.mxu0 0
      %919 = vmatpush1.bf16.msra.mxu0 %v564
      %920 = vmatprep.subr.bf16.mxu0 0
      %921 = vmatpush1.bf16.msra.mxu0 %v565
      %922 = vmatprep.subr.bf16.mxu0 0
      %923 = vmatpush1.bf16.msra.mxu0 %v566
      %924 = vmatprep.subr.bf16.mxu0 0
      %925 = vmatpush1.bf16.msra.mxu0 %v567
      %926 = vmatprep.subr.bf16.mxu0 0
      %927 = vmatpush1.bf16.msra.mxu0 %v568
      %928 = vmatprep.subr.bf16.mxu0 0
      %929 = vmatpush1.bf16.msra.mxu0 %v569
      %930 = vmatprep.subr.bf16.mxu0 0
      %931 = vmatpush1.bf16.msra.mxu0 %v570
      %932 = vmatprep.subr.bf16.mxu0 0
      %933 = vmatpush1.bf16.msra.mxu0 %v571
      %934 = vmatprep.subr.bf16.mxu0 0
      %935 = vmatpush1.bf16.msra.mxu0 %v572
      %936 = vmatprep.subr.bf16.mxu0 0
      %937 = vmatpush1.bf16.msra.mxu0 %v573
      %938 = vmatprep.subr.bf16.mxu0 0
      %939 = vmatpush1.bf16.msra.mxu0 %v574
      %940 = vmatprep.subr.bf16.mxu0 0
      %941 = vmatpush1.bf16.msra.mxu0 %v575
      %942 = vmatprep.subr.bf16.mxu0 0
      %943 = vmatpush1.bf16.msra.mxu0 0
      %944 = vmatprep.subr.bf16.mxu0 0
      %945 = vmatpush1.bf16.msra.mxu0 0
      %946 = vmatprep.subr.bf16.mxu0 0
      %947 = vmatpush1.bf16.msra.mxu0 0
      %948 = vmatprep.subr.bf16.mxu0 0
      %949 = vmatpush1.bf16.msra.mxu0 0
      %950 = vmatprep.mubr.bf16.mxu0 %v876
      %951 = vmatmul.mubr.bf16.gmra.mrb[0].mxu0 %v448
      %v952 = vpop.f32.mrb[0].mxu0
      %v953 = vadd.f32 0.0, %v952
      %v954 = vpop.f32.mrb[0].mxu0
      %v955 = vpop.f32.mrb[0].mxu0
      %v956 = vpop.f32.mrb[0].mxu0
      %957 = vdwg.mxu0
      %v958 = vsel %vm426, %v395, 0
      %960 = vmatprep.subr.bf16.mxu0 0
      %961 = vmatpush1.bf16.msra.mxu0 %v564
      %962 = vmatprep.subr.bf16.mxu0 0
      %963 = vmatpush1.bf16.msra.mxu0 %v565
      %964 = vmatprep.subr.bf16.mxu0 0
      %965 = vmatpush1.bf16.msra.mxu0 %v566
      %966 = vmatprep.subr.bf16.mxu0 0
      %967 = vmatpush1.bf16.msra.mxu0 %v567
      %968 = vmatprep.subr.bf16.mxu0 0
      %969 = vmatpush1.bf16.msra.mxu0 %v568
      %970 = vmatprep.subr.bf16.mxu0 0
      %971 = vmatpush1.bf16.msra.mxu0 %v569
      %972 = vmatprep.subr.bf16.mxu0 0
      %973 = vmatpush1.bf16.msra.mxu0 %v570
      %974 = vmatprep.subr.bf16.mxu0 0
      %975 = vmatpush1.bf16.msra.mxu0 %v571
      %976 = vmatprep.subr.bf16.mxu0 0
      %977 = vmatpush1.bf16.msra.mxu0 %v572
      %978 = vmatprep.subr.bf16.mxu0 0
      %979 = vmatpush1.bf16.msra.mxu0 %v573
      %980 = vmatprep.subr.bf16.mxu0 0
      %981 = vmatpush1.bf16.msra.mxu0 %v574
      %982 = vmatprep.subr.bf16.mxu0 0
      %983 = vmatpush1.bf16.msra.mxu0 %v575
      %984 = vmatprep.subr.bf16.mxu0 0
      %985 = vmatpush1.bf16.msra.mxu0 0
      %986 = vmatprep.subr.bf16.mxu0 0
      %987 = vmatpush1.bf16.msra.mxu0 0
      %988 = vmatprep.subr.bf16.mxu0 0
      %989 = vmatpush1.bf16.msra.mxu0 0
      %990 = vmatprep.subr.bf16.mxu0 0
      %991 = vmatpush1.bf16.msra.mxu0 0
      %992 = vmatprep.mubr.bf16.mxu0 %v958
      %993 = vmatmul.mubr.bf16.gmra.mrb[0].mxu0 %v450
      %v994 = vpop.f32.mrb[0].mxu0
      %v995 = vadd.f32 0.0, %v994
      %v996 = vpop.f32.mrb[0].mxu0
      %v997 = vpop.f32.mrb[0].mxu0
      %v998 = vpop.f32.mrb[0].mxu0
      %999 = vdwg.mxu0
      %1000 = vmatprep.subr.bf16.mxu0 0
      %1001 = vmatpush1.bf16.msra.mxu0 %v564
      %1002 = vmatprep.subr.bf16.mxu0 0
      %1003 = vmatpush1.bf16.msra.mxu0 %v565
      %1004 = vmatprep.subr.bf16.mxu0 0
      %1005 = vmatpush1.bf16.msra.mxu0 %v566
      %1006 = vmatprep.subr.bf16.mxu0 0
      %1007 = vmatpush1.bf16.msra.mxu0 %v567
      %1008 = vmatprep.subr.bf16.mxu0 0
      %1009 = vmatpush1.bf16.msra.mxu0 %v568
      %1010 = vmatprep.subr.bf16.mxu0 0
      %1011 = vmatpush1.bf16.msra.mxu0 %v569
      %1012 = vmatprep.subr.bf16.mxu0 0
      %1013 = vmatpush1.bf16.msra.mxu0 %v570
      %1014 = vmatprep.subr.bf16.mxu0 0
      %1015 = vmatpush1.bf16.msra.mxu0 %v571
      %1016 = vmatprep.subr.bf16.mxu0 0
      %1017 = vmatpush1.bf16.msra.mxu0 %v572
      %1018 = vmatprep.subr.bf16.mxu0 0
      %1019 = vmatpush1.bf16.msra.mxu0 %v573
      %1020 = vmatprep.subr.bf16.mxu0 0
      %1021 = vmatpush1.bf16.msra.mxu0 %v574
      %1022 = vmatprep.subr.bf16.mxu0 0
      %1023 = vmatpush1.bf16.msra.mxu0 %v575
      %1024 = vmatprep.subr.bf16.mxu0 0
      %1025 = vmatpush1.bf16.msra.mxu0 0
      %1026 = vmatprep.subr.bf16.mxu0 0
      %1027 = vmatpush1.bf16.msra.mxu0 0
      %1028 = vmatprep.subr.bf16.mxu0 0
      %1029 = vmatpush1.bf16.msra.mxu0 0
      %1030 = vmatprep.subr.bf16.mxu0 0
      %1031 = vmatpush1.bf16.msra.mxu0 0
      %1032 = vmatprep.mubr.bf16.mxu0 %v958
      %1033 = vmatmul.mubr.bf16.gmra.mrb[0].mxu0 %v453
      %v1034 = vpop.f32.mrb[0].mxu0
      %v1035 = vadd.f32 0.0, %v1034
      %v1036 = vpop.f32.mrb[0].mxu0
      %v1037 = vpop.f32.mrb[0].mxu0
      %v1038 = vpop.f32.mrb[0].mxu0
      %1039 = vdwg.mxu0
      %v1040 = vsel %vm426, %v397, 0
      %1042 = vmatprep.subr.bf16.mxu0 0
      %1043 = vmatpush1.bf16.msra.mxu0 %v564
      %1044 = vmatprep.subr.bf16.mxu0 0
      %1045 = vmatpush1.bf16.msra.mxu0 %v565
      %1046 = vmatprep.subr.bf16.mxu0 0
      %1047 = vmatpush1.bf16.msra.mxu0 %v566
      %1048 = vmatprep.subr.bf16.mxu0 0
      %1049 = vmatpush1.bf16.msra.mxu0 %v567
      %1050 = vmatprep.subr.bf16.mxu0 0
      %1051 = vmatpush1.bf16.msra.mxu0 %v568
      %1052 = vmatprep.subr.bf16.mxu0 0
      %1053 = vmatpush1.bf16.msra.mxu0 %v569
      %1054 = vmatprep.subr.bf16.mxu0 0
      %1055 = vmatpush1.bf16.msra.mxu0 %v570
      %1056 = vmatprep.subr.bf16.mxu0 0
      %1057 = vmatpush1.bf16.msra.mxu0 %v571
      %1058 = vmatprep.subr.bf16.mxu0 0
      %1059 = vmatpush1.bf16.msra.mxu0 %v572
      %1060 = vmatprep.subr.bf16.mxu0 0
      %1061 = vmatpush1.bf16.msra.mxu0 %v573
      %1062 = vmatprep.subr.bf16.mxu0 0
      %1063 = vmatpush1.bf16.msra.mxu0 %v574
      %1064 = vmatprep.subr.bf16.mxu0 0
      %1065 = vmatpush1.bf16.msra.mxu0 %v575
      %1066 = vmatprep.subr.bf16.mxu0 0
      %1067 = vmatpush1.bf16.msra.mxu0 0
      %1068 = vmatprep.subr.bf16.mxu0 0
      %1069 = vmatpush1.bf16.msra.mxu0 0
      %1070 = vmatprep.subr.bf16.mxu0 0
      %1071 = vmatpush1.bf16.msra.mxu0 0
      %1072 = vmatprep.subr.bf16.mxu0 0
      %1073 = vmatpush1.bf16.msra.mxu0 0
      %1074 = vmatprep.mubr.bf16.mxu0 %v1040
      %1075 = vmatmul.mubr.bf16.gmra.mrb[0].mxu0 %v455
      %v1076 = vpop.f32.mrb[0].mxu0
      %v1077 = vadd.f32 0.0, %v1076
      %v1078 = vpop.f32.mrb[0].mxu0
      %v1079 = vpop.f32.mrb[0].mxu0
      %v1080 = vpop.f32.mrb[0].mxu0
      %1081 = vdwg.mxu0
      %1082 = vmatprep.subr.bf16.mxu0 0
      %1083 = vmatpush1.bf16.msra.mxu0 %v564
      %1084 = vmatprep.subr.bf16.mxu0 0
      %1085 = vmatpush1.bf16.msra.mxu0 %v565
      %1086 = vmatprep.subr.bf16.mxu0 0
      %1087 = vmatpush1.bf16.msra.mxu0 %v566
      %1088 = vmatprep.subr.bf16.mxu0 0
      %1089 = vmatpush1.bf16.msra.mxu0 %v567
      %1090 = vmatprep.subr.bf16.mxu0 0
      %1091 = vmatpush1.bf16.msra.mxu0 %v568
      %1092 = vmatprep.subr.bf16.mxu0 0
      %1093 = vmatpush1.bf16.msra.mxu0 %v569
      %1094 = vmatprep.subr.bf16.mxu0 0
      %1095 = vmatpush1.bf16.msra.mxu0 %v570
      %1096 = vmatprep.subr.bf16.mxu0 0
      %1097 = vmatpush1.bf16.msra.mxu0 %v571
      %1098 = vmatprep.subr.bf16.mxu0 0
      %1099 = vmatpush1.bf16.msra.mxu0 %v572
      %1100 = vmatprep.subr.bf16.mxu0 0
      %1101 = vmatpush1.bf16.msra.mxu0 %v573
      %1102 = vmatprep.subr.bf16.mxu0 0
      %1103 = vmatpush1.bf16.msra.mxu0 %v574
      %1104 = vmatprep.subr.bf16.mxu0 0
      %1105 = vmatpush1.bf16.msra.mxu0 %v575
      %1106 = vmatprep.subr.bf16.mxu0 0
      %1107 = vmatpush1.bf16.msra.mxu0 0
      %1108 = vmatprep.subr.bf16.mxu0 0
      %1109 = vmatpush1.bf16.msra.mxu0 0
      %1110 = vmatprep.subr.bf16.mxu0 0
      %1111 = vmatpush1.bf16.msra.mxu0 0
      %1112 = vmatprep.subr.bf16.mxu0 0
      %1113 = vmatpush1.bf16.msra.mxu0 0
      %1114 = vmatprep.mubr.bf16.mxu0 %v1040
      %1115 = vmatmul.mubr.bf16.gmra.mrb[0].mxu0 %v458
      %v1116 = vpop.f32.mrb[0].mxu0
      %v1117 = vadd.f32 0.0, %v1116
      %v1118 = vpop.f32.mrb[0].mxu0
      %v1119 = vpop.f32.mrb[0].mxu0
      %v1120 = vpop.f32.mrb[0].mxu0
      %1121 = vdwg.mxu0
      %v1122 = vsel %vm426, %v399, 0
      %1124 = vmatprep.subr.bf16.mxu0 0
      %1125 = vmatpush1.bf16.msra.mxu0 %v564
      %1126 = vmatprep.subr.bf16.mxu0 0
      %1127 = vmatpush1.bf16.msra.mxu0 %v565
      %1128 = vmatprep.subr.bf16.mxu0 0
      %1129 = vmatpush1.bf16.msra.mxu0 %v566
      %1130 = vmatprep.subr.bf16.mxu0 0
      %1131 = vmatpush1.bf16.msra.mxu0 %v567
      %1132 = vmatprep.subr.bf16.mxu0 0
      %1133 = vmatpush1.bf16.msra.mxu0 %v568
      %1134 = vmatprep.subr.bf16.mxu0 0
      %1135 = vmatpush1.bf16.msra.mxu0 %v569
      %1136 = vmatprep.subr.bf16.mxu0 0
      %1137 = vmatpush1.bf16.msra.mxu0 %v570
      %1138 = vmatprep.subr.bf16.mxu0 0
      %1139 = vmatpush1.bf16.msra.mxu0 %v571
      %1140 = vmatprep.subr.bf16.mxu0 0
      %1141 = vmatpush1.bf16.msra.mxu0 %v572
      %1142 = vmatprep.subr.bf16.mxu0 0
      %1143 = vmatpush1.bf16.msra.mxu0 %v573
      %1144 = vmatprep.subr.bf16.mxu0 0
      %1145 = vmatpush1.bf16.msra.mxu0 %v574
      %1146 = vmatprep.subr.bf16.mxu0 0
      %1147 = vmatpush1.bf16.msra.mxu0 %v575
      %1148 = vmatprep.subr.bf16.mxu0 0
      %1149 = vmatpush1.bf16.msra.mxu0 0
      %1150 = vmatprep.subr.bf16.mxu0 0
      %1151 = vmatpush1.bf16.msra.mxu0 0
      %1152 = vmatprep.subr.bf16.mxu0 0
      %1153 = vmatpush1.bf16.msra.mxu0 0
      %1154 = vmatprep.subr.bf16.mxu0 0
      %1155 = vmatpush1.bf16.msra.mxu0 0
      %1156 = vmatprep.mubr.bf16.mxu0 %v1122
      %1157 = vmatmul.mubr.bf16.gmra.mrb[0].mxu0 %v460
      %v1158 = vpop.f32.mrb[0].mxu0
      %v1159 = vadd.f32 0.0, %v1158
      %v1160 = vpop.f32.mrb[0].mxu0
      %v1161 = vpop.f32.mrb[0].mxu0
      %v1162 = vpop.f32.mrb[0].mxu0
      %1163 = vdwg.mxu0
      %1164 = vmatprep.subr.bf16.mxu0 0
      %1165 = vmatpush1.bf16.msra.mxu0 %v564
      %1166 = vmatprep.subr.bf16.mxu0 0
      %1167 = vmatpush1.bf16.msra.mxu0 %v565
      %1168 = vmatprep.subr.bf16.mxu0 0
      %1169 = vmatpush1.bf16.msra.mxu0 %v566
      %1170 = vmatprep.subr.bf16.mxu0 0
      %1171 = vmatpush1.bf16.msra.mxu0 %v567
      %1172 = vmatprep.subr.bf16.mxu0 0
      %1173 = vmatpush1.bf16.msra.mxu0 %v568
      %1174 = vmatprep.subr.bf16.mxu0 0
      %1175 = vmatpush1.bf16.msra.mxu0 %v569
      %1176 = vmatprep.subr.bf16.mxu0 0
      %1177 = vmatpush1.bf16.msra.mxu0 %v570
      %1178 = vmatprep.subr.bf16.mxu0 0
      %1179 = vmatpush1.bf16.msra.mxu0 %v571
      %1180 = vmatprep.subr.bf16.mxu0 0
      %1181 = vmatpush1.bf16.msra.mxu0 %v572
      %1182 = vmatprep.subr.bf16.mxu0 0
      %1183 = vmatpush1.bf16.msra.mxu0 %v573
      %1184 = vmatprep.subr.bf16.mxu0 0
      %1185 = vmatpush1.bf16.msra.mxu0 %v574
      %1186 = vmatprep.subr.bf16.mxu0 0
      %1187 = vmatpush1.bf16.msra.mxu0 %v575
      %1188 = vmatprep.subr.bf16.mxu0 0
      %1189 = vmatpush1.bf16.msra.mxu0 0
      %1190 = vmatprep.subr.bf16.mxu0 0
      %1191 = vmatpush1.bf16.msra.mxu0 0
      %1192 = vmatprep.subr.bf16.mxu0 0
      %1193 = vmatpush1.bf16.msra.mxu0 0
      %1194 = vmatprep.subr.bf16.mxu0 0
      %1195 = vmatpush1.bf16.msra.mxu0 0
      %1196 = vmatprep.mubr.bf16.mxu0 %v1122
      %1197 = vmatmul.mubr.bf16.gmra.mrb[0].mxu0 %v463
      %v1198 = vpop.f32.mrb[0].mxu0
      %v1199 = vadd.f32 0.0, %v1198
      %v1200 = vpop.f32.mrb[0].mxu0
      %v1201 = vpop.f32.mrb[0].mxu0
      %v1202 = vpop.f32.mrb[0].mxu0
      %1203 = vdwg.mxu0
      %v1204 = vsel %vm426, %v401, 0
      %1206 = vmatprep.subr.bf16.mxu0 0
      %1207 = vmatpush1.bf16.msra.mxu0 %v564
      %1208 = vmatprep.subr.bf16.mxu0 0
      %1209 = vmatpush1.bf16.msra.mxu0 %v565
      %1210 = vmatprep.subr.bf16.mxu0 0
      %1211 = vmatpush1.bf16.msra.mxu0 %v566
      %1212 = vmatprep.subr.bf16.mxu0 0
      %1213 = vmatpush1.bf16.msra.mxu0 %v567
      %1214 = vmatprep.subr.bf16.mxu0 0
      %1215 = vmatpush1.bf16.msra.mxu0 %v568
      %1216 = vmatprep.subr.bf16.mxu0 0
      %1217 = vmatpush1.bf16.msra.mxu0 %v569
      %1218 = vmatprep.subr.bf16.mxu0 0
      %1219 = vmatpush1.bf16.msra.mxu0 %v570
      %1220 = vmatprep.subr.bf16.mxu0 0
      %1221 = vmatpush1.bf16.msra.mxu0 %v571
      %1222 = vmatprep.subr.bf16.mxu0 0
      %1223 = vmatpush1.bf16.msra.mxu0 %v572
      %1224 = vmatprep.subr.bf16.mxu0 0
      %1225 = vmatpush1.bf16.msra.mxu0 %v573
      %1226 = vmatprep.subr.bf16.mxu0 0
      %1227 = vmatpush1.bf16.msra.mxu0 %v574
      %1228 = vmatprep.subr.bf16.mxu0 0
      %1229 = vmatpush1.bf16.msra.mxu0 %v575
      %1230 = vmatprep.subr.bf16.mxu0 0
      %1231 = vmatpush1.bf16.msra.mxu0 0
      %1232 = vmatprep.subr.bf16.mxu0 0
      %1233 = vmatpush1.bf16.msra.mxu0 0
      %1234 = vmatprep.subr.bf16.mxu0 0
      %1235 = vmatpush1.bf16.msra.mxu0 0
      %1236 = vmatprep.subr.bf16.mxu0 0
      %1237 = vmatpush1.bf16.msra.mxu0 0
      %1238 = vmatprep.mubr.bf16.mxu0 %v1204
      %1239 = vmatmul.mubr.bf16.gmra.mrb[0].mxu0 %v465
      %v1240 = vpop.f32.mrb[0].mxu0
      %v1241 = vadd.f32 0.0, %v1240
      %v1242 = vpop.f32.mrb[0].mxu0
      %v1243 = vpop.f32.mrb[0].mxu0
      %v1244 = vpop.f32.mrb[0].mxu0
      %1245 = vdwg.mxu0
      %v1246 = vshrl.u32 %v428, 16
      %v1248 = vshll.u32 %v428, 16
      %v1250 = vrot.slane %v1248, 1
      %v1251 = vor.u32 %v1246, %v1250
      %v1252 = vshrl.u32 %v385, 16
      %v1254 = vshll.u32 %v385, 16
      %v1256 = vrot.slane %v1254, 1
      %v1257 = vor.u32 %v1252, %v1256
      %v1283 = vunpack.c.l.b16 %v492
      %v1284 = vunpack.c.l.b16 %v493
      %v1285 = vunpack.c.l.b16 %v494
      %v1286 = vunpack.c.l.b16 %v495
      %v1287 = vunpack.c.l.b16 %v496
      %v1288 = vunpack.c.l.b16 %v497
      %v1289 = vunpack.c.l.b16 %v498
      %v1290 = vunpack.c.l.b16 %v499
      %v1291 = vunpack.c.l.b16 %v500
      %v1292 = vunpack.c.l.b16 %v501
      %v1293 = vunpack.c.l.b16 %v502
      %v1294 = vunpack.c.l.b16 %v503
      %v1295 = vunpack.c.l.b16 %v504
      %v1296 = vunpack.c.l.b16 %v505
      %v1297 = vunpack.c.l.b16 %v506
      %v1298 = vunpack.c.l.b16 %v507
      %v1299 = vunpack.c.l.b16 %v508
      %v1300 = vunpack.c.l.b16 %v509
      %v1301 = vunpack.c.l.b16 %v510
      %v1302 = vunpack.c.l.b16 %v511
      %v1303 = vunpack.c.l.b16 %v512
      %v1304 = vunpack.c.l.b16 %v513
      %v1305 = vunpack.c.l.b16 %v514
      %v1306 = vunpack.c.l.b16 %v515
      %v1307 = vpack.c.b16 %v1284, %v1283
      %v1308 = vpack.c.b16 %v1286, %v1285
      %v1309 = vpack.c.b16 %v1288, %v1287
      %v1310 = vpack.c.b16 %v1290, %v1289
      %v1311 = vpack.c.b16 %v1292, %v1291
      %v1312 = vpack.c.b16 %v1294, %v1293
      %v1313 = vpack.c.b16 %v1296, %v1295
      %v1314 = vpack.c.b16 %v1298, %v1297
      %v1315 = vpack.c.b16 %v1300, %v1299
      %v1316 = vpack.c.b16 %v1302, %v1301
      %v1317 = vpack.c.b16 %v1304, %v1303
      %v1318 = vpack.c.b16 %v1306, %v1305
      %v1332 = vsel %vm426, %v1257, 0
      %1334 = vmatprep.subr.bf16.mxu0 0
      %1335 = vmatpush1.bf16.msra.mxu0 %v1307
      %1336 = vmatprep.subr.bf16.mxu0 0
      %1337 = vmatpush1.bf16.msra.mxu0 %v1308
      %1338 = vmatprep.subr.bf16.mxu0 0
      %1339 = vmatpush1.bf16.msra.mxu0 %v1309
      %1340 = vmatprep.subr.bf16.mxu0 0
      %1341 = vmatpush1.bf16.msra.mxu0 %v1310
      %1342 = vmatprep.subr.bf16.mxu0 0
      %1343 = vmatpush1.bf16.msra.mxu0 %v1311
      %1344 = vmatprep.subr.bf16.mxu0 0
      %1345 = vmatpush1.bf16.msra.mxu0 %v1312
      %1346 = vmatprep.subr.bf16.mxu0 0
      %1347 = vmatpush1.bf16.msra.mxu0 %v1313
      %1348 = vmatprep.subr.bf16.mxu0 0
      %1349 = vmatpush1.bf16.msra.mxu0 %v1314
      %1350 = vmatprep.subr.bf16.mxu0 0
      %1351 = vmatpush1.bf16.msra.mxu0 %v1315
      %1352 = vmatprep.subr.bf16.mxu0 0
      %1353 = vmatpush1.bf16.msra.mxu0 %v1316
      %1354 = vmatprep.subr.bf16.mxu0 0
      %1355 = vmatpush1.bf16.msra.mxu0 %v1317
      %1356 = vmatprep.subr.bf16.mxu0 0
      %1357 = vmatpush1.bf16.msra.mxu0 %v1318
      %1358 = vmatprep.subr.bf16.mxu0 0
      %1359 = vmatpush1.bf16.msra.mxu0 0
      %1360 = vmatprep.subr.bf16.mxu0 0
      %1361 = vmatpush1.bf16.msra.mxu0 0
      %1362 = vmatprep.subr.bf16.mxu0 0
      %1363 = vmatpush1.bf16.msra.mxu0 0
      %1364 = vmatprep.subr.bf16.mxu0 0
      %1365 = vmatpush1.bf16.msra.mxu0 0
      %1366 = vmatprep.mubr.bf16.mxu0 %v1332
      %1367 = vmatmul.mubr.bf16.gmra.mrb[0].mxu0 %v1251
      %v1368 = vpop.f32.mrb[0].mxu0
      %v1369 = vadd.f32 0.0, %v1368
      %v1370 = vpop.f32.mrb[0].mxu0
      %v1371 = vpop.f32.mrb[0].mxu0
      %v1372 = vpop.f32.mrb[0].mxu0
      %1373 = vdwg.mxu0
      %v1374 = vshrl.u32 %v430, 16
      %v1376 = vshll.u32 %v430, 16
      %v1378 = vrot.slane %v1376, 1
      %v1379 = vor.u32 %v1374, %v1378
      %v1380 = vshrl.u32 %v387, 16
      %v1382 = vshll.u32 %v387, 16
      %v1384 = vrot.slane %v1382, 1
      %v1385 = vor.u32 %v1380, %v1384
      %v1388 = vsel %vm426, %v1385, 0
      %1390 = vmatprep.subr.bf16.mxu0 0
      %1391 = vmatpush1.bf16.msra.mxu0 %v1307
      %1392 = vmatprep.subr.bf16.mxu0 0
      %1393 = vmatpush1.bf16.msra.mxu0 %v1308
      %1394 = vmatprep.subr.bf16.mxu0 0
      %1395 = vmatpush1.bf16.msra.mxu0 %v1309
      %1396 = vmatprep.subr.bf16.mxu0 0
      %1397 = vmatpush1.bf16.msra.mxu0 %v1310
      %1398 = vmatprep.subr.bf16.mxu0 0
      %1399 = vmatpush1.bf16.msra.mxu0 %v1311
      %1400 = vmatprep.subr.bf16.mxu0 0
      %1401 = vmatpush1.bf16.msra.mxu0 %v1312
      %1402 = vmatprep.subr.bf16.mxu0 0
      %1403 = vmatpush1.bf16.msra.mxu0 %v1313
      %1404 = vmatprep.subr.bf16.mxu0 0
      %1405 = vmatpush1.bf16.msra.mxu0 %v1314
      %1406 = vmatprep.subr.bf16.mxu0 0
      %1407 = vmatpush1.bf16.msra.mxu0 %v1315
      %1408 = vmatprep.subr.bf16.mxu0 0
      %1409 = vmatpush1.bf16.msra.mxu0 %v1316
      %1410 = vmatprep.subr.bf16.mxu0 0
      %1411 = vmatpush1.bf16.msra.mxu0 %v1317
      %1412 = vmatprep.subr.bf16.mxu0 0
      %1413 = vmatpush1.bf16.msra.mxu0 %v1318
      %1414 = vmatprep.subr.bf16.mxu0 0
      %1415 = vmatpush1.bf16.msra.mxu0 0
      %1416 = vmatprep.subr.bf16.mxu0 0
      %1417 = vmatpush1.bf16.msra.mxu0 0
      %1418 = vmatprep.subr.bf16.mxu0 0
      %1419 = vmatpush1.bf16.msra.mxu0 0
      %1420 = vmatprep.subr.bf16.mxu0 0
      %1421 = vmatpush1.bf16.msra.mxu0 0
      %1422 = vmatprep.mubr.bf16.mxu0 %v1388
      %1423 = vmatmul.mubr.bf16.gmra.mrb[0].mxu0 %v1379
      %v1424 = vpop.f32.mrb[0].mxu0
      %v1425 = vadd.f32 0.0, %v1424
      %v1426 = vpop.f32.mrb[0].mxu0
      %v1427 = vpop.f32.mrb[0].mxu0
      %v1428 = vpop.f32.mrb[0].mxu0
      %1429 = vdwg.mxu0
      %v1430 = vshrl.u32 %v433, 16
      %v1432 = vshll.u32 %v433, 16
      %v1434 = vrot.slane %v1432, 1
      %v1435 = vor.u32 %v1430, %v1434
      %1437 = vmatprep.subr.bf16.mxu0 0
      %1438 = vmatpush1.bf16.msra.mxu0 %v1307
      %1439 = vmatprep.subr.bf16.mxu0 0
      %1440 = vmatpush1.bf16.msra.mxu0 %v1308
      %1441 = vmatprep.subr.bf16.mxu0 0
      %1442 = vmatpush1.bf16.msra.mxu0 %v1309
      %1443 = vmatprep.subr.bf16.mxu0 0
      %1444 = vmatpush1.bf16.msra.mxu0 %v1310
      %1445 = vmatprep.subr.bf16.mxu0 0
      %1446 = vmatpush1.bf16.msra.mxu0 %v1311
      %1447 = vmatprep.subr.bf16.mxu0 0
      %1448 = vmatpush1.bf16.msra.mxu0 %v1312
      %1449 = vmatprep.subr.bf16.mxu0 0
      %1450 = vmatpush1.bf16.msra.mxu0 %v1313
      %1451 = vmatprep.subr.bf16.mxu0 0
      %1452 = vmatpush1.bf16.msra.mxu0 %v1314
      %1453 = vmatprep.subr.bf16.mxu0 0
      %1454 = vmatpush1.bf16.msra.mxu0 %v1315
      %1455 = vmatprep.subr.bf16.mxu0 0
      %1456 = vmatpush1.bf16.msra.mxu0 %v1316
      %1457 = vmatprep.subr.bf16.mxu0 0
      %1458 = vmatpush1.bf16.msra.mxu0 %v1317
      %1459 = vmatprep.subr.bf16.mxu0 0
      %1460 = vmatpush1.bf16.msra.mxu0 %v1318
      %1461 = vmatprep.subr.bf16.mxu0 0
      %1462 = vmatpush1.bf16.msra.mxu0 0
      %1463 = vmatprep.subr.bf16.mxu0 0
      %1464 = vmatpush1.bf16.msra.mxu0 0
      %1465 = vmatprep.subr.bf16.mxu0 0
      %1466 = vmatpush1.bf16.msra.mxu0 0
      %1467 = vmatprep.subr.bf16.mxu0 0
      %1468 = vmatpush1.bf16.msra.mxu0 0
      %1469 = vmatprep.mubr.bf16.mxu0 %v1388
      %1470 = vmatmul.mubr.bf16.gmra.mrb[0].mxu0 %v1435
      %v1471 = vpop.f32.mrb[0].mxu0
      %v1472 = vadd.f32 0.0, %v1471
      %v1473 = vpop.f32.mrb[0].mxu0
      %v1474 = vpop.f32.mrb[0].mxu0
      %v1475 = vpop.f32.mrb[0].mxu0
      %1476 = vdwg.mxu0
      %v1477 = vshrl.u32 %v435, 16
      %v1479 = vshll.u32 %v435, 16
      %v1481 = vrot.slane %v1479, 1
      %v1482 = vor.u32 %v1477, %v1481
      %v1483 = vshrl.u32 %v389, 16
      %v1485 = vshll.u32 %v389, 16
      %v1487 = vrot.slane %v1485, 1
      %v1488 = vor.u32 %v1483, %v1487
      %v1491 = vsel %vm426, %v1488, 0
      %1493 = vmatprep.subr.bf16.mxu0 0
      %1494 = vmatpush1.bf16.msra.mxu0 %v1307
      %1495 = vmatprep.subr.bf16.mxu0 0
      %1496 = vmatpush1.bf16.msra.mxu0 %v1308
      %1497 = vmatprep.subr.bf16.mxu0 0
      %1498 = vmatpush1.bf16.msra.mxu0 %v1309
      %1499 = vmatprep.subr.bf16.mxu0 0
      %1500 = vmatpush1.bf16.msra.mxu0 %v1310
      %1501 = vmatprep.subr.bf16.mxu0 0
      %1502 = vmatpush1.bf16.msra.mxu0 %v1311
      %1503 = vmatprep.subr.bf16.mxu0 0
      %1504 = vmatpush1.bf16.msra.mxu0 %v1312
      %1505 = vmatprep.subr.bf16.mxu0 0
      %1506 = vmatpush1.bf16.msra.mxu0 %v1313
      %1507 = vmatprep.subr.bf16.mxu0 0
      %1508 = vmatpush1.bf16.msra.mxu0 %v1314
      %1509 = vmatprep.subr.bf16.mxu0 0
      %1510 = vmatpush1.bf16.msra.mxu0 %v1315
      %1511 = vmatprep.subr.bf16.mxu0 0
      %1512 = vmatpush1.bf16.msra.mxu0 %v1316
      %1513 = vmatprep.subr.bf16.mxu0 0
      %1514 = vmatpush1.bf16.msra.mxu0 %v1317
      %1515 = vmatprep.subr.bf16.mxu0 0
      %1516 = vmatpush1.bf16.msra.mxu0 %v1318
      %1517 = vmatprep.subr.bf16.mxu0 0
      %1518 = vmatpush1.bf16.msra.mxu0 0
      %1519 = vmatprep.subr.bf16.mxu0 0
      %1520 = vmatpush1.bf16.msra.mxu0 0
      %1521 = vmatprep.subr.bf16.mxu0 0
      %1522 = vmatpush1.bf16.msra.mxu0 0
      %1523 = vmatprep.subr.bf16.mxu0 0
      %1524 = vmatpush1.bf16.msra.mxu0 0
      %1525 = vmatprep.mubr.bf16.mxu0 %v1491
      %1526 = vmatmul.mubr.bf16.gmra.mrb[0].mxu0 %v1482
      %v1527 = vpop.f32.mrb[0].mxu0
      %v1528 = vadd.f32 0.0, %v1527
      %v1529 = vpop.f32.mrb[0].mxu0
      %v1530 = vpop.f32.mrb[0].mxu0
      %v1531 = vpop.f32.mrb[0].mxu0
      %1532 = vdwg.mxu0
      %v1533 = vshrl.u32 %v438, 16
      %v1535 = vshll.u32 %v438, 16
      %v1537 = vrot.slane %v1535, 1
      %v1538 = vor.u32 %v1533, %v1537
      %1540 = vmatprep.subr.bf16.mxu0 0
      %1541 = vmatpush1.bf16.msra.mxu0 %v1307
      %1542 = vmatprep.subr.bf16.mxu0 0
      %1543 = vmatpush1.bf16.msra.mxu0 %v1308
      %1544 = vmatprep.subr.bf16.mxu0 0
      %1545 = vmatpush1.bf16.msra.mxu0 %v1309
      %1546 = vmatprep.subr.bf16.mxu0 0
      %1547 = vmatpush1.bf16.msra.mxu0 %v1310
      %1548 = vmatprep.subr.bf16.mxu0 0
      %1549 = vmatpush1.bf16.msra.mxu0 %v1311
      %1550 = vmatprep.subr.bf16.mxu0 0
      %1551 = vmatpush1.bf16.msra.mxu0 %v1312
      %1552 = vmatprep.subr.bf16.mxu0 0
      %1553 = vmatpush1.bf16.msra.mxu0 %v1313
      %1554 = vmatprep.subr.bf16.mxu0 0
      %1555 = vmatpush1.bf16.msra.mxu0 %v1314
      %1556 = vmatprep.subr.bf16.mxu0 0
      %1557 = vmatpush1.bf16.msra.mxu0 %v1315
      %1558 = vmatprep.subr.bf16.mxu0 0
      %1559 = vmatpush1.bf16.msra.mxu0 %v1316
      %1560 = vmatprep.subr.bf16.mxu0 0
      %1561 = vmatpush1.bf16.msra.mxu0 %v1317
      %1562 = vmatprep.subr.bf16.mxu0 0
      %1563 = vmatpush1.bf16.msra.mxu0 %v1318
      %1564 = vmatprep.subr.bf16.mxu0 0
      %1565 = vmatpush1.bf16.msra.mxu0 0
      %1566 = vmatprep.subr.bf16.mxu0 0
      %1567 = vmatpush1.bf16.msra.mxu0 0
      %1568 = vmatprep.subr.bf16.mxu0 0
      %1569 = vmatpush1.bf16.msra.mxu0 0
      %1570 = vmatprep.subr.bf16.mxu0 0
      %1571 = vmatpush1.bf16.msra.mxu0 0
      %1572 = vmatprep.mubr.bf16.mxu0 %v1491
      %1573 = vmatmul.mubr.bf16.gmra.mrb[0].mxu0 %v1538
      %v1574 = vpop.f32.mrb[0].mxu0
      %v1575 = vadd.f32 0.0, %v1574
      %v1576 = vpop.f32.mrb[0].mxu0
      %v1577 = vpop.f32.mrb[0].mxu0
      %v1578 = vpop.f32.mrb[0].mxu0
      %1579 = vdwg.mxu0
      %v1580 = vshrl.u32 %v440, 16
      %v1582 = vshll.u32 %v440, 16
      %v1584 = vrot.slane %v1582, 1
      %v1585 = vor.u32 %v1580, %v1584
      %v1586 = vshrl.u32 %v391, 16
      %v1588 = vshll.u32 %v391, 16
      %v1590 = vrot.slane %v1588, 1
      %v1591 = vor.u32 %v1586, %v1590
      %v1594 = vsel %vm426, %v1591, 0
      %1596 = vmatprep.subr.bf16.mxu0 0
      %1597 = vmatpush1.bf16.msra.mxu0 %v1307
      %1598 = vmatprep.subr.bf16.mxu0 0
      %1599 = vmatpush1.bf16.msra.mxu0 %v1308
      %1600 = vmatprep.subr.bf16.mxu0 0
      %1601 = vmatpush1.bf16.msra.mxu0 %v1309
      %1602 = vmatprep.subr.bf16.mxu0 0
      %1603 = vmatpush1.bf16.msra.mxu0 %v1310
      %1604 = vmatprep.subr.bf16.mxu0 0
      %1605 = vmatpush1.bf16.msra.mxu0 %v1311
      %1606 = vmatprep.subr.bf16.mxu0 0
      %1607 = vmatpush1.bf16.msra.mxu0 %v1312
      %1608 = vmatprep.subr.bf16.mxu0 0
      %1609 = vmatpush1.bf16.msra.mxu0 %v1313
      %1610 = vmatprep.subr.bf16.mxu0 0
      %1611 = vmatpush1.bf16.msra.mxu0 %v1314
      %1612 = vmatprep.subr.bf16.mxu0 0
      %1613 = vmatpush1.bf16.msra.mxu0 %v1315
      %1614 = vmatprep.subr.bf16.mxu0 0
      %1615 = vmatpush1.bf16.msra.mxu0 %v1316
      %1616 = vmatprep.subr.bf16.mxu0 0
      %1617 = vmatpush1.bf16.msra.mxu0 %v1317
      %1618 = vmatprep.subr.bf16.mxu0 0
      %1619 = vmatpush1.bf16.msra.mxu0 %v1318
      %1620 = vmatprep.subr.bf16.mxu0 0
      %1621 = vmatpush1.bf16.msra.mxu0 0
      %1622 = vmatprep.subr.bf16.mxu0 0
      %1623 = vmatpush1.bf16.msra.mxu0 0
      %1624 = vmatprep.subr.bf16.mxu0 0
      %1625 = vmatpush1.bf16.msra.mxu0 0
      %1626 = vmatprep.subr.bf16.mxu0 0
      %1627 = vmatpush1.bf16.msra.mxu0 0
      %1628 = vmatprep.mubr.bf16.mxu0 %v1594
      %1629 = vmatmul.mubr.bf16.gmra.mrb[0].mxu0 %v1585
      %v1630 = vpop.f32.mrb[0].mxu0
      %v1631 = vadd.f32 0.0, %v1630
      %v1632 = vpop.f32.mrb[0].mxu0
      %v1633 = vpop.f32.mrb[0].mxu0
      %v1634 = vpop.f32.mrb[0].mxu0
      %1635 = vdwg.mxu0
      %v1636 = vshrl.u32 %v443, 16
      %v1638 = vshll.u32 %v443, 16
      %v1640 = vrot.slane %v1638, 1
      %v1641 = vor.u32 %v1636, %v1640
      %1643 = vmatprep.subr.bf16.mxu0 0
      %1644 = vmatpush1.bf16.msra.mxu0 %v1307
      %1645 = vmatprep.subr.bf16.mxu0 0
      %1646 = vmatpush1.bf16.msra.mxu0 %v1308
      %1647 = vmatprep.subr.bf16.mxu0 0
      %1648 = vmatpush1.bf16.msra.mxu0 %v1309
      %1649 = vmatprep.subr.bf16.mxu0 0
      %1650 = vmatpush1.bf16.msra.mxu0 %v1310
      %1651 = vmatprep.subr.bf16.mxu0 0
      %1652 = vmatpush1.bf16.msra.mxu0 %v1311
      %1653 = vmatprep.subr.bf16.mxu0 0
      %1654 = vmatpush1.bf16.msra.mxu0 %v1312
      %1655 = vmatprep.subr.bf16.mxu0 0
      %1656 = vmatpush1.bf16.msra.mxu0 %v1313
      %1657 = vmatprep.subr.bf16.mxu0 0
      %1658 = vmatpush1.bf16.msra.mxu0 %v1314
      %1659 = vmatprep.subr.bf16.mxu0 0
      %1660 = vmatpush1.bf16.msra.mxu0 %v1315
      %1661 = vmatprep.subr.bf16.mxu0 0
      %1662 = vmatpush1.bf16.msra.mxu0 %v1316
      %1663 = vmatprep.subr.bf16.mxu0 0
      %1664 = vmatpush1.bf16.msra.mxu0 %v1317
      %1665 = vmatprep.subr.bf16.mxu0 0
      %1666 = vmatpush1.bf16.msra.mxu0 %v1318
      %1667 = vmatprep.subr.bf16.mxu0 0
      %1668 = vmatpush1.bf16.msra.mxu0 0
      %1669 = vmatprep.subr.bf16.mxu0 0
      %1670 = vmatpush1.bf16.msra.mxu0 0
      %1671 = vmatprep.subr.bf16.mxu0 0
      %1672 = vmatpush1.bf16.msra.mxu0 0
      %1673 = vmatprep.subr.bf16.mxu0 0
      %1674 = vmatpush1.bf16.msra.mxu0 0
      %1675 = vmatprep.mubr.bf16.mxu0 %v1594
      %1676 = vmatmul.mubr.bf16.gmra.mrb[0].mxu0 %v1641
      %v1677 = vpop.f32.mrb[0].mxu0
      %v1678 = vadd.f32 0.0, %v1677
      %v1679 = vpop.f32.mrb[0].mxu0
      %v1680 = vpop.f32.mrb[0].mxu0
      %v1681 = vpop.f32.mrb[0].mxu0
      %1682 = vdwg.mxu0
      %v1683 = vshrl.u32 %v445, 16
      %v1685 = vshll.u32 %v445, 16
      %v1687 = vrot.slane %v1685, 1
      %v1688 = vor.u32 %v1683, %v1687
      %v1689 = vshrl.u32 %v393, 16
      %v1691 = vshll.u32 %v393, 16
      %v1693 = vrot.slane %v1691, 1
      %v1694 = vor.u32 %v1689, %v1693
      %v1697 = vsel %vm426, %v1694, 0
      %1699 = vmatprep.subr.bf16.mxu0 0
      %1700 = vmatpush1.bf16.msra.mxu0 %v1307
      %1701 = vmatprep.subr.bf16.mxu0 0
      %1702 = vmatpush1.bf16.msra.mxu0 %v1308
      %1703 = vmatprep.subr.bf16.mxu0 0
      %1704 = vmatpush1.bf16.msra.mxu0 %v1309
      %1705 = vmatprep.subr.bf16.mxu0 0
      %1706 = vmatpush1.bf16.msra.mxu0 %v1310
      %1707 = vmatprep.subr.bf16.mxu0 0
      %1708 = vmatpush1.bf16.msra.mxu0 %v1311
      %1709 = vmatprep.subr.bf16.mxu0 0
      %1710 = vmatpush1.bf16.msra.mxu0 %v1312
      %1711 = vmatprep.subr.bf16.mxu0 0
      %1712 = vmatpush1.bf16.msra.mxu0 %v1313
      %1713 = vmatprep.subr.bf16.mxu0 0
      %1714 = vmatpush1.bf16.msra.mxu0 %v1314
      %1715 = vmatprep.subr.bf16.mxu0 0
      %1716 = vmatpush1.bf16.msra.mxu0 %v1315
      %1717 = vmatprep.subr.bf16.mxu0 0
      %1718 = vmatpush1.bf16.msra.mxu0 %v1316
      %1719 = vmatprep.subr.bf16.mxu0 0
      %1720 = vmatpush1.bf16.msra.mxu0 %v1317
      %1721 = vmatprep.subr.bf16.mxu0 0
      %1722 = vmatpush1.bf16.msra.mxu0 %v1318
      %1723 = vmatprep.subr.bf16.mxu0 0
      %1724 = vmatpush1.bf16.msra.mxu0 0
      %1725 = vmatprep.subr.bf16.mxu0 0
      %1726 = vmatpush1.bf16.msra.mxu0 0
      %1727 = vmatprep.subr.bf16.mxu0 0
      %1728 = vmatpush1.bf16.msra.mxu0 0
      %1729 = vmatprep.subr.bf16.mxu0 0
      %1730 = vmatpush1.bf16.msra.mxu0 0
      %1731 = vmatprep.mubr.bf16.mxu0 %v1697
      %1732 = vmatmul.mubr.bf16.gmra.mrb[0].mxu0 %v1688
      %v1733 = vpop.f32.mrb[0].mxu0
      %v1734 = vadd.f32 0.0, %v1733
      %v1735 = vpop.f32.mrb[0].mxu0
      %v1736 = vpop.f32.mrb[0].mxu0
      %v1737 = vpop.f32.mrb[0].mxu0
      %1738 = vdwg.mxu0
      %v1739 = vshrl.u32 %v448, 16
      %v1741 = vshll.u32 %v448, 16
      %v1743 = vrot.slane %v1741, 1
      %v1744 = vor.u32 %v1739, %v1743
      %1746 = vmatprep.subr.bf16.mxu0 0
      %1747 = vmatpush1.bf16.msra.mxu0 %v1307
      %1748 = vmatprep.subr.bf16.mxu0 0
      %1749 = vmatpush1.bf16.msra.mxu0 %v1308
      %1750 = vmatprep.subr.bf16.mxu0 0
      %1751 = vmatpush1.bf16.msra.mxu0 %v1309
      %1752 = vmatprep.subr.bf16.mxu0 0
      %1753 = vmatpush1.bf16.msra.mxu0 %v1310
      %1754 = vmatprep.subr.bf16.mxu0 0
      %1755 = vmatpush1.bf16.msra.mxu0 %v1311
      %1756 = vmatprep.subr.bf16.mxu0 0
      %1757 = vmatpush1.bf16.msra.mxu0 %v1312
      %1758 = vmatprep.subr.bf16.mxu0 0
      %1759 = vmatpush1.bf16.msra.mxu0 %v1313
      %1760 = vmatprep.subr.bf16.mxu0 0
      %1761 = vmatpush1.bf16.msra.mxu0 %v1314
      %1762 = vmatprep.subr.bf16.mxu0 0
      %1763 = vmatpush1.bf16.msra.mxu0 %v1315
      %1764 = vmatprep.subr.bf16.mxu0 0
      %1765 = vmatpush1.bf16.msra.mxu0 %v1316
      %1766 = vmatprep.subr.bf16.mxu0 0
      %1767 = vmatpush1.bf16.msra.mxu0 %v1317
      %1768 = vmatprep.subr.bf16.mxu0 0
      %1769 = vmatpush1.bf16.msra.mxu0 %v1318
      %1770 = vmatprep.subr.bf16.mxu0 0
      %1771 = vmatpush1.bf16.msra.mxu0 0
      %1772 = vmatprep.subr.bf16.mxu0 0
      %1773 = vmatpush1.bf16.msra.mxu0 0
      %1774 = vmatprep.subr.bf16.mxu0 0
      %1775 = vmatpush1.bf16.msra.mxu0 0
      %1776 = vmatprep.subr.bf16.mxu0 0
      %1777 = vmatpush1.bf16.msra.mxu0 0
      %1778 = vmatprep.mubr.bf16.mxu0 %v1697
      %1779 = vmatmul.mubr.bf16.gmra.mrb[0].mxu0 %v1744
      %v1780 = vpop.f32.mrb[0].mxu0
      %v1781 = vadd.f32 0.0, %v1780
      %v1782 = vpop.f32.mrb[0].mxu0
      %v1783 = vpop.f32.mrb[0].mxu0
      %v1784 = vpop.f32.mrb[0].mxu0
      %1785 = vdwg.mxu0
      %v1786 = vshrl.u32 %v450, 16
      %v1788 = vshll.u32 %v450, 16
      %v1790 = vrot.slane %v1788, 1
      %v1791 = vor.u32 %v1786, %v1790
      %v1792 = vshrl.u32 %v395, 16
      %v1794 = vshll.u32 %v395, 16
      %v1796 = vrot.slane %v1794, 1
      %v1797 = vor.u32 %v1792, %v1796
      %v1800 = vsel %vm426, %v1797, 0
      %1802 = vmatprep.subr.bf16.mxu0 0
      %1803 = vmatpush1.bf16.msra.mxu0 %v1307
      %1804 = vmatprep.subr.bf16.mxu0 0
      %1805 = vmatpush1.bf16.msra.mxu0 %v1308
      %1806 = vmatprep.subr.bf16.mxu0 0
      %1807 = vmatpush1.bf16.msra.mxu0 %v1309
      %1808 = vmatprep.subr.bf16.mxu0 0
      %1809 = vmatpush1.bf16.msra.mxu0 %v1310
      %1810 = vmatprep.subr.bf16.mxu0 0
      %1811 = vmatpush1.bf16.msra.mxu0 %v1311
      %1812 = vmatprep.subr.bf16.mxu0 0
      %1813 = vmatpush1.bf16.msra.mxu0 %v1312
      %1814 = vmatprep.subr.bf16.mxu0 0
      %1815 = vmatpush1.bf16.msra.mxu0 %v1313
      %1816 = vmatprep.subr.bf16.mxu0 0
      %1817 = vmatpush1.bf16.msra.mxu0 %v1314
      %1818 = vmatprep.subr.bf16.mxu0 0
      %1819 = vmatpush1.bf16.msra.mxu0 %v1315
      %1820 = vmatprep.subr.bf16.mxu0 0
      %1821 = vmatpush1.bf16.msra.mxu0 %v1316
      %1822 = vmatprep.subr.bf16.mxu0 0
      %1823 = vmatpush1.bf16.msra.mxu0 %v1317
      %1824 = vmatprep.subr.bf16.mxu0 0
      %1825 = vmatpush1.bf16.msra.mxu0 %v1318
      %1826 = vmatprep.subr.bf16.mxu0 0
      %1827 = vmatpush1.bf16.msra.mxu0 0
      %1828 = vmatprep.subr.bf16.mxu0 0
      %1829 = vmatpush1.bf16.msra.mxu0 0
      %1830 = vmatprep.subr.bf16.mxu0 0
      %1831 = vmatpush1.bf16.msra.mxu0 0
      %1832 = vmatprep.subr.bf16.mxu0 0
      %1833 = vmatpush1.bf16.msra.mxu0 0
      %1834 = vmatprep.mubr.bf16.mxu0 %v1800
      %1835 = vmatmul.mubr.bf16.gmra.mrb[0].mxu0 %v1791
      %v1836 = vpop.f32.mrb[0].mxu0
      %v1837 = vadd.f32 0.0, %v1836
      %v1838 = vpop.f32.mrb[0].mxu0
      %v1839 = vpop.f32.mrb[0].mxu0
      %v1840 = vpop.f32.mrb[0].mxu0
      %1841 = vdwg.mxu0
      %v1842 = vshrl.u32 %v453, 16
      %v1844 = vshll.u32 %v453, 16
      %v1846 = vrot.slane %v1844, 1
      %v1847 = vor.u32 %v1842, %v1846
      %1849 = vmatprep.subr.bf16.mxu0 0
      %1850 = vmatpush1.bf16.msra.mxu0 %v1307
      %1851 = vmatprep.subr.bf16.mxu0 0
      %1852 = vmatpush1.bf16.msra.mxu0 %v1308
      %1853 = vmatprep.subr.bf16.mxu0 0
      %1854 = vmatpush1.bf16.msra.mxu0 %v1309
      %1855 = vmatprep.subr.bf16.mxu0 0
      %1856 = vmatpush1.bf16.msra.mxu0 %v1310
      %1857 = vmatprep.subr.bf16.mxu0 0
      %1858 = vmatpush1.bf16.msra.mxu0 %v1311
      %1859 = vmatprep.subr.bf16.mxu0 0
      %1860 = vmatpush1.bf16.msra.mxu0 %v1312
      %1861 = vmatprep.subr.bf16.mxu0 0
      %1862 = vmatpush1.bf16.msra.mxu0 %v1313
      %1863 = vmatprep.subr.bf16.mxu0 0
      %1864 = vmatpush1.bf16.msra.mxu0 %v1314
      %1865 = vmatprep.subr.bf16.mxu0 0
      %1866 = vmatpush1.bf16.msra.mxu0 %v1315
      %1867 = vmatprep.subr.bf16.mxu0 0
      %1868 = vmatpush1.bf16.msra.mxu0 %v1316
      %1869 = vmatprep.subr.bf16.mxu0 0
      %1870 = vmatpush1.bf16.msra.mxu0 %v1317
      %1871 = vmatprep.subr.bf16.mxu0 0
      %1872 = vmatpush1.bf16.msra.mxu0 %v1318
      %1873 = vmatprep.subr.bf16.mxu0 0
      %1874 = vmatpush1.bf16.msra.mxu0 0
      %1875 = vmatprep.subr.bf16.mxu0 0
      %1876 = vmatpush1.bf16.msra.mxu0 0
      %1877 = vmatprep.subr.bf16.mxu0 0
      %1878 = vmatpush1.bf16.msra.mxu0 0
      %1879 = vmatprep.subr.bf16.mxu0 0
      %1880 = vmatpush1.bf16.msra.mxu0 0
      %1881 = vmatprep.mubr.bf16.mxu0 %v1800
      %1882 = vmatmul.mubr.bf16.gmra.mrb[0].mxu0 %v1847
      %v1883 = vpop.f32.mrb[0].mxu0
      %v1884 = vadd.f32 0.0, %v1883
      %v1885 = vpop.f32.mrb[0].mxu0
      %v1886 = vpop.f32.mrb[0].mxu0
      %v1887 = vpop.f32.mrb[0].mxu0
      %1888 = vdwg.mxu0
      %v1889 = vshrl.u32 %v455, 16
      %v1891 = vshll.u32 %v455, 16
      %v1893 = vrot.slane %v1891, 1
      %v1894 = vor.u32 %v1889, %v1893
      %v1895 = vshrl.u32 %v397, 16
      %v1897 = vshll.u32 %v397, 16
      %v1899 = vrot.slane %v1897, 1
      %v1900 = vor.u32 %v1895, %v1899
      %v1903 = vsel %vm426, %v1900, 0
      %1905 = vmatprep.subr.bf16.mxu0 0
      %1906 = vmatpush1.bf16.msra.mxu0 %v1307
      %1907 = vmatprep.subr.bf16.mxu0 0
      %1908 = vmatpush1.bf16.msra.mxu0 %v1308
      %1909 = vmatprep.subr.bf16.mxu0 0
      %1910 = vmatpush1.bf16.msra.mxu0 %v1309
      %1911 = vmatprep.subr.bf16.mxu0 0
      %1912 = vmatpush1.bf16.msra.mxu0 %v1310
      %1913 = vmatprep.subr.bf16.mxu0 0
      %1914 = vmatpush1.bf16.msra.mxu0 %v1311
      %1915 = vmatprep.subr.bf16.mxu0 0
      %1916 = vmatpush1.bf16.msra.mxu0 %v1312
      %1917 = vmatprep.subr.bf16.mxu0 0
      %1918 = vmatpush1.bf16.msra.mxu0 %v1313
      %1919 = vmatprep.subr.bf16.mxu0 0
      %1920 = vmatpush1.bf16.msra.mxu0 %v1314
      %1921 = vmatprep.subr.bf16.mxu0 0
      %1922 = vmatpush1.bf16.msra.mxu0 %v1315
      %1923 = vmatprep.subr.bf16.mxu0 0
      %1924 = vmatpush1.bf16.msra.mxu0 %v1316
      %1925 = vmatprep.subr.bf16.mxu0 0
      %1926 = vmatpush1.bf16.msra.mxu0 %v1317
      %1927 = vmatprep.subr.bf16.mxu0 0
      %1928 = vmatpush1.bf16.msra.mxu0 %v1318
      %1929 = vmatprep.subr.bf16.mxu0 0
      %1930 = vmatpush1.bf16.msra.mxu0 0
      %1931 = vmatprep.subr.bf16.mxu0 0
      %1932 = vmatpush1.bf16.msra.mxu0 0
      %1933 = vmatprep.subr.bf16.mxu0 0
      %1934 = vmatpush1.bf16.msra.mxu0 0
      %1935 = vmatprep.subr.bf16.mxu0 0
      %1936 = vmatpush1.bf16.msra.mxu0 0
      %1937 = vmatprep.mubr.bf16.mxu0 %v1903
      %1938 = vmatmul.mubr.bf16.gmra.mrb[0].mxu0 %v1894
      %v1939 = vpop.f32.mrb[0].mxu0
      %v1940 = vadd.f32 0.0, %v1939
      %v1941 = vpop.f32.mrb[0].mxu0
      %v1942 = vpop.f32.mrb[0].mxu0
      %v1943 = vpop.f32.mrb[0].mxu0
      %1944 = vdwg.mxu0
      %v1945 = vshrl.u32 %v458, 16
      %v1947 = vshll.u32 %v458, 16
      %v1949 = vrot.slane %v1947, 1
      %v1950 = vor.u32 %v1945, %v1949
      %1952 = vmatprep.subr.bf16.mxu0 0
      %1953 = vmatpush1.bf16.msra.mxu0 %v1307
      %1954 = vmatprep.subr.bf16.mxu0 0
      %1955 = vmatpush1.bf16.msra.mxu0 %v1308
      %1956 = vmatprep.subr.bf16.mxu0 0
      %1957 = vmatpush1.bf16.msra.mxu0 %v1309
      %1958 = vmatprep.subr.bf16.mxu0 0
      %1959 = vmatpush1.bf16.msra.mxu0 %v1310
      %1960 = vmatprep.subr.bf16.mxu0 0
      %1961 = vmatpush1.bf16.msra.mxu0 %v1311
      %1962 = vmatprep.subr.bf16.mxu0 0
      %1963 = vmatpush1.bf16.msra.mxu0 %v1312
      %1964 = vmatprep.subr.bf16.mxu0 0
      %1965 = vmatpush1.bf16.msra.mxu0 %v1313
      %1966 = vmatprep.subr.bf16.mxu0 0
      %1967 = vmatpush1.bf16.msra.mxu0 %v1314
      %1968 = vmatprep.subr.bf16.mxu0 0
      %1969 = vmatpush1.bf16.msra.mxu0 %v1315
      %1970 = vmatprep.subr.bf16.mxu0 0
      %1971 = vmatpush1.bf16.msra.mxu0 %v1316
      %1972 = vmatprep.subr.bf16.mxu0 0
      %1973 = vmatpush1.bf16.msra.mxu0 %v1317
      %1974 = vmatprep.subr.bf16.mxu0 0
      %1975 = vmatpush1.bf16.msra.mxu0 %v1318
      %1976 = vmatprep.subr.bf16.mxu0 0
      %1977 = vmatpush1.bf16.msra.mxu0 0
      %1978 = vmatprep.subr.bf16.mxu0 0
      %1979 = vmatpush1.bf16.msra.mxu0 0
      %1980 = vmatprep.subr.bf16.mxu0 0
      %1981 = vmatpush1.bf16.msra.mxu0 0
      %1982 = vmatprep.subr.bf16.mxu0 0
      %1983 = vmatpush1.bf16.msra.mxu0 0
      %1984 = vmatprep.mubr.bf16.mxu0 %v1903
      %1985 = vmatmul.mubr.bf16.gmra.mrb[0].mxu0 %v1950
      %v1986 = vpop.f32.mrb[0].mxu0
      %v1987 = vadd.f32 0.0, %v1986
      %v1988 = vpop.f32.mrb[0].mxu0
      %v1989 = vpop.f32.mrb[0].mxu0
      %v1990 = vpop.f32.mrb[0].mxu0
      %1991 = vdwg.mxu0
      %v1992 = vshrl.u32 %v460, 16
      %v1994 = vshll.u32 %v460, 16
      %v1996 = vrot.slane %v1994, 1
      %v1997 = vor.u32 %v1992, %v1996
      %v1998 = vshrl.u32 %v399, 16
      %v2000 = vshll.u32 %v399, 16
      %v2002 = vrot.slane %v2000, 1
      %v2003 = vor.u32 %v1998, %v2002
      %v2006 = vsel %vm426, %v2003, 0
      %2008 = vmatprep.subr.bf16.mxu0 0
      %2009 = vmatpush1.bf16.msra.mxu0 %v1307
      %2010 = vmatprep.subr.bf16.mxu0 0
      %2011 = vmatpush1.bf16.msra.mxu0 %v1308
      %2012 = vmatprep.subr.bf16.mxu0 0
      %2013 = vmatpush1.bf16.msra.mxu0 %v1309
      %2014 = vmatprep.subr.bf16.mxu0 0
      %2015 = vmatpush1.bf16.msra.mxu0 %v1310
      %2016 = vmatprep.subr.bf16.mxu0 0
      %2017 = vmatpush1.bf16.msra.mxu0 %v1311
      %2018 = vmatprep.subr.bf16.mxu0 0
      %2019 = vmatpush1.bf16.msra.mxu0 %v1312
      %2020 = vmatprep.subr.bf16.mxu0 0
      %2021 = vmatpush1.bf16.msra.mxu0 %v1313
      %2022 = vmatprep.subr.bf16.mxu0 0
      %2023 = vmatpush1.bf16.msra.mxu0 %v1314
      %2024 = vmatprep.subr.bf16.mxu0 0
      %2025 = vmatpush1.bf16.msra.mxu0 %v1315
      %2026 = vmatprep.subr.bf16.mxu0 0
      %2027 = vmatpush1.bf16.msra.mxu0 %v1316
      %2028 = vmatprep.subr.bf16.mxu0 0
      %2029 = vmatpush1.bf16.msra.mxu0 %v1317
      %2030 = vmatprep.subr.bf16.mxu0 0
      %2031 = vmatpush1.bf16.msra.mxu0 %v1318
      %2032 = vmatprep.subr.bf16.mxu0 0
      %2033 = vmatpush1.bf16.msra.mxu0 0
      %2034 = vmatprep.subr.bf16.mxu0 0
      %2035 = vmatpush1.bf16.msra.mxu0 0
      %2036 = vmatprep.subr.bf16.mxu0 0
      %2037 = vmatpush1.bf16.msra.mxu0 0
      %2038 = vmatprep.subr.bf16.mxu0 0
      %2039 = vmatpush1.bf16.msra.mxu0 0
      %2040 = vmatprep.mubr.bf16.mxu0 %v2006
      %2041 = vmatmul.mubr.bf16.gmra.mrb[0].mxu0 %v1997
      %v2042 = vpop.f32.mrb[0].mxu0
      %v2043 = vadd.f32 0.0, %v2042
      %v2044 = vpop.f32.mrb[0].mxu0
      %v2045 = vpop.f32.mrb[0].mxu0
      %v2046 = vpop.f32.mrb[0].mxu0
      %2047 = vdwg.mxu0
      %v2048 = vshrl.u32 %v463, 16
      %v2050 = vshll.u32 %v463, 16
      %v2052 = vrot.slane %v2050, 1
      %v2053 = vor.u32 %v2048, %v2052
      %2055 = vmatprep.subr.bf16.mxu0 0
      %2056 = vmatpush1.bf16.msra.mxu0 %v1307
      %2057 = vmatprep.subr.bf16.mxu0 0
      %2058 = vmatpush1.bf16.msra.mxu0 %v1308
      %2059 = vmatprep.subr.bf16.mxu0 0
      %2060 = vmatpush1.bf16.msra.mxu0 %v1309
      %2061 = vmatprep.subr.bf16.mxu0 0
      %2062 = vmatpush1.bf16.msra.mxu0 %v1310
      %2063 = vmatprep.subr.bf16.mxu0 0
      %2064 = vmatpush1.bf16.msra.mxu0 %v1311
      %2065 = vmatprep.subr.bf16.mxu0 0
      %2066 = vmatpush1.bf16.msra.mxu0 %v1312
      %2067 = vmatprep.subr.bf16.mxu0 0
      %2068 = vmatpush1.bf16.msra.mxu0 %v1313
      %2069 = vmatprep.subr.bf16.mxu0 0
      %2070 = vmatpush1.bf16.msra.mxu0 %v1314
      %2071 = vmatprep.subr.bf16.mxu0 0
      %2072 = vmatpush1.bf16.msra.mxu0 %v1315
      %2073 = vmatprep.subr.bf16.mxu0 0
      %2074 = vmatpush1.bf16.msra.mxu0 %v1316
      %2075 = vmatprep.subr.bf16.mxu0 0
      %2076 = vmatpush1.bf16.msra.mxu0 %v1317
      %2077 = vmatprep.subr.bf16.mxu0 0
      %2078 = vmatpush1.bf16.msra.mxu0 %v1318
      %2079 = vmatprep.subr.bf16.mxu0 0
      %2080 = vmatpush1.bf16.msra.mxu0 0
      %2081 = vmatprep.subr.bf16.mxu0 0
      %2082 = vmatpush1.bf16.msra.mxu0 0
      %2083 = vmatprep.subr.bf16.mxu0 0
      %2084 = vmatpush1.bf16.msra.mxu0 0
      %2085 = vmatprep.subr.bf16.mxu0 0
      %2086 = vmatpush1.bf16.msra.mxu0 0
      %2087 = vmatprep.mubr.bf16.mxu0 %v2006
      %2088 = vmatmul.mubr.bf16.gmra.mrb[0].mxu0 %v2053
      %v2089 = vpop.f32.mrb[0].mxu0
      %v2090 = vadd.f32 0.0, %v2089
      %v2091 = vpop.f32.mrb[0].mxu0
      %v2092 = vpop.f32.mrb[0].mxu0
      %v2093 = vpop.f32.mrb[0].mxu0
      %2094 = vdwg.mxu0
      %v2095 = vshrl.u32 %v465, 16
      %v2097 = vshll.u32 %v465, 16
      %v2099 = vrot.slane %v2097, 1
      %v2100 = vor.u32 %v2095, %v2099
      %v2101 = vshrl.u32 %v401, 16
      %v2103 = vshll.u32 %v401, 16
      %v2105 = vrot.slane %v2103, 1
      %v2106 = vor.u32 %v2101, %v2105
      %v2109 = vsel %vm426, %v2106, 0
      %2111 = vmatprep.subr.bf16.mxu0 0
      %2112 = vmatpush1.bf16.msra.mxu0 %v1307
      %2113 = vmatprep.subr.bf16.mxu0 0
      %2114 = vmatpush1.bf16.msra.mxu0 %v1308
      %2115 = vmatprep.subr.bf16.mxu0 0
      %2116 = vmatpush1.bf16.msra.mxu0 %v1309
      %2117 = vmatprep.subr.bf16.mxu0 0
      %2118 = vmatpush1.bf16.msra.mxu0 %v1310
      %2119 = vmatprep.subr.bf16.mxu0 0
      %2120 = vmatpush1.bf16.msra.mxu0 %v1311
      %2121 = vmatprep.subr.bf16.mxu0 0
      %2122 = vmatpush1.bf16.msra.mxu0 %v1312
      %2123 = vmatprep.subr.bf16.mxu0 0
      %2124 = vmatpush1.bf16.msra.mxu0 %v1313
      %2125 = vmatprep.subr.bf16.mxu0 0
      %2126 = vmatpush1.bf16.msra.mxu0 %v1314
      %2127 = vmatprep.subr.bf16.mxu0 0
      %2128 = vmatpush1.bf16.msra.mxu0 %v1315
      %2129 = vmatprep.subr.bf16.mxu0 0
      %2130 = vmatpush1.bf16.msra.mxu0 %v1316
      %2131 = vmatprep.subr.bf16.mxu0 0
      %2132 = vmatpush1.bf16.msra.mxu0 %v1317
      %2133 = vmatprep.subr.bf16.mxu0 0
      %2134 = vmatpush1.bf16.msra.mxu0 %v1318
      %2135 = vmatprep.subr.bf16.mxu0 0
      %2136 = vmatpush1.bf16.msra.mxu0 0
      %2137 = vmatprep.subr.bf16.mxu0 0
      %2138 = vmatpush1.bf16.msra.mxu0 0
      %2139 = vmatprep.subr.bf16.mxu0 0
      %2140 = vmatpush1.bf16.msra.mxu0 0
      %2141 = vmatprep.subr.bf16.mxu0 0
      %2142 = vmatpush1.bf16.msra.mxu0 0
      %2143 = vmatprep.mubr.bf16.mxu0 %v2109
      %2144 = vmatmul.mubr.bf16.gmra.mrb[0].mxu0 %v2100
      %v2145 = vpop.f32.mrb[0].mxu0
      %v2146 = vadd.f32 0.0, %v2145
      %v2147 = vpop.f32.mrb[0].mxu0
      %v2148 = vpop.f32.mrb[0].mxu0
      %v2149 = vpop.f32.mrb[0].mxu0
      %2150 = vdwg.mxu0
      %2167 = vrot.lane.b32.xlu0 %v1369, 16
      %v2168 = vpop.permute.xlu0 %2167
      %2169 = vrot.lane.b32.xlu0 %v1425, 16
      %v2170 = vpop.permute.xlu0 %2169
      %2171 = vrot.lane.b32.xlu0 %v1472, 16
      %v2172 = vpop.permute.xlu0 %2171
      %2173 = vrot.lane.b32.xlu0 %v1528, 16
      %v2174 = vpop.permute.xlu0 %2173
      %2175 = vrot.lane.b32.xlu0 %v1575, 16
      %v2176 = vpop.permute.xlu0 %2175
      %2177 = vrot.lane.b32.xlu0 %v1631, 16
      %v2178 = vpop.permute.xlu0 %2177
      %2179 = vrot.lane.b32.xlu0 %v1678, 16
      %v2180 = vpop.permute.xlu0 %2179
      %2181 = vrot.lane.b32.xlu0 %v1734, 16
      %v2182 = vpop.permute.xlu0 %2181
      %2183 = vrot.lane.b32.xlu0 %v1781, 16
      %v2184 = vpop.permute.xlu0 %2183
      %2185 = vrot.lane.b32.xlu0 %v1837, 16
      %v2186 = vpop.permute.xlu0 %2185
      %2187 = vrot.lane.b32.xlu0 %v1884, 16
      %v2188 = vpop.permute.xlu0 %2187
      %2189 = vrot.lane.b32.xlu0 %v1940, 16
      %v2190 = vpop.permute.xlu0 %2189
      %2191 = vrot.lane.b32.xlu0 %v1987, 16
      %v2192 = vpop.permute.xlu0 %2191
      %2193 = vrot.lane.b32.xlu0 %v2043, 16
      %v2194 = vpop.permute.xlu0 %2193
      %2195 = vrot.lane.b32.xlu0 %v2090, 16
      %v2196 = vpop.permute.xlu0 %2195
      %2197 = vrot.lane.b32.xlu0 %v2146, 16
      %v2198 = vpop.permute.xlu0 %2197
      %vm2215 = vcmask 130048
      %v2216 = vsel %vm2215, %v625, %v2168
      %v2217 = vsel %vm2215, %v667, %v2170
      %v2218 = vsel %vm2215, %v707, %v2172
      %v2219 = vsel %vm2215, %v749, %v2174
      %v2220 = vsel %vm2215, %v789, %v2176
      %v2221 = vsel %vm2215, %v831, %v2178
      %v2222 = vsel %vm2215, %v871, %v2180
      %v2223 = vsel %vm2215, %v913, %v2182
      %v2224 = vsel %vm2215, %v953, %v2184
      %v2225 = vsel %vm2215, %v995, %v2186
      %v2226 = vsel %vm2215, %v1035, %v2188
      %v2227 = vsel %vm2215, %v1077, %v2190
      %v2228 = vsel %vm2215, %v1117, %v2192
      %v2229 = vsel %vm2215, %v1159, %v2194
      %v2230 = vsel %vm2215, %v1199, %v2196
      %v2231 = vsel %vm2215, %v1241, %v2198
      %v2232 = vld [vmem:[%s2] sm:$0x1]
      %v2233 = vlaneseq
      %v2234 = vshrl.u32 %v2233, 7
      %v2235 = vsub.s32 0, %v2234
      %v2236 = vrot.slane %v2232, %v2235
      %v2237 = vmul.f32 %v2216, %v2236
      %v2238 = vmul.f32 %v2217, %v2236
      %v2239 = vmul.f32 %v2218, %v2236
      %v2240 = vmul.f32 %v2219, %v2236
      %v2241 = vmul.f32 %v2220, %v2236
      %v2242 = vmul.f32 %v2221, %v2236
      %v2243 = vmul.f32 %v2222, %v2236
      %v2244 = vmul.f32 %v2223, %v2236
      %v2245 = vmul.f32 %v2224, %v2236
      %v2246 = vmul.f32 %v2225, %v2236
      %v2247 = vmul.f32 %v2226, %v2236
      %v2248 = vmul.f32 %v2227, %v2236
      %v2249 = vmul.f32 %v2228, %v2236
      %v2250 = vmul.f32 %v2229, %v2236
      %v2251 = vmul.f32 %v2230, %v2236
      %v2252 = vmul.f32 %v2231, %v2236
      %v2253 = vld [vmem:[%s2 + $0x1] sm:$0x1]
      %v2254 = vlaneseq
      %v2255 = vshrl.u32 %v2254, 7
      %v2256 = vsub.s32 0, %v2255
      %v2257 = vrot.slane %v2253, %v2256
      %v2258 = vadd.f32 %v2237, %v2257
      %v2259 = vadd.f32 %v2238, %v2257
      %v2260 = vadd.f32 %v2239, %v2257
      %v2261 = vadd.f32 %v2240, %v2257
      %v2262 = vadd.f32 %v2241, %v2257
      %v2263 = vadd.f32 %v2242, %v2257
      %v2264 = vadd.f32 %v2243, %v2257
      %v2265 = vadd.f32 %v2244, %v2257
      %v2266 = vadd.f32 %v2245, %v2257
      %v2267 = vadd.f32 %v2246, %v2257
      %v2268 = vadd.f32 %v2247, %v2257
      %v2269 = vadd.f32 %v2248, %v2257
      %v2270 = vadd.f32 %v2249, %v2257
      %v2271 = vadd.f32 %v2250, %v2257
      %v2272 = vadd.f32 %v2251, %v2257
      %v2273 = vadd.f32 %v2252, %v2257
      %v2274 = vmax.f32 %v2258, 0.0
      %v2275 = vmax.f32 %v2259, 0.0
      %v2276 = vmax.f32 %v2260, 0.0
      %v2277 = vmax.f32 %v2261, 0.0
      %v2278 = vmax.f32 %v2262, 0.0
      %v2279 = vmax.f32 %v2263, 0.0
      %v2280 = vmax.f32 %v2264, 0.0
      %v2281 = vmax.f32 %v2265, 0.0
      %v2282 = vmax.f32 %v2266, 0.0
      %v2283 = vmax.f32 %v2267, 0.0
      %v2284 = vmax.f32 %v2268, 0.0
      %v2285 = vmax.f32 %v2269, 0.0
      %v2286 = vmax.f32 %v2270, 0.0
      %v2287 = vmax.f32 %v2271, 0.0
      %v2288 = vmax.f32 %v2272, 0.0
      %v2289 = vmax.f32 %v2273, 0.0
      %v2290 = vld [vmem:[%s245] sm:$0xff]
      %v2291 = vld [vmem:[%s245 + $0x8] sm:$0xff]
      %v2292 = vld [vmem:[%s245 + $0x10] sm:$0xff]
      %v2293 = vld [vmem:[%s245 + $0x18] sm:$0xff]
      %v2294 = vld [vmem:[%s245 + $0x20] sm:$0xff]
      %v2295 = vld [vmem:[%s245 + $0x28] sm:$0xff]
      %v2296 = vld [vmem:[%s245 + $0x30] sm:$0xff]
      %v2297 = vld [vmem:[%s245 + $0x38] sm:$0xff]
      %v2298 = vld [vmem:[%s245 + $0x40] sm:$0xff]
      %v2299 = vld [vmem:[%s245 + $0x48] sm:$0xff]
      %v2300 = vld [vmem:[%s245 + $0x50] sm:$0xff]
      %v2301 = vld [vmem:[%s245 + $0x58] sm:$0xff]
      %v2302 = vld [vmem:[%s245 + $0x60] sm:$0xff]
      %v2303 = vld [vmem:[%s245 + $0x68] sm:$0xff]
      %v2304 = vld [vmem:[%s245 + $0x70] sm:$0xff]
      %v2305 = vld [vmem:[%s245 + $0x78] sm:$0xff]
      %v2306 = vadd.f32 %v2274, %v2290
      %v2307 = vadd.f32 %v2275, %v2291
      %v2308 = vadd.f32 %v2276, %v2292
      %v2309 = vadd.f32 %v2277, %v2293
      %v2310 = vadd.f32 %v2278, %v2294
      %v2311 = vadd.f32 %v2279, %v2295
      %v2312 = vadd.f32 %v2280, %v2296
      %v2313 = vadd.f32 %v2281, %v2297
      %v2314 = vadd.f32 %v2282, %v2298
      %v2315 = vadd.f32 %v2283, %v2299
      %v2316 = vadd.f32 %v2284, %v2300
      %v2317 = vadd.f32 %v2285, %v2301
      %v2318 = vadd.f32 %v2286, %v2302
      %v2319 = vadd.f32 %v2287, %v2303
      %v2320 = vadd.f32 %v2288, %v2304
      %v2321 = vadd.f32 %v2289, %v2305
      %2322 = vst.msk [vmem:[%s255] sm:$0xff] %vm381, %v2306
      %2323 = vst.msk [vmem:[%s255 + $0x8] sm:$0xff] %vm381, %v2307
      %2324 = vst.msk [vmem:[%s255 + $0x10] sm:$0xff] %vm381, %v2308
      %2325 = vst.msk [vmem:[%s255 + $0x18] sm:$0xff] %vm381, %v2309
      %2326 = vst.msk [vmem:[%s255 + $0x20] sm:$0xff] %vm381, %v2310
      %2327 = vst.msk [vmem:[%s255 + $0x28] sm:$0xff] %vm381, %v2311
      %2328 = vst.msk [vmem:[%s255 + $0x30] sm:$0xff] %vm381, %v2312
      %2329 = vst.msk [vmem:[%s255 + $0x38] sm:$0xff] %vm381, %v2313
      %2330 = vst.msk [vmem:[%s255 + $0x40] sm:$0xff] %vm381, %v2314
      %2331 = vst.msk [vmem:[%s255 + $0x48] sm:$0xff] %vm381, %v2315
      %2332 = vst.msk [vmem:[%s255 + $0x50] sm:$0xff] %vm381, %v2316
      %2333 = vst.msk [vmem:[%s255 + $0x58] sm:$0xff] %vm381, %v2317
      %2334 = vst.msk [vmem:[%s255 + $0x60] sm:$0xff] %vm381, %v2318
      %2335 = vst.msk [vmem:[%s255 + $0x68] sm:$0xff] %vm381, %v2319
      %2336 = vst.msk [vmem:[%s255 + $0x70] sm:$0xff] %vm381, %v2320
      %2337 = vst.msk [vmem:[%s255 + $0x78] sm:$0xff] %vm381, %v2321
      %s2338 = smul.u32 16, %s20
      %p2339 = scmp.lt.s32.totalorder %s19, 1
      %s2340 = scalar_select %p2339, %s19, 1
      %p2341 = scmp.lt.s32.totalorder %s2338, 15
      %s2342 = scalar_select %p2341, %s2338, 15
      %s2343 = smul.addr %s2340, 16
      %s2344 = sadd.s32 %s2342, %s2343
      %s2345 = smul.addr %s2344, 8
      %s2346 = scalar_lea.vmem %s4, %s2345
      // Predicated region
      $region37: #{unet_forward.8} parent=35 // pred_check
        %p2347 = pneg %p143
      $region38: #{unet_forward.8} parent=35 // pred_check_branch
        %2349 = sbr.rel (%p2347) target = $region40
      $region39: #{unet_forward.8} parent=35 // pred_region
        %s2350 = smul.u32 16, %s20
      $region40: #{unet_forward.8} parent=35 // pred_fallthru
        _
    $region36: #{unet_forward.8} parent=5 // pred_fallthru
      _
    %p2351 = scmp.le.s32.totalorder 2, %s10
    // Predicated region
    $region41: #{unet_forward.8} parent=5 // pred_check
      %p2352 = pneg %p2351
    $region42: #{unet_forward.8} parent=5 // pred_check_branch
      %2354 = sbr.rel (%p2352) target = $region44
    $region43: #{unet_forward.8} parent=5 // pred_region
      %s2355 = ssub.s32 %s10, 2
      // Predicated region
      $region45: #{unet_forward.8} parent=43 // pred_check
        %p2356 = pneg %p149
      $region46: #{unet_forward.8} parent=43 // pred_check_branch
        %2358 = sbr.rel (%p2356) target = $region48
      $region47: #{unet_forward.8} parent=43 // pred_region
        %s2359 = smul.u32 16, %s22
        %p2360 = scmp.lt.s32.totalorder %s21, 1
        %s2361 = scalar_select %p2360, %s21, 1
        %p2362 = scmp.lt.s32.totalorder %s2359, 15
        %s2363 = scalar_select %p2362, %s2359, 15
        %s2364 = smul.addr %s2361, 16
        %s2365 = sadd.s32 %s2363, %s2364
        %s2366 = smul.addr %s2365, 8
        %s2367 = scalar_lea.vmem %s4, %s2366
      $region48: #{unet_forward.8} parent=43 // pred_fallthru
        _
    $region44: #{unet_forward.8} parent=5 // pred_fallthru
      _
  $region6: #{unet_forward.8} parent=0 // loop_footer
    %s14 = sadd.s32 1, %s10
  $region7: #{unet_forward.8} parent=0 // loop_footer_branch
    %9 = sbr.rel target = $region3
  $region8: #{unet_forward.8} parent=0 // loop_exit
    _

// kernel: unet_forward.10
$region0: #{unet_forward.10}
  #allocation0 [shape = 'u32[]', space=smem, size = 0x4, offset = 0x4, fixed_abs, tag = 'smem constant byte address 0x4 - core index']
  #allocation1 [shape = 'u32[144,128]{1,0:T(1,128)}', space=vmem, size = 0x12000, scoped, tag = 'internal scratch']
  %s0 = inlined_call_operand.vmem [shape: f32[2,18,18,8], index: 0, kind: input, shape index: {}]
  %s1 = inlined_call_operand.vmem [shape: bf16[2,48,8], index: 1, kind: input, shape index: {}]
  %s2 = inlined_call_operand.vmem [shape: f32[2,16], index: 2, kind: input, shape index: {}]
  %s3 = inlined_call_operand.vmem [shape: f32[2,32,16,16], index: 3, kind: output, shape index: {}]
  %s4 = sld [smem:[#allocation0]]
  $region45: #{unet_forward.10} parent=0
    _
  %s6 = ssub.s32 1, %s4
  %s7 = scalar_select 0, %s6, %s4
  loop: start=0, step=1, limit=6
  $region2: #{unet_forward.10} parent=0 // loop_pre_header
    _
  $region3: #{unet_forward.10} parent=0 // loop_header
    %s9 = sphi 0, %s13
    %p10 = scmp.ge.s32.totalorder %s9, 6
    %s16 = sphi 0, %s28
    %s17 = sphi 0, %s24
    %s18 = sphi 0, %s16
    %s19 = sphi 0, %s17
    %s20 = sphi 0, %s18
    %s21 = sphi 0, %s19
    %s31 = sphi 0, %s33
    %s34 = sphi 0, %s31
    %s35 = sphi 0, %s34
    %s51 = sphi 0, %s35
    %s55 = sphi 0, %s55
    %s57 = sphi 0, %s55
    %s58 = sphi 0, %s57
    %s72 = sphi 0, %s58
    %s76 = sphi 0, %s76
    %s78 = sphi 0, %s76
    %s79 = sphi 0, %s78
    %s93 = sphi 0, %s79
    %s101 = sphi 0, %s103
    %s104 = sphi 0, %s101
    %s105 = sphi 0, %s104
    %s121 = sphi 0, %s105
  $region4: #{unet_forward.10} parent=0 // loop_header_branch
    %12 = sbr.rel (%p10) target = $region8
  $region5: #{unet_forward.10} parent=0 // loop_body
    %s14 = ssub.s32 %s9, 1
    %s15 = ssub.s32 %s9, 2
    %s22 = sadd.s32 1, %s17
    %p23 = scmp.ge.s32.totalorder %s22, 2
    %s24 = scalar_select %p23, 0, %s22
    %s25 = sadd.s32 1, %s16
    %s26 = scalar_select %p23, %s25, %s16
    %p27 = scmp.ge.s32.totalorder %s26, 2
    %s28 = scalar_select %p27, 0, %s26
    %s29 = ssub.s32 %s16, %s28
    %p30 = scmp.eq.s32.totalorder %s29, 0
    %s32 = sadd.s32 %s31, 1
    %s33 = scalar_select %p30, %s31, %s32
    %p36 = pneg %p30
    %p37 = scmp.eq.s32.totalorder %s9, 3
    %p38 = por %p36, %p37
    %p39 = scmp.ne.s32.totalorder %s31, %s34
    %p40 = scmp.eq.s32.totalorder %s9, 0
    %p41 = por %p39, %p40
    %p42 = scmp.ne.s32.totalorder %s31, %s34
    %p43 = scmp.eq.s32.totalorder %s14, 3
    %p44 = por %p42, %p43
    %p45 = scmp.ne.s32.totalorder %s34, %s35
    %p46 = scmp.eq.s32.totalorder %s14, 0
    %p47 = por %p45, %p46
    %p48 = scmp.ne.s32.totalorder %s34, %s35
    %p49 = scmp.eq.s32.totalorder %s15, 3
    %p50 = por %p48, %p49
    %p52 = scmp.ne.s32.totalorder %s35, %s51
    %p53 = scmp.eq.s32.totalorder %s15, 0
    %p54 = por %p52, %p53
    %s56 = sadd.s32 %s55, 1
    %p59 = scmp.eq.s32.totalorder %s9, 3
    %p60 = scmp.ne.s32.totalorder %s55, %s57
    %p61 = scmp.eq.s32.totalorder %s9, 0
    %p62 = por %p60, %p61
    %p63 = scmp.ne.s32.totalorder %s55, %s57
    %p64 = scmp.eq.s32.totalorder %s14, 3
    %p65 = por %p63, %p64
    %p66 = scmp.ne.s32.totalorder %s57, %s58
    %p67 = scmp.eq.s32.totalorder %s14, 0
    %p68 = por %p66, %p67
    %p69 = scmp.ne.s32.totalorder %s57, %s58
    %p70 = scmp.eq.s32.totalorder %s15, 3
    %p71 = por %p69, %p70
    %p73 = scmp.ne.s32.totalorder %s58, %s72
    %p74 = scmp.eq.s32.totalorder %s15, 0
    %p75 = por %p73, %p74
    %s77 = sadd.s32 %s76, 1
    %p80 = scmp.eq.s32.totalorder %s9, 3
    %p81 = scmp.ne.s32.totalorder %s76, %s78
    %p82 = scmp.eq.s32.totalorder %s9, 0
    %p83 = por %p81, %p82
    %p84 = scmp.ne.s32.totalorder %s76, %s78
    %p85 = scmp.eq.s32.totalorder %s14, 3
    %p86 = por %p84, %p85
    %p87 = scmp.ne.s32.totalorder %s78, %s79
    %p88 = scmp.eq.s32.totalorder %s14, 0
    %p89 = por %p87, %p88
    %p90 = scmp.ne.s32.totalorder %s78, %s79
    %p91 = scmp.eq.s32.totalorder %s15, 3
    %p92 = por %p90, %p91
    %p94 = scmp.ne.s32.totalorder %s79, %s93
    %p95 = scmp.eq.s32.totalorder %s15, 0
    %p96 = por %p94, %p95
    %s97 = ssub.s32 %s16, %s28
    %s98 = ssub.s32 %s17, %s24
    %s99 = sor.u32 %s97, %s98
    %p100 = scmp.eq.s32.totalorder %s99, 0
    %s102 = sadd.s32 %s101, 1
    %s103 = scalar_select %p100, %s101, %s102
    %p106 = pneg %p100
    %p107 = scmp.eq.s32.totalorder %s9, 3
    %p108 = por %p106, %p107
    %p109 = scmp.ne.s32.totalorder %s101, %s104
    %p110 = scmp.eq.s32.totalorder %s9, 0
    %p111 = por %p109, %p110
    %p112 = scmp.ne.s32.totalorder %s101, %s104
    %p113 = scmp.eq.s32.totalorder %s14, 3
    %p114 = por %p112, %p113
    %p115 = scmp.ne.s32.totalorder %s104, %s105
    %p116 = scmp.eq.s32.totalorder %s14, 0
    %p117 = por %p115, %p116
    %p118 = scmp.ne.s32.totalorder %s104, %s105
    %p119 = scmp.eq.s32.totalorder %s15, 3
    %p120 = por %p118, %p119
    %p122 = scmp.ne.s32.totalorder %s105, %s121
    %p123 = scmp.eq.s32.totalorder %s15, 0
    %p124 = por %p122, %p123
    %p125 = scmp.le.s32.totalorder 1, %s9
    %p126 = scmp.lt.s32.totalorder %s9, 5
    %p127 = pnand %p125, %p126
    %p128 = pneg %p127
    // Predicated region
    $region9: #{unet_forward.10} parent=5 // pred_check
      _
    $region10: #{unet_forward.10} parent=5 // pred_check_branch
      %130 = sbr.rel (%p127) target = $region12
    $region11: #{unet_forward.10} parent=5 // pred_region
      %s131 = ssub.s32 %s9, 1
      // Predicated region
      $region13: #{unet_forward.10} parent=11 // pred_check
        %p132 = pneg %p68
      $region14: #{unet_forward.10} parent=11 // pred_check_branch
        %134 = sbr.rel (%p132) target = $region16
      $region15: #{unet_forward.10} parent=11 // pred_region
        _
      $region16: #{unet_forward.10} parent=11 // pred_fallthru
        _
      // Predicated region
      $region17: #{unet_forward.10} parent=11 // pred_check
        %p135 = pneg %p89
      $region18: #{unet_forward.10} parent=11 // pred_check_branch
        %137 = sbr.rel (%p135) target = $region20
      $region19: #{unet_forward.10} parent=11 // pred_region
        _
      $region20: #{unet_forward.10} parent=11 // pred_fallthru
        _
    $region12: #{unet_forward.10} parent=5 // pred_fallthru
      _
    %p138 = scmp.lt.s32.totalorder %s9, 4
    // Predicated region
    $region21: #{unet_forward.10} parent=5 // pred_check
      %p139 = pneg %p138
    $region22: #{unet_forward.10} parent=5 // pred_check_branch
      %141 = sbr.rel (%p139) target = $region24
    $region23: #{unet_forward.10} parent=5 // pred_region
      // Predicated region
      $region25: #{unet_forward.10} parent=23 // pred_check
        %p142 = pneg %p41
      $region26: #{unet_forward.10} parent=23 // pred_check_branch
        %144 = sbr.rel (%p142) target = $region28
      $region27: #{unet_forward.10} parent=23 // pred_region
        %p145 = scmp.lt.s32.totalorder %s16, 1
        %s146 = scalar_select %p145, %s16, 1
        %s147 = smul.addr %s146, 54
        %s148 = smul.addr %s147, 8
        %s149 = scalar_lea.vmem %s0, %s148
      $region28: #{unet_forward.10} parent=23 // pred_fallthru
        _
    $region24: #{unet_forward.10} parent=5 // pred_fallthru
      _
    %p150 = scmp.le.s32.totalorder 1, %s9
    %p151 = scmp.lt.s32.totalorder %s9, 5
    %p152 = pnand %p150, %p151
    %p153 = pneg %p152
    // Predicated region
    $region29: #{unet_forward.10} parent=5 // pred_check
      _
    $region30: #{unet_forward.10} parent=5 // pred_check_branch
      %155 = sbr.rel (%p152) target = $region32
    $region31: #{unet_forward.10} parent=5 // pred_region
      %s156 = ssub.s32 %s9, 1
      %p157 = scmp.lt.s32.totalorder %s18, 1
      %s158 = scalar_select %p157, %s18, 1
      %s159 = smul.addr %s158, 54
      %s160 = smul.addr %s159, 8
      %s161 = scalar_lea.vmem %s0, %s160
      %p162 = pneg %p47
      %p163 = pneg %p44
      %p164 = pneg %p68
      %p165 = pneg %p65
      %p166 = pneg %p89
      %p167 = pneg %p86
      %p168 = pneg %p117
      %p169 = pneg %p114
      %s170 = smul.u32 16, %s19
      %p171 = scmp.lt.s32.totalorder %s18, 1
      %s172 = scalar_select %p171, %s18, 1
      %p173 = scmp.lt.s32.totalorder %s170, 31
      %s174 = scalar_select %p173, %s170, 31
      %s175 = smul.addr %s174, 2
      %s176 = smul.addr %s172, 64
      %s177 = sadd.s32 %s175, %s176
      %s178 = smul.addr %s177, 8
      %s179 = scalar_lea.vmem %s3, %s178
      %p180 = scmp.lt.s32.totalorder %s18, 1
      %s181 = scalar_select %p180, %s18, 1
      %s182 = smul.addr %s181, 54
      %s183 = smul.addr %s182, 8
      %s184 = scalar_lea.vmem %s0, %s183
      %s185 = smul.u32 16, %s19
      %p186 = scmp.lt.s32.totalorder %s18, 1
      %s187 = scalar_select %p186, %s18, 1
      %p188 = scmp.lt.s32.totalorder %s185, 31
      %s189 = scalar_select %p188, %s185, 31
      %s190 = smul.addr %s189, 2
      %s191 = smul.addr %s187, 64
      %s192 = sadd.s32 %s190, %s191
      %s193 = smul.addr %s192, 8
      %s194 = scalar_lea.vmem %s3, %s193
      %s195 = smul.u32 16, %s19
      %s197 = smul.u32 %s19, 8
      %s198 = smul.u32 %s197, 24
      %s199 = scalar_lea.vmem %s184, %s198
      %v200 = vld [vmem:[%s199] sm:$0xff]
      %v201 = vld [vmem:[%s199 + $0x8] sm:$0xff]
      %v202 = vld [vmem:[%s199 + $0x10] sm:$0x3]
      %v203 = vld [vmem:[%s199 + $0x18] sm:$0xff]
      %v204 = vld [vmem:[%s199 + $0x20] sm:$0xff]
      %v205 = vld [vmem:[%s199 + $0x28] sm:$0x3]
      %v206 = vld [vmem:[%s199 + $0x30] sm:$0xff]
      %v207 = vld [vmem:[%s199 + $0x38] sm:$0xff]
      %v208 = vld [vmem:[%s199 + $0x40] sm:$0x3]
      %v209 = vld [vmem:[%s199 + $0x48] sm:$0xff]
      %v210 = vld [vmem:[%s199 + $0x50] sm:$0xff]
      %v211 = vld [vmem:[%s199 + $0x58] sm:$0x3]
      %v212 = vld [vmem:[%s199 + $0x60] sm:$0xff]
      %v213 = vld [vmem:[%s199 + $0x68] sm:$0xff]
      %v214 = vld [vmem:[%s199 + $0x70] sm:$0x3]
      %v215 = vld [vmem:[%s199 + $0x78] sm:$0xff]
      %v216 = vld [vmem:[%s199 + $0x80] sm:$0xff]
      %v217 = vld [vmem:[%s199 + $0x88] sm:$0x3]
      %v218 = vld [vmem:[%s199 + $0x90] sm:$0xff]
      %v219 = vld [vmem:[%s199 + $0x98] sm:$0xff]
      %v220 = vld [vmem:[%s199 + $0xa0] sm:$0x3]
      %v221 = vld [vmem:[%s199 + $0xa8] sm:$0xff]
      %v222 = vld [vmem:[%s199 + $0xb0] sm:$0xff]
      %v223 = vld [vmem:[%s199 + $0xb8] sm:$0x3]
      %v224 = vld [vmem:[%s199 + $0xc0] sm:$0xff]
      %v225 = vld [vmem:[%s199 + $0xc8] sm:$0xff]
      %v226 = vld [vmem:[%s199 + $0xd0] sm:$0x3]
      %v227 = vld [vmem:[%s199 + $0xd8] sm:$0xff]
      %v228 = vld [vmem:[%s199 + $0xe0] sm:$0xff]
      %v229 = vld [vmem:[%s199 + $0xe8] sm:$0x3]
      %v230 = vpack.c.bf16 %v201, %v200
      %v231 = vpack.c.bf16 %v202, %v202
      %v232 = vpack.c.bf16 %v204, %v203
      %v233 = vpack.c.bf16 %v205, %v205
      %v234 = vpack.c.bf16 %v207, %v206
      %v235 = vpack.c.bf16 %v208, %v208
      %v236 = vpack.c.bf16 %v210, %v209
      %v237 = vpack.c.bf16 %v211, %v211
      %v238 = vpack.c.bf16 %v213, %v212
      %v239 = vpack.c.bf16 %v214, %v214
      %v240 = vpack.c.bf16 %v216, %v215
      %v241 = vpack.c.bf16 %v217, %v217
      %v242 = vpack.c.bf16 %v219, %v218
      %v243 = vpack.c.bf16 %v220, %v220
      %v244 = vpack.c.bf16 %v222, %v221
      %v245 = vpack.c.bf16 %v223, %v223
      %v246 = vpack.c.bf16 %v225, %v224
      %v247 = vpack.c.bf16 %v226, %v226
      %v248 = vpack.c.bf16 %v228, %v227
      %v249 = vpack.c.bf16 %v229, %v229
      %vm250 = vsmask.f32 7424
      %v252 = vshrl.u32 %v230, 16
      %v254 = vshll.u32 %v230, 16
      %v256 = vrot.slane %v254, 1
      %v257 = vor.u32 %v252, %v256
      %v259 = vshll.u32 %v231, 16
      %v261 = vrot.slane %v259, 1
      %v262 = vsel %vm250, %v257, %v261
      %v263 = vshrl.u32 %v231, 16
      %v266 = vshrl.u32 %v232, 16
      %v268 = vshll.u32 %v232, 16
      %v270 = vrot.slane %v268, 1
      %v271 = vor.u32 %v266, %v270
      %v273 = vshll.u32 %v233, 16
      %v275 = vrot.slane %v273, 1
      %v276 = vsel %vm250, %v271, %v275
      %v277 = vshrl.u32 %v233, 16
      %v280 = vshrl.u32 %v234, 16
      %v282 = vshll.u32 %v234, 16
      %v284 = vrot.slane %v282, 1
      %v285 = vor.u32 %v280, %v284
      %v287 = vshll.u32 %v235, 16
      %v289 = vrot.slane %v287, 1
      %v290 = vsel %vm250, %v285, %v289
      %v291 = vshrl.u32 %v235, 16
      %v294 = vshrl.u32 %v236, 16
      %v296 = vshll.u32 %v236, 16
      %v298 = vrot.slane %v296, 1
      %v299 = vor.u32 %v294, %v298
      %v301 = vshll.u32 %v237, 16
      %v303 = vrot.slane %v301, 1
      %v304 = vsel %vm250, %v299, %v303
      %v305 = vshrl.u32 %v237, 16
      %v308 = vshrl.u32 %v238, 16
      %v310 = vshll.u32 %v238, 16
      %v312 = vrot.slane %v310, 1
      %v313 = vor.u32 %v308, %v312
      %v315 = vshll.u32 %v239, 16
      %v317 = vrot.slane %v315, 1
      %v318 = vsel %vm250, %v313, %v317
      %v319 = vshrl.u32 %v239, 16
      %v322 = vshrl.u32 %v240, 16
      %v324 = vshll.u32 %v240, 16
      %v326 = vrot.slane %v324, 1
      %v327 = vor.u32 %v322, %v326
      %v329 = vshll.u32 %v241, 16
      %v331 = vrot.slane %v329, 1
      %v332 = vsel %vm250, %v327, %v331
      %v333 = vshrl.u32 %v241, 16
      %v336 = vshrl.u32 %v242, 16
      %v338 = vshll.u32 %v242, 16
      %v340 = vrot.slane %v338, 1
      %v341 = vor.u32 %v336, %v340
      %v343 = vshll.u32 %v243, 16
      %v345 = vrot.slane %v343, 1
      %v346 = vsel %vm250, %v341, %v345
      %v347 = vshrl.u32 %v243, 16
      %v350 = vshrl.u32 %v244, 16
      %v352 = vshll.u32 %v244, 16
      %v354 = vrot.slane %v352, 1
      %v355 = vor.u32 %v350, %v354
      %v357 = vshll.u32 %v245, 16
      %v359 = vrot.slane %v357, 1
      %v360 = vsel %vm250, %v355, %v359
      %v361 = vshrl.u32 %v245, 16
      %v364 = vshrl.u32 %v246, 16
      %v366 = vshll.u32 %v246, 16
      %v368 = vrot.slane %v366, 1
      %v369 = vor.u32 %v364, %v368
      %v371 = vshll.u32 %v247, 16
      %v373 = vrot.slane %v371, 1
      %v374 = vsel %vm250, %v369, %v373
      %v375 = vshrl.u32 %v247, 16
      %v378 = vshrl.u32 %v248, 16
      %v380 = vshll.u32 %v248, 16
      %v382 = vrot.slane %v380, 1
      %v383 = vor.u32 %v378, %v382
      %v385 = vshll.u32 %v249, 16
      %v387 = vrot.slane %v385, 1
      %v388 = vsel %vm250, %v383, %v387
      %v389 = vshrl.u32 %v249, 16
      %391 = vrot.lane.b32.xlu0 %v262, 8
      %v392 = vpop.permute.xlu0 %391
      %393 = vrot.lane.b32.xlu0 %v263, 8
      %v394 = vpop.permute.xlu0 %393
      %395 = vrot.lane.b32.xlu0 %v276, 8
      %v396 = vpop.permute.xlu0 %395
      %397 = vrot.lane.b32.xlu0 %v277, 8
      %v398 = vpop.permute.xlu0 %397
      %399 = vrot.lane.b32.xlu0 %v290, 8
      %v400 = vpop.permute.xlu0 %399
      %401 = vrot.lane.b32.xlu0 %v291, 8
      %v402 = vpop.permute.xlu0 %401
      %403 = vrot.lane.b32.xlu0 %v304, 8
      %v404 = vpop.permute.xlu0 %403
      %405 = vrot.lane.b32.xlu0 %v305, 8
      %v406 = vpop.permute.xlu0 %405
      %407 = vrot.lane.b32.xlu0 %v318, 8
      %v408 = vpop.permute.xlu0 %407
      %409 = vrot.lane.b32.xlu0 %v319, 8
      %v410 = vpop.permute.xlu0 %409
      %411 = vrot.lane.b32.xlu0 %v332, 8
      %v412 = vpop.permute.xlu0 %411
      %413 = vrot.lane.b32.xlu0 %v333, 8
      %v414 = vpop.permute.xlu0 %413
      %415 = vrot.lane.b32.xlu0 %v346, 8
      %v416 = vpop.permute.xlu0 %415
      %417 = vrot.lane.b32.xlu0 %v347, 8
      %v418 = vpop.permute.xlu0 %417
      %419 = vrot.lane.b32.xlu0 %v360, 8
      %v420 = vpop.permute.xlu0 %419
      %421 = vrot.lane.b32.xlu0 %v361, 8
      %v422 = vpop.permute.xlu0 %421
      %423 = vrot.lane.b32.xlu0 %v374, 8
      %v424 = vpop.permute.xlu0 %423
      %425 = vrot.lane.b32.xlu0 %v375, 8
      %v426 = vpop.permute.xlu0 %425
      %427 = vrot.lane.b32.xlu0 %v388, 8
      %v428 = vpop.permute.xlu0 %427
      %429 = vrot.lane.b32.xlu0 %v389, 8
      %v430 = vpop.permute.xlu0 %429
      %vm431 = vcmask 64512
      %v433 = vsel %vm431, %v230, %v392
      %v435 = vsel %vm431, %v231, %v394
      %v437 = vsel %vm431, %v232, %v396
      %v439 = vsel %vm431, %v233, %v398
      %v441 = vsel %vm431, %v234, %v400
      %v443 = vsel %vm431, %v235, %v402
      %v445 = vsel %vm431, %v236, %v404
      %v447 = vsel %vm431, %v237, %v406
      %v449 = vsel %vm431, %v238, %v408
      %v451 = vsel %vm431, %v239, %v410
      %v453 = vsel %vm431, %v240, %v412
      %v455 = vsel %vm431, %v241, %v414
      %v457 = vsel %vm431, %v242, %v416
      %v459 = vsel %vm431, %v243, %v418
      %v461 = vsel %vm431, %v244, %v420
      %v463 = vsel %vm431, %v245, %v422
      %v465 = vsel %vm431, %v246, %v424
      %v467 = vsel %vm431, %v247, %v426
      %v469 = vsel %vm431, %v248, %v428
      %v471 = vsel %vm431, %v249, %v430
      %480 = vrot.lane.b32.xlu0 %v437, 16
      %v481 = vpop.permute.xlu0 %480
      %482 = vrot.lane.b32.xlu0 %v441, 16
      %v483 = vpop.permute.xlu0 %482
      %484 = vrot.lane.b32.xlu0 %v445, 16
      %v485 = vpop.permute.xlu0 %484
      %486 = vrot.lane.b32.xlu0 %v449, 16
      %v487 = vpop.permute.xlu0 %486
      %488 = vrot.lane.b32.xlu0 %v453, 16
      %v489 = vpop.permute.xlu0 %488
      %490 = vrot.lane.b32.xlu0 %v457, 16
      %v491 = vpop.permute.xlu0 %490
      %492 = vrot.lane.b32.xlu0 %v461, 16
      %v493 = vpop.permute.xlu0 %492
      %494 = vrot.lane.b32.xlu0 %v465, 16
      %v495 = vpop.permute.xlu0 %494
      %497 = vrot.lane.b32.xlu0 %v437, 32
      %v498 = vpop.permute.xlu0 %497
      %499 = vrot.lane.b32.xlu0 %v441, 32
      %v500 = vpop.permute.xlu0 %499
      %501 = vrot.lane.b32.xlu0 %v445, 32
      %v502 = vpop.permute.xlu0 %501
      %503 = vrot.lane.b32.xlu0 %v449, 32
      %v504 = vpop.permute.xlu0 %503
      %505 = vrot.lane.b32.xlu0 %v453, 32
      %v506 = vpop.permute.xlu0 %505
      %507 = vrot.lane.b32.xlu0 %v457, 32
      %v508 = vpop.permute.xlu0 %507
      %509 = vrot.lane.b32.xlu0 %v461, 32
      %v510 = vpop.permute.xlu0 %509
      %511 = vrot.lane.b32.xlu0 %v465, 32
      %v512 = vpop.permute.xlu0 %511
      %513 = vrot.lane.b32.xlu0 %v469, 32
      %v514 = vpop.permute.xlu0 %513
      %vm515 = vcmask 130048
      %v517 = vsel %vm515, %v433, %v481
      %v518 = vsel %vm515, %v437, %v481
      %v520 = vsel %vm515, %v437, %v483
      %v521 = vsel %vm515, %v441, %v483
      %v523 = vsel %vm515, %v441, %v485
      %v524 = vsel %vm515, %v445, %v485
      %v526 = vsel %vm515, %v445, %v487
      %v527 = vsel %vm515, %v449, %v487
      %v529 = vsel %vm515, %v449, %v489
      %v530 = vsel %vm515, %v453, %v489
      %v532 = vsel %vm515, %v453, %v491
      %v533 = vsel %vm515, %v457, %v491
      %v535 = vsel %vm515, %v457, %v493
      %v536 = vsel %vm515, %v461, %v493
      %v538 = vsel %vm515, %v461, %v495
      %v539 = vsel %vm515, %v465, %v495
      %vm540 = vcmask 261120
      %v542 = vsel %vm540, %v517, %v498
      %v544 = vsel %vm540, %v518, %v500
      %v545 = vsel %vm540, %v520, %v500
      %v547 = vsel %vm540, %v521, %v502
      %v548 = vsel %vm540, %v523, %v502
      %v550 = vsel %vm540, %v524, %v504
      %v551 = vsel %vm540, %v526, %v504
      %v553 = vsel %vm540, %v527, %v506
      %v554 = vsel %vm540, %v529, %v506
      %v556 = vsel %vm540, %v530, %v508
      %v557 = vsel %vm540, %v532, %v508
      %v559 = vsel %vm540, %v533, %v510
      %v560 = vsel %vm540, %v535, %v510
      %v562 = vsel %vm540, %v536, %v512
      %v563 = vsel %vm540, %v538, %v512
      %v565 = vsel %vm540, %v539, %v514
      %574 = vrot.lane.b32.xlu0 %v439, 16
      %v575 = vpop.permute.xlu0 %574
      %576 = vrot.lane.b32.xlu0 %v443, 16
      %v577 = vpop.permute.xlu0 %576
      %578 = vrot.lane.b32.xlu0 %v447, 16
      %v579 = vpop.permute.xlu0 %578
      %580 = vrot.lane.b32.xlu0 %v451, 16
      %v581 = vpop.permute.xlu0 %580
      %582 = vrot.lane.b32.xlu0 %v455, 16
      %v583 = vpop.permute.xlu0 %582
      %584 = vrot.lane.b32.xlu0 %v459, 16
      %v585 = vpop.permute.xlu0 %584
      %586 = vrot.lane.b32.xlu0 %v463, 16
      %v587 = vpop.permute.xlu0 %586
      %588 = vrot.lane.b32.xlu0 %v467, 16
      %v589 = vpop.permute.xlu0 %588
      %591 = vrot.lane.b32.xlu0 %v439, 32
      %v592 = vpop.permute.xlu0 %591
      %593 = vrot.lane.b32.xlu0 %v443, 32
      %v594 = vpop.permute.xlu0 %593
      %595 = vrot.lane.b32.xlu0 %v447, 32
      %v596 = vpop.permute.xlu0 %595
      %597 = vrot.lane.b32.xlu0 %v451, 32
      %v598 = vpop.permute.xlu0 %597
      %599 = vrot.lane.b32.xlu0 %v455, 32
      %v600 = vpop.permute.xlu0 %599
      %601 = vrot.lane.b32.xlu0 %v459, 32
      %v602 = vpop.permute.xlu0 %601
      %603 = vrot.lane.b32.xlu0 %v463, 32
      %v604 = vpop.permute.xlu0 %603
      %605 = vrot.lane.b32.xlu0 %v467, 32
      %v606 = vpop.permute.xlu0 %605
      %607 = vrot.lane.b32.xlu0 %v471, 32
      %v608 = vpop.permute.xlu0 %607
      %v610 = vsel %vm515, %v435, %v575
      %v611 = vsel %vm515, %v439, %v575
      %v613 = vsel %vm515, %v439, %v577
      %v614 = vsel %vm515, %v443, %v577
      %v616 = vsel %vm515, %v443, %v579
      %v617 = vsel %vm515, %v447, %v579
      %v619 = vsel %vm515, %v447, %v581
      %v620 = vsel %vm515, %v451, %v581
      %v622 = vsel %vm515, %v451, %v583
      %v623 = vsel %vm515, %v455, %v583
      %v625 = vsel %vm515, %v455, %v585
      %v626 = vsel %vm515, %v459, %v585
      %v628 = vsel %vm515, %v459, %v587
      %v629 = vsel %vm515, %v463, %v587
      %v631 = vsel %vm515, %v463, %v589
      %v632 = vsel %vm515, %v467, %v589
      %v634 = vsel %vm540, %v610, %v592
      %v636 = vsel %vm540, %v611, %v594
      %v637 = vsel %vm540, %v613, %v594
      %v639 = vsel %vm540, %v614, %v596
      %v640 = vsel %vm540, %v616, %v596
      %v642 = vsel %vm540, %v617, %v598
      %v643 = vsel %vm540, %v619, %v598
      %v645 = vsel %vm540, %v620, %v600
      %v646 = vsel %vm540, %v622, %v600
      %v648 = vsel %vm540, %v623, %v602
      %v649 = vsel %vm540, %v625, %v602
      %v651 = vsel %vm540, %v626, %v604
      %v652 = vsel %vm540, %v628, %v604
      %v654 = vsel %vm540, %v629, %v606
      %v655 = vsel %vm540, %v631, %v606
      %v657 = vsel %vm540, %v632, %v608
      %v658 = vld [vmem:[%s1] sm:$0xf]
      %v659 = vld [vmem:[%s1 + $0x4] sm:$0xf]
      %v660 = vld [vmem:[%s1 + $0x8] sm:$0xf]
      %v661 = vld [vmem:[%s1 + $0xc] sm:$0xf]
      %v662 = vld [vmem:[%s1 + $0x10] sm:$0xf]
      %v663 = vld [vmem:[%s1 + $0x14] sm:$0xf]
      %s664 = scalar_lea.vmem %s1, 24
      %v665 = vld [vmem:[%s664] sm:$0xf]
      %v666 = vld [vmem:[%s664 + $0x4] sm:$0xf]
      %v667 = vld [vmem:[%s664 + $0x8] sm:$0xf]
      %v668 = vld [vmem:[%s664 + $0xc] sm:$0xf]
      %v669 = vld [vmem:[%s664 + $0x10] sm:$0xf]
      %v670 = vld [vmem:[%s664 + $0x14] sm:$0xf]
      %v677 = vunpack.c.l.b16 %v658
      %v678 = vunpack.c.l.b16 %v659
      %v679 = vunpack.c.l.b16 %v660
      %v680 = vunpack.c.l.b16 %v661
      %v681 = vunpack.c.l.b16 %v662
      %v682 = vunpack.c.l.b16 %v663
      %v683 = vpack.c.b16 %v678, %v677
      %v684 = vpack.c.b16 %v680, %v679
      %v685 = vpack.c.b16 %v682, %v681
      %vm689 = vcmask 392192
      %v690 = vsel %vm689, %v542, 0
      %692 = vmatprep.subr.bf16.mxu0 0
      %693 = vmatpush1.bf16.msra.mxu0 %v683
      %694 = vmatprep.subr.bf16.mxu0 0
      %695 = vmatpush1.bf16.msra.mxu0 %v684
      %696 = vmatprep.subr.bf16.mxu0 0
      %697 = vmatpush1.bf16.msra.mxu0 %v685
      %698 = vmatprep.subr.bf16.mxu0 0
      %699 = vmatpush1.bf16.msra.mxu0 0
      %700 = vmatprep.subr.bf16.mxu0 0
      %701 = vmatpush1.bf16.msra.mxu0 0
      %702 = vmatprep.subr.bf16.mxu0 0
      %703 = vmatpush1.bf16.msra.mxu0 0
      %704 = vmatprep.subr.bf16.mxu0 0
      %705 = vmatpush1.bf16.msra.mxu0 0
      %706 = vmatprep.subr.bf16.mxu0 0
      %707 = vmatpush1.bf16.msra.mxu0 0
      %708 = vmatprep.subr.bf16.mxu0 0
      %709 = vmatpush1.bf16.msra.mxu0 0
      %710 = vmatprep.subr.bf16.mxu0 0
      %711 = vmatpush1.bf16.msra.mxu0 0
      %712 = vmatprep.subr.bf16.mxu0 0
      %713 = vmatpush1.bf16.msra.mxu0 0
      %714 = vmatprep.subr.bf16.mxu0 0
      %715 = vmatpush1.bf16.msra.mxu0 0
      %716 = vmatprep.subr.bf16.mxu0 0
      %717 = vmatpush1.bf16.msra.mxu0 0
      %718 = vmatprep.subr.bf16.mxu0 0
      %719 = vmatpush1.bf16.msra.mxu0 0
      %720 = vmatprep.subr.bf16.mxu0 0
      %721 = vmatpush1.bf16.msra.mxu0 0
      %722 = vmatprep.subr.bf16.mxu0 0
      %723 = vmatpush1.bf16.msra.mxu0 0
      %724 = vmatprep.mubr.bf16.mxu0 0
      %725 = vmatmul.mubr.bf16.gmra.mrb[0].mxu0 %v690
      %v726 = vpop.f32.mrb[0].mxu0
      %v727 = vadd.f32 0.0, %v726
      %v728 = vpop.f32.mrb[0].mxu0
      %v729 = vpop.f32.mrb[0].mxu0
      %v730 = vadd.f32 0.0, %v729
      %v731 = vpop.f32.mrb[0].mxu0
      %732 = vdwg.mxu0
      %v733 = vsel %vm689, %v544, 0
      %735 = vmatprep.subr.bf16.mxu0 0
      %736 = vmatpush1.bf16.msra.mxu0 %v683
      %737 = vmatprep.subr.bf16.mxu0 0
      %738 = vmatpush1.bf16.msra.mxu0 %v684
      %739 = vmatprep.subr.bf16.mxu0 0
      %740 = vmatpush1.bf16.msra.mxu0 %v685
      %741 = vmatprep.subr.bf16.mxu0 0
      %742 = vmatpush1.bf16.msra.mxu0 0
      %743 = vmatprep.subr.bf16.mxu0 0
      %744 = vmatpush1.bf16.msra.mxu0 0
      %745 = vmatprep.subr.bf16.mxu0 0
      %746 = vmatpush1.bf16.msra.mxu0 0
      %747 = vmatprep.subr.bf16.mxu0 0
      %748 = vmatpush1.bf16.msra.mxu0 0
      %749 = vmatprep.subr.bf16.mxu0 0
      %750 = vmatpush1.bf16.msra.mxu0 0
      %751 = vmatprep.subr.bf16.mxu0 0
      %752 = vmatpush1.bf16.msra.mxu0 0
      %753 = vmatprep.subr.bf16.mxu0 0
      %754 = vmatpush1.bf16.msra.mxu0 0
      %755 = vmatprep.subr.bf16.mxu0 0
      %756 = vmatpush1.bf16.msra.mxu0 0
      %757 = vmatprep.subr.bf16.mxu0 0
      %758 = vmatpush1.bf16.msra.mxu0 0
      %759 = vmatprep.subr.bf16.mxu0 0
      %760 = vmatpush1.bf16.msra.mxu0 0
      %761 = vmatprep.subr.bf16.mxu0 0
      %762 = vmatpush1.bf16.msra.mxu0 0
      %763 = vmatprep.subr.bf16.mxu0 0
      %764 = vmatpush1.bf16.msra.mxu0 0
      %765 = vmatprep.subr.bf16.mxu0 0
      %766 = vmatpush1.bf16.msra.mxu0 0
      %767 = vmatprep.mubr.bf16.mxu0 0
      %768 = vmatmul.mubr.bf16.gmra.mrb[0].mxu0 %v733
      %v769 = vpop.f32.mrb[0].mxu0
      %v770 = vadd.f32 0.0, %v769
      %v771 = vpop.f32.mrb[0].mxu0
      %v772 = vpop.f32.mrb[0].mxu0
      %v773 = vadd.f32 0.0, %v772
      %v774 = vpop.f32.mrb[0].mxu0
      %775 = vdwg.mxu0
      %v776 = vsel %vm689, %v545, 0
      %778 = vmatprep.subr.bf16.mxu0 0
      %779 = vmatpush1.bf16.msra.mxu0 %v683
      %780 = vmatprep.subr.bf16.mxu0 0
      %781 = vmatpush1.bf16.msra.mxu0 %v684
      %782 = vmatprep.subr.bf16.mxu0 0
      %783 = vmatpush1.bf16.msra.mxu0 %v685
      %784 = vmatprep.subr.bf16.mxu0 0
      %785 = vmatpush1.bf16.msra.mxu0 0
      %786 = vmatprep.subr.bf16.mxu0 0
      %787 = vmatpush1.bf16.msra.mxu0 0
      %788 = vmatprep.subr.bf16.mxu0 0
      %789 = vmatpush1.bf16.msra.mxu0 0
      %790 = vmatprep.subr.bf16.mxu0 0
      %791 = vmatpush1.bf16.msra.mxu0 0
      %792 = vmatprep.subr.bf16.mxu0 0
      %793 = vmatpush1.bf16.msra.mxu0 0
      %794 = vmatprep.subr.bf16.mxu0 0
      %795 = vmatpush1.bf16.msra.mxu0 0
      %796 = vmatprep.subr.bf16.mxu0 0
      %797 = vmatpush1.bf16.msra.mxu0 0
      %798 = vmatprep.subr.bf16.mxu0 0
      %799 = vmatpush1.bf16.msra.mxu0 0
      %800 = vmatprep.subr.bf16.mxu0 0
      %801 = vmatpush1.bf16.msra.mxu0 0
      %802 = vmatprep.subr.bf16.mxu0 0
      %803 = vmatpush1.bf16.msra.mxu0 0
      %804 = vmatprep.subr.bf16.mxu0 0
      %805 = vmatpush1.bf16.msra.mxu0 0
      %806 = vmatprep.subr.bf16.mxu0 0
      %807 = vmatpush1.bf16.msra.mxu0 0
      %808 = vmatprep.subr.bf16.mxu0 0
      %809 = vmatpush1.bf16.msra.mxu0 0
      %810 = vmatprep.mubr.bf16.mxu0 0
      %811 = vmatmul.mubr.bf16.gmra.mrb[0].mxu0 %v776
      %v812 = vpop.f32.mrb[0].mxu0
      %v813 = vadd.f32 0.0, %v812
      %v814 = vpop.f32.mrb[0].mxu0
      %v815 = vpop.f32.mrb[0].mxu0
      %v816 = vadd.f32 0.0, %v815
      %v817 = vpop.f32.mrb[0].mxu0
      %818 = vdwg.mxu0
      %v819 = vsel %vm689, %v547, 0
      %821 = vmatprep.subr.bf16.mxu0 0
      %822 = vmatpush1.bf16.msra.mxu0 %v683
      %823 = vmatprep.subr.bf16.mxu0 0
      %824 = vmatpush1.bf16.msra.mxu0 %v684
      %825 = vmatprep.subr.bf16.mxu0 0
      %826 = vmatpush1.bf16.msra.mxu0 %v685
      %827 = vmatprep.subr.bf16.mxu0 0
      %828 = vmatpush1.bf16.msra.mxu0 0
      %829 = vmatprep.subr.bf16.mxu0 0
      %830 = vmatpush1.bf16.msra.mxu0 0
      %831 = vmatprep.subr.bf16.mxu0 0
      %832 = vmatpush1.bf16.msra.mxu0 0
      %833 = vmatprep.subr.bf16.mxu0 0
      %834 = vmatpush1.bf16.msra.mxu0 0
      %835 = vmatprep.subr.bf16.mxu0 0
      %836 = vmatpush1.bf16.msra.mxu0 0
      %837 = vmatprep.subr.bf16.mxu0 0
      %838 = vmatpush1.bf16.msra.mxu0 0
      %839 = vmatprep.subr.bf16.mxu0 0
      %840 = vmatpush1.bf16.msra.mxu0 0
      %841 = vmatprep.subr.bf16.mxu0 0
      %842 = vmatpush1.bf16.msra.mxu0 0
      %843 = vmatprep.subr.bf16.mxu0 0
      %844 = vmatpush1.bf16.msra.mxu0 0
      %845 = vmatprep.subr.bf16.mxu0 0
      %846 = vmatpush1.bf16.msra.mxu0 0
      %847 = vmatprep.subr.bf16.mxu0 0
      %848 = vmatpush1.bf16.msra.mxu0 0
      %849 = vmatprep.subr.bf16.mxu0 0
      %850 = vmatpush1.bf16.msra.mxu0 0
      %851 = vmatprep.subr.bf16.mxu0 0
      %852 = vmatpush1.bf16.msra.mxu0 0
      %853 = vmatprep.mubr.bf16.mxu0 0
      %854 = vmatmul.mubr.bf16.gmra.mrb[0].mxu0 %v819
      %v855 = vpop.f32.mrb[0].mxu0
      %v856 = vadd.f32 0.0, %v855
      %v857 = vpop.f32.mrb[0].mxu0
      %v858 = vpop.f32.mrb[0].mxu0
      %v859 = vadd.f32 0.0, %v858
      %v860 = vpop.f32.mrb[0].mxu0
      %861 = vdwg.mxu0
      %v862 = vsel %vm689, %v548, 0
      %864 = vmatprep.subr.bf16.mxu0 0
      %865 = vmatpush1.bf16.msra.mxu0 %v683
      %866 = vmatprep.subr.bf16.mxu0 0
      %867 = vmatpush1.bf16.msra.mxu0 %v684
      %868 = vmatprep.subr.bf16.mxu0 0
      %869 = vmatpush1.bf16.msra.mxu0 %v685
      %870 = vmatprep.subr.bf16.mxu0 0
      %871 = vmatpush1.bf16.msra.mxu0 0
      %872 = vmatprep.subr.bf16.mxu0 0
      %873 = vmatpush1.bf16.msra.mxu0 0
      %874 = vmatprep.subr.bf16.mxu0 0
      %875 = vmatpush1.bf16.msra.mxu0 0
      %876 = vmatprep.subr.bf16.mxu0 0
      %877 = vmatpush1.bf16.msra.mxu0 0
      %878 = vmatprep.subr.bf16.mxu0 0
      %879 = vmatpush1.bf16.msra.mxu0 0
      %880 = vmatprep.subr.bf16.mxu0 0
      %881 = vmatpush1.bf16.msra.mxu0 0
      %882 = vmatprep.subr.bf16.mxu0 0
      %883 = vmatpush1.bf16.msra.mxu0 0
      %884 = vmatprep.subr.bf16.mxu0 0
      %885 = vmatpush1.bf16.msra.mxu0 0
      %886 = vmatprep.subr.bf16.mxu0 0
      %887 = vmatpush1.bf16.msra.mxu0 0
      %888 = vmatprep.subr.bf16.mxu0 0
      %889 = vmatpush1.bf16.msra.mxu0 0
      %890 = vmatprep.subr.bf16.mxu0 0
      %891 = vmatpush1.bf16.msra.mxu0 0
      %892 = vmatprep.subr.bf16.mxu0 0
      %893 = vmatpush1.bf16.msra.mxu0 0
      %894 = vmatprep.subr.bf16.mxu0 0
      %895 = vmatpush1.bf16.msra.mxu0 0
      %896 = vmatprep.mubr.bf16.mxu0 0
      %897 = vmatmul.mubr.bf16.gmra.mrb[0].mxu0 %v862
      %v898 = vpop.f32.mrb[0].mxu0
      %v899 = vadd.f32 0.0, %v898
      %v900 = vpop.f32.mrb[0].mxu0
      %v901 = vpop.f32.mrb[0].mxu0
      %v902 = vadd.f32 0.0, %v901
      %v903 = vpop.f32.mrb[0].mxu0
      %904 = vdwg.mxu0
      %v905 = vsel %vm689, %v550, 0
      %907 = vmatprep.subr.bf16.mxu0 0
      %908 = vmatpush1.bf16.msra.mxu0 %v683
      %909 = vmatprep.subr.bf16.mxu0 0
      %910 = vmatpush1.bf16.msra.mxu0 %v684
      %911 = vmatprep.subr.bf16.mxu0 0
      %912 = vmatpush1.bf16.msra.mxu0 %v685
      %913 = vmatprep.subr.bf16.mxu0 0
      %914 = vmatpush1.bf16.msra.mxu0 0
      %915 = vmatprep.subr.bf16.mxu0 0
      %916 = vmatpush1.bf16.msra.mxu0 0
      %917 = vmatprep.subr.bf16.mxu0 0
      %918 = vmatpush1.bf16.msra.mxu0 0
      %919 = vmatprep.subr.bf16.mxu0 0
      %920 = vmatpush1.bf16.msra.mxu0 0
      %921 = vmatprep.subr.bf16.mxu0 0
      %922 = vmatpush1.bf16.msra.mxu0 0
      %923 = vmatprep.subr.bf16.mxu0 0
      %924 = vmatpush1.bf16.msra.mxu0 0
      %925 = vmatprep.subr.bf16.mxu0 0
      %926 = vmatpush1.bf16.msra.mxu0 0
      %927 = vmatprep.subr.bf16.mxu0 0
      %928 = vmatpush1.bf16.msra.mxu0 0
      %929 = vmatprep.subr.bf16.mxu0 0
      %930 = vmatpush1.bf16.msra.mxu0 0
      %931 = vmatprep.subr.bf16.mxu0 0
      %932 = vmatpush1.bf16.msra.mxu0 0
      %933 = vmatprep.subr.bf16.mxu0 0
      %934 = vmatpush1.bf16.msra.mxu0 0
      %935 = vmatprep.subr.bf16.mxu0 0
      %936 = vmatpush1.bf16.msra.mxu0 0
      %937 = vmatprep.subr.bf16.mxu0 0
      %938 = vmatpush1.bf16.msra.mxu0 0
      %939 = vmatprep.mubr.bf16.mxu0 0
      %940 = vmatmul.mubr.bf16.gmra.mrb[0].mxu0 %v905
      %v941 = vpop.f32.mrb[0].mxu0
      %v942 = vadd.f32 0.0, %v941
      %v943 = vpop.f32.mrb[0].mxu0
      %v944 = vpop.f32.mrb[0].mxu0
      %v945 = vadd.f32 0.0, %v944
      %v946 = vpop.f32.mrb[0].mxu0
      %947 = vdwg.mxu0
      %v948 = vsel %vm689, %v551, 0
      %950 = vmatprep.subr.bf16.mxu0 0
      %951 = vmatpush1.bf16.msra.mxu0 %v683
      %952 = vmatprep.subr.bf16.mxu0 0
      %953 = vmatpush1.bf16.msra.mxu0 %v684
      %954 = vmatprep.subr.bf16.mxu0 0
      %955 = vmatpush1.bf16.msra.mxu0 %v685
      %956 = vmatprep.subr.bf16.mxu0 0
      %957 = vmatpush1.bf16.msra.mxu0 0
      %958 = vmatprep.subr.bf16.mxu0 0
      %959 = vmatpush1.bf16.msra.mxu0 0
      %960 = vmatprep.subr.bf16.mxu0 0
      %961 = vmatpush1.bf16.msra.mxu0 0
      %962 = vmatprep.subr.bf16.mxu0 0
      %963 = vmatpush1.bf16.msra.mxu0 0
      %964 = vmatprep.subr.bf16.mxu0 0
      %965 = vmatpush1.bf16.msra.mxu0 0
      %966 = vmatprep.subr.bf16.mxu0 0
      %967 = vmatpush1.bf16.msra.mxu0 0
      %968 = vmatprep.subr.bf16.mxu0 0
      %969 = vmatpush1.bf16.msra.mxu0 0
      %970 = vmatprep.subr.bf16.mxu0 0
      %971 = vmatpush1.bf16.msra.mxu0 0
      %972 = vmatprep.subr.bf16.mxu0 0
      %973 = vmatpush1.bf16.msra.mxu0 0
      %974 = vmatprep.subr.bf16.mxu0 0
      %975 = vmatpush1.bf16.msra.mxu0 0
      %976 = vmatprep.subr.bf16.mxu0 0
      %977 = vmatpush1.bf16.msra.mxu0 0
      %978 = vmatprep.subr.bf16.mxu0 0
      %979 = vmatpush1.bf16.msra.mxu0 0
      %980 = vmatprep.subr.bf16.mxu0 0
      %981 = vmatpush1.bf16.msra.mxu0 0
      %982 = vmatprep.mubr.bf16.mxu0 0
      %983 = vmatmul.mubr.bf16.gmra.mrb[0].mxu0 %v948
      %v984 = vpop.f32.mrb[0].mxu0
      %v985 = vadd.f32 0.0, %v984
      %v986 = vpop.f32.mrb[0].mxu0
      %v987 = vpop.f32.mrb[0].mxu0
      %v988 = vadd.f32 0.0, %v987
      %v989 = vpop.f32.mrb[0].mxu0
      %990 = vdwg.mxu0
      %v991 = vsel %vm689, %v553, 0
      %993 = vmatprep.subr.bf16.mxu0 0
      %994 = vmatpush1.bf16.msra.mxu0 %v683
      %995 = vmatprep.subr.bf16.mxu0 0
      %996 = vmatpush1.bf16.msra.mxu0 %v684
      %997 = vmatprep.subr.bf16.mxu0 0
      %998 = vmatpush1.bf16.msra.mxu0 %v685
      %999 = vmatprep.subr.bf16.mxu0 0
      %1000 = vmatpush1.bf16.msra.mxu0 0
      %1001 = vmatprep.subr.bf16.mxu0 0
      %1002 = vmatpush1.bf16.msra.mxu0 0
      %1003 = vmatprep.subr.bf16.mxu0 0
      %1004 = vmatpush1.bf16.msra.mxu0 0
      %1005 = vmatprep.subr.bf16.mxu0 0
      %1006 = vmatpush1.bf16.msra.mxu0 0
      %1007 = vmatprep.subr.bf16.mxu0 0
      %1008 = vmatpush1.bf16.msra.mxu0 0
      %1009 = vmatprep.subr.bf16.mxu0 0
      %1010 = vmatpush1.bf16.msra.mxu0 0
      %1011 = vmatprep.subr.bf16.mxu0 0
      %1012 = vmatpush1.bf16.msra.mxu0 0
      %1013 = vmatprep.subr.bf16.mxu0 0
      %1014 = vmatpush1.bf16.msra.mxu0 0
      %1015 = vmatprep.subr.bf16.mxu0 0
      %1016 = vmatpush1.bf16.msra.mxu0 0
      %1017 = vmatprep.subr.bf16.mxu0 0
      %1018 = vmatpush1.bf16.msra.mxu0 0
      %1019 = vmatprep.subr.bf16.mxu0 0
      %1020 = vmatpush1.bf16.msra.mxu0 0
      %1021 = vmatprep.subr.bf16.mxu0 0
      %1022 = vmatpush1.bf16.msra.mxu0 0
      %1023 = vmatprep.subr.bf16.mxu0 0
      %1024 = vmatpush1.bf16.msra.mxu0 0
      %1025 = vmatprep.mubr.bf16.mxu0 0
      %1026 = vmatmul.mubr.bf16.gmra.mrb[0].mxu0 %v991
      %v1027 = vpop.f32.mrb[0].mxu0
      %v1028 = vadd.f32 0.0, %v1027
      %v1029 = vpop.f32.mrb[0].mxu0
      %v1030 = vpop.f32.mrb[0].mxu0
      %v1031 = vadd.f32 0.0, %v1030
      %v1032 = vpop.f32.mrb[0].mxu0
      %1033 = vdwg.mxu0
      %v1034 = vsel %vm689, %v554, 0
      %1036 = vmatprep.subr.bf16.mxu0 0
      %1037 = vmatpush1.bf16.msra.mxu0 %v683
      %1038 = vmatprep.subr.bf16.mxu0 0
      %1039 = vmatpush1.bf16.msra.mxu0 %v684
      %1040 = vmatprep.subr.bf16.mxu0 0
      %1041 = vmatpush1.bf16.msra.mxu0 %v685
      %1042 = vmatprep.subr.bf16.mxu0 0
      %1043 = vmatpush1.bf16.msra.mxu0 0
      %1044 = vmatprep.subr.bf16.mxu0 0
      %1045 = vmatpush1.bf16.msra.mxu0 0
      %1046 = vmatprep.subr.bf16.mxu0 0
      %1047 = vmatpush1.bf16.msra.mxu0 0
      %1048 = vmatprep.subr.bf16.mxu0 0
      %1049 = vmatpush1.bf16.msra.mxu0 0
      %1050 = vmatprep.subr.bf16.mxu0 0
      %1051 = vmatpush1.bf16.msra.mxu0 0
      %1052 = vmatprep.subr.bf16.mxu0 0
      %1053 = vmatpush1.bf16.msra.mxu0 0
      %1054 = vmatprep.subr.bf16.mxu0 0
      %1055 = vmatpush1.bf16.msra.mxu0 0
      %1056 = vmatprep.subr.bf16.mxu0 0
      %1057 = vmatpush1.bf16.msra.mxu0 0
      %1058 = vmatprep.subr.bf16.mxu0 0
      %1059 = vmatpush1.bf16.msra.mxu0 0
      %1060 = vmatprep.subr.bf16.mxu0 0
      %1061 = vmatpush1.bf16.msra.mxu0 0
      %1062 = vmatprep.subr.bf16.mxu0 0
      %1063 = vmatpush1.bf16.msra.mxu0 0
      %1064 = vmatprep.subr.bf16.mxu0 0
      %1065 = vmatpush1.bf16.msra.mxu0 0
      %1066 = vmatprep.subr.bf16.mxu0 0
      %1067 = vmatpush1.bf16.msra.mxu0 0
      %1068 = vmatprep.mubr.bf16.mxu0 0
      %1069 = vmatmul.mubr.bf16.gmra.mrb[0].mxu0 %v1034
      %v1070 = vpop.f32.mrb[0].mxu0
      %v1071 = vadd.f32 0.0, %v1070
      %v1072 = vpop.f32.mrb[0].mxu0
      %v1073 = vpop.f32.mrb[0].mxu0
      %v1074 = vadd.f32 0.0, %v1073
      %v1075 = vpop.f32.mrb[0].mxu0
      %1076 = vdwg.mxu0
      %v1077 = vsel %vm689, %v556, 0
      %1079 = vmatprep.subr.bf16.mxu0 0
      %1080 = vmatpush1.bf16.msra.mxu0 %v683
      %1081 = vmatprep.subr.bf16.mxu0 0
      %1082 = vmatpush1.bf16.msra.mxu0 %v684
      %1083 = vmatprep.subr.bf16.mxu0 0
      %1084 = vmatpush1.bf16.msra.mxu0 %v685
      %1085 = vmatprep.subr.bf16.mxu0 0
      %1086 = vmatpush1.bf16.msra.mxu0 0
      %1087 = vmatprep.subr.bf16.mxu0 0
      %1088 = vmatpush1.bf16.msra.mxu0 0
      %1089 = vmatprep.subr.bf16.mxu0 0
      %1090 = vmatpush1.bf16.msra.mxu0 0
      %1091 = vmatprep.subr.bf16.mxu0 0
      %1092 = vmatpush1.bf16.msra.mxu0 0
      %1093 = vmatprep.subr.bf16.mxu0 0
      %1094 = vmatpush1.bf16.msra.mxu0 0
      %1095 = vmatprep.subr.bf16.mxu0 0
      %1096 = vmatpush1.bf16.msra.mxu0 0
      %1097 = vmatprep.subr.bf16.mxu0 0
      %1098 = vmatpush1.bf16.msra.mxu0 0
      %1099 = vmatprep.subr.bf16.mxu0 0
      %1100 = vmatpush1.bf16.msra.mxu0 0
      %1101 = vmatprep.subr.bf16.mxu0 0
      %1102 = vmatpush1.bf16.msra.mxu0 0
      %1103 = vmatprep.subr.bf16.mxu0 0
      %1104 = vmatpush1.bf16.msra.mxu0 0
      %1105 = vmatprep.subr.bf16.mxu0 0
      %1106 = vmatpush1.bf16.msra.mxu0 0
      %1107 = vmatprep.subr.bf16.mxu0 0
      %1108 = vmatpush1.bf16.msra.mxu0 0
      %1109 = vmatprep.subr.bf16.mxu0 0
      %1110 = vmatpush1.bf16.msra.mxu0 0
      %1111 = vmatprep.mubr.bf16.mxu0 0
      %1112 = vmatmul.mubr.bf16.gmra.mrb[0].mxu0 %v1077
      %v1113 = vpop.f32.mrb[0].mxu0
      %v1114 = vadd.f32 0.0, %v1113
      %v1115 = vpop.f32.mrb[0].mxu0
      %v1116 = vpop.f32.mrb[0].mxu0
      %v1117 = vadd.f32 0.0, %v1116
      %v1118 = vpop.f32.mrb[0].mxu0
      %1119 = vdwg.mxu0
      %v1120 = vsel %vm689, %v557, 0
      %1122 = vmatprep.subr.bf16.mxu0 0
      %1123 = vmatpush1.bf16.msra.mxu0 %v683
      %1124 = vmatprep.subr.bf16.mxu0 0
      %1125 = vmatpush1.bf16.msra.mxu0 %v684
      %1126 = vmatprep.subr.bf16.mxu0 0
      %1127 = vmatpush1.bf16.msra.mxu0 %v685
      %1128 = vmatprep.subr.bf16.mxu0 0
      %1129 = vmatpush1.bf16.msra.mxu0 0
      %1130 = vmatprep.subr.bf16.mxu0 0
      %1131 = vmatpush1.bf16.msra.mxu0 0
      %1132 = vmatprep.subr.bf16.mxu0 0
      %1133 = vmatpush1.bf16.msra.mxu0 0
      %1134 = vmatprep.subr.bf16.mxu0 0
      %1135 = vmatpush1.bf16.msra.mxu0 0
      %1136 = vmatprep.subr.bf16.mxu0 0
      %1137 = vmatpush1.bf16.msra.mxu0 0
      %1138 = vmatprep.subr.bf16.mxu0 0
      %1139 = vmatpush1.bf16.msra.mxu0 0
      %1140 = vmatprep.subr.bf16.mxu0 0
      %1141 = vmatpush1.bf16.msra.mxu0 0
      %1142 = vmatprep.subr.bf16.mxu0 0
      %1143 = vmatpush1.bf16.msra.mxu0 0
      %1144 = vmatprep.subr.bf16.mxu0 0
      %1145 = vmatpush1.bf16.msra.mxu0 0
      %1146 = vmatprep.subr.bf16.mxu0 0
      %1147 = vmatpush1.bf16.msra.mxu0 0
      %1148 = vmatprep.subr.bf16.mxu0 0
      %1149 = vmatpush1.bf16.msra.mxu0 0
      %1150 = vmatprep.subr.bf16.mxu0 0
      %1151 = vmatpush1.bf16.msra.mxu0 0
      %1152 = vmatprep.subr.bf16.mxu0 0
      %1153 = vmatpush1.bf16.msra.mxu0 0
      %1154 = vmatprep.mubr.bf16.mxu0 0
      %1155 = vmatmul.mubr.bf16.gmra.mrb[0].mxu0 %v1120
      %v1156 = vpop.f32.mrb[0].mxu0
      %v1157 = vadd.f32 0.0, %v1156
      %v1158 = vpop.f32.mrb[0].mxu0
      %v1159 = vpop.f32.mrb[0].mxu0
      %v1160 = vadd.f32 0.0, %v1159
      %v1161 = vpop.f32.mrb[0].mxu0
      %1162 = vdwg.mxu0
      %v1163 = vsel %vm689, %v559, 0
      %1165 = vmatprep.subr.bf16.mxu0 0
      %1166 = vmatpush1.bf16.msra.mxu0 %v683
      %1167 = vmatprep.subr.bf16.mxu0 0
      %1168 = vmatpush1.bf16.msra.mxu0 %v684
      %1169 = vmatprep.subr.bf16.mxu0 0
      %1170 = vmatpush1.bf16.msra.mxu0 %v685
      %1171 = vmatprep.subr.bf16.mxu0 0
      %1172 = vmatpush1.bf16.msra.mxu0 0
      %1173 = vmatprep.subr.bf16.mxu0 0
      %1174 = vmatpush1.bf16.msra.mxu0 0
      %1175 = vmatprep.subr.bf16.mxu0 0
      %1176 = vmatpush1.bf16.msra.mxu0 0
      %1177 = vmatprep.subr.bf16.mxu0 0
      %1178 = vmatpush1.bf16.msra.mxu0 0
      %1179 = vmatprep.subr.bf16.mxu0 0
      %1180 = vmatpush1.bf16.msra.mxu0 0
      %1181 = vmatprep.subr.bf16.mxu0 0
      %1182 = vmatpush1.bf16.msra.mxu0 0
      %1183 = vmatprep.subr.bf16.mxu0 0
      %1184 = vmatpush1.bf16.msra.mxu0 0
      %1185 = vmatprep.subr.bf16.mxu0 0
      %1186 = vmatpush1.bf16.msra.mxu0 0
      %1187 = vmatprep.subr.bf16.mxu0 0
      %1188 = vmatpush1.bf16.msra.mxu0 0
      %1189 = vmatprep.subr.bf16.mxu0 0
      %1190 = vmatpush1.bf16.msra.mxu0 0
      %1191 = vmatprep.subr.bf16.mxu0 0
      %1192 = vmatpush1.bf16.msra.mxu0 0
      %1193 = vmatprep.subr.bf16.mxu0 0
      %1194 = vmatpush1.bf16.msra.mxu0 0
      %1195 = vmatprep.subr.bf16.mxu0 0
      %1196 = vmatpush1.bf16.msra.mxu0 0
      %1197 = vmatprep.mubr.bf16.mxu0 0
      %1198 = vmatmul.mubr.bf16.gmra.mrb[0].mxu0 %v1163
      %v1199 = vpop.f32.mrb[0].mxu0
      %v1200 = vadd.f32 0.0, %v1199
      %v1201 = vpop.f32.mrb[0].mxu0
      %v1202 = vpop.f32.mrb[0].mxu0
      %v1203 = vadd.f32 0.0, %v1202
      %v1204 = vpop.f32.mrb[0].mxu0
      %1205 = vdwg.mxu0
      %v1206 = vsel %vm689, %v560, 0
      %1208 = vmatprep.subr.bf16.mxu0 0
      %1209 = vmatpush1.bf16.msra.mxu0 %v683
      %1210 = vmatprep.subr.bf16.mxu0 0
      %1211 = vmatpush1.bf16.msra.mxu0 %v684
      %1212 = vmatprep.subr.bf16.mxu0 0
      %1213 = vmatpush1.bf16.msra.mxu0 %v685
      %1214 = vmatprep.subr.bf16.mxu0 0
      %1215 = vmatpush1.bf16.msra.mxu0 0
      %1216 = vmatprep.subr.bf16.mxu0 0
      %1217 = vmatpush1.bf16.msra.mxu0 0
      %1218 = vmatprep.subr.bf16.mxu0 0
      %1219 = vmatpush1.bf16.msra.mxu0 0
      %1220 = vmatprep.subr.bf16.mxu0 0
      %1221 = vmatpush1.bf16.msra.mxu0 0
      %1222 = vmatprep.subr.bf16.mxu0 0
      %1223 = vmatpush1.bf16.msra.mxu0 0
      %1224 = vmatprep.subr.bf16.mxu0 0
      %1225 = vmatpush1.bf16.msra.mxu0 0
      %1226 = vmatprep.subr.bf16.mxu0 0
      %1227 = vmatpush1.bf16.msra.mxu0 0
      %1228 = vmatprep.subr.bf16.mxu0 0
      %1229 = vmatpush1.bf16.msra.mxu0 0
      %1230 = vmatprep.subr.bf16.mxu0 0
      %1231 = vmatpush1.bf16.msra.mxu0 0
      %1232 = vmatprep.subr.bf16.mxu0 0
      %1233 = vmatpush1.bf16.msra.mxu0 0
      %1234 = vmatprep.subr.bf16.mxu0 0
      %1235 = vmatpush1.bf16.msra.mxu0 0
      %1236 = vmatprep.subr.bf16.mxu0 0
      %1237 = vmatpush1.bf16.msra.mxu0 0
      %1238 = vmatprep.subr.bf16.mxu0 0
      %1239 = vmatpush1.bf16.msra.mxu0 0
      %1240 = vmatprep.mubr.bf16.mxu0 0
      %1241 = vmatmul.mubr.bf16.gmra.mrb[0].mxu0 %v1206
      %v1242 = vpop.f32.mrb[0].mxu0
      %v1243 = vadd.f32 0.0, %v1242
      %v1244 = vpop.f32.mrb[0].mxu0
      %v1245 = vpop.f32.mrb[0].mxu0
      %v1246 = vadd.f32 0.0, %v1245
      %v1247 = vpop.f32.mrb[0].mxu0
      %1248 = vdwg.mxu0
      %v1249 = vsel %vm689, %v562, 0
      %1251 = vmatprep.subr.bf16.mxu0 0
      %1252 = vmatpush1.bf16.msra.mxu0 %v683
      %1253 = vmatprep.subr.bf16.mxu0 0
      %1254 = vmatpush1.bf16.msra.mxu0 %v684
      %1255 = vmatprep.subr.bf16.mxu0 0
      %1256 = vmatpush1.bf16.msra.mxu0 %v685
      %1257 = vmatprep.subr.bf16.mxu0 0
      %1258 = vmatpush1.bf16.msra.mxu0 0
      %1259 = vmatprep.subr.bf16.mxu0 0
      %1260 = vmatpush1.bf16.msra.mxu0 0
      %1261 = vmatprep.subr.bf16.mxu0 0
      %1262 = vmatpush1.bf16.msra.mxu0 0
      %1263 = vmatprep.subr.bf16.mxu0 0
      %1264 = vmatpush1.bf16.msra.mxu0 0
      %1265 = vmatprep.subr.bf16.mxu0 0
      %1266 = vmatpush1.bf16.msra.mxu0 0
      %1267 = vmatprep.subr.bf16.mxu0 0
      %1268 = vmatpush1.bf16.msra.mxu0 0
      %1269 = vmatprep.subr.bf16.mxu0 0
      %1270 = vmatpush1.bf16.msra.mxu0 0
      %1271 = vmatprep.subr.bf16.mxu0 0
      %1272 = vmatpush1.bf16.msra.mxu0 0
      %1273 = vmatprep.subr.bf16.mxu0 0
      %1274 = vmatpush1.bf16.msra.mxu0 0
      %1275 = vmatprep.subr.bf16.mxu0 0
      %1276 = vmatpush1.bf16.msra.mxu0 0
      %1277 = vmatprep.subr.bf16.mxu0 0
      %1278 = vmatpush1.bf16.msra.mxu0 0
      %1279 = vmatprep.subr.bf16.mxu0 0
      %1280 = vmatpush1.bf16.msra.mxu0 0
      %1281 = vmatprep.subr.bf16.mxu0 0
      %1282 = vmatpush1.bf16.msra.mxu0 0
      %1283 = vmatprep.mubr.bf16.mxu0 0
      %1284 = vmatmul.mubr.bf16.gmra.mrb[0].mxu0 %v1249
      %v1285 = vpop.f32.mrb[0].mxu0
      %v1286 = vadd.f32 0.0, %v1285
      %v1287 = vpop.f32.mrb[0].mxu0
      %v1288 = vpop.f32.mrb[0].mxu0
      %v1289 = vadd.f32 0.0, %v1288
      %v1290 = vpop.f32.mrb[0].mxu0
      %1291 = vdwg.mxu0
      %v1292 = vsel %vm689, %v563, 0
      %1294 = vmatprep.subr.bf16.mxu0 0
      %1295 = vmatpush1.bf16.msra.mxu0 %v683
      %1296 = vmatprep.subr.bf16.mxu0 0
      %1297 = vmatpush1.bf16.msra.mxu0 %v684
      %1298 = vmatprep.subr.bf16.mxu0 0
      %1299 = vmatpush1.bf16.msra.mxu0 %v685
      %1300 = vmatprep.subr.bf16.mxu0 0
      %1301 = vmatpush1.bf16.msra.mxu0 0
      %1302 = vmatprep.subr.bf16.mxu0 0
      %1303 = vmatpush1.bf16.msra.mxu0 0
      %1304 = vmatprep.subr.bf16.mxu0 0
      %1305 = vmatpush1.bf16.msra.mxu0 0
      %1306 = vmatprep.subr.bf16.mxu0 0
      %1307 = vmatpush1.bf16.msra.mxu0 0
      %1308 = vmatprep.subr.bf16.mxu0 0
      %1309 = vmatpush1.bf16.msra.mxu0 0
      %1310 = vmatprep.subr.bf16.mxu0 0
      %1311 = vmatpush1.bf16.msra.mxu0 0
      %1312 = vmatprep.subr.bf16.mxu0 0
      %1313 = vmatpush1.bf16.msra.mxu0 0
      %1314 = vmatprep.subr.bf16.mxu0 0
      %1315 = vmatpush1.bf16.msra.mxu0 0
      %1316 = vmatprep.subr.bf16.mxu0 0
      %1317 = vmatpush1.bf16.msra.mxu0 0
      %1318 = vmatprep.subr.bf16.mxu0 0
      %1319 = vmatpush1.bf16.msra.mxu0 0
      %1320 = vmatprep.subr.bf16.mxu0 0
      %1321 = vmatpush1.bf16.msra.mxu0 0
      %1322 = vmatprep.subr.bf16.mxu0 0
      %1323 = vmatpush1.bf16.msra.mxu0 0
      %1324 = vmatprep.subr.bf16.mxu0 0
      %1325 = vmatpush1.bf16.msra.mxu0 0
      %1326 = vmatprep.mubr.bf16.mxu0 0
      %1327 = vmatmul.mubr.bf16.gmra.mrb[0].mxu0 %v1292
      %v1328 = vpop.f32.mrb[0].mxu0
      %v1329 = vadd.f32 0.0, %v1328
      %v1330 = vpop.f32.mrb[0].mxu0
      %v1331 = vpop.f32.mrb[0].mxu0
      %v1332 = vadd.f32 0.0, %v1331
      %v1333 = vpop.f32.mrb[0].mxu0
      %1334 = vdwg.mxu0
      %v1335 = vsel %vm689, %v565, 0
      %1337 = vmatprep.subr.bf16.mxu0 0
      %1338 = vmatpush1.bf16.msra.mxu0 %v683
      %1339 = vmatprep.subr.bf16.mxu0 0
      %1340 = vmatpush1.bf16.msra.mxu0 %v684
      %1341 = vmatprep.subr.bf16.mxu0 0
      %1342 = vmatpush1.bf16.msra.mxu0 %v685
      %1343 = vmatprep.subr.bf16.mxu0 0
      %1344 = vmatpush1.bf16.msra.mxu0 0
      %1345 = vmatprep.subr.bf16.mxu0 0
      %1346 = vmatpush1.bf16.msra.mxu0 0
      %1347 = vmatprep.subr.bf16.mxu0 0
      %1348 = vmatpush1.bf16.msra.mxu0 0
      %1349 = vmatprep.subr.bf16.mxu0 0
      %1350 = vmatpush1.bf16.msra.mxu0 0
      %1351 = vmatprep.subr.bf16.mxu0 0
      %1352 = vmatpush1.bf16.msra.mxu0 0
      %1353 = vmatprep.subr.bf16.mxu0 0
      %1354 = vmatpush1.bf16.msra.mxu0 0
      %1355 = vmatprep.subr.bf16.mxu0 0
      %1356 = vmatpush1.bf16.msra.mxu0 0
      %1357 = vmatprep.subr.bf16.mxu0 0
      %1358 = vmatpush1.bf16.msra.mxu0 0
      %1359 = vmatprep.subr.bf16.mxu0 0
      %1360 = vmatpush1.bf16.msra.mxu0 0
      %1361 = vmatprep.subr.bf16.mxu0 0
      %1362 = vmatpush1.bf16.msra.mxu0 0
      %1363 = vmatprep.subr.bf16.mxu0 0
      %1364 = vmatpush1.bf16.msra.mxu0 0
      %1365 = vmatprep.subr.bf16.mxu0 0
      %1366 = vmatpush1.bf16.msra.mxu0 0
      %1367 = vmatprep.subr.bf16.mxu0 0
      %1368 = vmatpush1.bf16.msra.mxu0 0
      %1369 = vmatprep.mubr.bf16.mxu0 0
      %1370 = vmatmul.mubr.bf16.gmra.mrb[0].mxu0 %v1335
      %v1371 = vpop.f32.mrb[0].mxu0
      %v1372 = vadd.f32 0.0, %v1371
      %v1373 = vpop.f32.mrb[0].mxu0
      %v1374 = vpop.f32.mrb[0].mxu0
      %v1375 = vadd.f32 0.0, %v1374
      %v1376 = vpop.f32.mrb[0].mxu0
      %1377 = vdwg.mxu0
      %v1378 = vshrl.u32 %v542, 16
      %v1380 = vshll.u32 %v542, 16
      %v1382 = vrot.slane %v1380, 1
      %v1383 = vor.u32 %v1378, %v1382
      %v1384 = vshll.u32 %v634, 16
      %v1386 = vrot.slane %v1384, 1
      %v1387 = vsel %vm250, %v1383, %v1386
      %v1394 = vunpack.c.l.b16 %v665
      %v1395 = vunpack.c.l.b16 %v666
      %v1396 = vunpack.c.l.b16 %v667
      %v1397 = vunpack.c.l.b16 %v668
      %v1398 = vunpack.c.l.b16 %v669
      %v1399 = vunpack.c.l.b16 %v670
      %v1400 = vpack.c.b16 %v1395, %v1394
      %v1401 = vpack.c.b16 %v1397, %v1396
      %v1402 = vpack.c.b16 %v1399, %v1398
      %v1407 = vsel %vm689, %v1387, 0
      %1409 = vmatprep.subr.bf16.mxu0 0
      %1410 = vmatpush1.bf16.msra.mxu0 %v1400
      %1411 = vmatprep.subr.bf16.mxu0 0
      %1412 = vmatpush1.bf16.msra.mxu0 %v1401
      %1413 = vmatprep.subr.bf16.mxu0 0
      %1414 = vmatpush1.bf16.msra.mxu0 %v1402
      %1415 = vmatprep.subr.bf16.mxu0 0
      %1416 = vmatpush1.bf16.msra.mxu0 0
      %1417 = vmatprep.subr.bf16.mxu0 0
      %1418 = vmatpush1.bf16.msra.mxu0 0
      %1419 = vmatprep.subr.bf16.mxu0 0
      %1420 = vmatpush1.bf16.msra.mxu0 0
      %1421 = vmatprep.subr.bf16.mxu0 0
      %1422 = vmatpush1.bf16.msra.mxu0 0
      %1423 = vmatprep.subr.bf16.mxu0 0
      %1424 = vmatpush1.bf16.msra.mxu0 0
      %1425 = vmatprep.subr.bf16.mxu0 0
      %1426 = vmatpush1.bf16.msra.mxu0 0
      %1427 = vmatprep.subr.bf16.mxu0 0
      %1428 = vmatpush1.bf16.msra.mxu0 0
      %1429 = vmatprep.subr.bf16.mxu0 0
      %1430 = vmatpush1.bf16.msra.mxu0 0
      %1431 = vmatprep.subr.bf16.mxu0 0
      %1432 = vmatpush1.bf16.msra.mxu0 0
      %1433 = vmatprep.subr.bf16.mxu0 0
      %1434 = vmatpush1.bf16.msra.mxu0 0
      %1435 = vmatprep.subr.bf16.mxu0 0
      %1436 = vmatpush1.bf16.msra.mxu0 0
      %1437 = vmatprep.subr.bf16.mxu0 0
      %1438 = vmatpush1.bf16.msra.mxu0 0
      %1439 = vmatprep.subr.bf16.mxu0 0
      %1440 = vmatpush1.bf16.msra.mxu0 0
      %1441 = vmatprep.mubr.bf16.mxu0 0
      %1442 = vmatmul.mubr.bf16.gmra.mrb[0].mxu0 %v1407
      %v1443 = vpop.f32.mrb[0].mxu0
      %v1444 = vadd.f32 0.0, %v1443
      %v1445 = vpop.f32.mrb[0].mxu0
      %v1446 = vpop.f32.mrb[0].mxu0
      %v1447 = vadd.f32 0.0, %v1446
      %v1448 = vpop.f32.mrb[0].mxu0
      %1449 = vdwg.mxu0
      %v1450 = vshrl.u32 %v544, 16
      %v1452 = vshll.u32 %v544, 16
      %v1454 = vrot.slane %v1452, 1
      %v1455 = vor.u32 %v1450, %v1454
      %v1456 = vshll.u32 %v636, 16
      %v1458 = vrot.slane %v1456, 1
      %v1459 = vsel %vm250, %v1455, %v1458
      %v1461 = vsel %vm689, %v1459, 0
      %1463 = vmatprep.subr.bf16.mxu0 0
      %1464 = vmatpush1.bf16.msra.mxu0 %v1400
      %1465 = vmatprep.subr.bf16.mxu0 0
      %1466 = vmatpush1.bf16.msra.mxu0 %v1401
      %1467 = vmatprep.subr.bf16.mxu0 0
      %1468 = vmatpush1.bf16.msra.mxu0 %v1402
      %1469 = vmatprep.subr.bf16.mxu0 0
      %1470 = vmatpush1.bf16.msra.mxu0 0
      %1471 = vmatprep.subr.bf16.mxu0 0
      %1472 = vmatpush1.bf16.msra.mxu0 0
      %1473 = vmatprep.subr.bf16.mxu0 0
      %1474 = vmatpush1.bf16.msra.mxu0 0
      %1475 = vmatprep.subr.bf16.mxu0 0
      %1476 = vmatpush1.bf16.msra.mxu0 0
      %1477 = vmatprep.subr.bf16.mxu0 0
      %1478 = vmatpush1.bf16.msra.mxu0 0
      %1479 = vmatprep.subr.bf16.mxu0 0
      %1480 = vmatpush1.bf16.msra.mxu0 0
      %1481 = vmatprep.subr.bf16.mxu0 0
      %1482 = vmatpush1.bf16.msra.mxu0 0
      %1483 = vmatprep.subr.bf16.mxu0 0
      %1484 = vmatpush1.bf16.msra.mxu0 0
      %1485 = vmatprep.subr.bf16.mxu0 0
      %1486 = vmatpush1.bf16.msra.mxu0 0
      %1487 = vmatprep.subr.bf16.mxu0 0
      %1488 = vmatpush1.bf16.msra.mxu0 0
      %1489 = vmatprep.subr.bf16.mxu0 0
      %1490 = vmatpush1.bf16.msra.mxu0 0
      %1491 = vmatprep.subr.bf16.mxu0 0
      %1492 = vmatpush1.bf16.msra.mxu0 0
      %1493 = vmatprep.subr.bf16.mxu0 0
      %1494 = vmatpush1.bf16.msra.mxu0 0
      %1495 = vmatprep.mubr.bf16.mxu0 0
      %1496 = vmatmul.mubr.bf16.gmra.mrb[0].mxu0 %v1461
      %v1497 = vpop.f32.mrb[0].mxu0
      %v1498 = vadd.f32 0.0, %v1497
      %v1499 = vpop.f32.mrb[0].mxu0
      %v1500 = vpop.f32.mrb[0].mxu0
      %v1501 = vadd.f32 0.0, %v1500
      %v1502 = vpop.f32.mrb[0].mxu0
      %1503 = vdwg.mxu0
      %v1504 = vshrl.u32 %v545, 16
      %v1506 = vshll.u32 %v545, 16
      %v1508 = vrot.slane %v1506, 1
      %v1509 = vor.u32 %v1504, %v1508
      %v1510 = vshll.u32 %v637, 16
      %v1512 = vrot.slane %v1510, 1
      %v1513 = vsel %vm250, %v1509, %v1512
      %v1515 = vsel %vm689, %v1513, 0
      %1517 = vmatprep.subr.bf16.mxu0 0
      %1518 = vmatpush1.bf16.msra.mxu0 %v1400
      %1519 = vmatprep.subr.bf16.mxu0 0
      %1520 = vmatpush1.bf16.msra.mxu0 %v1401
      %1521 = vmatprep.subr.bf16.mxu0 0
      %1522 = vmatpush1.bf16.msra.mxu0 %v1402
      %1523 = vmatprep.subr.bf16.mxu0 0
      %1524 = vmatpush1.bf16.msra.mxu0 0
      %1525 = vmatprep.subr.bf16.mxu0 0
      %1526 = vmatpush1.bf16.msra.mxu0 0
      %1527 = vmatprep.subr.bf16.mxu0 0
      %1528 = vmatpush1.bf16.msra.mxu0 0
      %1529 = vmatprep.subr.bf16.mxu0 0
      %1530 = vmatpush1.bf16.msra.mxu0 0
      %1531 = vmatprep.subr.bf16.mxu0 0
      %1532 = vmatpush1.bf16.msra.mxu0 0
      %1533 = vmatprep.subr.bf16.mxu0 0
      %1534 = vmatpush1.bf16.msra.mxu0 0
      %1535 = vmatprep.subr.bf16.mxu0 0
      %1536 = vmatpush1.bf16.msra.mxu0 0
      %1537 = vmatprep.subr.bf16.mxu0 0
      %1538 = vmatpush1.bf16.msra.mxu0 0
      %1539 = vmatprep.subr.bf16.mxu0 0
      %1540 = vmatpush1.bf16.msra.mxu0 0
      %1541 = vmatprep.subr.bf16.mxu0 0
      %1542 = vmatpush1.bf16.msra.mxu0 0
      %1543 = vmatprep.subr.bf16.mxu0 0
      %1544 = vmatpush1.bf16.msra.mxu0 0
      %1545 = vmatprep.subr.bf16.mxu0 0
      %1546 = vmatpush1.bf16.msra.mxu0 0
      %1547 = vmatprep.subr.bf16.mxu0 0
      %1548 = vmatpush1.bf16.msra.mxu0 0
      %1549 = vmatprep.mubr.bf16.mxu0 0
      %1550 = vmatmul.mubr.bf16.gmra.mrb[0].mxu0 %v1515
      %v1551 = vpop.f32.mrb[0].mxu0
      %v1552 = vadd.f32 0.0, %v1551
      %v1553 = vpop.f32.mrb[0].mxu0
      %v1554 = vpop.f32.mrb[0].mxu0
      %v1555 = vadd.f32 0.0, %v1554
      %v1556 = vpop.f32.mrb[0].mxu0
      %1557 = vdwg.mxu0
      %v1558 = vshrl.u32 %v547, 16
      %v1560 = vshll.u32 %v547, 16
      %v1562 = vrot.slane %v1560, 1
      %v1563 = vor.u32 %v1558, %v1562
      %v1564 = vshll.u32 %v639, 16
      %v1566 = vrot.slane %v1564, 1
      %v1567 = vsel %vm250, %v1563, %v1566
      %v1569 = vsel %vm689, %v1567, 0
      %1571 = vmatprep.subr.bf16.mxu0 0
      %1572 = vmatpush1.bf16.msra.mxu0 %v1400
      %1573 = vmatprep.subr.bf16.mxu0 0
      %1574 = vmatpush1.bf16.msra.mxu0 %v1401
      %1575 = vmatprep.subr.bf16.mxu0 0
      %1576 = vmatpush1.bf16.msra.mxu0 %v1402
      %1577 = vmatprep.subr.bf16.mxu0 0
      %1578 = vmatpush1.bf16.msra.mxu0 0
      %1579 = vmatprep.subr.bf16.mxu0 0
      %1580 = vmatpush1.bf16.msra.mxu0 0
      %1581 = vmatprep.subr.bf16.mxu0 0
      %1582 = vmatpush1.bf16.msra.mxu0 0
      %1583 = vmatprep.subr.bf16.mxu0 0
      %1584 = vmatpush1.bf16.msra.mxu0 0
      %1585 = vmatprep.subr.bf16.mxu0 0
      %1586 = vmatpush1.bf16.msra.mxu0 0
      %1587 = vmatprep.subr.bf16.mxu0 0
      %1588 = vmatpush1.bf16.msra.mxu0 0
      %1589 = vmatprep.subr.bf16.mxu0 0
      %1590 = vmatpush1.bf16.msra.mxu0 0
      %1591 = vmatprep.subr.bf16.mxu0 0
      %1592 = vmatpush1.bf16.msra.mxu0 0
      %1593 = vmatprep.subr.bf16.mxu0 0
      %1594 = vmatpush1.bf16.msra.mxu0 0
      %1595 = vmatprep.subr.bf16.mxu0 0
      %1596 = vmatpush1.bf16.msra.mxu0 0
      %1597 = vmatprep.subr.bf16.mxu0 0
      %1598 = vmatpush1.bf16.msra.mxu0 0
      %1599 = vmatprep.subr.bf16.mxu0 0
      %1600 = vmatpush1.bf16.msra.mxu0 0
      %1601 = vmatprep.subr.bf16.mxu0 0
      %1602 = vmatpush1.bf16.msra.mxu0 0
      %1603 = vmatprep.mubr.bf16.mxu0 0
      %1604 = vmatmul.mubr.bf16.gmra.mrb[0].mxu0 %v1569
      %v1605 = vpop.f32.mrb[0].mxu0
      %v1606 = vadd.f32 0.0, %v1605
      %v1607 = vpop.f32.mrb[0].mxu0
      %v1608 = vpop.f32.mrb[0].mxu0
      %v1609 = vadd.f32 0.0, %v1608
      %v1610 = vpop.f32.mrb[0].mxu0
      %1611 = vdwg.mxu0
      %v1612 = vshrl.u32 %v548, 16
      %v1614 = vshll.u32 %v548, 16
      %v1616 = vrot.slane %v1614, 1
      %v1617 = vor.u32 %v1612, %v1616
      %v1618 = vshll.u32 %v640, 16
      %v1620 = vrot.slane %v1618, 1
      %v1621 = vsel %vm250, %v1617, %v1620
      %v1623 = vsel %vm689, %v1621, 0
      %1625 = vmatprep.subr.bf16.mxu0 0
      %1626 = vmatpush1.bf16.msra.mxu0 %v1400
      %1627 = vmatprep.subr.bf16.mxu0 0
      %1628 = vmatpush1.bf16.msra.mxu0 %v1401
      %1629 = vmatprep.subr.bf16.mxu0 0
      %1630 = vmatpush1.bf16.msra.mxu0 %v1402
      %1631 = vmatprep.subr.bf16.mxu0 0
      %1632 = vmatpush1.bf16.msra.mxu0 0
      %1633 = vmatprep.subr.bf16.mxu0 0
      %1634 = vmatpush1.bf16.msra.mxu0 0
      %1635 = vmatprep.subr.bf16.mxu0 0
      %1636 = vmatpush1.bf16.msra.mxu0 0
      %1637 = vmatprep.subr.bf16.mxu0 0
      %1638 = vmatpush1.bf16.msra.mxu0 0
      %1639 = vmatprep.subr.bf16.mxu0 0
      %1640 = vmatpush1.bf16.msra.mxu0 0
      %1641 = vmatprep.subr.bf16.mxu0 0
      %1642 = vmatpush1.bf16.msra.mxu0 0
      %1643 = vmatprep.subr.bf16.mxu0 0
      %1644 = vmatpush1.bf16.msra.mxu0 0
      %1645 = vmatprep.subr.bf16.mxu0 0
      %1646 = vmatpush1.bf16.msra.mxu0 0
      %1647 = vmatprep.subr.bf16.mxu0 0
      %1648 = vmatpush1.bf16.msra.mxu0 0
      %1649 = vmatprep.subr.bf16.mxu0 0
      %1650 = vmatpush1.bf16.msra.mxu0 0
      %1651 = vmatprep.subr.bf16.mxu0 0
      %1652 = vmatpush1.bf16.msra.mxu0 0
      %1653 = vmatprep.subr.bf16.mxu0 0
      %1654 = vmatpush1.bf16.msra.mxu0 0
      %1655 = vmatprep.subr.bf16.mxu0 0
      %1656 = vmatpush1.bf16.msra.mxu0 0
      %1657 = vmatprep.mubr.bf16.mxu0 0
      %1658 = vmatmul.mubr.bf16.gmra.mrb[0].mxu0 %v1623
      %v1659 = vpop.f32.mrb[0].mxu0
      %v1660 = vadd.f32 0.0, %v1659
      %v1661 = vpop.f32.mrb[0].mxu0
      %v1662 = vpop.f32.mrb[0].mxu0
      %v1663 = vadd.f32 0.0, %v1662
      %v1664 = vpop.f32.mrb[0].mxu0
      %1665 = vdwg.mxu0
      %v1666 = vshrl.u32 %v550, 16
      %v1668 = vshll.u32 %v550, 16
      %v1670 = vrot.slane %v1668, 1
      %v1671 = vor.u32 %v1666, %v1670
      %v1672 = vshll.u32 %v642, 16
      %v1674 = vrot.slane %v1672, 1
      %v1675 = vsel %vm250, %v1671, %v1674
      %v1677 = vsel %vm689, %v1675, 0
      %1679 = vmatprep.subr.bf16.mxu0 0
      %1680 = vmatpush1.bf16.msra.mxu0 %v1400
      %1681 = vmatprep.subr.bf16.mxu0 0
      %1682 = vmatpush1.bf16.msra.mxu0 %v1401
      %1683 = vmatprep.subr.bf16.mxu0 0
      %1684 = vmatpush1.bf16.msra.mxu0 %v1402
      %1685 = vmatprep.subr.bf16.mxu0 0
      %1686 = vmatpush1.bf16.msra.mxu0 0
      %1687 = vmatprep.subr.bf16.mxu0 0
      %1688 = vmatpush1.bf16.msra.mxu0 0
      %1689 = vmatprep.subr.bf16.mxu0 0
      %1690 = vmatpush1.bf16.msra.mxu0 0
      %1691 = vmatprep.subr.bf16.mxu0 0
      %1692 = vmatpush1.bf16.msra.mxu0 0
      %1693 = vmatprep.subr.bf16.mxu0 0
      %1694 = vmatpush1.bf16.msra.mxu0 0
      %1695 = vmatprep.subr.bf16.mxu0 0
      %1696 = vmatpush1.bf16.msra.mxu0 0
      %1697 = vmatprep.subr.bf16.mxu0 0
      %1698 = vmatpush1.bf16.msra.mxu0 0
      %1699 = vmatprep.subr.bf16.mxu0 0
      %1700 = vmatpush1.bf16.msra.mxu0 0
      %1701 = vmatprep.subr.bf16.mxu0 0
      %1702 = vmatpush1.bf16.msra.mxu0 0
      %1703 = vmatprep.subr.bf16.mxu0 0
      %1704 = vmatpush1.bf16.msra.mxu0 0
      %1705 = vmatprep.subr.bf16.mxu0 0
      %1706 = vmatpush1.bf16.msra.mxu0 0
      %1707 = vmatprep.subr.bf16.mxu0 0
      %1708 = vmatpush1.bf16.msra.mxu0 0
      %1709 = vmatprep.subr.bf16.mxu0 0
      %1710 = vmatpush1.bf16.msra.mxu0 0
      %1711 = vmatprep.mubr.bf16.mxu0 0
      %1712 = vmatmul.mubr.bf16.gmra.mrb[0].mxu0 %v1677
      %v1713 = vpop.f32.mrb[0].mxu0
      %v1714 = vadd.f32 0.0, %v1713
      %v1715 = vpop.f32.mrb[0].mxu0
      %v1716 = vpop.f32.mrb[0].mxu0
      %v1717 = vadd.f32 0.0, %v1716
      %v1718 = vpop.f32.mrb[0].mxu0
      %1719 = vdwg.mxu0
      %v1720 = vshrl.u32 %v551, 16
      %v1722 = vshll.u32 %v551, 16
      %v1724 = vrot.slane %v1722, 1
      %v1725 = vor.u32 %v1720, %v1724
      %v1726 = vshll.u32 %v643, 16
      %v1728 = vrot.slane %v1726, 1
      %v1729 = vsel %vm250, %v1725, %v1728
      %v1731 = vsel %vm689, %v1729, 0
      %1733 = vmatprep.subr.bf16.mxu0 0
      %1734 = vmatpush1.bf16.msra.mxu0 %v1400
      %1735 = vmatprep.subr.bf16.mxu0 0
      %1736 = vmatpush1.bf16.msra.mxu0 %v1401
      %1737 = vmatprep.subr.bf16.mxu0 0
      %1738 = vmatpush1.bf16.msra.mxu0 %v1402
      %1739 = vmatprep.subr.bf16.mxu0 0
      %1740 = vmatpush1.bf16.msra.mxu0 0
      %1741 = vmatprep.subr.bf16.mxu0 0
      %1742 = vmatpush1.bf16.msra.mxu0 0
      %1743 = vmatprep.subr.bf16.mxu0 0
      %1744 = vmatpush1.bf16.msra.mxu0 0
      %1745 = vmatprep.subr.bf16.mxu0 0
      %1746 = vmatpush1.bf16.msra.mxu0 0
      %1747 = vmatprep.subr.bf16.mxu0 0
      %1748 = vmatpush1.bf16.msra.mxu0 0
      %1749 = vmatprep.subr.bf16.mxu0 0
      %1750 = vmatpush1.bf16.msra.mxu0 0
      %1751 = vmatprep.subr.bf16.mxu0 0
      %1752 = vmatpush1.bf16.msra.mxu0 0
      %1753 = vmatprep.subr.bf16.mxu0 0
      %1754 = vmatpush1.bf16.msra.mxu0 0
      %1755 = vmatprep.subr.bf16.mxu0 0
      %1756 = vmatpush1.bf16.msra.mxu0 0
      %1757 = vmatprep.subr.bf16.mxu0 0
      %1758 = vmatpush1.bf16.msra.mxu0 0
      %1759 = vmatprep.subr.bf16.mxu0 0
      %1760 = vmatpush1.bf16.msra.mxu0 0
      %1761 = vmatprep.subr.bf16.mxu0 0
      %1762 = vmatpush1.bf16.msra.mxu0 0
      %1763 = vmatprep.subr.bf16.mxu0 0
      %1764 = vmatpush1.bf16.msra.mxu0 0
      %1765 = vmatprep.mubr.bf16.mxu0 0
      %1766 = vmatmul.mubr.bf16.gmra.mrb[0].mxu0 %v1731
      %v1767 = vpop.f32.mrb[0].mxu0
      %v1768 = vadd.f32 0.0, %v1767
      %v1769 = vpop.f32.mrb[0].mxu0
      %v1770 = vpop.f32.mrb[0].mxu0
      %v1771 = vadd.f32 0.0, %v1770
      %v1772 = vpop.f32.mrb[0].mxu0
      %1773 = vdwg.mxu0
      %v1774 = vshrl.u32 %v553, 16
      %v1776 = vshll.u32 %v553, 16
      %v1778 = vrot.slane %v1776, 1
      %v1779 = vor.u32 %v1774, %v1778
      %v1780 = vshll.u32 %v645, 16
      %v1782 = vrot.slane %v1780, 1
      %v1783 = vsel %vm250, %v1779, %v1782
      %v1785 = vsel %vm689, %v1783, 0
      %1787 = vmatprep.subr.bf16.mxu0 0
      %1788 = vmatpush1.bf16.msra.mxu0 %v1400
      %1789 = vmatprep.subr.bf16.mxu0 0
      %1790 = vmatpush1.bf16.msra.mxu0 %v1401
      %1791 = vmatprep.subr.bf16.mxu0 0
      %1792 = vmatpush1.bf16.msra.mxu0 %v1402
      %1793 = vmatprep.subr.bf16.mxu0 0
      %1794 = vmatpush1.bf16.msra.mxu0 0
      %1795 = vmatprep.subr.bf16.mxu0 0
      %1796 = vmatpush1.bf16.msra.mxu0 0
      %1797 = vmatprep.subr.bf16.mxu0 0
      %1798 = vmatpush1.bf16.msra.mxu0 0
      %1799 = vmatprep.subr.bf16.mxu0 0
      %1800 = vmatpush1.bf16.msra.mxu0 0
      %1801 = vmatprep.subr.bf16.mxu0 0
      %1802 = vmatpush1.bf16.msra.mxu0 0
      %1803 = vmatprep.subr.bf16.mxu0 0
      %1804 = vmatpush1.bf16.msra.mxu0 0
      %1805 = vmatprep.subr.bf16.mxu0 0
      %1806 = vmatpush1.bf16.msra.mxu0 0
      %1807 = vmatprep.subr.bf16.mxu0 0
      %1808 = vmatpush1.bf16.msra.mxu0 0
      %1809 = vmatprep.subr.bf16.mxu0 0
      %1810 = vmatpush1.bf16.msra.mxu0 0
      %1811 = vmatprep.subr.bf16.mxu0 0
      %1812 = vmatpush1.bf16.msra.mxu0 0
      %1813 = vmatprep.subr.bf16.mxu0 0
      %1814 = vmatpush1.bf16.msra.mxu0 0
      %1815 = vmatprep.subr.bf16.mxu0 0
      %1816 = vmatpush1.bf16.msra.mxu0 0
      %1817 = vmatprep.subr.bf16.mxu0 0
      %1818 = vmatpush1.bf16.msra.mxu0 0
      %1819 = vmatprep.mubr.bf16.mxu0 0
      %1820 = vmatmul.mubr.bf16.gmra.mrb[0].mxu0 %v1785
      %v1821 = vpop.f32.mrb[0].mxu0
      %v1822 = vadd.f32 0.0, %v1821
      %v1823 = vpop.f32.mrb[0].mxu0
      %v1824 = vpop.f32.mrb[0].mxu0
      %v1825 = vadd.f32 0.0, %v1824
      %v1826 = vpop.f32.mrb[0].mxu0
      %1827 = vdwg.mxu0
      %v1828 = vshrl.u32 %v554, 16
      %v1830 = vshll.u32 %v554, 16
      %v1832 = vrot.slane %v1830, 1
      %v1833 = vor.u32 %v1828, %v1832
      %v1834 = vshll.u32 %v646, 16
      %v1836 = vrot.slane %v1834, 1
      %v1837 = vsel %vm250, %v1833, %v1836
      %v1839 = vsel %vm689, %v1837, 0
      %1841 = vmatprep.subr.bf16.mxu0 0
      %1842 = vmatpush1.bf16.msra.mxu0 %v1400
      %1843 = vmatprep.subr.bf16.mxu0 0
      %1844 = vmatpush1.bf16.msra.mxu0 %v1401
      %1845 = vmatprep.subr.bf16.mxu0 0
      %1846 = vmatpush1.bf16.msra.mxu0 %v1402
      %1847 = vmatprep.subr.bf16.mxu0 0
      %1848 = vmatpush1.bf16.msra.mxu0 0
      %1849 = vmatprep.subr.bf16.mxu0 0
      %1850 = vmatpush1.bf16.msra.mxu0 0
      %1851 = vmatprep.subr.bf16.mxu0 0
      %1852 = vmatpush1.bf16.msra.mxu0 0
      %1853 = vmatprep.subr.bf16.mxu0 0
      %1854 = vmatpush1.bf16.msra.mxu0 0
      %1855 = vmatprep.subr.bf16.mxu0 0
      %1856 = vmatpush1.bf16.msra.mxu0 0
      %1857 = vmatprep.subr.bf16.mxu0 0
      %1858 = vmatpush1.bf16.msra.mxu0 0
      %1859 = vmatprep.subr.bf16.mxu0 0
      %1860 = vmatpush1.bf16.msra.mxu0 0
      %1861 = vmatprep.subr.bf16.mxu0 0
      %1862 = vmatpush1.bf16.msra.mxu0 0
      %1863 = vmatprep.subr.bf16.mxu0 0
      %1864 = vmatpush1.bf16.msra.mxu0 0
      %1865 = vmatprep.subr.bf16.mxu0 0
      %1866 = vmatpush1.bf16.msra.mxu0 0
      %1867 = vmatprep.subr.bf16.mxu0 0
      %1868 = vmatpush1.bf16.msra.mxu0 0
      %1869 = vmatprep.subr.bf16.mxu0 0
      %1870 = vmatpush1.bf16.msra.mxu0 0
      %1871 = vmatprep.subr.bf16.mxu0 0
      %1872 = vmatpush1.bf16.msra.mxu0 0
      %1873 = vmatprep.mubr.bf16.mxu0 0
      %1874 = vmatmul.mubr.bf16.gmra.mrb[0].mxu0 %v1839
      %v1875 = vpop.f32.mrb[0].mxu0
      %v1876 = vadd.f32 0.0, %v1875
      %v1877 = vpop.f32.mrb[0].mxu0
      %v1878 = vpop.f32.mrb[0].mxu0
      %v1879 = vadd.f32 0.0, %v1878
      %v1880 = vpop.f32.mrb[0].mxu0
      %1881 = vdwg.mxu0
      %v1882 = vshrl.u32 %v556, 16
      %v1884 = vshll.u32 %v556, 16
      %v1886 = vrot.slane %v1884, 1
      %v1887 = vor.u32 %v1882, %v1886
      %v1888 = vshll.u32 %v648, 16
      %v1890 = vrot.slane %v1888, 1
      %v1891 = vsel %vm250, %v1887, %v1890
      %v1893 = vsel %vm689, %v1891, 0
      %1895 = vmatprep.subr.bf16.mxu0 0
      %1896 = vmatpush1.bf16.msra.mxu0 %v1400
      %1897 = vmatprep.subr.bf16.mxu0 0
      %1898 = vmatpush1.bf16.msra.mxu0 %v1401
      %1899 = vmatprep.subr.bf16.mxu0 0
      %1900 = vmatpush1.bf16.msra.mxu0 %v1402
      %1901 = vmatprep.subr.bf16.mxu0 0
      %1902 = vmatpush1.bf16.msra.mxu0 0
      %1903 = vmatprep.subr.bf16.mxu0 0
      %1904 = vmatpush1.bf16.msra.mxu0 0
      %1905 = vmatprep.subr.bf16.mxu0 0
      %1906 = vmatpush1.bf16.msra.mxu0 0
      %1907 = vmatprep.subr.bf16.mxu0 0
      %1908 = vmatpush1.bf16.msra.mxu0 0
      %1909 = vmatprep.subr.bf16.mxu0 0
      %1910 = vmatpush1.bf16.msra.mxu0 0
      %1911 = vmatprep.subr.bf16.mxu0 0
      %1912 = vmatpush1.bf16.msra.mxu0 0
      %1913 = vmatprep.subr.bf16.mxu0 0
      %1914 = vmatpush1.bf16.msra.mxu0 0
      %1915 = vmatprep.subr.bf16.mxu0 0
      %1916 = vmatpush1.bf16.msra.mxu0 0
      %1917 = vmatprep.subr.bf16.mxu0 0
      %1918 = vmatpush1.bf16.msra.mxu0 0
      %1919 = vmatprep.subr.bf16.mxu0 0
      %1920 = vmatpush1.bf16.msra.mxu0 0
      %1921 = vmatprep.subr.bf16.mxu0 0
      %1922 = vmatpush1.bf16.msra.mxu0 0
      %1923 = vmatprep.subr.bf16.mxu0 0
      %1924 = vmatpush1.bf16.msra.mxu0 0
      %1925 = vmatprep.subr.bf16.mxu0 0
      %1926 = vmatpush1.bf16.msra.mxu0 0
      %1927 = vmatprep.mubr.bf16.mxu0 0
      %1928 = vmatmul.mubr.bf16.gmra.mrb[0].mxu0 %v1893
      %v1929 = vpop.f32.mrb[0].mxu0
      %v1930 = vadd.f32 0.0, %v1929
      %v1931 = vpop.f32.mrb[0].mxu0
      %v1932 = vpop.f32.mrb[0].mxu0
      %v1933 = vadd.f32 0.0, %v1932
      %v1934 = vpop.f32.mrb[0].mxu0
      %1935 = vdwg.mxu0
      %v1936 = vshrl.u32 %v557, 16
      %v1938 = vshll.u32 %v557, 16
      %v1940 = vrot.slane %v1938, 1
      %v1941 = vor.u32 %v1936, %v1940
      %v1942 = vshll.u32 %v649, 16
      %v1944 = vrot.slane %v1942, 1
      %v1945 = vsel %vm250, %v1941, %v1944
      %v1947 = vsel %vm689, %v1945, 0
      %1949 = vmatprep.subr.bf16.mxu0 0
      %1950 = vmatpush1.bf16.msra.mxu0 %v1400
      %1951 = vmatprep.subr.bf16.mxu0 0
      %1952 = vmatpush1.bf16.msra.mxu0 %v1401
      %1953 = vmatprep.subr.bf16.mxu0 0
      %1954 = vmatpush1.bf16.msra.mxu0 %v1402
      %1955 = vmatprep.subr.bf16.mxu0 0
      %1956 = vmatpush1.bf16.msra.mxu0 0
      %1957 = vmatprep.subr.bf16.mxu0 0
      %1958 = vmatpush1.bf16.msra.mxu0 0
      %1959 = vmatprep.subr.bf16.mxu0 0
      %1960 = vmatpush1.bf16.msra.mxu0 0
      %1961 = vmatprep.subr.bf16.mxu0 0
      %1962 = vmatpush1.bf16.msra.mxu0 0
      %1963 = vmatprep.subr.bf16.mxu0 0
      %1964 = vmatpush1.bf16.msra.mxu0 0
      %1965 = vmatprep.subr.bf16.mxu0 0
      %1966 = vmatpush1.bf16.msra.mxu0 0
      %1967 = vmatprep.subr.bf16.mxu0 0
      %1968 = vmatpush1.bf16.msra.mxu0 0
      %1969 = vmatprep.subr.bf16.mxu0 0
      %1970 = vmatpush1.bf16.msra.mxu0 0
      %1971 = vmatprep.subr.bf16.mxu0 0
      %1972 = vmatpush1.bf16.msra.mxu0 0
      %1973 = vmatprep.subr.bf16.mxu0 0
      %1974 = vmatpush1.bf16.msra.mxu0 0
      %1975 = vmatprep.subr.bf16.mxu0 0
      %1976 = vmatpush1.bf16.msra.mxu0 0
      %1977 = vmatprep.subr.bf16.mxu0 0
      %1978 = vmatpush1.bf16.msra.mxu0 0
      %1979 = vmatprep.subr.bf16.mxu0 0
      %1980 = vmatpush1.bf16.msra.mxu0 0
      %1981 = vmatprep.mubr.bf16.mxu0 0
      %1982 = vmatmul.mubr.bf16.gmra.mrb[0].mxu0 %v1947
      %v1983 = vpop.f32.mrb[0].mxu0
      %v1984 = vadd.f32 0.0, %v1983
      %v1985 = vpop.f32.mrb[0].mxu0
      %v1986 = vpop.f32.mrb[0].mxu0
      %v1987 = vadd.f32 0.0, %v1986
      %v1988 = vpop.f32.mrb[0].mxu0
      %1989 = vdwg.mxu0
      %v1990 = vshrl.u32 %v559, 16
      %v1992 = vshll.u32 %v559, 16
      %v1994 = vrot.slane %v1992, 1
      %v1995 = vor.u32 %v1990, %v1994
      %v1996 = vshll.u32 %v651, 16
      %v1998 = vrot.slane %v1996, 1
      %v1999 = vsel %vm250, %v1995, %v1998
      %v2001 = vsel %vm689, %v1999, 0
      %2003 = vmatprep.subr.bf16.mxu0 0
      %2004 = vmatpush1.bf16.msra.mxu0 %v1400
      %2005 = vmatprep.subr.bf16.mxu0 0
      %2006 = vmatpush1.bf16.msra.mxu0 %v1401
      %2007 = vmatprep.subr.bf16.mxu0 0
      %2008 = vmatpush1.bf16.msra.mxu0 %v1402
      %2009 = vmatprep.subr.bf16.mxu0 0
      %2010 = vmatpush1.bf16.msra.mxu0 0
      %2011 = vmatprep.subr.bf16.mxu0 0
      %2012 = vmatpush1.bf16.msra.mxu0 0
      %2013 = vmatprep.subr.bf16.mxu0 0
      %2014 = vmatpush1.bf16.msra.mxu0 0
      %2015 = vmatprep.subr.bf16.mxu0 0
      %2016 = vmatpush1.bf16.msra.mxu0 0
      %2017 = vmatprep.subr.bf16.mxu0 0
      %2018 = vmatpush1.bf16.msra.mxu0 0
      %2019 = vmatprep.subr.bf16.mxu0 0
      %2020 = vmatpush1.bf16.msra.mxu0 0
      %2021 = vmatprep.subr.bf16.mxu0 0
      %2022 = vmatpush1.bf16.msra.mxu0 0
      %2023 = vmatprep.subr.bf16.mxu0 0
      %2024 = vmatpush1.bf16.msra.mxu0 0
      %2025 = vmatprep.subr.bf16.mxu0 0
      %2026 = vmatpush1.bf16.msra.mxu0 0
      %2027 = vmatprep.subr.bf16.mxu0 0
      %2028 = vmatpush1.bf16.msra.mxu0 0
      %2029 = vmatprep.subr.bf16.mxu0 0
      %2030 = vmatpush1.bf16.msra.mxu0 0
      %2031 = vmatprep.subr.bf16.mxu0 0
      %2032 = vmatpush1.bf16.msra.mxu0 0
      %2033 = vmatprep.subr.bf16.mxu0 0
      %2034 = vmatpush1.bf16.msra.mxu0 0
      %2035 = vmatprep.mubr.bf16.mxu0 0
      %2036 = vmatmul.mubr.bf16.gmra.mrb[0].mxu0 %v2001
      %v2037 = vpop.f32.mrb[0].mxu0
      %v2038 = vadd.f32 0.0, %v2037
      %v2039 = vpop.f32.mrb[0].mxu0
      %v2040 = vpop.f32.mrb[0].mxu0
      %v2041 = vadd.f32 0.0, %v2040
      %v2042 = vpop.f32.mrb[0].mxu0
      %2043 = vdwg.mxu0
      %v2044 = vshrl.u32 %v560, 16
      %v2046 = vshll.u32 %v560, 16
      %v2048 = vrot.slane %v2046, 1
      %v2049 = vor.u32 %v2044, %v2048
      %v2050 = vshll.u32 %v652, 16
      %v2052 = vrot.slane %v2050, 1
      %v2053 = vsel %vm250, %v2049, %v2052
      %v2055 = vsel %vm689, %v2053, 0
      %2057 = vmatprep.subr.bf16.mxu0 0
      %2058 = vmatpush1.bf16.msra.mxu0 %v1400
      %2059 = vmatprep.subr.bf16.mxu0 0
      %2060 = vmatpush1.bf16.msra.mxu0 %v1401
      %2061 = vmatprep.subr.bf16.mxu0 0
      %2062 = vmatpush1.bf16.msra.mxu0 %v1402
      %2063 = vmatprep.subr.bf16.mxu0 0
      %2064 = vmatpush1.bf16.msra.mxu0 0
      %2065 = vmatprep.subr.bf16.mxu0 0
      %2066 = vmatpush1.bf16.msra.mxu0 0
      %2067 = vmatprep.subr.bf16.mxu0 0
      %2068 = vmatpush1.bf16.msra.mxu0 0
      %2069 = vmatprep.subr.bf16.mxu0 0
      %2070 = vmatpush1.bf16.msra.mxu0 0
      %2071 = vmatprep.subr.bf16.mxu0 0
      %2072 = vmatpush1.bf16.msra.mxu0 0
      %2073 = vmatprep.subr.bf16.mxu0 0
      %2074 = vmatpush1.bf16.msra.mxu0 0
      %2075 = vmatprep.subr.bf16.mxu0 0
      %2076 = vmatpush1.bf16.msra.mxu0 0
      %2077 = vmatprep.subr.bf16.mxu0 0
      %2078 = vmatpush1.bf16.msra.mxu0 0
      %2079 = vmatprep.subr.bf16.mxu0 0
      %2080 = vmatpush1.bf16.msra.mxu0 0
      %2081 = vmatprep.subr.bf16.mxu0 0
      %2082 = vmatpush1.bf16.msra.mxu0 0
      %2083 = vmatprep.subr.bf16.mxu0 0
      %2084 = vmatpush1.bf16.msra.mxu0 0
      %2085 = vmatprep.subr.bf16.mxu0 0
      %2086 = vmatpush1.bf16.msra.mxu0 0
      %2087 = vmatprep.subr.bf16.mxu0 0
      %2088 = vmatpush1.bf16.msra.mxu0 0
      %2089 = vmatprep.mubr.bf16.mxu0 0
      %2090 = vmatmul.mubr.bf16.gmra.mrb[0].mxu0 %v2055
      %v2091 = vpop.f32.mrb[0].mxu0
      %v2092 = vadd.f32 0.0, %v2091
      %v2093 = vpop.f32.mrb[0].mxu0
      %v2094 = vpop.f32.mrb[0].mxu0
      %v2095 = vadd.f32 0.0, %v2094
      %v2096 = vpop.f32.mrb[0].mxu0
      %2097 = vdwg.mxu0
      %v2098 = vshrl.u32 %v562, 16
      %v2100 = vshll.u32 %v562, 16
      %v2102 = vrot.slane %v2100, 1
      %v2103 = vor.u32 %v2098, %v2102
      %v2104 = vshll.u32 %v654, 16
      %v2106 = vrot.slane %v2104, 1
      %v2107 = vsel %vm250, %v2103, %v2106
      %v2109 = vsel %vm689, %v2107, 0
      %2111 = vmatprep.subr.bf16.mxu0 0
      %2112 = vmatpush1.bf16.msra.mxu0 %v1400
      %2113 = vmatprep.subr.bf16.mxu0 0
      %2114 = vmatpush1.bf16.msra.mxu0 %v1401
      %2115 = vmatprep.subr.bf16.mxu0 0
      %2116 = vmatpush1.bf16.msra.mxu0 %v1402
      %2117 = vmatprep.subr.bf16.mxu0 0
      %2118 = vmatpush1.bf16.msra.mxu0 0
      %2119 = vmatprep.subr.bf16.mxu0 0
      %2120 = vmatpush1.bf16.msra.mxu0 0
      %2121 = vmatprep.subr.bf16.mxu0 0
      %2122 = vmatpush1.bf16.msra.mxu0 0
      %2123 = vmatprep.subr.bf16.mxu0 0
      %2124 = vmatpush1.bf16.msra.mxu0 0
      %2125 = vmatprep.subr.bf16.mxu0 0
      %2126 = vmatpush1.bf16.msra.mxu0 0
      %2127 = vmatprep.subr.bf16.mxu0 0
      %2128 = vmatpush1.bf16.msra.mxu0 0
      %2129 = vmatprep.subr.bf16.mxu0 0
      %2130 = vmatpush1.bf16.msra.mxu0 0
      %2131 = vmatprep.subr.bf16.mxu0 0
      %2132 = vmatpush1.bf16.msra.mxu0 0
      %2133 = vmatprep.subr.bf16.mxu0 0
      %2134 = vmatpush1.bf16.msra.mxu0 0
      %2135 = vmatprep.subr.bf16.mxu0 0
      %2136 = vmatpush1.bf16.msra.mxu0 0
      %2137 = vmatprep.subr.bf16.mxu0 0
      %2138 = vmatpush1.bf16.msra.mxu0 0
      %2139 = vmatprep.subr.bf16.mxu0 0
      %2140 = vmatpush1.bf16.msra.mxu0 0
      %2141 = vmatprep.subr.bf16.mxu0 0
      %2142 = vmatpush1.bf16.msra.mxu0 0
      %2143 = vmatprep.mubr.bf16.mxu0 0
      %2144 = vmatmul.mubr.bf16.gmra.mrb[0].mxu0 %v2109
      %v2145 = vpop.f32.mrb[0].mxu0
      %v2146 = vadd.f32 0.0, %v2145
      %v2147 = vpop.f32.mrb[0].mxu0
      %v2148 = vpop.f32.mrb[0].mxu0
      %v2149 = vadd.f32 0.0, %v2148
      %v2150 = vpop.f32.mrb[0].mxu0
      %2151 = vdwg.mxu0
      %v2152 = vshrl.u32 %v563, 16
      %v2154 = vshll.u32 %v563, 16
      %v2156 = vrot.slane %v2154, 1
      %v2157 = vor.u32 %v2152, %v2156
      %v2158 = vshll.u32 %v655, 16
      %v2160 = vrot.slane %v2158, 1
      %v2161 = vsel %vm250, %v2157, %v2160
      %v2163 = vsel %vm689, %v2161, 0
      %2165 = vmatprep.subr.bf16.mxu0 0
      %2166 = vmatpush1.bf16.msra.mxu0 %v1400
      %2167 = vmatprep.subr.bf16.mxu0 0
      %2168 = vmatpush1.bf16.msra.mxu0 %v1401
      %2169 = vmatprep.subr.bf16.mxu0 0
      %2170 = vmatpush1.bf16.msra.mxu0 %v1402
      %2171 = vmatprep.subr.bf16.mxu0 0
      %2172 = vmatpush1.bf16.msra.mxu0 0
      %2173 = vmatprep.subr.bf16.mxu0 0
      %2174 = vmatpush1.bf16.msra.mxu0 0
      %2175 = vmatprep.subr.bf16.mxu0 0
      %2176 = vmatpush1.bf16.msra.mxu0 0
      %2177 = vmatprep.subr.bf16.mxu0 0
      %2178 = vmatpush1.bf16.msra.mxu0 0
      %2179 = vmatprep.subr.bf16.mxu0 0
      %2180 = vmatpush1.bf16.msra.mxu0 0
      %2181 = vmatprep.subr.bf16.mxu0 0
      %2182 = vmatpush1.bf16.msra.mxu0 0
      %2183 = vmatprep.subr.bf16.mxu0 0
      %2184 = vmatpush1.bf16.msra.mxu0 0
      %2185 = vmatprep.subr.bf16.mxu0 0
      %2186 = vmatpush1.bf16.msra.mxu0 0
      %2187 = vmatprep.subr.bf16.mxu0 0
      %2188 = vmatpush1.bf16.msra.mxu0 0
      %2189 = vmatprep.subr.bf16.mxu0 0
      %2190 = vmatpush1.bf16.msra.mxu0 0
      %2191 = vmatprep.subr.bf16.mxu0 0
      %2192 = vmatpush1.bf16.msra.mxu0 0
      %2193 = vmatprep.subr.bf16.mxu0 0
      %2194 = vmatpush1.bf16.msra.mxu0 0
      %2195 = vmatprep.subr.bf16.mxu0 0
      %2196 = vmatpush1.bf16.msra.mxu0 0
      %2197 = vmatprep.mubr.bf16.mxu0 0
      %2198 = vmatmul.mubr.bf16.gmra.mrb[0].mxu0 %v2163
      %v2199 = vpop.f32.mrb[0].mxu0
      %v2200 = vadd.f32 0.0, %v2199
      %v2201 = vpop.f32.mrb[0].mxu0
      %v2202 = vpop.f32.mrb[0].mxu0
      %v2203 = vadd.f32 0.0, %v2202
      %v2204 = vpop.f32.mrb[0].mxu0
      %2205 = vdwg.mxu0
      %v2206 = vshrl.u32 %v565, 16
      %v2208 = vshll.u32 %v565, 16
      %v2210 = vrot.slane %v2208, 1
      %v2211 = vor.u32 %v2206, %v2210
      %v2212 = vshll.u32 %v657, 16
      %v2214 = vrot.slane %v2212, 1
      %v2215 = vsel %vm250, %v2211, %v2214
      %v2217 = vsel %vm689, %v2215, 0
      %2219 = vmatprep.subr.bf16.mxu0 0
      %2220 = vmatpush1.bf16.msra.mxu0 %v1400
      %2221 = vmatprep.subr.bf16.mxu0 0
      %2222 = vmatpush1.bf16.msra.mxu0 %v1401
      %2223 = vmatprep.subr.bf16.mxu0 0
      %2224 = vmatpush1.bf16.msra.mxu0 %v1402
      %2225 = vmatprep.subr.bf16.mxu0 0
      %2226 = vmatpush1.bf16.msra.mxu0 0
      %2227 = vmatprep.subr.bf16.mxu0 0
      %2228 = vmatpush1.bf16.msra.mxu0 0
      %2229 = vmatprep.subr.bf16.mxu0 0
      %2230 = vmatpush1.bf16.msra.mxu0 0
      %2231 = vmatprep.subr.bf16.mxu0 0
      %2232 = vmatpush1.bf16.msra.mxu0 0
      %2233 = vmatprep.subr.bf16.mxu0 0
      %2234 = vmatpush1.bf16.msra.mxu0 0
      %2235 = vmatprep.subr.bf16.mxu0 0
      %2236 = vmatpush1.bf16.msra.mxu0 0
      %2237 = vmatprep.subr.bf16.mxu0 0
      %2238 = vmatpush1.bf16.msra.mxu0 0
      %2239 = vmatprep.subr.bf16.mxu0 0
      %2240 = vmatpush1.bf16.msra.mxu0 0
      %2241 = vmatprep.subr.bf16.mxu0 0
      %2242 = vmatpush1.bf16.msra.mxu0 0
      %2243 = vmatprep.subr.bf16.mxu0 0
      %2244 = vmatpush1.bf16.msra.mxu0 0
      %2245 = vmatprep.subr.bf16.mxu0 0
      %2246 = vmatpush1.bf16.msra.mxu0 0
      %2247 = vmatprep.subr.bf16.mxu0 0
      %2248 = vmatpush1.bf16.msra.mxu0 0
      %2249 = vmatprep.subr.bf16.mxu0 0
      %2250 = vmatpush1.bf16.msra.mxu0 0
      %2251 = vmatprep.mubr.bf16.mxu0 0
      %2252 = vmatmul.mubr.bf16.gmra.mrb[0].mxu0 %v2217
      %v2253 = vpop.f32.mrb[0].mxu0
      %v2254 = vadd.f32 0.0, %v2253
      %v2255 = vpop.f32.mrb[0].mxu0
      %v2256 = vpop.f32.mrb[0].mxu0
      %v2257 = vadd.f32 0.0, %v2256
      %v2258 = vpop.f32.mrb[0].mxu0
      %2259 = vdwg.mxu0
      %2292 = vrot.lane.b32.xlu0 %v1444, 8
      %v2293 = vpop.permute.xlu0 %2292
      %2294 = vrot.lane.b32.xlu0 %v1447, 8
      %v2295 = vpop.permute.xlu0 %2294
      %2296 = vrot.lane.b32.xlu0 %v1498, 8
      %v2297 = vpop.permute.xlu0 %2296
      %2298 = vrot.lane.b32.xlu0 %v1501, 8
      %v2299 = vpop.permute.xlu0 %2298
      %2300 = vrot.lane.b32.xlu0 %v1552, 8
      %v2301 = vpop.permute.xlu0 %2300
      %2302 = vrot.lane.b32.xlu0 %v1555, 8
      %v2303 = vpop.permute.xlu0 %2302
      %2304 = vrot.lane.b32.xlu0 %v1606, 8
      %v2305 = vpop.permute.xlu0 %2304
      %2306 = vrot.lane.b32.xlu0 %v1609, 8
      %v2307 = vpop.permute.xlu0 %2306
      %2308 = vrot.lane.b32.xlu0 %v1660, 8
      %v2309 = vpop.permute.xlu0 %2308
      %2310 = vrot.lane.b32.xlu0 %v1663, 8
      %v2311 = vpop.permute.xlu0 %2310
      %2312 = vrot.lane.b32.xlu0 %v1714, 8
      %v2313 = vpop.permute.xlu0 %2312
      %2314 = vrot.lane.b32.xlu0 %v1717, 8
      %v2315 = vpop.permute.xlu0 %2314
      %2316 = vrot.lane.b32.xlu0 %v1768, 8
      %v2317 = vpop.permute.xlu0 %2316
      %2318 = vrot.lane.b32.xlu0 %v1771, 8
      %v2319 = vpop.permute.xlu0 %2318
      %2320 = vrot.lane.b32.xlu0 %v1822, 8
      %v2321 = vpop.permute.xlu0 %2320
      %2322 = vrot.lane.b32.xlu0 %v1825, 8
      %v2323 = vpop.permute.xlu0 %2322
      %2324 = vrot.lane.b32.xlu0 %v1876, 8
      %v2325 = vpop.permute.xlu0 %2324
      %2326 = vrot.lane.b32.xlu0 %v1879, 8
      %v2327 = vpop.permute.xlu0 %2326
      %2328 = vrot.lane.b32.xlu0 %v1930, 8
      %v2329 = vpop.permute.xlu0 %2328
      %2330 = vrot.lane.b32.xlu0 %v1933, 8
      %v2331 = vpop.permute.xlu0 %2330
      %2332 = vrot.lane.b32.xlu0 %v1984, 8
      %v2333 = vpop.permute.xlu0 %2332
      %2334 = vrot.lane.b32.xlu0 %v1987, 8
      %v2335 = vpop.permute.xlu0 %2334
      %2336 = vrot.lane.b32.xlu0 %v2038, 8
      %v2337 = vpop.permute.xlu0 %2336
      %2338 = vrot.lane.b32.xlu0 %v2041, 8
      %v2339 = vpop.permute.xlu0 %2338
      %2340 = vrot.lane.b32.xlu0 %v2092, 8
      %v2341 = vpop.permute.xlu0 %2340
      %2342 = vrot.lane.b32.xlu0 %v2095, 8
      %v2343 = vpop.permute.xlu0 %2342
      %2344 = vrot.lane.b32.xlu0 %v2146, 8
      %v2345 = vpop.permute.xlu0 %2344
      %2346 = vrot.lane.b32.xlu0 %v2149, 8
      %v2347 = vpop.permute.xlu0 %2346
      %2348 = vrot.lane.b32.xlu0 %v2200, 8
      %v2349 = vpop.permute.xlu0 %2348
      %2350 = vrot.lane.b32.xlu0 %v2203, 8
      %v2351 = vpop.permute.xlu0 %2350
      %2352 = vrot.lane.b32.xlu0 %v2254, 8
      %v2353 = vpop.permute.xlu0 %2352
      %2354 = vrot.lane.b32.xlu0 %v2257, 8
      %v2355 = vpop.permute.xlu0 %2354
      %v2388 = vsel %vm431, %v727, %v2293
      %v2389 = vsel %vm431, %v730, %v2295
      %v2390 = vsel %vm431, %v770, %v2297
      %v2391 = vsel %vm431, %v773, %v2299
      %v2392 = vsel %vm431, %v813, %v2301
      %v2393 = vsel %vm431, %v816, %v2303
      %v2394 = vsel %vm431, %v856, %v2305
      %v2395 = vsel %vm431, %v859, %v2307
      %v2396 = vsel %vm431, %v899, %v2309
      %v2397 = vsel %vm431, %v902, %v2311
      %v2398 = vsel %vm431, %v942, %v2313
      %v2399 = vsel %vm431, %v945, %v2315
      %v2400 = vsel %vm431, %v985, %v2317
      %v2401 = vsel %vm431, %v988, %v2319
      %v2402 = vsel %vm431, %v1028, %v2321
      %v2403 = vsel %vm431, %v1031, %v2323
      %v2404 = vsel %vm431, %v1071, %v2325
      %v2405 = vsel %vm431, %v1074, %v2327
      %v2406 = vsel %vm431, %v1114, %v2329
      %v2407 = vsel %vm431, %v1117, %v2331
      %v2408 = vsel %vm431, %v1157, %v2333
      %v2409 = vsel %vm431, %v1160, %v2335
      %v2410 = vsel %vm431, %v1200, %v2337
      %v2411 = vsel %vm431, %v1203, %v2339
      %v2412 = vsel %vm431, %v1243, %v2341
      %v2413 = vsel %vm431, %v1246, %v2343
      %v2414 = vsel %vm431, %v1286, %v2345
      %v2415 = vsel %vm431, %v1289, %v2347
      %v2416 = vsel %vm431, %v1329, %v2349
      %v2417 = vsel %vm431, %v1332, %v2351
      %v2418 = vsel %vm431, %v1372, %v2353
      %v2419 = vsel %vm431, %v1375, %v2355
      %v2420 = vld [vmem:[%s2] sm:$0x1]
      %v2421 = vlaneseq
      %v2422 = vshrl.u32 %v2421, 7
      %v2423 = vsub.s32 0, %v2422
      %v2424 = vrot.slane %v2420, %v2423
      %v2425 = vmul.f32 %v2388, %v2424
      %v2426 = vmul.f32 %v2389, %v2424
      %v2427 = vmul.f32 %v2390, %v2424
      %v2428 = vmul.f32 %v2391, %v2424
      %v2429 = vmul.f32 %v2392, %v2424
      %v2430 = vmul.f32 %v2393, %v2424
      %v2431 = vmul.f32 %v2394, %v2424
      %v2432 = vmul.f32 %v2395, %v2424
      %v2433 = vmul.f32 %v2396, %v2424
      %v2434 = vmul.f32 %v2397, %v2424
      %v2435 = vmul.f32 %v2398, %v2424
      %v2436 = vmul.f32 %v2399, %v2424
      %v2437 = vmul.f32 %v2400, %v2424
      %v2438 = vmul.f32 %v2401, %v2424
      %v2439 = vmul.f32 %v2402, %v2424
      %v2440 = vmul.f32 %v2403, %v2424
      %v2441 = vmul.f32 %v2404, %v2424
      %v2442 = vmul.f32 %v2405, %v2424
      %v2443 = vmul.f32 %v2406, %v2424
      %v2444 = vmul.f32 %v2407, %v2424
      %v2445 = vmul.f32 %v2408, %v2424
      %v2446 = vmul.f32 %v2409, %v2424
      %v2447 = vmul.f32 %v2410, %v2424
      %v2448 = vmul.f32 %v2411, %v2424
      %v2449 = vmul.f32 %v2412, %v2424
      %v2450 = vmul.f32 %v2413, %v2424
      %v2451 = vmul.f32 %v2414, %v2424
      %v2452 = vmul.f32 %v2415, %v2424
      %v2453 = vmul.f32 %v2416, %v2424
      %v2454 = vmul.f32 %v2417, %v2424
      %v2455 = vmul.f32 %v2418, %v2424
      %v2456 = vmul.f32 %v2419, %v2424
      %v2457 = vld [vmem:[%s2 + $0x1] sm:$0x1]
      %v2458 = vlaneseq
      %v2459 = vshrl.u32 %v2458, 7
      %v2460 = vsub.s32 0, %v2459
      %v2461 = vrot.slane %v2457, %v2460
      %v2462 = vadd.f32 %v2425, %v2461
      %v2463 = vadd.f32 %v2426, %v2461
      %v2464 = vadd.f32 %v2427, %v2461
      %v2465 = vadd.f32 %v2428, %v2461
      %v2466 = vadd.f32 %v2429, %v2461
      %v2467 = vadd.f32 %v2430, %v2461
      %v2468 = vadd.f32 %v2431, %v2461
      %v2469 = vadd.f32 %v2432, %v2461
      %v2470 = vadd.f32 %v2433, %v2461
      %v2471 = vadd.f32 %v2434, %v2461
      %v2472 = vadd.f32 %v2435, %v2461
      %v2473 = vadd.f32 %v2436, %v2461
      %v2474 = vadd.f32 %v2437, %v2461
      %v2475 = vadd.f32 %v2438, %v2461
      %v2476 = vadd.f32 %v2439, %v2461
      %v2477 = vadd.f32 %v2440, %v2461
      %v2478 = vadd.f32 %v2441, %v2461
      %v2479 = vadd.f32 %v2442, %v2461
      %v2480 = vadd.f32 %v2443, %v2461
      %v2481 = vadd.f32 %v2444, %v2461
      %v2482 = vadd.f32 %v2445, %v2461
      %v2483 = vadd.f32 %v2446, %v2461
      %v2484 = vadd.f32 %v2447, %v2461
      %v2485 = vadd.f32 %v2448, %v2461
      %v2486 = vadd.f32 %v2449, %v2461
      %v2487 = vadd.f32 %v2450, %v2461
      %v2488 = vadd.f32 %v2451, %v2461
      %v2489 = vadd.f32 %v2452, %v2461
      %v2490 = vadd.f32 %v2453, %v2461
      %v2491 = vadd.f32 %v2454, %v2461
      %v2492 = vadd.f32 %v2455, %v2461
      %v2493 = vadd.f32 %v2456, %v2461
      %v2494 = vmax.f32 %v2462, 0.0
      %v2495 = vmax.f32 %v2463, 0.0
      %v2496 = vmax.f32 %v2464, 0.0
      %v2497 = vmax.f32 %v2465, 0.0
      %v2498 = vmax.f32 %v2466, 0.0
      %v2499 = vmax.f32 %v2467, 0.0
      %v2500 = vmax.f32 %v2468, 0.0
      %v2501 = vmax.f32 %v2469, 0.0
      %v2502 = vmax.f32 %v2470, 0.0
      %v2503 = vmax.f32 %v2471, 0.0
      %v2504 = vmax.f32 %v2472, 0.0
      %v2505 = vmax.f32 %v2473, 0.0
      %v2506 = vmax.f32 %v2474, 0.0
      %v2507 = vmax.f32 %v2475, 0.0
      %v2508 = vmax.f32 %v2476, 0.0
      %v2509 = vmax.f32 %v2477, 0.0
      %v2510 = vmax.f32 %v2478, 0.0
      %v2511 = vmax.f32 %v2479, 0.0
      %v2512 = vmax.f32 %v2480, 0.0
      %v2513 = vmax.f32 %v2481, 0.0
      %v2514 = vmax.f32 %v2482, 0.0
      %v2515 = vmax.f32 %v2483, 0.0
      %v2516 = vmax.f32 %v2484, 0.0
      %v2517 = vmax.f32 %v2485, 0.0
      %v2518 = vmax.f32 %v2486, 0.0
      %v2519 = vmax.f32 %v2487, 0.0
      %v2520 = vmax.f32 %v2488, 0.0
      %v2521 = vmax.f32 %v2489, 0.0
      %v2522 = vmax.f32 %v2490, 0.0
      %v2523 = vmax.f32 %v2491, 0.0
      %v2524 = vmax.f32 %v2492, 0.0
      %v2525 = vmax.f32 %v2493, 0.0
      %2526 = vst.msk [vmem:[%s194] sm:$0xff] %vm515, %v2494
      %2527 = vst.msk [vmem:[%s194 + $0x8] sm:$0xff] %vm515, %v2495
      %2528 = vst.msk [vmem:[%s194 + $0x10] sm:$0xff] %vm515, %v2496
      %2529 = vst.msk [vmem:[%s194 + $0x18] sm:$0xff] %vm515, %v2497
      %2530 = vst.msk [vmem:[%s194 + $0x20] sm:$0xff] %vm515, %v2498
      %2531 = vst.msk [vmem:[%s194 + $0x28] sm:$0xff] %vm515, %v2499
      %2532 = vst.msk [vmem:[%s194 + $0x30] sm:$0xff] %vm515, %v2500
      %2533 = vst.msk [vmem:[%s194 + $0x38] sm:$0xff] %vm515, %v2501
      %2534 = vst.msk [vmem:[%s194 + $0x40] sm:$0xff] %vm515, %v2502
      %2535 = vst.msk [vmem:[%s194 + $0x48] sm:$0xff] %vm515, %v2503
      %2536 = vst.msk [vmem:[%s194 + $0x50] sm:$0xff] %vm515, %v2504
      %2537 = vst.msk [vmem:[%s194 + $0x58] sm:$0xff] %vm515, %v2505
      %2538 = vst.msk [vmem:[%s194 + $0x60] sm:$0xff] %vm515, %v2506
      %2539 = vst.msk [vmem:[%s194 + $0x68] sm:$0xff] %vm515, %v2507
      %2540 = vst.msk [vmem:[%s194 + $0x70] sm:$0xff] %vm515, %v2508
      %2541 = vst.msk [vmem:[%s194 + $0x78] sm:$0xff] %vm515, %v2509
      %2542 = vst.msk [vmem:[%s194 + $0x80] sm:$0xff] %vm515, %v2510
      %2543 = vst.msk [vmem:[%s194 + $0x88] sm:$0xff] %vm515, %v2511
      %2544 = vst.msk [vmem:[%s194 + $0x90] sm:$0xff] %vm515, %v2512
      %2545 = vst.msk [vmem:[%s194 + $0x98] sm:$0xff] %vm515, %v2513
      %2546 = vst.msk [vmem:[%s194 + $0xa0] sm:$0xff] %vm515, %v2514
      %2547 = vst.msk [vmem:[%s194 + $0xa8] sm:$0xff] %vm515, %v2515
      %2548 = vst.msk [vmem:[%s194 + $0xb0] sm:$0xff] %vm515, %v2516
      %2549 = vst.msk [vmem:[%s194 + $0xb8] sm:$0xff] %vm515, %v2517
      %2550 = vst.msk [vmem:[%s194 + $0xc0] sm:$0xff] %vm515, %v2518
      %2551 = vst.msk [vmem:[%s194 + $0xc8] sm:$0xff] %vm515, %v2519
      %2552 = vst.msk [vmem:[%s194 + $0xd0] sm:$0xff] %vm515, %v2520
      %2553 = vst.msk [vmem:[%s194 + $0xd8] sm:$0xff] %vm515, %v2521
      %2554 = vst.msk [vmem:[%s194 + $0xe0] sm:$0xff] %vm515, %v2522
      %2555 = vst.msk [vmem:[%s194 + $0xe8] sm:$0xff] %vm515, %v2523
      %2556 = vst.msk [vmem:[%s194 + $0xf0] sm:$0xff] %vm515, %v2524
      %2557 = vst.msk [vmem:[%s194 + $0xf8] sm:$0xff] %vm515, %v2525
      %s2558 = smul.u32 16, %s19
      %p2559 = scmp.lt.s32.totalorder %s18, 1
      %s2560 = scalar_select %p2559, %s18, 1
      %p2561 = scmp.lt.s32.totalorder %s2558, 31
      %s2562 = scalar_select %p2561, %s2558, 31
      %s2563 = smul.addr %s2562, 2
      %s2564 = smul.addr %s2560, 64
      %s2565 = sadd.s32 %s2563, %s2564
      %s2566 = smul.addr %s2565, 8
      %s2567 = scalar_lea.vmem %s3, %s2566
      // Predicated region
      $region33: #{unet_forward.10} parent=31 // pred_check
        %p2568 = pneg %p114
      $region34: #{unet_forward.10} parent=31 // pred_check_branch
        %2570 = sbr.rel (%p2568) target = $region36
      $region35: #{unet_forward.10} parent=31 // pred_region
        %s2571 = smul.u32 16, %s19
      $region36: #{unet_forward.10} parent=31 // pred_fallthru
        _
    $region32: #{unet_forward.10} parent=5 // pred_fallthru
      _
    %p2572 = scmp.le.s32.totalorder 2, %s9
    // Predicated region
    $region37: #{unet_forward.10} parent=5 // pred_check
      %p2573 = pneg %p2572
    $region38: #{unet_forward.10} parent=5 // pred_check_branch
      %2575 = sbr.rel (%p2573) target = $region40
    $region39: #{unet_forward.10} parent=5 // pred_region
      %s2576 = ssub.s32 %s9, 2
      // Predicated region
      $region41: #{unet_forward.10} parent=39 // pred_check
        %p2577 = pneg %p120
      $region42: #{unet_forward.10} parent=39 // pred_check_branch
        %2579 = sbr.rel (%p2577) target = $region44
      $region43: #{unet_forward.10} parent=39 // pred_region
        %s2580 = smul.u32 16, %s21
        %p2581 = scmp.lt.s32.totalorder %s20, 1
        %s2582 = scalar_select %p2581, %s20, 1
        %p2583 = scmp.lt.s32.totalorder %s2580, 31
        %s2584 = scalar_select %p2583, %s2580, 31
        %s2585 = smul.addr %s2584, 2
        %s2586 = smul.addr %s2582, 64
        %s2587 = sadd.s32 %s2585, %s2586
        %s2588 = smul.addr %s2587, 8
        %s2589 = scalar_lea.vmem %s3, %s2588
      $region44: #{unet_forward.10} parent=39 // pred_fallthru
        _
    $region40: #{unet_forward.10} parent=5 // pred_fallthru
      _
  $region6: #{unet_forward.10} parent=0 // loop_footer
    %s13 = sadd.s32 1, %s9
  $region7: #{unet_forward.10} parent=0 // loop_footer_branch
    %8 = sbr.rel target = $region3
  $region8: #{unet_forward.10} parent=0 // loop_exit
    _

// kernel: unet_forward.11
$region0: #{unet_forward.11}
  #allocation0 [shape = 'u32[]', space=smem, size = 0x4, offset = 0x4, fixed_abs, tag = 'smem constant byte address 0x4 - core index']
  #allocation1 [shape = 'u32[144,128]{1,0:T(1,128)}', space=vmem, size = 0x12000, scoped, tag = 'internal scratch']
  %s0 = inlined_call_operand.vmem [shape: f32[2,34,34,8], index: 0, kind: input, shape index: {}]
  %s1 = inlined_call_operand.vmem [shape: bf16[2,48,8], index: 1, kind: input, shape index: {}]
  %s2 = inlined_call_operand.vmem [shape: f32[2,16], index: 2, kind: input, shape index: {}]
  %s3 = inlined_call_operand.vmem [shape: f32[2,64,32,16], index: 3, kind: output, shape index: {}]
  %s4 = sld [smem:[#allocation0]]
  $region45: #{unet_forward.11} parent=0
    _
  %s6 = ssub.s32 1, %s4
  %s7 = scalar_select 0, %s6, %s4
  loop: start=0, step=1, limit=10
  $region2: #{unet_forward.11} parent=0 // loop_pre_header
    _
  $region3: #{unet_forward.11} parent=0 // loop_header
    %s9 = sphi 0, %s13
    %p10 = scmp.ge.s32.totalorder %s9, 10
    %s16 = sphi 0, %s28
    %s17 = sphi 0, %s24
    %s18 = sphi 0, %s16
    %s19 = sphi 0, %s17
    %s20 = sphi 0, %s18
    %s21 = sphi 0, %s19
    %s31 = sphi 0, %s33
    %s34 = sphi 0, %s31
    %s35 = sphi 0, %s34
    %s51 = sphi 0, %s35
    %s55 = sphi 0, %s55
    %s57 = sphi 0, %s55
    %s58 = sphi 0, %s57
    %s72 = sphi 0, %s58
    %s76 = sphi 0, %s76
    %s78 = sphi 0, %s76
    %s79 = sphi 0, %s78
    %s93 = sphi 0, %s79
    %s101 = sphi 0, %s103
    %s104 = sphi 0, %s101
    %s105 = sphi 0, %s104
    %s121 = sphi 0, %s105
  $region4: #{unet_forward.11} parent=0 // loop_header_branch
    %12 = sbr.rel (%p10) target = $region8
  $region5: #{unet_forward.11} parent=0 // loop_body
    %s14 = ssub.s32 %s9, 1
    %s15 = ssub.s32 %s9, 2
    %s22 = sadd.s32 1, %s17
    %p23 = scmp.ge.s32.totalorder %s22, 4
    %s24 = scalar_select %p23, 0, %s22
    %s25 = sadd.s32 1, %s16
    %s26 = scalar_select %p23, %s25, %s16
    %p27 = scmp.ge.s32.totalorder %s26, 2
    %s28 = scalar_select %p27, 0, %s26
    %s29 = ssub.s32 %s16, %s28
    %p30 = scmp.eq.s32.totalorder %s29, 0
    %s32 = sadd.s32 %s31, 1
    %s33 = scalar_select %p30, %s31, %s32
    %p36 = pneg %p30
    %p37 = scmp.eq.s32.totalorder %s9, 7
    %p38 = por %p36, %p37
    %p39 = scmp.ne.s32.totalorder %s31, %s34
    %p40 = scmp.eq.s32.totalorder %s9, 0
    %p41 = por %p39, %p40
    %p42 = scmp.ne.s32.totalorder %s31, %s34
    %p43 = scmp.eq.s32.totalorder %s14, 7
    %p44 = por %p42, %p43
    %p45 = scmp.ne.s32.totalorder %s34, %s35
    %p46 = scmp.eq.s32.totalorder %s14, 0
    %p47 = por %p45, %p46
    %p48 = scmp.ne.s32.totalorder %s34, %s35
    %p49 = scmp.eq.s32.totalorder %s15, 7
    %p50 = por %p48, %p49
    %p52 = scmp.ne.s32.totalorder %s35, %s51
    %p53 = scmp.eq.s32.totalorder %s15, 0
    %p54 = por %p52, %p53
    %s56 = sadd.s32 %s55, 1
    %p59 = scmp.eq.s32.totalorder %s9, 7
    %p60 = scmp.ne.s32.totalorder %s55, %s57
    %p61 = scmp.eq.s32.totalorder %s9, 0
    %p62 = por %p60, %p61
    %p63 = scmp.ne.s32.totalorder %s55, %s57
    %p64 = scmp.eq.s32.totalorder %s14, 7
    %p65 = por %p63, %p64
    %p66 = scmp.ne.s32.totalorder %s57, %s58
    %p67 = scmp.eq.s32.totalorder %s14, 0
    %p68 = por %p66, %p67
    %p69 = scmp.ne.s32.totalorder %s57, %s58
    %p70 = scmp.eq.s32.totalorder %s15, 7
    %p71 = por %p69, %p70
    %p73 = scmp.ne.s32.totalorder %s58, %s72
    %p74 = scmp.eq.s32.totalorder %s15, 0
    %p75 = por %p73, %p74
    %s77 = sadd.s32 %s76, 1
    %p80 = scmp.eq.s32.totalorder %s9, 7
    %p81 = scmp.ne.s32.totalorder %s76, %s78
    %p82 = scmp.eq.s32.totalorder %s9, 0
    %p83 = por %p81, %p82
    %p84 = scmp.ne.s32.totalorder %s76, %s78
    %p85 = scmp.eq.s32.totalorder %s14, 7
    %p86 = por %p84, %p85
    %p87 = scmp.ne.s32.totalorder %s78, %s79
    %p88 = scmp.eq.s32.totalorder %s14, 0
    %p89 = por %p87, %p88
    %p90 = scmp.ne.s32.totalorder %s78, %s79
    %p91 = scmp.eq.s32.totalorder %s15, 7
    %p92 = por %p90, %p91
    %p94 = scmp.ne.s32.totalorder %s79, %s93
    %p95 = scmp.eq.s32.totalorder %s15, 0
    %p96 = por %p94, %p95
    %s97 = ssub.s32 %s16, %s28
    %s98 = ssub.s32 %s17, %s24
    %s99 = sor.u32 %s97, %s98
    %p100 = scmp.eq.s32.totalorder %s99, 0
    %s102 = sadd.s32 %s101, 1
    %s103 = scalar_select %p100, %s101, %s102
    %p106 = pneg %p100
    %p107 = scmp.eq.s32.totalorder %s9, 7
    %p108 = por %p106, %p107
    %p109 = scmp.ne.s32.totalorder %s101, %s104
    %p110 = scmp.eq.s32.totalorder %s9, 0
    %p111 = por %p109, %p110
    %p112 = scmp.ne.s32.totalorder %s101, %s104
    %p113 = scmp.eq.s32.totalorder %s14, 7
    %p114 = por %p112, %p113
    %p115 = scmp.ne.s32.totalorder %s104, %s105
    %p116 = scmp.eq.s32.totalorder %s14, 0
    %p117 = por %p115, %p116
    %p118 = scmp.ne.s32.totalorder %s104, %s105
    %p119 = scmp.eq.s32.totalorder %s15, 7
    %p120 = por %p118, %p119
    %p122 = scmp.ne.s32.totalorder %s105, %s121
    %p123 = scmp.eq.s32.totalorder %s15, 0
    %p124 = por %p122, %p123
    %p125 = scmp.le.s32.totalorder 1, %s9
    %p126 = scmp.lt.s32.totalorder %s9, 9
    %p127 = pnand %p125, %p126
    %p128 = pneg %p127
    // Predicated region
    $region9: #{unet_forward.11} parent=5 // pred_check
      _
    $region10: #{unet_forward.11} parent=5 // pred_check_branch
      %130 = sbr.rel (%p127) target = $region12
    $region11: #{unet_forward.11} parent=5 // pred_region
      %s131 = ssub.s32 %s9, 1
      // Predicated region
      $region13: #{unet_forward.11} parent=11 // pred_check
        %p132 = pneg %p68
      $region14: #{unet_forward.11} parent=11 // pred_check_branch
        %134 = sbr.rel (%p132) target = $region16
      $region15: #{unet_forward.11} parent=11 // pred_region
        _
      $region16: #{unet_forward.11} parent=11 // pred_fallthru
        _
      // Predicated region
      $region17: #{unet_forward.11} parent=11 // pred_check
        %p135 = pneg %p89
      $region18: #{unet_forward.11} parent=11 // pred_check_branch
        %137 = sbr.rel (%p135) target = $region20
      $region19: #{unet_forward.11} parent=11 // pred_region
        _
      $region20: #{unet_forward.11} parent=11 // pred_fallthru
        _
    $region12: #{unet_forward.11} parent=5 // pred_fallthru
      _
    %p138 = scmp.lt.s32.totalorder %s9, 8
    // Predicated region
    $region21: #{unet_forward.11} parent=5 // pred_check
      %p139 = pneg %p138
    $region22: #{unet_forward.11} parent=5 // pred_check_branch
      %141 = sbr.rel (%p139) target = $region24
    $region23: #{unet_forward.11} parent=5 // pred_region
      // Predicated region
      $region25: #{unet_forward.11} parent=23 // pred_check
        %p142 = pneg %p41
      $region26: #{unet_forward.11} parent=23 // pred_check_branch
        %144 = sbr.rel (%p142) target = $region28
      $region27: #{unet_forward.11} parent=23 // pred_region
        %p145 = scmp.lt.s32.totalorder %s16, 1
        %s146 = scalar_select %p145, %s16, 1
        %s147 = smul.addr %s146, 170
        %s148 = smul.addr %s147, 8
        %s149 = scalar_lea.vmem %s0, %s148
      $region28: #{unet_forward.11} parent=23 // pred_fallthru
        _
    $region24: #{unet_forward.11} parent=5 // pred_fallthru
      _
    %p150 = scmp.le.s32.totalorder 1, %s9
    %p151 = scmp.lt.s32.totalorder %s9, 9
    %p152 = pnand %p150, %p151
    %p153 = pneg %p152
    // Predicated region
    $region29: #{unet_forward.11} parent=5 // pred_check
      _
    $region30: #{unet_forward.11} parent=5 // pred_check_branch
      %155 = sbr.rel (%p152) target = $region32
    $region31: #{unet_forward.11} parent=5 // pred_region
      %s156 = ssub.s32 %s9, 1
      %p157 = scmp.lt.s32.totalorder %s18, 1
      %s158 = scalar_select %p157, %s18, 1
      %s159 = smul.addr %s158, 170
      %s160 = smul.addr %s159, 8
      %s161 = scalar_lea.vmem %s0, %s160
      %p162 = pneg %p47
      %p163 = pneg %p44
      %p164 = pneg %p68
      %p165 = pneg %p65
      %p166 = pneg %p89
      %p167 = pneg %p86
      %p168 = pneg %p117
      %p169 = pneg %p114
      %s170 = smul.u32 16, %s19
      %p171 = scmp.lt.s32.totalorder %s18, 1
      %s172 = scalar_select %p171, %s18, 1
      %p173 = scmp.lt.s32.totalorder %s170, 63
      %s174 = scalar_select %p173, %s170, 63
      %s175 = smul.addr %s174, 4
      %s176 = smul.addr %s172, 256
      %s177 = sadd.s32 %s175, %s176
      %s178 = smul.addr %s177, 8
      %s179 = scalar_lea.vmem %s3, %s178
      %p180 = scmp.lt.s32.totalorder %s18, 1
      %s181 = scalar_select %p180, %s18, 1
      %s182 = smul.addr %s181, 170
      %s183 = smul.addr %s182, 8
      %s184 = scalar_lea.vmem %s0, %s183
      %s185 = smul.u32 16, %s19
      %p186 = scmp.lt.s32.totalorder %s18, 1
      %s187 = scalar_select %p186, %s18, 1
      %p188 = scmp.lt.s32.totalorder %s185, 63
      %s189 = scalar_select %p188, %s185, 63
      %s190 = smul.addr %s189, 4
      %s191 = smul.addr %s187, 256
      %s192 = sadd.s32 %s190, %s191
      %s193 = smul.addr %s192, 8
      %s194 = scalar_lea.vmem %s3, %s193
      %s195 = smul.u32 16, %s19
      %s197 = smul.u32 %s19, 8
      %s198 = smul.u32 %s197, 40
      %s199 = scalar_lea.vmem %s184, %s198
      %v200 = vld [vmem:[%s199] sm:$0xff]
      %v201 = vld [vmem:[%s199 + $0x8] sm:$0xff]
      %v202 = vld [vmem:[%s199 + $0x10] sm:$0xff]
      %v203 = vld [vmem:[%s199 + $0x18] sm:$0xff]
      %v204 = vld [vmem:[%s199 + $0x20] sm:$0x3]
      %v205 = vld [vmem:[%s199 + $0x28] sm:$0xff]
      %v206 = vld [vmem:[%s199 + $0x30] sm:$0xff]
      %v207 = vld [vmem:[%s199 + $0x38] sm:$0xff]
      %v208 = vld [vmem:[%s199 + $0x40] sm:$0xff]
      %v209 = vld [vmem:[%s199 + $0x48] sm:$0x3]
      %v210 = vld [vmem:[%s199 + $0x50] sm:$0xff]
      %v211 = vld [vmem:[%s199 + $0x58] sm:$0xff]
      %v212 = vld [vmem:[%s199 + $0x60] sm:$0xff]
      %v213 = vld [vmem:[%s199 + $0x68] sm:$0xff]
      %v214 = vld [vmem:[%s199 + $0x70] sm:$0x3]
      %v215 = vld [vmem:[%s199 + $0x78] sm:$0xff]
      %v216 = vld [vmem:[%s199 + $0x80] sm:$0xff]
      %v217 = vld [vmem:[%s199 + $0x88] sm:$0xff]
      %v218 = vld [vmem:[%s199 + $0x90] sm:$0xff]
      %v219 = vld [vmem:[%s199 + $0x98] sm:$0x3]
      %v220 = vld [vmem:[%s199 + $0xa0] sm:$0xff]
      %v221 = vld [vmem:[%s199 + $0xa8] sm:$0xff]
      %v222 = vld [vmem:[%s199 + $0xb0] sm:$0xff]
      %v223 = vld [vmem:[%s199 + $0xb8] sm:$0xff]
      %v224 = vld [vmem:[%s199 + $0xc0] sm:$0x3]
      %v225 = vld [vmem:[%s199 + $0xc8] sm:$0xff]
      %v226 = vld [vmem:[%s199 + $0xd0] sm:$0xff]
      %v227 = vld [vmem:[%s199 + $0xd8] sm:$0xff]
      %v228 = vld [vmem:[%s199 + $0xe0] sm:$0xff]
      %v229 = vld [vmem:[%s199 + $0xe8] sm:$0x3]
      %v230 = vld [vmem:[%s199 + $0xf0] sm:$0xff]
      %v231 = vld [vmem:[%s199 + $0xf8] sm:$0xff]
      %v232 = vld [vmem:[%s199 + $0x100] sm:$0xff]
      %v233 = vld [vmem:[%s199 + $0x108] sm:$0xff]
      %v234 = vld [vmem:[%s199 + $0x110] sm:$0x3]
      %v235 = vld [vmem:[%s199 + $0x118] sm:$0xff]
      %v236 = vld [vmem:[%s199 + $0x120] sm:$0xff]
      %v237 = vld [vmem:[%s199 + $0x128] sm:$0xff]
      %v238 = vld [vmem:[%s199 + $0x130] sm:$0xff]
      %v239 = vld [vmem:[%s199 + $0x138] sm:$0x3]
      %v240 = vld [vmem:[%s199 + $0x140] sm:$0xff]
      %v241 = vld [vmem:[%s199 + $0x148] sm:$0xff]
      %v242 = vld [vmem:[%s199 + $0x150] sm:$0xff]
      %v243 = vld [vmem:[%s199 + $0x158] sm:$0xff]
      %v244 = vld [vmem:[%s199 + $0x160] sm:$0x3]
      %v245 = vld [vmem:[%s199 + $0x168] sm:$0xff]
      %v246 = vld [vmem:[%s199 + $0x170] sm:$0xff]
      %v247 = vld [vmem:[%s199 + $0x178] sm:$0xff]
      %v248 = vld [vmem:[%s199 + $0x180] sm:$0xff]
      %v249 = vld [vmem:[%s199 + $0x188] sm:$0x3]
      %v250 = vpack.c.bf16 %v201, %v200
      %v251 = vpack.c.bf16 %v203, %v202
      %v252 = vpack.c.bf16 %v204, %v204
      %v253 = vpack.c.bf16 %v206, %v205
      %v254 = vpack.c.bf16 %v208, %v207
      %v255 = vpack.c.bf16 %v209, %v209
      %v256 = vpack.c.bf16 %v211, %v210
      %v257 = vpack.c.bf16 %v213, %v212
      %v258 = vpack.c.bf16 %v214, %v214
      %v259 = vpack.c.bf16 %v216, %v215
      %v260 = vpack.c.bf16 %v218, %v217
      %v261 = vpack.c.bf16 %v219, %v219
      %v262 = vpack.c.bf16 %v221, %v220
      %v263 = vpack.c.bf16 %v223, %v222
      %v264 = vpack.c.bf16 %v224, %v224
      %v265 = vpack.c.bf16 %v226, %v225
      %v266 = vpack.c.bf16 %v228, %v227
      %v267 = vpack.c.bf16 %v229, %v229
      %v268 = vpack.c.bf16 %v231, %v230
      %v269 = vpack.c.bf16 %v233, %v232
      %v270 = vpack.c.bf16 %v234, %v234
      %v271 = vpack.c.bf16 %v236, %v235
      %v272 = vpack.c.bf16 %v238, %v237
      %v273 = vpack.c.bf16 %v239, %v239
      %v274 = vpack.c.bf16 %v241, %v240
      %v275 = vpack.c.bf16 %v243, %v242
      %v276 = vpack.c.bf16 %v244, %v244
      %v277 = vpack.c.bf16 %v246, %v245
      %v278 = vpack.c.bf16 %v248, %v247
      %v279 = vpack.c.bf16 %v249, %v249
      %vm280 = vsmask.f32 7424
      %v282 = vshrl.u32 %v250, 16
      %v284 = vshll.u32 %v250, 16
      %v286 = vrot.slane %v284, 1
      %v287 = vor.u32 %v282, %v286
      %v289 = vshll.u32 %v251, 16
      %v291 = vrot.slane %v289, 1
      %v292 = vsel %vm280, %v287, %v291
      %v293 = vshrl.u32 %v251, 16
      %v295 = vor.u32 %v293, %v291
      %v297 = vshll.u32 %v252, 16
      %v299 = vrot.slane %v297, 1
      %v300 = vsel %vm280, %v295, %v299
      %v301 = vshrl.u32 %v252, 16
      %v304 = vshrl.u32 %v253, 16
      %v306 = vshll.u32 %v253, 16
      %v308 = vrot.slane %v306, 1
      %v309 = vor.u32 %v304, %v308
      %v311 = vshll.u32 %v254, 16
      %v313 = vrot.slane %v311, 1
      %v314 = vsel %vm280, %v309, %v313
      %v315 = vshrl.u32 %v254, 16
      %v317 = vor.u32 %v315, %v313
      %v319 = vshll.u32 %v255, 16
      %v321 = vrot.slane %v319, 1
      %v322 = vsel %vm280, %v317, %v321
      %v323 = vshrl.u32 %v255, 16
      %v326 = vshrl.u32 %v256, 16
      %v328 = vshll.u32 %v256, 16
      %v330 = vrot.slane %v328, 1
      %v331 = vor.u32 %v326, %v330
      %v333 = vshll.u32 %v257, 16
      %v335 = vrot.slane %v333, 1
      %v336 = vsel %vm280, %v331, %v335
      %v337 = vshrl.u32 %v257, 16
      %v339 = vor.u32 %v337, %v335
      %v341 = vshll.u32 %v258, 16
      %v343 = vrot.slane %v341, 1
      %v344 = vsel %vm280, %v339, %v343
      %v345 = vshrl.u32 %v258, 16
      %v348 = vshrl.u32 %v259, 16
      %v350 = vshll.u32 %v259, 16
      %v352 = vrot.slane %v350, 1
      %v353 = vor.u32 %v348, %v352
      %v355 = vshll.u32 %v260, 16
      %v357 = vrot.slane %v355, 1
      %v358 = vsel %vm280, %v353, %v357
      %v359 = vshrl.u32 %v260, 16
      %v361 = vor.u32 %v359, %v357
      %v363 = vshll.u32 %v261, 16
      %v365 = vrot.slane %v363, 1
      %v366 = vsel %vm280, %v361, %v365
      %v367 = vshrl.u32 %v261, 16
      %v370 = vshrl.u32 %v262, 16
      %v372 = vshll.u32 %v262, 16
      %v374 = vrot.slane %v372, 1
      %v375 = vor.u32 %v370, %v374
      %v377 = vshll.u32 %v263, 16
      %v379 = vrot.slane %v377, 1
      %v380 = vsel %vm280, %v375, %v379
      %v381 = vshrl.u32 %v263, 16
      %v383 = vor.u32 %v381, %v379
      %v385 = vshll.u32 %v264, 16
      %v387 = vrot.slane %v385, 1
      %v388 = vsel %vm280, %v383, %v387
      %v389 = vshrl.u32 %v264, 16
      %v392 = vshrl.u32 %v265, 16
      %v394 = vshll.u32 %v265, 16
      %v396 = vrot.slane %v394, 1
      %v397 = vor.u32 %v392, %v396
      %v399 = vshll.u32 %v266, 16
      %v401 = vrot.slane %v399, 1
      %v402 = vsel %vm280, %v397, %v401
      %v403 = vshrl.u32 %v266, 16
      %v405 = vor.u32 %v403, %v401
      %v407 = vshll.u32 %v267, 16
      %v409 = vrot.slane %v407, 1
      %v410 = vsel %vm280, %v405, %v409
      %v411 = vshrl.u32 %v267, 16
      %v414 = vshrl.u32 %v268, 16
      %v416 = vshll.u32 %v268, 16
      %v418 = vrot.slane %v416, 1
      %v419 = vor.u32 %v414, %v418
      %v421 = vshll.u32 %v269, 16
      %v423 = vrot.slane %v421, 1
      %v424 = vsel %vm280, %v419, %v423
      %v425 = vshrl.u32 %v269, 16
      %v427 = vor.u32 %v425, %v423
      %v429 = vshll.u32 %v270, 16
      %v431 = vrot.slane %v429, 1
      %v432 = vsel %vm280, %v427, %v431
      %v433 = vshrl.u32 %v270, 16
      %v436 = vshrl.u32 %v271, 16
      %v438 = vshll.u32 %v271, 16
      %v440 = vrot.slane %v438, 1
      %v441 = vor.u32 %v436, %v440
      %v443 = vshll.u32 %v272, 16
      %v445 = vrot.slane %v443, 1
      %v446 = vsel %vm280, %v441, %v445
      %v447 = vshrl.u32 %v272, 16
      %v449 = vor.u32 %v447, %v445
      %v451 = vshll.u32 %v273, 16
      %v453 = vrot.slane %v451, 1
      %v454 = vsel %vm280, %v449, %v453
      %v455 = vshrl.u32 %v273, 16
      %v458 = vshrl.u32 %v274, 16
      %v460 = vshll.u32 %v274, 16
      %v462 = vrot.slane %v460, 1
      %v463 = vor.u32 %v458, %v462
      %v465 = vshll.u32 %v275, 16
      %v467 = vrot.slane %v465, 1
      %v468 = vsel %vm280, %v463, %v467
      %v469 = vshrl.u32 %v275, 16
      %v471 = vor.u32 %v469, %v467
      %v473 = vshll.u32 %v276, 16
      %v475 = vrot.slane %v473, 1
      %v476 = vsel %vm280, %v471, %v475
      %v477 = vshrl.u32 %v276, 16
      %v480 = vshrl.u32 %v277, 16
      %v482 = vshll.u32 %v277, 16
      %v484 = vrot.slane %v482, 1
      %v485 = vor.u32 %v480, %v484
      %v487 = vshll.u32 %v278, 16
      %v489 = vrot.slane %v487, 1
      %v490 = vsel %vm280, %v485, %v489
      %v491 = vshrl.u32 %v278, 16
      %v493 = vor.u32 %v491, %v489
      %v495 = vshll.u32 %v279, 16
      %v497 = vrot.slane %v495, 1
      %v498 = vsel %vm280, %v493, %v497
      %v499 = vshrl.u32 %v279, 16
      %501 = vrot.lane.b32.xlu0 %v292, 8
      %v502 = vpop.permute.xlu0 %501
      %503 = vrot.lane.b32.xlu0 %v300, 8
      %v504 = vpop.permute.xlu0 %503
      %505 = vrot.lane.b32.xlu0 %v301, 8
      %v506 = vpop.permute.xlu0 %505
      %507 = vrot.lane.b32.xlu0 %v314, 8
      %v508 = vpop.permute.xlu0 %507
      %509 = vrot.lane.b32.xlu0 %v322, 8
      %v510 = vpop.permute.xlu0 %509
      %511 = vrot.lane.b32.xlu0 %v323, 8
      %v512 = vpop.permute.xlu0 %511
      %513 = vrot.lane.b32.xlu0 %v336, 8
      %v514 = vpop.permute.xlu0 %513
      %515 = vrot.lane.b32.xlu0 %v344, 8
      %v516 = vpop.permute.xlu0 %515
      %517 = vrot.lane.b32.xlu0 %v345, 8
      %v518 = vpop.permute.xlu0 %517
      %519 = vrot.lane.b32.xlu0 %v358, 8
      %v520 = vpop.permute.xlu0 %519
      %521 = vrot.lane.b32.xlu0 %v366, 8
      %v522 = vpop.permute.xlu0 %521
      %523 = vrot.lane.b32.xlu0 %v367, 8
      %v524 = vpop.permute.xlu0 %523
      %525 = vrot.lane.b32.xlu0 %v380, 8
      %v526 = vpop.permute.xlu0 %525
      %527 = vrot.lane.b32.xlu0 %v388, 8
      %v528 = vpop.permute.xlu0 %527
      %529 = vrot.lane.b32.xlu0 %v389, 8
      %v530 = vpop.permute.xlu0 %529
      %531 = vrot.lane.b32.xlu0 %v402, 8
      %v532 = vpop.permute.xlu0 %531
      %533 = vrot.lane.b32.xlu0 %v410, 8
      %v534 = vpop.permute.xlu0 %533
      %535 = vrot.lane.b32.xlu0 %v411, 8
      %v536 = vpop.permute.xlu0 %535
      %537 = vrot.lane.b32.xlu0 %v424, 8
      %v538 = vpop.permute.xlu0 %537
      %539 = vrot.lane.b32.xlu0 %v432, 8
      %v540 = vpop.permute.xlu0 %539
      %541 = vrot.lane.b32.xlu0 %v433, 8
      %v542 = vpop.permute.xlu0 %541
      %543 = vrot.lane.b32.xlu0 %v446, 8
      %v544 = vpop.permute.xlu0 %543
      %545 = vrot.lane.b32.xlu0 %v454, 8
      %v546 = vpop.permute.xlu0 %545
      %547 = vrot.lane.b32.xlu0 %v455, 8
      %v548 = vpop.permute.xlu0 %547
      %549 = vrot.lane.b32.xlu0 %v468, 8
      %v550 = vpop.permute.xlu0 %549
      %551 = vrot.lane.b32.xlu0 %v476, 8
      %v552 = vpop.permute.xlu0 %551
      %553 = vrot.lane.b32.xlu0 %v477, 8
      %v554 = vpop.permute.xlu0 %553
      %555 = vrot.lane.b32.xlu0 %v490, 8
      %v556 = vpop.permute.xlu0 %555
      %557 = vrot.lane.b32.xlu0 %v498, 8
      %v558 = vpop.permute.xlu0 %557
      %559 = vrot.lane.b32.xlu0 %v499, 8
      %v560 = vpop.permute.xlu0 %559
      %vm561 = vcmask 64512
      %v563 = vsel %vm561, %v250, %v502
      %v565 = vsel %vm561, %v251, %v504
      %v567 = vsel %vm561, %v252, %v506
      %v569 = vsel %vm561, %v253, %v508
      %v571 = vsel %vm561, %v254, %v510
      %v573 = vsel %vm561, %v255, %v512
      %v575 = vsel %vm561, %v256, %v514
      %v577 = vsel %vm561, %v257, %v516
      %v579 = vsel %vm561, %v258, %v518
      %v581 = vsel %vm561, %v259, %v520
      %v583 = vsel %vm561, %v260, %v522
      %v585 = vsel %vm561, %v261, %v524
      %v587 = vsel %vm561, %v262, %v526
      %v589 = vsel %vm561, %v263, %v528
      %v591 = vsel %vm561, %v264, %v530
      %v593 = vsel %vm561, %v265, %v532
      %v595 = vsel %vm561, %v266, %v534
      %v597 = vsel %vm561, %v267, %v536
      %v599 = vsel %vm561, %v268, %v538
      %v601 = vsel %vm561, %v269, %v540
      %v603 = vsel %vm561, %v270, %v542
      %v605 = vsel %vm561, %v271, %v544
      %v607 = vsel %vm561, %v272, %v546
      %v609 = vsel %vm561, %v273, %v548
      %v611 = vsel %vm561, %v274, %v550
      %v613 = vsel %vm561, %v275, %v552
      %v615 = vsel %vm561, %v276, %v554
      %v617 = vsel %vm561, %v277, %v556
      %v619 = vsel %vm561, %v278, %v558
      %v621 = vsel %vm561, %v279, %v560
      %638 = vrot.lane.b32.xlu0 %v569, 16
      %v639 = vpop.permute.xlu0 %638
      %640 = vrot.lane.b32.xlu0 %v571, 16
      %v641 = vpop.permute.xlu0 %640
      %642 = vrot.lane.b32.xlu0 %v575, 16
      %v643 = vpop.permute.xlu0 %642
      %644 = vrot.lane.b32.xlu0 %v577, 16
      %v645 = vpop.permute.xlu0 %644
      %646 = vrot.lane.b32.xlu0 %v581, 16
      %v647 = vpop.permute.xlu0 %646
      %648 = vrot.lane.b32.xlu0 %v583, 16
      %v649 = vpop.permute.xlu0 %648
      %650 = vrot.lane.b32.xlu0 %v587, 16
      %v651 = vpop.permute.xlu0 %650
      %652 = vrot.lane.b32.xlu0 %v589, 16
      %v653 = vpop.permute.xlu0 %652
      %654 = vrot.lane.b32.xlu0 %v593, 16
      %v655 = vpop.permute.xlu0 %654
      %656 = vrot.lane.b32.xlu0 %v595, 16
      %v657 = vpop.permute.xlu0 %656
      %658 = vrot.lane.b32.xlu0 %v599, 16
      %v659 = vpop.permute.xlu0 %658
      %660 = vrot.lane.b32.xlu0 %v601, 16
      %v661 = vpop.permute.xlu0 %660
      %662 = vrot.lane.b32.xlu0 %v605, 16
      %v663 = vpop.permute.xlu0 %662
      %664 = vrot.lane.b32.xlu0 %v607, 16
      %v665 = vpop.permute.xlu0 %664
      %666 = vrot.lane.b32.xlu0 %v611, 16
      %v667 = vpop.permute.xlu0 %666
      %668 = vrot.lane.b32.xlu0 %v613, 16
      %v669 = vpop.permute.xlu0 %668
      %672 = vrot.lane.b32.xlu0 %v569, 32
      %v673 = vpop.permute.xlu0 %672
      %674 = vrot.lane.b32.xlu0 %v571, 32
      %v675 = vpop.permute.xlu0 %674
      %676 = vrot.lane.b32.xlu0 %v575, 32
      %v677 = vpop.permute.xlu0 %676
      %678 = vrot.lane.b32.xlu0 %v577, 32
      %v679 = vpop.permute.xlu0 %678
      %680 = vrot.lane.b32.xlu0 %v581, 32
      %v681 = vpop.permute.xlu0 %680
      %682 = vrot.lane.b32.xlu0 %v583, 32
      %v683 = vpop.permute.xlu0 %682
      %684 = vrot.lane.b32.xlu0 %v587, 32
      %v685 = vpop.permute.xlu0 %684
      %686 = vrot.lane.b32.xlu0 %v589, 32
      %v687 = vpop.permute.xlu0 %686
      %688 = vrot.lane.b32.xlu0 %v593, 32
      %v689 = vpop.permute.xlu0 %688
      %690 = vrot.lane.b32.xlu0 %v595, 32
      %v691 = vpop.permute.xlu0 %690
      %692 = vrot.lane.b32.xlu0 %v599, 32
      %v693 = vpop.permute.xlu0 %692
      %694 = vrot.lane.b32.xlu0 %v601, 32
      %v695 = vpop.permute.xlu0 %694
      %696 = vrot.lane.b32.xlu0 %v605, 32
      %v697 = vpop.permute.xlu0 %696
      %698 = vrot.lane.b32.xlu0 %v607, 32
      %v699 = vpop.permute.xlu0 %698
      %700 = vrot.lane.b32.xlu0 %v611, 32
      %v701 = vpop.permute.xlu0 %700
      %702 = vrot.lane.b32.xlu0 %v613, 32
      %v703 = vpop.permute.xlu0 %702
      %704 = vrot.lane.b32.xlu0 %v617, 32
      %v705 = vpop.permute.xlu0 %704
      %706 = vrot.lane.b32.xlu0 %v619, 32
      %v707 = vpop.permute.xlu0 %706
      %vm708 = vcmask 130048
      %v710 = vsel %vm708, %v563, %v639
      %v712 = vsel %vm708, %v565, %v641
      %v713 = vsel %vm708, %v569, %v639
      %v714 = vsel %vm708, %v571, %v641
      %v716 = vsel %vm708, %v569, %v643
      %v718 = vsel %vm708, %v571, %v645
      %v719 = vsel %vm708, %v575, %v643
      %v720 = vsel %vm708, %v577, %v645
      %v722 = vsel %vm708, %v575, %v647
      %v724 = vsel %vm708, %v577, %v649
      %v725 = vsel %vm708, %v581, %v647
      %v726 = vsel %vm708, %v583, %v649
      %v728 = vsel %vm708, %v581, %v651
      %v730 = vsel %vm708, %v583, %v653
      %v731 = vsel %vm708, %v587, %v651
      %v732 = vsel %vm708, %v589, %v653
      %v734 = vsel %vm708, %v587, %v655
      %v736 = vsel %vm708, %v589, %v657
      %v737 = vsel %vm708, %v593, %v655
      %v738 = vsel %vm708, %v595, %v657
      %v740 = vsel %vm708, %v593, %v659
      %v742 = vsel %vm708, %v595, %v661
      %v743 = vsel %vm708, %v599, %v659
      %v744 = vsel %vm708, %v601, %v661
      %v746 = vsel %vm708, %v599, %v663
      %v748 = vsel %vm708, %v601, %v665
      %v749 = vsel %vm708, %v605, %v663
      %v750 = vsel %vm708, %v607, %v665
      %v752 = vsel %vm708, %v605, %v667
      %v754 = vsel %vm708, %v607, %v669
      %v755 = vsel %vm708, %v611, %v667
      %v756 = vsel %vm708, %v613, %v669
      %vm757 = vcmask 261120
      %v759 = vsel %vm757, %v710, %v673
      %v761 = vsel %vm757, %v712, %v675
      %v763 = vsel %vm757, %v713, %v677
      %v765 = vsel %vm757, %v714, %v679
      %v766 = vsel %vm757, %v716, %v677
      %v767 = vsel %vm757, %v718, %v679
      %v769 = vsel %vm757, %v719, %v681
      %v771 = vsel %vm757, %v720, %v683
      %v772 = vsel %vm757, %v722, %v681
      %v773 = vsel %vm757, %v724, %v683
      %v775 = vsel %vm757, %v725, %v685
      %v777 = vsel %vm757, %v726, %v687
      %v778 = vsel %vm757, %v728, %v685
      %v779 = vsel %vm757, %v730, %v687
      %v781 = vsel %vm757, %v731, %v689
      %v783 = vsel %vm757, %v732, %v691
      %v784 = vsel %vm757, %v734, %v689
      %v785 = vsel %vm757, %v736, %v691
      %v787 = vsel %vm757, %v737, %v693
      %v789 = vsel %vm757, %v738, %v695
      %v790 = vsel %vm757, %v740, %v693
      %v791 = vsel %vm757, %v742, %v695
      %v793 = vsel %vm757, %v743, %v697
      %v795 = vsel %vm757, %v744, %v699
      %v796 = vsel %vm757, %v746, %v697
      %v797 = vsel %vm757, %v748, %v699
      %v799 = vsel %vm757, %v749, %v701
      %v801 = vsel %vm757, %v750, %v703
      %v802 = vsel %vm757, %v752, %v701
      %v803 = vsel %vm757, %v754, %v703
      %v805 = vsel %vm757, %v755, %v705
      %v807 = vsel %vm757, %v756, %v707
      %816 = vrot.lane.b32.xlu0 %v573, 16
      %v817 = vpop.permute.xlu0 %816
      %818 = vrot.lane.b32.xlu0 %v579, 16
      %v819 = vpop.permute.xlu0 %818
      %820 = vrot.lane.b32.xlu0 %v585, 16
      %v821 = vpop.permute.xlu0 %820
      %822 = vrot.lane.b32.xlu0 %v591, 16
      %v823 = vpop.permute.xlu0 %822
      %824 = vrot.lane.b32.xlu0 %v597, 16
      %v825 = vpop.permute.xlu0 %824
      %826 = vrot.lane.b32.xlu0 %v603, 16
      %v827 = vpop.permute.xlu0 %826
      %828 = vrot.lane.b32.xlu0 %v609, 16
      %v829 = vpop.permute.xlu0 %828
      %830 = vrot.lane.b32.xlu0 %v615, 16
      %v831 = vpop.permute.xlu0 %830
      %833 = vrot.lane.b32.xlu0 %v573, 32
      %v834 = vpop.permute.xlu0 %833
      %835 = vrot.lane.b32.xlu0 %v579, 32
      %v836 = vpop.permute.xlu0 %835
      %837 = vrot.lane.b32.xlu0 %v585, 32
      %v838 = vpop.permute.xlu0 %837
      %839 = vrot.lane.b32.xlu0 %v591, 32
      %v840 = vpop.permute.xlu0 %839
      %841 = vrot.lane.b32.xlu0 %v597, 32
      %v842 = vpop.permute.xlu0 %841
      %843 = vrot.lane.b32.xlu0 %v603, 32
      %v844 = vpop.permute.xlu0 %843
      %845 = vrot.lane.b32.xlu0 %v609, 32
      %v846 = vpop.permute.xlu0 %845
      %847 = vrot.lane.b32.xlu0 %v615, 32
      %v848 = vpop.permute.xlu0 %847
      %849 = vrot.lane.b32.xlu0 %v621, 32
      %v850 = vpop.permute.xlu0 %849
      %v852 = vsel %vm708, %v567, %v817
      %v853 = vsel %vm708, %v573, %v817
      %v855 = vsel %vm708, %v573, %v819
      %v856 = vsel %vm708, %v579, %v819
      %v858 = vsel %vm708, %v579, %v821
      %v859 = vsel %vm708, %v585, %v821
      %v861 = vsel %vm708, %v585, %v823
      %v862 = vsel %vm708, %v591, %v823
      %v864 = vsel %vm708, %v591, %v825
      %v865 = vsel %vm708, %v597, %v825
      %v867 = vsel %vm708, %v597, %v827
      %v868 = vsel %vm708, %v603, %v827
      %v870 = vsel %vm708, %v603, %v829
      %v871 = vsel %vm708, %v609, %v829
      %v873 = vsel %vm708, %v609, %v831
      %v874 = vsel %vm708, %v615, %v831
      %v876 = vsel %vm757, %v852, %v834
      %v878 = vsel %vm757, %v853, %v836
      %v879 = vsel %vm757, %v855, %v836
      %v881 = vsel %vm757, %v856, %v838
      %v882 = vsel %vm757, %v858, %v838
      %v884 = vsel %vm757, %v859, %v840
      %v885 = vsel %vm757, %v861, %v840
      %v887 = vsel %vm757, %v862, %v842
      %v888 = vsel %vm757, %v864, %v842
      %v890 = vsel %vm757, %v865, %v844
      %v891 = vsel %vm757, %v867, %v844
      %v893 = vsel %vm757, %v868, %v846
      %v894 = vsel %vm757, %v870, %v846
      %v896 = vsel %vm757, %v871, %v848
      %v897 = vsel %vm757, %v873, %v848
      %v899 = vsel %vm757, %v874, %v850
      %v900 = vld [vmem:[%s1] sm:$0xf]
      %v901 = vld [vmem:[%s1 + $0x4] sm:$0xf]
      %v902 = vld [vmem:[%s1 + $0x8] sm:$0xf]
      %v903 = vld [vmem:[%s1 + $0xc] sm:$0xf]
      %v904 = vld [vmem:[%s1 + $0x10] sm:$0xf]
      %v905 = vld [vmem:[%s1 + $0x14] sm:$0xf]
      %s906 = scalar_lea.vmem %s1, 24
      %v907 = vld [vmem:[%s906] sm:$0xf]
      %v908 = vld [vmem:[%s906 + $0x4] sm:$0xf]
      %v909 = vld [vmem:[%s906 + $0x8] sm:$0xf]
      %v910 = vld [vmem:[%s906 + $0xc] sm:$0xf]
      %v911 = vld [vmem:[%s906 + $0x10] sm:$0xf]
      %v912 = vld [vmem:[%s906 + $0x14] sm:$0xf]
      %v919 = vunpack.c.l.b16 %v900
      %v920 = vunpack.c.l.b16 %v901
      %v921 = vunpack.c.l.b16 %v902
      %v922 = vunpack.c.l.b16 %v903
      %v923 = vunpack.c.l.b16 %v904
      %v924 = vunpack.c.l.b16 %v905
      %v925 = vpack.c.b16 %v920, %v919
      %v926 = vpack.c.b16 %v922, %v921
      %v927 = vpack.c.b16 %v924, %v923
      %vm931 = vcmask 392192
      %v932 = vsel %vm931, %v759, 0
      %v934 = vsel %vm931, %v761, 0
      %936 = vmatprep.subr.bf16.mxu0 0
      %937 = vmatpush1.bf16.msra.mxu0 %v925
      %938 = vmatprep.subr.bf16.mxu0 0
      %939 = vmatpush1.bf16.msra.mxu0 %v926
      %940 = vmatprep.subr.bf16.mxu0 0
      %941 = vmatpush1.bf16.msra.mxu0 %v927
      %942 = vmatprep.subr.bf16.mxu0 0
      %943 = vmatpush1.bf16.msra.mxu0 0
      %944 = vmatprep.subr.bf16.mxu0 0
      %945 = vmatpush1.bf16.msra.mxu0 0
      %946 = vmatprep.subr.bf16.mxu0 0
      %947 = vmatpush1.bf16.msra.mxu0 0
      %948 = vmatprep.subr.bf16.mxu0 0
      %949 = vmatpush1.bf16.msra.mxu0 0
      %950 = vmatprep.subr.bf16.mxu0 0
      %951 = vmatpush1.bf16.msra.mxu0 0
      %952 = vmatprep.subr.bf16.mxu0 0
      %953 = vmatpush1.bf16.msra.mxu0 0
      %954 = vmatprep.subr.bf16.mxu0 0
      %955 = vmatpush1.bf16.msra.mxu0 0
      %956 = vmatprep.subr.bf16.mxu0 0
      %957 = vmatpush1.bf16.msra.mxu0 0
      %958 = vmatprep.subr.bf16.mxu0 0
      %959 = vmatpush1.bf16.msra.mxu0 0
      %960 = vmatprep.subr.bf16.mxu0 0
      %961 = vmatpush1.bf16.msra.mxu0 0
      %962 = vmatprep.subr.bf16.mxu0 0
      %963 = vmatpush1.bf16.msra.mxu0 0
      %964 = vmatprep.subr.bf16.mxu0 0
      %965 = vmatpush1.bf16.msra.mxu0 0
      %966 = vmatprep.subr.bf16.mxu0 0
      %967 = vmatpush1.bf16.msra.mxu0 0
      %968 = vmatprep.mubr.bf16.mxu0 0
      %969 = vmatmul.mubr.bf16.gmra.mrb[0].mxu0 %v932
      %v970 = vpop.f32.mrb[0].mxu0
      %v971 = vadd.f32 0.0, %v970
      %v972 = vpop.f32.mrb[0].mxu0
      %v973 = vpop.f32.mrb[0].mxu0
      %v974 = vadd.f32 0.0, %v973
      %v975 = vpop.f32.mrb[0].mxu0
      %976 = vmatprep.mubr.bf16.mxu0 0
      %977 = vmatmul.mubr.bf16.gmra.mrb[0].mxu0 %v934
      %v978 = vpop.f32.mrb[0].mxu0
      %v979 = vadd.f32 0.0, %v978
      %v980 = vpop.f32.mrb[0].mxu0
      %v981 = vpop.f32.mrb[0].mxu0
      %v982 = vadd.f32 0.0, %v981
      %v983 = vpop.f32.mrb[0].mxu0
      %984 = vdwg.mxu0
      %v985 = vsel %vm931, %v763, 0
      %v987 = vsel %vm931, %v765, 0
      %989 = vmatprep.subr.bf16.mxu0 0
      %990 = vmatpush1.bf16.msra.mxu0 %v925
      %991 = vmatprep.subr.bf16.mxu0 0
      %992 = vmatpush1.bf16.msra.mxu0 %v926
      %993 = vmatprep.subr.bf16.mxu0 0
      %994 = vmatpush1.bf16.msra.mxu0 %v927
      %995 = vmatprep.subr.bf16.mxu0 0
      %996 = vmatpush1.bf16.msra.mxu0 0
      %997 = vmatprep.subr.bf16.mxu0 0
      %998 = vmatpush1.bf16.msra.mxu0 0
      %999 = vmatprep.subr.bf16.mxu0 0
      %1000 = vmatpush1.bf16.msra.mxu0 0
      %1001 = vmatprep.subr.bf16.mxu0 0
      %1002 = vmatpush1.bf16.msra.mxu0 0
      %1003 = vmatprep.subr.bf16.mxu0 0
      %1004 = vmatpush1.bf16.msra.mxu0 0
      %1005 = vmatprep.subr.bf16.mxu0 0
      %1006 = vmatpush1.bf16.msra.mxu0 0
      %1007 = vmatprep.subr.bf16.mxu0 0
      %1008 = vmatpush1.bf16.msra.mxu0 0
      %1009 = vmatprep.subr.bf16.mxu0 0
      %1010 = vmatpush1.bf16.msra.mxu0 0
      %1011 = vmatprep.subr.bf16.mxu0 0
      %1012 = vmatpush1.bf16.msra.mxu0 0
      %1013 = vmatprep.subr.bf16.mxu0 0
      %1014 = vmatpush1.bf16.msra.mxu0 0
      %1015 = vmatprep.subr.bf16.mxu0 0
      %1016 = vmatpush1.bf16.msra.mxu0 0
      %1017 = vmatprep.subr.bf16.mxu0 0
      %1018 = vmatpush1.bf16.msra.mxu0 0
      %1019 = vmatprep.subr.bf16.mxu0 0
      %1020 = vmatpush1.bf16.msra.mxu0 0
      %1021 = vmatprep.mubr.bf16.mxu0 0
      %1022 = vmatmul.mubr.bf16.gmra.mrb[0].mxu0 %v985
      %v1023 = vpop.f32.mrb[0].mxu0
      %v1024 = vadd.f32 0.0, %v1023
      %v1025 = vpop.f32.mrb[0].mxu0
      %v1026 = vpop.f32.mrb[0].mxu0
      %v1027 = vadd.f32 0.0, %v1026
      %v1028 = vpop.f32.mrb[0].mxu0
      %1029 = vmatprep.mubr.bf16.mxu0 0
      %1030 = vmatmul.mubr.bf16.gmra.mrb[0].mxu0 %v987
      %v1031 = vpop.f32.mrb[0].mxu0
      %v1032 = vadd.f32 0.0, %v1031
      %v1033 = vpop.f32.mrb[0].mxu0
      %v1034 = vpop.f32.mrb[0].mxu0
      %v1035 = vadd.f32 0.0, %v1034
      %v1036 = vpop.f32.mrb[0].mxu0
      %1037 = vdwg.mxu0
      %v1038 = vsel %vm931, %v766, 0
      %v1040 = vsel %vm931, %v767, 0
      %1042 = vmatprep.subr.bf16.mxu0 0
      %1043 = vmatpush1.bf16.msra.mxu0 %v925
      %1044 = vmatprep.subr.bf16.mxu0 0
      %1045 = vmatpush1.bf16.msra.mxu0 %v926
      %1046 = vmatprep.subr.bf16.mxu0 0
      %1047 = vmatpush1.bf16.msra.mxu0 %v927
      %1048 = vmatprep.subr.bf16.mxu0 0
      %1049 = vmatpush1.bf16.msra.mxu0 0
      %1050 = vmatprep.subr.bf16.mxu0 0
      %1051 = vmatpush1.bf16.msra.mxu0 0
      %1052 = vmatprep.subr.bf16.mxu0 0
      %1053 = vmatpush1.bf16.msra.mxu0 0
      %1054 = vmatprep.subr.bf16.mxu0 0
      %1055 = vmatpush1.bf16.msra.mxu0 0
      %1056 = vmatprep.subr.bf16.mxu0 0
      %1057 = vmatpush1.bf16.msra.mxu0 0
      %1058 = vmatprep.subr.bf16.mxu0 0
      %1059 = vmatpush1.bf16.msra.mxu0 0
      %1060 = vmatprep.subr.bf16.mxu0 0
      %1061 = vmatpush1.bf16.msra.mxu0 0
      %1062 = vmatprep.subr.bf16.mxu0 0
      %1063 = vmatpush1.bf16.msra.mxu0 0
      %1064 = vmatprep.subr.bf16.mxu0 0
      %1065 = vmatpush1.bf16.msra.mxu0 0
      %1066 = vmatprep.subr.bf16.mxu0 0
      %1067 = vmatpush1.bf16.msra.mxu0 0
      %1068 = vmatprep.subr.bf16.mxu0 0
      %1069 = vmatpush1.bf16.msra.mxu0 0
      %1070 = vmatprep.subr.bf16.mxu0 0
      %1071 = vmatpush1.bf16.msra.mxu0 0
      %1072 = vmatprep.subr.bf16.mxu0 0
      %1073 = vmatpush1.bf16.msra.mxu0 0
      %1074 = vmatprep.mubr.bf16.mxu0 0
      %1075 = vmatmul.mubr.bf16.gmra.mrb[0].mxu0 %v1038
      %v1076 = vpop.f32.mrb[0].mxu0
      %v1077 = vadd.f32 0.0, %v1076
      %v1078 = vpop.f32.mrb[0].mxu0
      %v1079 = vpop.f32.mrb[0].mxu0
      %v1080 = vadd.f32 0.0, %v1079
      %v1081 = vpop.f32.mrb[0].mxu0
      %1082 = vmatprep.mubr.bf16.mxu0 0
      %1083 = vmatmul.mubr.bf16.gmra.mrb[0].mxu0 %v1040
      %v1084 = vpop.f32.mrb[0].mxu0
      %v1085 = vadd.f32 0.0, %v1084
      %v1086 = vpop.f32.mrb[0].mxu0
      %v1087 = vpop.f32.mrb[0].mxu0
      %v1088 = vadd.f32 0.0, %v1087
      %v1089 = vpop.f32.mrb[0].mxu0
      %1090 = vdwg.mxu0
      %v1091 = vsel %vm931, %v769, 0
      %v1093 = vsel %vm931, %v771, 0
      %1095 = vmatprep.subr.bf16.mxu0 0
      %1096 = vmatpush1.bf16.msra.mxu0 %v925
      %1097 = vmatprep.subr.bf16.mxu0 0
      %1098 = vmatpush1.bf16.msra.mxu0 %v926
      %1099 = vmatprep.subr.bf16.mxu0 0
      %1100 = vmatpush1.bf16.msra.mxu0 %v927
      %1101 = vmatprep.subr.bf16.mxu0 0
      %1102 = vmatpush1.bf16.msra.mxu0 0
      %1103 = vmatprep.subr.bf16.mxu0 0
      %1104 = vmatpush1.bf16.msra.mxu0 0
      %1105 = vmatprep.subr.bf16.mxu0 0
      %1106 = vmatpush1.bf16.msra.mxu0 0
      %1107 = vmatprep.subr.bf16.mxu0 0
      %1108 = vmatpush1.bf16.msra.mxu0 0
      %1109 = vmatprep.subr.bf16.mxu0 0
      %1110 = vmatpush1.bf16.msra.mxu0 0
      %1111 = vmatprep.subr.bf16.mxu0 0
      %1112 = vmatpush1.bf16.msra.mxu0 0
      %1113 = vmatprep.subr.bf16.mxu0 0
      %1114 = vmatpush1.bf16.msra.mxu0 0
      %1115 = vmatprep.subr.bf16.mxu0 0
      %1116 = vmatpush1.bf16.msra.mxu0 0
      %1117 = vmatprep.subr.bf16.mxu0 0
      %1118 = vmatpush1.bf16.msra.mxu0 0
      %1119 = vmatprep.subr.bf16.mxu0 0
      %1120 = vmatpush1.bf16.msra.mxu0 0
      %1121 = vmatprep.subr.bf16.mxu0 0
      %1122 = vmatpush1.bf16.msra.mxu0 0
      %1123 = vmatprep.subr.bf16.mxu0 0
      %1124 = vmatpush1.bf16.msra.mxu0 0
      %1125 = vmatprep.subr.bf16.mxu0 0
      %1126 = vmatpush1.bf16.msra.mxu0 0
      %1127 = vmatprep.mubr.bf16.mxu0 0
      %1128 = vmatmul.mubr.bf16.gmra.mrb[0].mxu0 %v1091
      %v1129 = vpop.f32.mrb[0].mxu0
      %v1130 = vadd.f32 0.0, %v1129
      %v1131 = vpop.f32.mrb[0].mxu0
      %v1132 = vpop.f32.mrb[0].mxu0
      %v1133 = vadd.f32 0.0, %v1132
      %v1134 = vpop.f32.mrb[0].mxu0
      %1135 = vmatprep.mubr.bf16.mxu0 0
      %1136 = vmatmul.mubr.bf16.gmra.mrb[0].mxu0 %v1093
      %v1137 = vpop.f32.mrb[0].mxu0
      %v1138 = vadd.f32 0.0, %v1137
      %v1139 = vpop.f32.mrb[0].mxu0
      %v1140 = vpop.f32.mrb[0].mxu0
      %v1141 = vadd.f32 0.0, %v1140
      %v1142 = vpop.f32.mrb[0].mxu0
      %1143 = vdwg.mxu0
      %v1144 = vsel %vm931, %v772, 0
      %v1146 = vsel %vm931, %v773, 0
      %1148 = vmatprep.subr.bf16.mxu0 0
      %1149 = vmatpush1.bf16.msra.mxu0 %v925
      %1150 = vmatprep.subr.bf16.mxu0 0
      %1151 = vmatpush1.bf16.msra.mxu0 %v926
      %1152 = vmatprep.subr.bf16.mxu0 0
      %1153 = vmatpush1.bf16.msra.mxu0 %v927
      %1154 = vmatprep.subr.bf16.mxu0 0
      %1155 = vmatpush1.bf16.msra.mxu0 0
      %1156 = vmatprep.subr.bf16.mxu0 0
      %1157 = vmatpush1.bf16.msra.mxu0 0
      %1158 = vmatprep.subr.bf16.mxu0 0
      %1159 = vmatpush1.bf16.msra.mxu0 0
      %1160 = vmatprep.subr.bf16.mxu0 0
      %1161 = vmatpush1.bf16.msra.mxu0 0
      %1162 = vmatprep.subr.bf16.mxu0 0
      %1163 = vmatpush1.bf16.msra.mxu0 0
      %1164 = vmatprep.subr.bf16.mxu0 0
      %1165 = vmatpush1.bf16.msra.mxu0 0
      %1166 = vmatprep.subr.bf16.mxu0 0
      %1167 = vmatpush1.bf16.msra.mxu0 0
      %1168 = vmatprep.subr.bf16.mxu0 0
      %1169 = vmatpush1.bf16.msra.mxu0 0
      %1170 = vmatprep.subr.bf16.mxu0 0
      %1171 = vmatpush1.bf16.msra.mxu0 0
      %1172 = vmatprep.subr.bf16.mxu0 0
      %1173 = vmatpush1.bf16.msra.mxu0 0
      %1174 = vmatprep.subr.bf16.mxu0 0
      %1175 = vmatpush1.bf16.msra.mxu0 0
      %1176 = vmatprep.subr.bf16.mxu0 0
      %1177 = vmatpush1.bf16.msra.mxu0 0
      %1178 = vmatprep.subr.bf16.mxu0 0
      %1179 = vmatpush1.bf16.msra.mxu0 0
      %1180 = vmatprep.mubr.bf16.mxu0 0
      %1181 = vmatmul.mubr.bf16.gmra.mrb[0].mxu0 %v1144
      %v1182 = vpop.f32.mrb[0].mxu0
      %v1183 = vadd.f32 0.0, %v1182
      %v1184 = vpop.f32.mrb[0].mxu0
      %v1185 = vpop.f32.mrb[0].mxu0
      %v1186 = vadd.f32 0.0, %v1185
      %v1187 = vpop.f32.mrb[0].mxu0
      %1188 = vmatprep.mubr.bf16.mxu0 0
      %1189 = vmatmul.mubr.bf16.gmra.mrb[0].mxu0 %v1146
      %v1190 = vpop.f32.mrb[0].mxu0
      %v1191 = vadd.f32 0.0, %v1190
      %v1192 = vpop.f32.mrb[0].mxu0
      %v1193 = vpop.f32.mrb[0].mxu0
      %v1194 = vadd.f32 0.0, %v1193
      %v1195 = vpop.f32.mrb[0].mxu0
      %1196 = vdwg.mxu0
      %v1197 = vsel %vm931, %v775, 0
      %v1199 = vsel %vm931, %v777, 0
      %1201 = vmatprep.subr.bf16.mxu0 0
      %1202 = vmatpush1.bf16.msra.mxu0 %v925
      %1203 = vmatprep.subr.bf16.mxu0 0
      %1204 = vmatpush1.bf16.msra.mxu0 %v926
      %1205 = vmatprep.subr.bf16.mxu0 0
      %1206 = vmatpush1.bf16.msra.mxu0 %v927
      %1207 = vmatprep.subr.bf16.mxu0 0
      %1208 = vmatpush1.bf16.msra.mxu0 0
      %1209 = vmatprep.subr.bf16.mxu0 0
      %1210 = vmatpush1.bf16.msra.mxu0 0
      %1211 = vmatprep.subr.bf16.mxu0 0
      %1212 = vmatpush1.bf16.msra.mxu0 0
      %1213 = vmatprep.subr.bf16.mxu0 0
      %1214 = vmatpush1.bf16.msra.mxu0 0
      %1215 = vmatprep.subr.bf16.mxu0 0
      %1216 = vmatpush1.bf16.msra.mxu0 0
      %1217 = vmatprep.subr.bf16.mxu0 0
      %1218 = vmatpush1.bf16.msra.mxu0 0
      %1219 = vmatprep.subr.bf16.mxu0 0
      %1220 = vmatpush1.bf16.msra.mxu0 0
      %1221 = vmatprep.subr.bf16.mxu0 0
      %1222 = vmatpush1.bf16.msra.mxu0 0
      %1223 = vmatprep.subr.bf16.mxu0 0
      %1224 = vmatpush1.bf16.msra.mxu0 0
      %1225 = vmatprep.subr.bf16.mxu0 0
      %1226 = vmatpush1.bf16.msra.mxu0 0
      %1227 = vmatprep.subr.bf16.mxu0 0
      %1228 = vmatpush1.bf16.msra.mxu0 0
      %1229 = vmatprep.subr.bf16.mxu0 0
      %1230 = vmatpush1.bf16.msra.mxu0 0
      %1231 = vmatprep.subr.bf16.mxu0 0
      %1232 = vmatpush1.bf16.msra.mxu0 0
      %1233 = vmatprep.mubr.bf16.mxu0 0
      %1234 = vmatmul.mubr.bf16.gmra.mrb[0].mxu0 %v1197
      %v1235 = vpop.f32.mrb[0].mxu0
      %v1236 = vadd.f32 0.0, %v1235
      %v1237 = vpop.f32.mrb[0].mxu0
      %v1238 = vpop.f32.mrb[0].mxu0
      %v1239 = vadd.f32 0.0, %v1238
      %v1240 = vpop.f32.mrb[0].mxu0
      %1241 = vmatprep.mubr.bf16.mxu0 0
      %1242 = vmatmul.mubr.bf16.gmra.mrb[0].mxu0 %v1199
      %v1243 = vpop.f32.mrb[0].mxu0
      %v1244 = vadd.f32 0.0, %v1243
      %v1245 = vpop.f32.mrb[0].mxu0
      %v1246 = vpop.f32.mrb[0].mxu0
      %v1247 = vadd.f32 0.0, %v1246
      %v1248 = vpop.f32.mrb[0].mxu0
      %1249 = vdwg.mxu0
      %v1250 = vsel %vm931, %v778, 0
      %v1252 = vsel %vm931, %v779, 0
      %1254 = vmatprep.subr.bf16.mxu0 0
      %1255 = vmatpush1.bf16.msra.mxu0 %v925
      %1256 = vmatprep.subr.bf16.mxu0 0
      %1257 = vmatpush1.bf16.msra.mxu0 %v926
      %1258 = vmatprep.subr.bf16.mxu0 0
      %1259 = vmatpush1.bf16.msra.mxu0 %v927
      %1260 = vmatprep.subr.bf16.mxu0 0
      %1261 = vmatpush1.bf16.msra.mxu0 0
      %1262 = vmatprep.subr.bf16.mxu0 0
      %1263 = vmatpush1.bf16.msra.mxu0 0
      %1264 = vmatprep.subr.bf16.mxu0 0
      %1265 = vmatpush1.bf16.msra.mxu0 0
      %1266 = vmatprep.subr.bf16.mxu0 0
      %1267 = vmatpush1.bf16.msra.mxu0 0
      %1268 = vmatprep.subr.bf16.mxu0 0
      %1269 = vmatpush1.bf16.msra.mxu0 0
      %1270 = vmatprep.subr.bf16.mxu0 0
      %1271 = vmatpush1.bf16.msra.mxu0 0
      %1272 = vmatprep.subr.bf16.mxu0 0
      %1273 = vmatpush1.bf16.msra.mxu0 0
      %1274 = vmatprep.subr.bf16.mxu0 0
      %1275 = vmatpush1.bf16.msra.mxu0 0
      %1276 = vmatprep.subr.bf16.mxu0 0
      %1277 = vmatpush1.bf16.msra.mxu0 0
      %1278 = vmatprep.subr.bf16.mxu0 0
      %1279 = vmatpush1.bf16.msra.mxu0 0
      %1280 = vmatprep.subr.bf16.mxu0 0
      %1281 = vmatpush1.bf16.msra.mxu0 0
      %1282 = vmatprep.subr.bf16.mxu0 0
      %1283 = vmatpush1.bf16.msra.mxu0 0
      %1284 = vmatprep.subr.bf16.mxu0 0
      %1285 = vmatpush1.bf16.msra.mxu0 0
      %1286 = vmatprep.mubr.bf16.mxu0 0
      %1287 = vmatmul.mubr.bf16.gmra.mrb[0].mxu0 %v1250
      %v1288 = vpop.f32.mrb[0].mxu0
      %v1289 = vadd.f32 0.0, %v1288
      %v1290 = vpop.f32.mrb[0].mxu0
      %v1291 = vpop.f32.mrb[0].mxu0
      %v1292 = vadd.f32 0.0, %v1291
      %v1293 = vpop.f32.mrb[0].mxu0
      %1294 = vmatprep.mubr.bf16.mxu0 0
      %1295 = vmatmul.mubr.bf16.gmra.mrb[0].mxu0 %v1252
      %v1296 = vpop.f32.mrb[0].mxu0
      %v1297 = vadd.f32 0.0, %v1296
      %v1298 = vpop.f32.mrb[0].mxu0
      %v1299 = vpop.f32.mrb[0].mxu0
      %v1300 = vadd.f32 0.0, %v1299
      %v1301 = vpop.f32.mrb[0].mxu0
      %1302 = vdwg.mxu0
      %v1303 = vsel %vm931, %v781, 0
      %v1305 = vsel %vm931, %v783, 0
      %1307 = vmatprep.subr.bf16.mxu0 0
      %1308 = vmatpush1.bf16.msra.mxu0 %v925
      %1309 = vmatprep.subr.bf16.mxu0 0
      %1310 = vmatpush1.bf16.msra.mxu0 %v926
      %1311 = vmatprep.subr.bf16.mxu0 0
      %1312 = vmatpush1.bf16.msra.mxu0 %v927
      %1313 = vmatprep.subr.bf16.mxu0 0
      %1314 = vmatpush1.bf16.msra.mxu0 0
      %1315 = vmatprep.subr.bf16.mxu0 0
      %1316 = vmatpush1.bf16.msra.mxu0 0
      %1317 = vmatprep.subr.bf16.mxu0 0
      %1318 = vmatpush1.bf16.msra.mxu0 0
      %1319 = vmatprep.subr.bf16.mxu0 0
      %1320 = vmatpush1.bf16.msra.mxu0 0
      %1321 = vmatprep.subr.bf16.mxu0 0
      %1322 = vmatpush1.bf16.msra.mxu0 0
      %1323 = vmatprep.subr.bf16.mxu0 0
      %1324 = vmatpush1.bf16.msra.mxu0 0
      %1325 = vmatprep.subr.bf16.mxu0 0
      %1326 = vmatpush1.bf16.msra.mxu0 0
      %1327 = vmatprep.subr.bf16.mxu0 0
      %1328 = vmatpush1.bf16.msra.mxu0 0
      %1329 = vmatprep.subr.bf16.mxu0 0
      %1330 = vmatpush1.bf16.msra.mxu0 0
      %1331 = vmatprep.subr.bf16.mxu0 0
      %1332 = vmatpush1.bf16.msra.mxu0 0
      %1333 = vmatprep.subr.bf16.mxu0 0
      %1334 = vmatpush1.bf16.msra.mxu0 0
      %1335 = vmatprep.subr.bf16.mxu0 0
      %1336 = vmatpush1.bf16.msra.mxu0 0
      %1337 = vmatprep.subr.bf16.mxu0 0
      %1338 = vmatpush1.bf16.msra.mxu0 0
      %1339 = vmatprep.mubr.bf16.mxu0 0
      %1340 = vmatmul.mubr.bf16.gmra.mrb[0].mxu0 %v1303
      %v1341 = vpop.f32.mrb[0].mxu0
      %v1342 = vadd.f32 0.0, %v1341
      %v1343 = vpop.f32.mrb[0].mxu0
      %v1344 = vpop.f32.mrb[0].mxu0
      %v1345 = vadd.f32 0.0, %v1344
      %v1346 = vpop.f32.mrb[0].mxu0
      %1347 = vmatprep.mubr.bf16.mxu0 0
      %1348 = vmatmul.mubr.bf16.gmra.mrb[0].mxu0 %v1305
      %v1349 = vpop.f32.mrb[0].mxu0
      %v1350 = vadd.f32 0.0, %v1349
      %v1351 = vpop.f32.mrb[0].mxu0
      %v1352 = vpop.f32.mrb[0].mxu0
      %v1353 = vadd.f32 0.0, %v1352
      %v1354 = vpop.f32.mrb[0].mxu0
      %1355 = vdwg.mxu0
      %v1356 = vsel %vm931, %v784, 0
      %v1358 = vsel %vm931, %v785, 0
      %1360 = vmatprep.subr.bf16.mxu0 0
      %1361 = vmatpush1.bf16.msra.mxu0 %v925
      %1362 = vmatprep.subr.bf16.mxu0 0
      %1363 = vmatpush1.bf16.msra.mxu0 %v926
      %1364 = vmatprep.subr.bf16.mxu0 0
      %1365 = vmatpush1.bf16.msra.mxu0 %v927
      %1366 = vmatprep.subr.bf16.mxu0 0
      %1367 = vmatpush1.bf16.msra.mxu0 0
      %1368 = vmatprep.subr.bf16.mxu0 0
      %1369 = vmatpush1.bf16.msra.mxu0 0
      %1370 = vmatprep.subr.bf16.mxu0 0
      %1371 = vmatpush1.bf16.msra.mxu0 0
      %1372 = vmatprep.subr.bf16.mxu0 0
      %1373 = vmatpush1.bf16.msra.mxu0 0
      %1374 = vmatprep.subr.bf16.mxu0 0
      %1375 = vmatpush1.bf16.msra.mxu0 0
      %1376 = vmatprep.subr.bf16.mxu0 0
      %1377 = vmatpush1.bf16.msra.mxu0 0
      %1378 = vmatprep.subr.bf16.mxu0 0
      %1379 = vmatpush1.bf16.msra.mxu0 0
      %1380 = vmatprep.subr.bf16.mxu0 0
      %1381 = vmatpush1.bf16.msra.mxu0 0
      %1382 = vmatprep.subr.bf16.mxu0 0
      %1383 = vmatpush1.bf16.msra.mxu0 0
      %1384 = vmatprep.subr.bf16.mxu0 0
      %1385 = vmatpush1.bf16.msra.mxu0 0
      %1386 = vmatprep.subr.bf16.mxu0 0
      %1387 = vmatpush1.bf16.msra.mxu0 0
      %1388 = vmatprep.subr.bf16.mxu0 0
      %1389 = vmatpush1.bf16.msra.mxu0 0
      %1390 = vmatprep.subr.bf16.mxu0 0
      %1391 = vmatpush1.bf16.msra.mxu0 0
      %1392 = vmatprep.mubr.bf16.mxu0 0
      %1393 = vmatmul.mubr.bf16.gmra.mrb[0].mxu0 %v1356
      %v1394 = vpop.f32.mrb[0].mxu0
      %v1395 = vadd.f32 0.0, %v1394
      %v1396 = vpop.f32.mrb[0].mxu0
      %v1397 = vpop.f32.mrb[0].mxu0
      %v1398 = vadd.f32 0.0, %v1397
      %v1399 = vpop.f32.mrb[0].mxu0
      %1400 = vmatprep.mubr.bf16.mxu0 0
      %1401 = vmatmul.mubr.bf16.gmra.mrb[0].mxu0 %v1358
      %v1402 = vpop.f32.mrb[0].mxu0
      %v1403 = vadd.f32 0.0, %v1402
      %v1404 = vpop.f32.mrb[0].mxu0
      %v1405 = vpop.f32.mrb[0].mxu0
      %v1406 = vadd.f32 0.0, %v1405
      %v1407 = vpop.f32.mrb[0].mxu0
      %1408 = vdwg.mxu0
      %v1409 = vsel %vm931, %v787, 0
      %v1411 = vsel %vm931, %v789, 0
      %1413 = vmatprep.subr.bf16.mxu0 0
      %1414 = vmatpush1.bf16.msra.mxu0 %v925
      %1415 = vmatprep.subr.bf16.mxu0 0
      %1416 = vmatpush1.bf16.msra.mxu0 %v926
      %1417 = vmatprep.subr.bf16.mxu0 0
      %1418 = vmatpush1.bf16.msra.mxu0 %v927
      %1419 = vmatprep.subr.bf16.mxu0 0
      %1420 = vmatpush1.bf16.msra.mxu0 0
      %1421 = vmatprep.subr.bf16.mxu0 0
      %1422 = vmatpush1.bf16.msra.mxu0 0
      %1423 = vmatprep.subr.bf16.mxu0 0
      %1424 = vmatpush1.bf16.msra.mxu0 0
      %1425 = vmatprep.subr.bf16.mxu0 0
      %1426 = vmatpush1.bf16.msra.mxu0 0
      %1427 = vmatprep.subr.bf16.mxu0 0
      %1428 = vmatpush1.bf16.msra.mxu0 0
      %1429 = vmatprep.subr.bf16.mxu0 0
      %1430 = vmatpush1.bf16.msra.mxu0 0
      %1431 = vmatprep.subr.bf16.mxu0 0
      %1432 = vmatpush1.bf16.msra.mxu0 0
      %1433 = vmatprep.subr.bf16.mxu0 0
      %1434 = vmatpush1.bf16.msra.mxu0 0
      %1435 = vmatprep.subr.bf16.mxu0 0
      %1436 = vmatpush1.bf16.msra.mxu0 0
      %1437 = vmatprep.subr.bf16.mxu0 0
      %1438 = vmatpush1.bf16.msra.mxu0 0
      %1439 = vmatprep.subr.bf16.mxu0 0
      %1440 = vmatpush1.bf16.msra.mxu0 0
      %1441 = vmatprep.subr.bf16.mxu0 0
      %1442 = vmatpush1.bf16.msra.mxu0 0
      %1443 = vmatprep.subr.bf16.mxu0 0
      %1444 = vmatpush1.bf16.msra.mxu0 0
      %1445 = vmatprep.mubr.bf16.mxu0 0
      %1446 = vmatmul.mubr.bf16.gmra.mrb[0].mxu0 %v1409
      %v1447 = vpop.f32.mrb[0].mxu0
      %v1448 = vadd.f32 0.0, %v1447
      %v1449 = vpop.f32.mrb[0].mxu0
      %v1450 = vpop.f32.mrb[0].mxu0
      %v1451 = vadd.f32 0.0, %v1450
      %v1452 = vpop.f32.mrb[0].mxu0
      %1453 = vmatprep.mubr.bf16.mxu0 0
      %1454 = vmatmul.mubr.bf16.gmra.mrb[0].mxu0 %v1411
      %v1455 = vpop.f32.mrb[0].mxu0
      %v1456 = vadd.f32 0.0, %v1455
      %v1457 = vpop.f32.mrb[0].mxu0
      %v1458 = vpop.f32.mrb[0].mxu0
      %v1459 = vadd.f32 0.0, %v1458
      %v1460 = vpop.f32.mrb[0].mxu0
      %1461 = vdwg.mxu0
      %v1462 = vsel %vm931, %v790, 0
      %v1464 = vsel %vm931, %v791, 0
      %1466 = vmatprep.subr.bf16.mxu0 0
      %1467 = vmatpush1.bf16.msra.mxu0 %v925
      %1468 = vmatprep.subr.bf16.mxu0 0
      %1469 = vmatpush1.bf16.msra.mxu0 %v926
      %1470 = vmatprep.subr.bf16.mxu0 0
      %1471 = vmatpush1.bf16.msra.mxu0 %v927
      %1472 = vmatprep.subr.bf16.mxu0 0
      %1473 = vmatpush1.bf16.msra.mxu0 0
      %1474 = vmatprep.subr.bf16.mxu0 0
      %1475 = vmatpush1.bf16.msra.mxu0 0
      %1476 = vmatprep.subr.bf16.mxu0 0
      %1477 = vmatpush1.bf16.msra.mxu0 0
      %1478 = vmatprep.subr.bf16.mxu0 0
      %1479 = vmatpush1.bf16.msra.mxu0 0
      %1480 = vmatprep.subr.bf16.mxu0 0
      %1481 = vmatpush1.bf16.msra.mxu0 0
      %1482 = vmatprep.subr.bf16.mxu0 0
      %1483 = vmatpush1.bf16.msra.mxu0 0
      %1484 = vmatprep.subr.bf16.mxu0 0
      %1485 = vmatpush1.bf16.msra.mxu0 0
      %1486 = vmatprep.subr.bf16.mxu0 0
      %1487 = vmatpush1.bf16.msra.mxu0 0
      %1488 = vmatprep.subr.bf16.mxu0 0
      %1489 = vmatpush1.bf16.msra.mxu0 0
      %1490 = vmatprep.subr.bf16.mxu0 0
      %1491 = vmatpush1.bf16.msra.mxu0 0
      %1492 = vmatprep.subr.bf16.mxu0 0
      %1493 = vmatpush1.bf16.msra.mxu0 0
      %1494 = vmatprep.subr.bf16.mxu0 0
      %1495 = vmatpush1.bf16.msra.mxu0 0
      %1496 = vmatprep.subr.bf16.mxu0 0
      %1497 = vmatpush1.bf16.msra.mxu0 0
      %1498 = vmatprep.mubr.bf16.mxu0 0
      %1499 = vmatmul.mubr.bf16.gmra.mrb[0].mxu0 %v1462
      %v1500 = vpop.f32.mrb[0].mxu0
      %v1501 = vadd.f32 0.0, %v1500
      %v1502 = vpop.f32.mrb[0].mxu0
      %v1503 = vpop.f32.mrb[0].mxu0
      %v1504 = vadd.f32 0.0, %v1503
      %v1505 = vpop.f32.mrb[0].mxu0
      %1506 = vmatprep.mubr.bf16.mxu0 0
      %1507 = vmatmul.mubr.bf16.gmra.mrb[0].mxu0 %v1464
      %v1508 = vpop.f32.mrb[0].mxu0
      %v1509 = vadd.f32 0.0, %v1508
      %v1510 = vpop.f32.mrb[0].mxu0
      %v1511 = vpop.f32.mrb[0].mxu0
      %v1512 = vadd.f32 0.0, %v1511
      %v1513 = vpop.f32.mrb[0].mxu0
      %1514 = vdwg.mxu0
      %v1515 = vsel %vm931, %v793, 0
      %v1517 = vsel %vm931, %v795, 0
      %1519 = vmatprep.subr.bf16.mxu0 0
      %1520 = vmatpush1.bf16.msra.mxu0 %v925
      %1521 = vmatprep.subr.bf16.mxu0 0
      %1522 = vmatpush1.bf16.msra.mxu0 %v926
      %1523 = vmatprep.subr.bf16.mxu0 0
      %1524 = vmatpush1.bf16.msra.mxu0 %v927
      %1525 = vmatprep.subr.bf16.mxu0 0
      %1526 = vmatpush1.bf16.msra.mxu0 0
      %1527 = vmatprep.subr.bf16.mxu0 0
      %1528 = vmatpush1.bf16.msra.mxu0 0
      %1529 = vmatprep.subr.bf16.mxu0 0
      %1530 = vmatpush1.bf16.msra.mxu0 0
      %1531 = vmatprep.subr.bf16.mxu0 0
      %1532 = vmatpush1.bf16.msra.mxu0 0
      %1533 = vmatprep.subr.bf16.mxu0 0
      %1534 = vmatpush1.bf16.msra.mxu0 0
      %1535 = vmatprep.subr.bf16.mxu0 0
      %1536 = vmatpush1.bf16.msra.mxu0 0
      %1537 = vmatprep.subr.bf16.mxu0 0
      %1538 = vmatpush1.bf16.msra.mxu0 0
      %1539 = vmatprep.subr.bf16.mxu0 0
      %1540 = vmatpush1.bf16.msra.mxu0 0
      %1541 = vmatprep.subr.bf16.mxu0 0
      %1542 = vmatpush1.bf16.msra.mxu0 0
      %1543 = vmatprep.subr.bf16.mxu0 0
      %1544 = vmatpush1.bf16.msra.mxu0 0
      %1545 = vmatprep.subr.bf16.mxu0 0
      %1546 = vmatpush1.bf16.msra.mxu0 0
      %1547 = vmatprep.subr.bf16.mxu0 0
      %1548 = vmatpush1.bf16.msra.mxu0 0
      %1549 = vmatprep.subr.bf16.mxu0 0
      %1550 = vmatpush1.bf16.msra.mxu0 0
      %1551 = vmatprep.mubr.bf16.mxu0 0
      %1552 = vmatmul.mubr.bf16.gmra.mrb[0].mxu0 %v1515
      %v1553 = vpop.f32.mrb[0].mxu0
      %v1554 = vadd.f32 0.0, %v1553
      %v1555 = vpop.f32.mrb[0].mxu0
      %v1556 = vpop.f32.mrb[0].mxu0
      %v1557 = vadd.f32 0.0, %v1556
      %v1558 = vpop.f32.mrb[0].mxu0
      %1559 = vmatprep.mubr.bf16.mxu0 0
      %1560 = vmatmul.mubr.bf16.gmra.mrb[0].mxu0 %v1517
      %v1561 = vpop.f32.mrb[0].mxu0
      %v1562 = vadd.f32 0.0, %v1561
      %v1563 = vpop.f32.mrb[0].mxu0
      %v1564 = vpop.f32.mrb[0].mxu0
      %v1565 = vadd.f32 0.0, %v1564
      %v1566 = vpop.f32.mrb[0].mxu0
      %1567 = vdwg.mxu0
      %v1568 = vsel %vm931, %v796, 0
      %v1570 = vsel %vm931, %v797, 0
      %1572 = vmatprep.subr.bf16.mxu0 0
      %1573 = vmatpush1.bf16.msra.mxu0 %v925
      %1574 = vmatprep.subr.bf16.mxu0 0
      %1575 = vmatpush1.bf16.msra.mxu0 %v926
      %1576 = vmatprep.subr.bf16.mxu0 0
      %1577 = vmatpush1.bf16.msra.mxu0 %v927
      %1578 = vmatprep.subr.bf16.mxu0 0
      %1579 = vmatpush1.bf16.msra.mxu0 0
      %1580 = vmatprep.subr.bf16.mxu0 0
      %1581 = vmatpush1.bf16.msra.mxu0 0
      %1582 = vmatprep.subr.bf16.mxu0 0
      %1583 = vmatpush1.bf16.msra.mxu0 0
      %1584 = vmatprep.subr.bf16.mxu0 0
      %1585 = vmatpush1.bf16.msra.mxu0 0
      %1586 = vmatprep.subr.bf16.mxu0 0
      %1587 = vmatpush1.bf16.msra.mxu0 0
      %1588 = vmatprep.subr.bf16.mxu0 0
      %1589 = vmatpush1.bf16.msra.mxu0 0
      %1590 = vmatprep.subr.bf16.mxu0 0
      %1591 = vmatpush1.bf16.msra.mxu0 0
      %1592 = vmatprep.subr.bf16.mxu0 0
      %1593 = vmatpush1.bf16.msra.mxu0 0
      %1594 = vmatprep.subr.bf16.mxu0 0
      %1595 = vmatpush1.bf16.msra.mxu0 0
      %1596 = vmatprep.subr.bf16.mxu0 0
      %1597 = vmatpush1.bf16.msra.mxu0 0
      %1598 = vmatprep.subr.bf16.mxu0 0
      %1599 = vmatpush1.bf16.msra.mxu0 0
      %1600 = vmatprep.subr.bf16.mxu0 0
      %1601 = vmatpush1.bf16.msra.mxu0 0
      %1602 = vmatprep.subr.bf16.mxu0 0
      %1603 = vmatpush1.bf16.msra.mxu0 0
      %1604 = vmatprep.mubr.bf16.mxu0 0
      %1605 = vmatmul.mubr.bf16.gmra.mrb[0].mxu0 %v1568
      %v1606 = vpop.f32.mrb[0].mxu0
      %v1607 = vadd.f32 0.0, %v1606
      %v1608 = vpop.f32.mrb[0].mxu0
      %v1609 = vpop.f32.mrb[0].mxu0
      %v1610 = vadd.f32 0.0, %v1609
      %v1611 = vpop.f32.mrb[0].mxu0
      %1612 = vmatprep.mubr.bf16.mxu0 0
      %1613 = vmatmul.mubr.bf16.gmra.mrb[0].mxu0 %v1570
      %v1614 = vpop.f32.mrb[0].mxu0
      %v1615 = vadd.f32 0.0, %v1614
      %v1616 = vpop.f32.mrb[0].mxu0
      %v1617 = vpop.f32.mrb[0].mxu0
      %v1618 = vadd.f32 0.0, %v1617
      %v1619 = vpop.f32.mrb[0].mxu0
      %1620 = vdwg.mxu0
      %v1621 = vsel %vm931, %v799, 0
      %v1623 = vsel %vm931, %v801, 0
      %1625 = vmatprep.subr.bf16.mxu0 0
      %1626 = vmatpush1.bf16.msra.mxu0 %v925
      %1627 = vmatprep.subr.bf16.mxu0 0
      %1628 = vmatpush1.bf16.msra.mxu0 %v926
      %1629 = vmatprep.subr.bf16.mxu0 0
      %1630 = vmatpush1.bf16.msra.mxu0 %v927
      %1631 = vmatprep.subr.bf16.mxu0 0
      %1632 = vmatpush1.bf16.msra.mxu0 0
      %1633 = vmatprep.subr.bf16.mxu0 0
      %1634 = vmatpush1.bf16.msra.mxu0 0
      %1635 = vmatprep.subr.bf16.mxu0 0
      %1636 = vmatpush1.bf16.msra.mxu0 0
      %1637 = vmatprep.subr.bf16.mxu0 0
      %1638 = vmatpush1.bf16.msra.mxu0 0
      %1639 = vmatprep.subr.bf16.mxu0 0
      %1640 = vmatpush1.bf16.msra.mxu0 0
      %1641 = vmatprep.subr.bf16.mxu0 0
      %1642 = vmatpush1.bf16.msra.mxu0 0
      %1643 = vmatprep.subr.bf16.mxu0 0
      %1644 = vmatpush1.bf16.msra.mxu0 0
      %1645 = vmatprep.subr.bf16.mxu0 0
      %1646 = vmatpush1.bf16.msra.mxu0 0
      %1647 = vmatprep.subr.bf16.mxu0 0
      %1648 = vmatpush1.bf16.msra.mxu0 0
      %1649 = vmatprep.subr.bf16.mxu0 0
      %1650 = vmatpush1.bf16.msra.mxu0 0
      %1651 = vmatprep.subr.bf16.mxu0 0
      %1652 = vmatpush1.bf16.msra.mxu0 0
      %1653 = vmatprep.subr.bf16.mxu0 0
      %1654 = vmatpush1.bf16.msra.mxu0 0
      %1655 = vmatprep.subr.bf16.mxu0 0
      %1656 = vmatpush1.bf16.msra.mxu0 0
      %1657 = vmatprep.mubr.bf16.mxu0 0
      %1658 = vmatmul.mubr.bf16.gmra.mrb[0].mxu0 %v1621
      %v1659 = vpop.f32.mrb[0].mxu0
      %v1660 = vadd.f32 0.0, %v1659
      %v1661 = vpop.f32.mrb[0].mxu0
      %v1662 = vpop.f32.mrb[0].mxu0
      %v1663 = vadd.f32 0.0, %v1662
      %v1664 = vpop.f32.mrb[0].mxu0
      %1665 = vmatprep.mubr.bf16.mxu0 0
      %1666 = vmatmul.mubr.bf16.gmra.mrb[0].mxu0 %v1623
      %v1667 = vpop.f32.mrb[0].mxu0
      %v1668 = vadd.f32 0.0, %v1667
      %v1669 = vpop.f32.mrb[0].mxu0
      %v1670 = vpop.f32.mrb[0].mxu0
      %v1671 = vadd.f32 0.0, %v1670
      %v1672 = vpop.f32.mrb[0].mxu0
      %1673 = vdwg.mxu0
      %v1674 = vsel %vm931, %v802, 0
      %v1676 = vsel %vm931, %v803, 0
      %1678 = vmatprep.subr.bf16.mxu0 0
      %1679 = vmatpush1.bf16.msra.mxu0 %v925
      %1680 = vmatprep.subr.bf16.mxu0 0
      %1681 = vmatpush1.bf16.msra.mxu0 %v926
      %1682 = vmatprep.subr.bf16.mxu0 0
      %1683 = vmatpush1.bf16.msra.mxu0 %v927
      %1684 = vmatprep.subr.bf16.mxu0 0
      %1685 = vmatpush1.bf16.msra.mxu0 0
      %1686 = vmatprep.subr.bf16.mxu0 0
      %1687 = vmatpush1.bf16.msra.mxu0 0
      %1688 = vmatprep.subr.bf16.mxu0 0
      %1689 = vmatpush1.bf16.msra.mxu0 0
      %1690 = vmatprep.subr.bf16.mxu0 0
      %1691 = vmatpush1.bf16.msra.mxu0 0
      %1692 = vmatprep.subr.bf16.mxu0 0
      %1693 = vmatpush1.bf16.msra.mxu0 0
      %1694 = vmatprep.subr.bf16.mxu0 0
      %1695 = vmatpush1.bf16.msra.mxu0 0
      %1696 = vmatprep.subr.bf16.mxu0 0
      %1697 = vmatpush1.bf16.msra.mxu0 0
      %1698 = vmatprep.subr.bf16.mxu0 0
      %1699 = vmatpush1.bf16.msra.mxu0 0
      %1700 = vmatprep.subr.bf16.mxu0 0
      %1701 = vmatpush1.bf16.msra.mxu0 0
      %1702 = vmatprep.subr.bf16.mxu0 0
      %1703 = vmatpush1.bf16.msra.mxu0 0
      %1704 = vmatprep.subr.bf16.mxu0 0
      %1705 = vmatpush1.bf16.msra.mxu0 0
      %1706 = vmatprep.subr.bf16.mxu0 0
      %1707 = vmatpush1.bf16.msra.mxu0 0
      %1708 = vmatprep.subr.bf16.mxu0 0
      %1709 = vmatpush1.bf16.msra.mxu0 0
      %1710 = vmatprep.mubr.bf16.mxu0 0
      %1711 = vmatmul.mubr.bf16.gmra.mrb[0].mxu0 %v1674
      %v1712 = vpop.f32.mrb[0].mxu0
      %v1713 = vadd.f32 0.0, %v1712
      %v1714 = vpop.f32.mrb[0].mxu0
      %v1715 = vpop.f32.mrb[0].mxu0
      %v1716 = vadd.f32 0.0, %v1715
      %v1717 = vpop.f32.mrb[0].mxu0
      %1718 = vmatprep.mubr.bf16.mxu0 0
      %1719 = vmatmul.mubr.bf16.gmra.mrb[0].mxu0 %v1676
      %v1720 = vpop.f32.mrb[0].mxu0
      %v1721 = vadd.f32 0.0, %v1720
      %v1722 = vpop.f32.mrb[0].mxu0
      %v1723 = vpop.f32.mrb[0].mxu0
      %v1724 = vadd.f32 0.0, %v1723
      %v1725 = vpop.f32.mrb[0].mxu0
      %1726 = vdwg.mxu0
      %v1727 = vsel %vm931, %v805, 0
      %v1729 = vsel %vm931, %v807, 0
      %1731 = vmatprep.subr.bf16.mxu0 0
      %1732 = vmatpush1.bf16.msra.mxu0 %v925
      %1733 = vmatprep.subr.bf16.mxu0 0
      %1734 = vmatpush1.bf16.msra.mxu0 %v926
      %1735 = vmatprep.subr.bf16.mxu0 0
      %1736 = vmatpush1.bf16.msra.mxu0 %v927
      %1737 = vmatprep.subr.bf16.mxu0 0
      %1738 = vmatpush1.bf16.msra.mxu0 0
      %1739 = vmatprep.subr.bf16.mxu0 0
      %1740 = vmatpush1.bf16.msra.mxu0 0
      %1741 = vmatprep.subr.bf16.mxu0 0
      %1742 = vmatpush1.bf16.msra.mxu0 0
      %1743 = vmatprep.subr.bf16.mxu0 0
      %1744 = vmatpush1.bf16.msra.mxu0 0
      %1745 = vmatprep.subr.bf16.mxu0 0
      %1746 = vmatpush1.bf16.msra.mxu0 0
      %1747 = vmatprep.subr.bf16.mxu0 0
      %1748 = vmatpush1.bf16.msra.mxu0 0
      %1749 = vmatprep.subr.bf16.mxu0 0
      %1750 = vmatpush1.bf16.msra.mxu0 0
      %1751 = vmatprep.subr.bf16.mxu0 0
      %1752 = vmatpush1.bf16.msra.mxu0 0
      %1753 = vmatprep.subr.bf16.mxu0 0
      %1754 = vmatpush1.bf16.msra.mxu0 0
      %1755 = vmatprep.subr.bf16.mxu0 0
      %1756 = vmatpush1.bf16.msra.mxu0 0
      %1757 = vmatprep.subr.bf16.mxu0 0
      %1758 = vmatpush1.bf16.msra.mxu0 0
      %1759 = vmatprep.subr.bf16.mxu0 0
      %1760 = vmatpush1.bf16.msra.mxu0 0
      %1761 = vmatprep.subr.bf16.mxu0 0
      %1762 = vmatpush1.bf16.msra.mxu0 0
      %1763 = vmatprep.mubr.bf16.mxu0 0
      %1764 = vmatmul.mubr.bf16.gmra.mrb[0].mxu0 %v1727
      %v1765 = vpop.f32.mrb[0].mxu0
      %v1766 = vadd.f32 0.0, %v1765
      %v1767 = vpop.f32.mrb[0].mxu0
      %v1768 = vpop.f32.mrb[0].mxu0
      %v1769 = vadd.f32 0.0, %v1768
      %v1770 = vpop.f32.mrb[0].mxu0
      %1771 = vmatprep.mubr.bf16.mxu0 0
      %1772 = vmatmul.mubr.bf16.gmra.mrb[0].mxu0 %v1729
      %v1773 = vpop.f32.mrb[0].mxu0
      %v1774 = vadd.f32 0.0, %v1773
      %v1775 = vpop.f32.mrb[0].mxu0
      %v1776 = vpop.f32.mrb[0].mxu0
      %v1777 = vadd.f32 0.0, %v1776
      %v1778 = vpop.f32.mrb[0].mxu0
      %1779 = vdwg.mxu0
      %v1780 = vshrl.u32 %v759, 16
      %v1782 = vshll.u32 %v759, 16
      %v1784 = vrot.slane %v1782, 1
      %v1785 = vor.u32 %v1780, %v1784
      %v1786 = vshll.u32 %v761, 16
      %v1788 = vrot.slane %v1786, 1
      %v1789 = vsel %vm280, %v1785, %v1788
      %v1790 = vshrl.u32 %v761, 16
      %v1792 = vor.u32 %v1790, %v1788
      %v1793 = vshll.u32 %v876, 16
      %v1795 = vrot.slane %v1793, 1
      %v1796 = vsel %vm280, %v1792, %v1795
      %v1803 = vunpack.c.l.b16 %v907
      %v1804 = vunpack.c.l.b16 %v908
      %v1805 = vunpack.c.l.b16 %v909
      %v1806 = vunpack.c.l.b16 %v910
      %v1807 = vunpack.c.l.b16 %v911
      %v1808 = vunpack.c.l.b16 %v912
      %v1809 = vpack.c.b16 %v1804, %v1803
      %v1810 = vpack.c.b16 %v1806, %v1805
      %v1811 = vpack.c.b16 %v1808, %v1807
      %v1816 = vsel %vm931, %v1789, 0
      %v1819 = vsel %vm931, %v1796, 0
      %1821 = vmatprep.subr.bf16.mxu0 0
      %1822 = vmatpush1.bf16.msra.mxu0 %v1809
      %1823 = vmatprep.subr.bf16.mxu0 0
      %1824 = vmatpush1.bf16.msra.mxu0 %v1810
      %1825 = vmatprep.subr.bf16.mxu0 0
      %1826 = vmatpush1.bf16.msra.mxu0 %v1811
      %1827 = vmatprep.subr.bf16.mxu0 0
      %1828 = vmatpush1.bf16.msra.mxu0 0
      %1829 = vmatprep.subr.bf16.mxu0 0
      %1830 = vmatpush1.bf16.msra.mxu0 0
      %1831 = vmatprep.subr.bf16.mxu0 0
      %1832 = vmatpush1.bf16.msra.mxu0 0
      %1833 = vmatprep.subr.bf16.mxu0 0
      %1834 = vmatpush1.bf16.msra.mxu0 0
      %1835 = vmatprep.subr.bf16.mxu0 0
      %1836 = vmatpush1.bf16.msra.mxu0 0
      %1837 = vmatprep.subr.bf16.mxu0 0
      %1838 = vmatpush1.bf16.msra.mxu0 0
      %1839 = vmatprep.subr.bf16.mxu0 0
      %1840 = vmatpush1.bf16.msra.mxu0 0
      %1841 = vmatprep.subr.bf16.mxu0 0
      %1842 = vmatpush1.bf16.msra.mxu0 0
      %1843 = vmatprep.subr.bf16.mxu0 0
      %1844 = vmatpush1.bf16.msra.mxu0 0
      %1845 = vmatprep.subr.bf16.mxu0 0
      %1846 = vmatpush1.bf16.msra.mxu0 0
      %1847 = vmatprep.subr.bf16.mxu0 0
      %1848 = vmatpush1.bf16.msra.mxu0 0
      %1849 = vmatprep.subr.bf16.mxu0 0
      %1850 = vmatpush1.bf16.msra.mxu0 0
      %1851 = vmatprep.subr.bf16.mxu0 0
      %1852 = vmatpush1.bf16.msra.mxu0 0
      %1853 = vmatprep.mubr.bf16.mxu0 0
      %1854 = vmatmul.mubr.bf16.gmra.mrb[0].mxu0 %v1816
      %v1855 = vpop.f32.mrb[0].mxu0
      %v1856 = vadd.f32 0.0, %v1855
      %v1857 = vpop.f32.mrb[0].mxu0
      %v1858 = vpop.f32.mrb[0].mxu0
      %v1859 = vadd.f32 0.0, %v1858
      %v1860 = vpop.f32.mrb[0].mxu0
      %1861 = vmatprep.mubr.bf16.mxu0 0
      %1862 = vmatmul.mubr.bf16.gmra.mrb[0].mxu0 %v1819
      %v1863 = vpop.f32.mrb[0].mxu0
      %v1864 = vadd.f32 0.0, %v1863
      %v1865 = vpop.f32.mrb[0].mxu0
      %v1866 = vpop.f32.mrb[0].mxu0
      %v1867 = vadd.f32 0.0, %v1866
      %v1868 = vpop.f32.mrb[0].mxu0
      %1869 = vdwg.mxu0
      %v1870 = vshrl.u32 %v763, 16
      %v1872 = vshll.u32 %v763, 16
      %v1874 = vrot.slane %v1872, 1
      %v1875 = vor.u32 %v1870, %v1874
      %v1876 = vshll.u32 %v765, 16
      %v1878 = vrot.slane %v1876, 1
      %v1879 = vsel %vm280, %v1875, %v1878
      %v1880 = vshrl.u32 %v765, 16
      %v1882 = vor.u32 %v1880, %v1878
      %v1883 = vshll.u32 %v878, 16
      %v1885 = vrot.slane %v1883, 1
      %v1886 = vsel %vm280, %v1882, %v1885
      %v1888 = vsel %vm931, %v1879, 0
      %v1891 = vsel %vm931, %v1886, 0
      %1893 = vmatprep.subr.bf16.mxu0 0
      %1894 = vmatpush1.bf16.msra.mxu0 %v1809
      %1895 = vmatprep.subr.bf16.mxu0 0
      %1896 = vmatpush1.bf16.msra.mxu0 %v1810
      %1897 = vmatprep.subr.bf16.mxu0 0
      %1898 = vmatpush1.bf16.msra.mxu0 %v1811
      %1899 = vmatprep.subr.bf16.mxu0 0
      %1900 = vmatpush1.bf16.msra.mxu0 0
      %1901 = vmatprep.subr.bf16.mxu0 0
      %1902 = vmatpush1.bf16.msra.mxu0 0
      %1903 = vmatprep.subr.bf16.mxu0 0
      %1904 = vmatpush1.bf16.msra.mxu0 0
      %1905 = vmatprep.subr.bf16.mxu0 0
      %1906 = vmatpush1.bf16.msra.mxu0 0
      %1907 = vmatprep.subr.bf16.mxu0 0
      %1908 = vmatpush1.bf16.msra.mxu0 0
      %1909 = vmatprep.subr.bf16.mxu0 0
      %1910 = vmatpush1.bf16.msra.mxu0 0
      %1911 = vmatprep.subr.bf16.mxu0 0
      %1912 = vmatpush1.bf16.msra.mxu0 0
      %1913 = vmatprep.subr.bf16.mxu0 0
      %1914 = vmatpush1.bf16.msra.mxu0 0
      %1915 = vmatprep.subr.bf16.mxu0 0
      %1916 = vmatpush1.bf16.msra.mxu0 0
      %1917 = vmatprep.subr.bf16.mxu0 0
      %1918 = vmatpush1.bf16.msra.mxu0 0
      %1919 = vmatprep.subr.bf16.mxu0 0
      %1920 = vmatpush1.bf16.msra.mxu0 0
      %1921 = vmatprep.subr.bf16.mxu0 0
      %1922 = vmatpush1.bf16.msra.mxu0 0
      %1923 = vmatprep.subr.bf16.mxu0 0
      %1924 = vmatpush1.bf16.msra.mxu0 0
      %1925 = vmatprep.mubr.bf16.mxu0 0
      %1926 = vmatmul.mubr.bf16.gmra.mrb[0].mxu0 %v1888
      %v1927 = vpop.f32.mrb[0].mxu0
      %v1928 = vadd.f32 0.0, %v1927
      %v1929 = vpop.f32.mrb[0].mxu0
      %v1930 = vpop.f32.mrb[0].mxu0
      %v1931 = vadd.f32 0.0, %v1930
      %v1932 = vpop.f32.mrb[0].mxu0
      %1933 = vmatprep.mubr.bf16.mxu0 0
      %1934 = vmatmul.mubr.bf16.gmra.mrb[0].mxu0 %v1891
      %v1935 = vpop.f32.mrb[0].mxu0
      %v1936 = vadd.f32 0.0, %v1935
      %v1937 = vpop.f32.mrb[0].mxu0
      %v1938 = vpop.f32.mrb[0].mxu0
      %v1939 = vadd.f32 0.0, %v1938
      %v1940 = vpop.f32.mrb[0].mxu0
      %1941 = vdwg.mxu0
      %v1942 = vshrl.u32 %v766, 16
      %v1944 = vshll.u32 %v766, 16
      %v1946 = vrot.slane %v1944, 1
      %v1947 = vor.u32 %v1942, %v1946
      %v1948 = vshll.u32 %v767, 16
      %v1950 = vrot.slane %v1948, 1
      %v1951 = vsel %vm280, %v1947, %v1950
      %v1952 = vshrl.u32 %v767, 16
      %v1954 = vor.u32 %v1952, %v1950
      %v1955 = vshll.u32 %v879, 16
      %v1957 = vrot.slane %v1955, 1
      %v1958 = vsel %vm280, %v1954, %v1957
      %v1960 = vsel %vm931, %v1951, 0
      %v1963 = vsel %vm931, %v1958, 0
      %1965 = vmatprep.subr.bf16.mxu0 0
      %1966 = vmatpush1.bf16.msra.mxu0 %v1809
      %1967 = vmatprep.subr.bf16.mxu0 0
      %1968 = vmatpush1.bf16.msra.mxu0 %v1810
      %1969 = vmatprep.subr.bf16.mxu0 0
      %1970 = vmatpush1.bf16.msra.mxu0 %v1811
      %1971 = vmatprep.subr.bf16.mxu0 0
      %1972 = vmatpush1.bf16.msra.mxu0 0
      %1973 = vmatprep.subr.bf16.mxu0 0
      %1974 = vmatpush1.bf16.msra.mxu0 0
      %1975 = vmatprep.subr.bf16.mxu0 0
      %1976 = vmatpush1.bf16.msra.mxu0 0
      %1977 = vmatprep.subr.bf16.mxu0 0
      %1978 = vmatpush1.bf16.msra.mxu0 0
      %1979 = vmatprep.subr.bf16.mxu0 0
      %1980 = vmatpush1.bf16.msra.mxu0 0
      %1981 = vmatprep.subr.bf16.mxu0 0
      %1982 = vmatpush1.bf16.msra.mxu0 0
      %1983 = vmatprep.subr.bf16.mxu0 0
      %1984 = vmatpush1.bf16.msra.mxu0 0
      %1985 = vmatprep.subr.bf16.mxu0 0
      %1986 = vmatpush1.bf16.msra.mxu0 0
      %1987 = vmatprep.subr.bf16.mxu0 0
      %1988 = vmatpush1.bf16.msra.mxu0 0
      %1989 = vmatprep.subr.bf16.mxu0 0
      %1990 = vmatpush1.bf16.msra.mxu0 0
      %1991 = vmatprep.subr.bf16.mxu0 0
      %1992 = vmatpush1.bf16.msra.mxu0 0
      %1993 = vmatprep.subr.bf16.mxu0 0
      %1994 = vmatpush1.bf16.msra.mxu0 0
      %1995 = vmatprep.subr.bf16.mxu0 0
      %1996 = vmatpush1.bf16.msra.mxu0 0
      %1997 = vmatprep.mubr.bf16.mxu0 0
      %1998 = vmatmul.mubr.bf16.gmra.mrb[0].mxu0 %v1960
      %v1999 = vpop.f32.mrb[0].mxu0
      %v2000 = vadd.f32 0.0, %v1999
      %v2001 = vpop.f32.mrb[0].mxu0
      %v2002 = vpop.f32.mrb[0].mxu0
      %v2003 = vadd.f32 0.0, %v2002
      %v2004 = vpop.f32.mrb[0].mxu0
      %2005 = vmatprep.mubr.bf16.mxu0 0
      %2006 = vmatmul.mubr.bf16.gmra.mrb[0].mxu0 %v1963
      %v2007 = vpop.f32.mrb[0].mxu0
      %v2008 = vadd.f32 0.0, %v2007
      %v2009 = vpop.f32.mrb[0].mxu0
      %v2010 = vpop.f32.mrb[0].mxu0
      %v2011 = vadd.f32 0.0, %v2010
      %v2012 = vpop.f32.mrb[0].mxu0
      %2013 = vdwg.mxu0
      %v2014 = vshrl.u32 %v769, 16
      %v2016 = vshll.u32 %v769, 16
      %v2018 = vrot.slane %v2016, 1
      %v2019 = vor.u32 %v2014, %v2018
      %v2020 = vshll.u32 %v771, 16
      %v2022 = vrot.slane %v2020, 1
      %v2023 = vsel %vm280, %v2019, %v2022
      %v2024 = vshrl.u32 %v771, 16
      %v2026 = vor.u32 %v2024, %v2022
      %v2027 = vshll.u32 %v881, 16
      %v2029 = vrot.slane %v2027, 1
      %v2030 = vsel %vm280, %v2026, %v2029
      %v2032 = vsel %vm931, %v2023, 0
      %v2035 = vsel %vm931, %v2030, 0
      %2037 = vmatprep.subr.bf16.mxu0 0
      %2038 = vmatpush1.bf16.msra.mxu0 %v1809
      %2039 = vmatprep.subr.bf16.mxu0 0
      %2040 = vmatpush1.bf16.msra.mxu0 %v1810
      %2041 = vmatprep.subr.bf16.mxu0 0
      %2042 = vmatpush1.bf16.msra.mxu0 %v1811
      %2043 = vmatprep.subr.bf16.mxu0 0
      %2044 = vmatpush1.bf16.msra.mxu0 0
      %2045 = vmatprep.subr.bf16.mxu0 0
      %2046 = vmatpush1.bf16.msra.mxu0 0
      %2047 = vmatprep.subr.bf16.mxu0 0
      %2048 = vmatpush1.bf16.msra.mxu0 0
      %2049 = vmatprep.subr.bf16.mxu0 0
      %2050 = vmatpush1.bf16.msra.mxu0 0
      %2051 = vmatprep.subr.bf16.mxu0 0
      %2052 = vmatpush1.bf16.msra.mxu0 0
      %2053 = vmatprep.subr.bf16.mxu0 0
      %2054 = vmatpush1.bf16.msra.mxu0 0
      %2055 = vmatprep.subr.bf16.mxu0 0
      %2056 = vmatpush1.bf16.msra.mxu0 0
      %2057 = vmatprep.subr.bf16.mxu0 0
      %2058 = vmatpush1.bf16.msra.mxu0 0
      %2059 = vmatprep.subr.bf16.mxu0 0
      %2060 = vmatpush1.bf16.msra.mxu0 0
      %2061 = vmatprep.subr.bf16.mxu0 0
      %2062 = vmatpush1.bf16.msra.mxu0 0
      %2063 = vmatprep.subr.bf16.mxu0 0
      %2064 = vmatpush1.bf16.msra.mxu0 0
      %2065 = vmatprep.subr.bf16.mxu0 0
      %2066 = vmatpush1.bf16.msra.mxu0 0
      %2067 = vmatprep.subr.bf16.mxu0 0
      %2068 = vmatpush1.bf16.msra.mxu0 0
      %2069 = vmatprep.mubr.bf16.mxu0 0
      %2070 = vmatmul.mubr.bf16.gmra.mrb[0].mxu0 %v2032
      %v2071 = vpop.f32.mrb[0].mxu0
      %v2072 = vadd.f32 0.0, %v2071
      %v2073 = vpop.f32.mrb[0].mxu0
      %v2074 = vpop.f32.mrb[0].mxu0
      %v2075 = vadd.f32 0.0, %v2074
      %v2076 = vpop.f32.mrb[0].mxu0
      %2077 = vmatprep.mubr.bf16.mxu0 0
      %2078 = vmatmul.mubr.bf16.gmra.mrb[0].mxu0 %v2035
      %v2079 = vpop.f32.mrb[0].mxu0
      %v2080 = vadd.f32 0.0, %v2079
      %v2081 = vpop.f32.mrb[0].mxu0
      %v2082 = vpop.f32.mrb[0].mxu0
      %v2083 = vadd.f32 0.0, %v2082
      %v2084 = vpop.f32.mrb[0].mxu0
      %2085 = vdwg.mxu0
      %v2086 = vshrl.u32 %v772, 16
      %v2088 = vshll.u32 %v772, 16
      %v2090 = vrot.slane %v2088, 1
      %v2091 = vor.u32 %v2086, %v2090
      %v2092 = vshll.u32 %v773, 16
      %v2094 = vrot.slane %v2092, 1
      %v2095 = vsel %vm280, %v2091, %v2094
      %v2096 = vshrl.u32 %v773, 16
      %v2098 = vor.u32 %v2096, %v2094
      %v2099 = vshll.u32 %v882, 16
      %v2101 = vrot.slane %v2099, 1
      %v2102 = vsel %vm280, %v2098, %v2101
      %v2104 = vsel %vm931, %v2095, 0
      %v2107 = vsel %vm931, %v2102, 0
      %2109 = vmatprep.subr.bf16.mxu0 0
      %2110 = vmatpush1.bf16.msra.mxu0 %v1809
      %2111 = vmatprep.subr.bf16.mxu0 0
      %2112 = vmatpush1.bf16.msra.mxu0 %v1810
      %2113 = vmatprep.subr.bf16.mxu0 0
      %2114 = vmatpush1.bf16.msra.mxu0 %v1811
      %2115 = vmatprep.subr.bf16.mxu0 0
      %2116 = vmatpush1.bf16.msra.mxu0 0
      %2117 = vmatprep.subr.bf16.mxu0 0
      %2118 = vmatpush1.bf16.msra.mxu0 0
      %2119 = vmatprep.subr.bf16.mxu0 0
      %2120 = vmatpush1.bf16.msra.mxu0 0
      %2121 = vmatprep.subr.bf16.mxu0 0
      %2122 = vmatpush1.bf16.msra.mxu0 0
      %2123 = vmatprep.subr.bf16.mxu0 0
      %2124 = vmatpush1.bf16.msra.mxu0 0
      %2125 = vmatprep.subr.bf16.mxu0 0
      %2126 = vmatpush1.bf16.msra.mxu0 0
      %2127 = vmatprep.subr.bf16.mxu0 0
      %2128 = vmatpush1.bf16.msra.mxu0 0
      %2129 = vmatprep.subr.bf16.mxu0 0
      %2130 = vmatpush1.bf16.msra.mxu0 0
      %2131 = vmatprep.subr.bf16.mxu0 0
      %2132 = vmatpush1.bf16.msra.mxu0 0
      %2133 = vmatprep.subr.bf16.mxu0 0
      %2134 = vmatpush1.bf16.msra.mxu0 0
      %2135 = vmatprep.subr.bf16.mxu0 0
      %2136 = vmatpush1.bf16.msra.mxu0 0
      %2137 = vmatprep.subr.bf16.mxu0 0
      %2138 = vmatpush1.bf16.msra.mxu0 0
      %2139 = vmatprep.subr.bf16.mxu0 0
      %2140 = vmatpush1.bf16.msra.mxu0 0
      %2141 = vmatprep.mubr.bf16.mxu0 0
      %2142 = vmatmul.mubr.bf16.gmra.mrb[0].mxu0 %v2104
      %v2143 = vpop.f32.mrb[0].mxu0
      %v2144 = vadd.f32 0.0, %v2143
      %v2145 = vpop.f32.mrb[0].mxu0
      %v2146 = vpop.f32.mrb[0].mxu0
      %v2147 = vadd.f32 0.0, %v2146
      %v2148 = vpop.f32.mrb[0].mxu0
      %2149 = vmatprep.mubr.bf16.mxu0 0
      %2150 = vmatmul.mubr.bf16.gmra.mrb[0].mxu0 %v2107
      %v2151 = vpop.f32.mrb[0].mxu0
      %v2152 = vadd.f32 0.0, %v2151
      %v2153 = vpop.f32.mrb[0].mxu0
      %v2154 = vpop.f32.mrb[0].mxu0
      %v2155 = vadd.f32 0.0, %v2154
      %v2156 = vpop.f32.mrb[0].mxu0
      %2157 = vdwg.mxu0
      %v2158 = vshrl.u32 %v775, 16
      %v2160 = vshll.u32 %v775, 16
      %v2162 = vrot.slane %v2160, 1
      %v2163 = vor.u32 %v2158, %v2162
      %v2164 = vshll.u32 %v777, 16
      %v2166 = vrot.slane %v2164, 1
      %v2167 = vsel %vm280, %v2163, %v2166
      %v2168 = vshrl.u32 %v777, 16
      %v2170 = vor.u32 %v2168, %v2166
      %v2171 = vshll.u32 %v884, 16
      %v2173 = vrot.slane %v2171, 1
      %v2174 = vsel %vm280, %v2170, %v2173
      %v2176 = vsel %vm931, %v2167, 0
      %v2179 = vsel %vm931, %v2174, 0
      %2181 = vmatprep.subr.bf16.mxu0 0
      %2182 = vmatpush1.bf16.msra.mxu0 %v1809
      %2183 = vmatprep.subr.bf16.mxu0 0
      %2184 = vmatpush1.bf16.msra.mxu0 %v1810
      %2185 = vmatprep.subr.bf16.mxu0 0
      %2186 = vmatpush1.bf16.msra.mxu0 %v1811
      %2187 = vmatprep.subr.bf16.mxu0 0
      %2188 = vmatpush1.bf16.msra.mxu0 0
      %2189 = vmatprep.subr.bf16.mxu0 0
      %2190 = vmatpush1.bf16.msra.mxu0 0
      %2191 = vmatprep.subr.bf16.mxu0 0
      %2192 = vmatpush1.bf16.msra.mxu0 0
      %2193 = vmatprep.subr.bf16.mxu0 0
      %2194 = vmatpush1.bf16.msra.mxu0 0
      %2195 = vmatprep.subr.bf16.mxu0 0
      %2196 = vmatpush1.bf16.msra.mxu0 0
      %2197 = vmatprep.subr.bf16.mxu0 0
      %2198 = vmatpush1.bf16.msra.mxu0 0
      %2199 = vmatprep.subr.bf16.mxu0 0
      %2200 = vmatpush1.bf16.msra.mxu0 0
      %2201 = vmatprep.subr.bf16.mxu0 0
      %2202 = vmatpush1.bf16.msra.mxu0 0
      %2203 = vmatprep.subr.bf16.mxu0 0
      %2204 = vmatpush1.bf16.msra.mxu0 0
      %2205 = vmatprep.subr.bf16.mxu0 0
      %2206 = vmatpush1.bf16.msra.mxu0 0
      %2207 = vmatprep.subr.bf16.mxu0 0
      %2208 = vmatpush1.bf16.msra.mxu0 0
      %2209 = vmatprep.subr.bf16.mxu0 0
      %2210 = vmatpush1.bf16.msra.mxu0 0
      %2211 = vmatprep.subr.bf16.mxu0 0
      %2212 = vmatpush1.bf16.msra.mxu0 0
      %2213 = vmatprep.mubr.bf16.mxu0 0
      %2214 = vmatmul.mubr.bf16.gmra.mrb[0].mxu0 %v2176
      %v2215 = vpop.f32.mrb[0].mxu0
      %v2216 = vadd.f32 0.0, %v2215
      %v2217 = vpop.f32.mrb[0].mxu0
      %v2218 = vpop.f32.mrb[0].mxu0
      %v2219 = vadd.f32 0.0, %v2218
      %v2220 = vpop.f32.mrb[0].mxu0
      %2221 = vmatprep.mubr.bf16.mxu0 0
      %2222 = vmatmul.mubr.bf16.gmra.mrb[0].mxu0 %v2179
      %v2223 = vpop.f32.mrb[0].mxu0
      %v2224 = vadd.f32 0.0, %v2223
      %v2225 = vpop.f32.mrb[0].mxu0
      %v2226 = vpop.f32.mrb[0].mxu0
      %v2227 = vadd.f32 0.0, %v2226
      %v2228 = vpop.f32.mrb[0].mxu0
      %2229 = vdwg.mxu0
      %v2230 = vshrl.u32 %v778, 16
      %v2232 = vshll.u32 %v778, 16
      %v2234 = vrot.slane %v2232, 1
      %v2235 = vor.u32 %v2230, %v2234
      %v2236 = vshll.u32 %v779, 16
      %v2238 = vrot.slane %v2236, 1
      %v2239 = vsel %vm280, %v2235, %v2238
      %v2240 = vshrl.u32 %v779, 16
      %v2242 = vor.u32 %v2240, %v2238
      %v2243 = vshll.u32 %v885, 16
      %v2245 = vrot.slane %v2243, 1
      %v2246 = vsel %vm280, %v2242, %v2245
      %v2248 = vsel %vm931, %v2239, 0
      %v2251 = vsel %vm931, %v2246, 0
      %2253 = vmatprep.subr.bf16.mxu0 0
      %2254 = vmatpush1.bf16.msra.mxu0 %v1809
      %2255 = vmatprep.subr.bf16.mxu0 0
      %2256 = vmatpush1.bf16.msra.mxu0 %v1810
      %2257 = vmatprep.subr.bf16.mxu0 0
      %2258 = vmatpush1.bf16.msra.mxu0 %v1811
      %2259 = vmatprep.subr.bf16.mxu0 0
      %2260 = vmatpush1.bf16.msra.mxu0 0
      %2261 = vmatprep.subr.bf16.mxu0 0
      %2262 = vmatpush1.bf16.msra.mxu0 0
      %2263 = vmatprep.subr.bf16.mxu0 0
      %2264 = vmatpush1.bf16.msra.mxu0 0
      %2265 = vmatprep.subr.bf16.mxu0 0
      %2266 = vmatpush1.bf16.msra.mxu0 0
      %2267 = vmatprep.subr.bf16.mxu0 0
      %2268 = vmatpush1.bf16.msra.mxu0 0
      %2269 = vmatprep.subr.bf16.mxu0 0
      %2270 = vmatpush1.bf16.msra.mxu0 0
      %2271 = vmatprep.subr.bf16.mxu0 0
      %2272 = vmatpush1.bf16.msra.mxu0 0
      %2273 = vmatprep.subr.bf16.mxu0 0
      %2274 = vmatpush1.bf16.msra.mxu0 0
      %2275 = vmatprep.subr.bf16.mxu0 0
      %2276 = vmatpush1.bf16.msra.mxu0 0
      %2277 = vmatprep.subr.bf16.mxu0 0
      %2278 = vmatpush1.bf16.msra.mxu0 0
      %2279 = vmatprep.subr.bf16.mxu0 0
      %2280 = vmatpush1.bf16.msra.mxu0 0
      %2281 = vmatprep.subr.bf16.mxu0 0
      %2282 = vmatpush1.bf16.msra.mxu0 0
      %2283 = vmatprep.subr.bf16.mxu0 0
      %2284 = vmatpush1.bf16.msra.mxu0 0
      %2285 = vmatprep.mubr.bf16.mxu0 0
      %2286 = vmatmul.mubr.bf16.gmra.mrb[0].mxu0 %v2248
      %v2287 = vpop.f32.mrb[0].mxu0
      %v2288 = vadd.f32 0.0, %v2287
      %v2289 = vpop.f32.mrb[0].mxu0
      %v2290 = vpop.f32.mrb[0].mxu0
      %v2291 = vadd.f32 0.0, %v2290
      %v2292 = vpop.f32.mrb[0].mxu0
      %2293 = vmatprep.mubr.bf16.mxu0 0
      %2294 = vmatmul.mubr.bf16.gmra.mrb[0].mxu0 %v2251
      %v2295 = vpop.f32.mrb[0].mxu0
      %v2296 = vadd.f32 0.0, %v2295
      %v2297 = vpop.f32.mrb[0].mxu0
      %v2298 = vpop.f32.mrb[0].mxu0
      %v2299 = vadd.f32 0.0, %v2298
      %v2300 = vpop.f32.mrb[0].mxu0
      %2301 = vdwg.mxu0
      %v2302 = vshrl.u32 %v781, 16
      %v2304 = vshll.u32 %v781, 16
      %v2306 = vrot.slane %v2304, 1
      %v2307 = vor.u32 %v2302, %v2306
      %v2308 = vshll.u32 %v783, 16
      %v2310 = vrot.slane %v2308, 1
      %v2311 = vsel %vm280, %v2307, %v2310
      %v2312 = vshrl.u32 %v783, 16
      %v2314 = vor.u32 %v2312, %v2310
      %v2315 = vshll.u32 %v887, 16
      %v2317 = vrot.slane %v2315, 1
      %v2318 = vsel %vm280, %v2314, %v2317
      %v2320 = vsel %vm931, %v2311, 0
      %v2323 = vsel %vm931, %v2318, 0
      %2325 = vmatprep.subr.bf16.mxu0 0
      %2326 = vmatpush1.bf16.msra.mxu0 %v1809
      %2327 = vmatprep.subr.bf16.mxu0 0
      %2328 = vmatpush1.bf16.msra.mxu0 %v1810
      %2329 = vmatprep.subr.bf16.mxu0 0
      %2330 = vmatpush1.bf16.msra.mxu0 %v1811
      %2331 = vmatprep.subr.bf16.mxu0 0
      %2332 = vmatpush1.bf16.msra.mxu0 0
      %2333 = vmatprep.subr.bf16.mxu0 0
      %2334 = vmatpush1.bf16.msra.mxu0 0
      %2335 = vmatprep.subr.bf16.mxu0 0
      %2336 = vmatpush1.bf16.msra.mxu0 0
      %2337 = vmatprep.subr.bf16.mxu0 0
      %2338 = vmatpush1.bf16.msra.mxu0 0
      %2339 = vmatprep.subr.bf16.mxu0 0
      %2340 = vmatpush1.bf16.msra.mxu0 0
      %2341 = vmatprep.subr.bf16.mxu0 0
      %2342 = vmatpush1.bf16.msra.mxu0 0
      %2343 = vmatprep.subr.bf16.mxu0 0
      %2344 = vmatpush1.bf16.msra.mxu0 0
      %2345 = vmatprep.subr.bf16.mxu0 0
      %2346 = vmatpush1.bf16.msra.mxu0 0
      %2347 = vmatprep.subr.bf16.mxu0 0
      %2348 = vmatpush1.bf16.msra.mxu0 0
      %2349 = vmatprep.subr.bf16.mxu0 0
      %2350 = vmatpush1.bf16.msra.mxu0 0
      %2351 = vmatprep.subr.bf16.mxu0 0
      %2352 = vmatpush1.bf16.msra.mxu0 0
      %2353 = vmatprep.subr.bf16.mxu0 0
      %2354 = vmatpush1.bf16.msra.mxu0 0
      %2355 = vmatprep.subr.bf16.mxu0 0
      %2356 = vmatpush1.bf16.msra.mxu0 0
      %2357 = vmatprep.mubr.bf16.mxu0 0
      %2358 = vmatmul.mubr.bf16.gmra.mrb[0].mxu0 %v2320
      %v2359 = vpop.f32.mrb[0].mxu0
      %v2360 = vadd.f32 0.0, %v2359
      %v2361 = vpop.f32.mrb[0].mxu0
      %v2362 = vpop.f32.mrb[0].mxu0
      %v2363 = vadd.f32 0.0, %v2362
      %v2364 = vpop.f32.mrb[0].mxu0
      %2365 = vmatprep.mubr.bf16.mxu0 0
      %2366 = vmatmul.mubr.bf16.gmra.mrb[0].mxu0 %v2323
      %v2367 = vpop.f32.mrb[0].mxu0
      %v2368 = vadd.f32 0.0, %v2367
      %v2369 = vpop.f32.mrb[0].mxu0
      %v2370 = vpop.f32.mrb[0].mxu0
      %v2371 = vadd.f32 0.0, %v2370
      %v2372 = vpop.f32.mrb[0].mxu0
      %2373 = vdwg.mxu0
      %v2374 = vshrl.u32 %v784, 16
      %v2376 = vshll.u32 %v784, 16
      %v2378 = vrot.slane %v2376, 1
      %v2379 = vor.u32 %v2374, %v2378
      %v2380 = vshll.u32 %v785, 16
      %v2382 = vrot.slane %v2380, 1
      %v2383 = vsel %vm280, %v2379, %v2382
      %v2384 = vshrl.u32 %v785, 16
      %v2386 = vor.u32 %v2384, %v2382
      %v2387 = vshll.u32 %v888, 16
      %v2389 = vrot.slane %v2387, 1
      %v2390 = vsel %vm280, %v2386, %v2389
      %v2392 = vsel %vm931, %v2383, 0
      %v2395 = vsel %vm931, %v2390, 0
      %2397 = vmatprep.subr.bf16.mxu0 0
      %2398 = vmatpush1.bf16.msra.mxu0 %v1809
      %2399 = vmatprep.subr.bf16.mxu0 0
      %2400 = vmatpush1.bf16.msra.mxu0 %v1810
      %2401 = vmatprep.subr.bf16.mxu0 0
      %2402 = vmatpush1.bf16.msra.mxu0 %v1811
      %2403 = vmatprep.subr.bf16.mxu0 0
      %2404 = vmatpush1.bf16.msra.mxu0 0
      %2405 = vmatprep.subr.bf16.mxu0 0
      %2406 = vmatpush1.bf16.msra.mxu0 0
      %2407 = vmatprep.subr.bf16.mxu0 0
      %2408 = vmatpush1.bf16.msra.mxu0 0
      %2409 = vmatprep.subr.bf16.mxu0 0
      %2410 = vmatpush1.bf16.msra.mxu0 0
      %2411 = vmatprep.subr.bf16.mxu0 0
      %2412 = vmatpush1.bf16.msra.mxu0 0
      %2413 = vmatprep.subr.bf16.mxu0 0
      %2414 = vmatpush1.bf16.msra.mxu0 0
      %2415 = vmatprep.subr.bf16.mxu0 0
      %2416 = vmatpush1.bf16.msra.mxu0 0
      %2417 = vmatprep.subr.bf16.mxu0 0
      %2418 = vmatpush1.bf16.msra.mxu0 0
      %2419 = vmatprep.subr.bf16.mxu0 0
      %2420 = vmatpush1.bf16.msra.mxu0 0
      %2421 = vmatprep.subr.bf16.mxu0 0
      %2422 = vmatpush1.bf16.msra.mxu0 0
      %2423 = vmatprep.subr.bf16.mxu0 0
      %2424 = vmatpush1.bf16.msra.mxu0 0
      %2425 = vmatprep.subr.bf16.mxu0 0
      %2426 = vmatpush1.bf16.msra.mxu0 0
      %2427 = vmatprep.subr.bf16.mxu0 0
      %2428 = vmatpush1.bf16.msra.mxu0 0
      %2429 = vmatprep.mubr.bf16.mxu0 0
      %2430 = vmatmul.mubr.bf16.gmra.mrb[0].mxu0 %v2392
      %v2431 = vpop.f32.mrb[0].mxu0
      %v2432 = vadd.f32 0.0, %v2431
      %v2433 = vpop.f32.mrb[0].mxu0
      %v2434 = vpop.f32.mrb[0].mxu0
      %v2435 = vadd.f32 0.0, %v2434
      %v2436 = vpop.f32.mrb[0].mxu0
      %2437 = vmatprep.mubr.bf16.mxu0 0
      %2438 = vmatmul.mubr.bf16.gmra.mrb[0].mxu0 %v2395
      %v2439 = vpop.f32.mrb[0].mxu0
      %v2440 = vadd.f32 0.0, %v2439
      %v2441 = vpop.f32.mrb[0].mxu0
      %v2442 = vpop.f32.mrb[0].mxu0
      %v2443 = vadd.f32 0.0, %v2442
      %v2444 = vpop.f32.mrb[0].mxu0
      %2445 = vdwg.mxu0
      %v2446 = vshrl.u32 %v787, 16
      %v2448 = vshll.u32 %v787, 16
      %v2450 = vrot.slane %v2448, 1
      %v2451 = vor.u32 %v2446, %v2450
      %v2452 = vshll.u32 %v789, 16
      %v2454 = vrot.slane %v2452, 1
      %v2455 = vsel %vm280, %v2451, %v2454
      %v2456 = vshrl.u32 %v789, 16
      %v2458 = vor.u32 %v2456, %v2454
      %v2459 = vshll.u32 %v890, 16
      %v2461 = vrot.slane %v2459, 1
      %v2462 = vsel %vm280, %v2458, %v2461
      %v2464 = vsel %vm931, %v2455, 0
      %v2467 = vsel %vm931, %v2462, 0
      %2469 = vmatprep.subr.bf16.mxu0 0
      %2470 = vmatpush1.bf16.msra.mxu0 %v1809
      %2471 = vmatprep.subr.bf16.mxu0 0
      %2472 = vmatpush1.bf16.msra.mxu0 %v1810
      %2473 = vmatprep.subr.bf16.mxu0 0
      %2474 = vmatpush1.bf16.msra.mxu0 %v1811
      %2475 = vmatprep.subr.bf16.mxu0 0
      %2476 = vmatpush1.bf16.msra.mxu0 0
      %2477 = vmatprep.subr.bf16.mxu0 0
      %2478 = vmatpush1.bf16.msra.mxu0 0
      %2479 = vmatprep.subr.bf16.mxu0 0
      %2480 = vmatpush1.bf16.msra.mxu0 0
      %2481 = vmatprep.subr.bf16.mxu0 0
      %2482 = vmatpush1.bf16.msra.mxu0 0
      %2483 = vmatprep.subr.bf16.mxu0 0
      %2484 = vmatpush1.bf16.msra.mxu0 0
      %2485 = vmatprep.subr.bf16.mxu0 0
      %2486 = vmatpush1.bf16.msra.mxu0 0
      %2487 = vmatprep.subr.bf16.mxu0 0
      %2488 = vmatpush1.bf16.msra.mxu0 0
      %2489 = vmatprep.subr.bf16.mxu0 0
      %2490 = vmatpush1.bf16.msra.mxu0 0
      %2491 = vmatprep.subr.bf16.mxu0 0
      %2492 = vmatpush1.bf16.msra.mxu0 0
      %2493 = vmatprep.subr.bf16.mxu0 0
      %2494 = vmatpush1.bf16.msra.mxu0 0
      %2495 = vmatprep.subr.bf16.mxu0 0
      %2496 = vmatpush1.bf16.msra.mxu0 0
      %2497 = vmatprep.subr.bf16.mxu0 0
      %2498 = vmatpush1.bf16.msra.mxu0 0
      %2499 = vmatprep.subr.bf16.mxu0 0
      %2500 = vmatpush1.bf16.msra.mxu0 0
      %2501 = vmatprep.mubr.bf16.mxu0 0
      %2502 = vmatmul.mubr.bf16.gmra.mrb[0].mxu0 %v2464
      %v2503 = vpop.f32.mrb[0].mxu0
      %v2504 = vadd.f32 0.0, %v2503
      %v2505 = vpop.f32.mrb[0].mxu0
      %v2506 = vpop.f32.mrb[0].mxu0
      %v2507 = vadd.f32 0.0, %v2506
      %v2508 = vpop.f32.mrb[0].mxu0
      %2509 = vmatprep.mubr.bf16.mxu0 0
      %2510 = vmatmul.mubr.bf16.gmra.mrb[0].mxu0 %v2467
      %v2511 = vpop.f32.mrb[0].mxu0
      %v2512 = vadd.f32 0.0, %v2511
      %v2513 = vpop.f32.mrb[0].mxu0
      %v2514 = vpop.f32.mrb[0].mxu0
      %v2515 = vadd.f32 0.0, %v2514
      %v2516 = vpop.f32.mrb[0].mxu0
      %2517 = vdwg.mxu0
      %v2518 = vshrl.u32 %v790, 16
      %v2520 = vshll.u32 %v790, 16
      %v2522 = vrot.slane %v2520, 1
      %v2523 = vor.u32 %v2518, %v2522
      %v2524 = vshll.u32 %v791, 16
      %v2526 = vrot.slane %v2524, 1
      %v2527 = vsel %vm280, %v2523, %v2526
      %v2528 = vshrl.u32 %v791, 16
      %v2530 = vor.u32 %v2528, %v2526
      %v2531 = vshll.u32 %v891, 16
      %v2533 = vrot.slane %v2531, 1
      %v2534 = vsel %vm280, %v2530, %v2533
      %v2536 = vsel %vm931, %v2527, 0
      %v2539 = vsel %vm931, %v2534, 0
      %2541 = vmatprep.subr.bf16.mxu0 0
      %2542 = vmatpush1.bf16.msra.mxu0 %v1809
      %2543 = vmatprep.subr.bf16.mxu0 0
      %2544 = vmatpush1.bf16.msra.mxu0 %v1810
      %2545 = vmatprep.subr.bf16.mxu0 0
      %2546 = vmatpush1.bf16.msra.mxu0 %v1811
      %2547 = vmatprep.subr.bf16.mxu0 0
      %2548 = vmatpush1.bf16.msra.mxu0 0
      %2549 = vmatprep.subr.bf16.mxu0 0
      %2550 = vmatpush1.bf16.msra.mxu0 0
      %2551 = vmatprep.subr.bf16.mxu0 0
      %2552 = vmatpush1.bf16.msra.mxu0 0
      %2553 = vmatprep.subr.bf16.mxu0 0
      %2554 = vmatpush1.bf16.msra.mxu0 0
      %2555 = vmatprep.subr.bf16.mxu0 0
      %2556 = vmatpush1.bf16.msra.mxu0 0
      %2557 = vmatprep.subr.bf16.mxu0 0
      %2558 = vmatpush1.bf16.msra.mxu0 0
      %2559 = vmatprep.subr.bf16.mxu0 0
      %2560 = vmatpush1.bf16.msra.mxu0 0
      %2561 = vmatprep.subr.bf16.mxu0 0
      %2562 = vmatpush1.bf16.msra.mxu0 0
      %2563 = vmatprep.subr.bf16.mxu0 0
      %2564 = vmatpush1.bf16.msra.mxu0 0
      %2565 = vmatprep.subr.bf16.mxu0 0
      %2566 = vmatpush1.bf16.msra.mxu0 0
      %2567 = vmatprep.subr.bf16.mxu0 0
      %2568 = vmatpush1.bf16.msra.mxu0 0
      %2569 = vmatprep.subr.bf16.mxu0 0
      %2570 = vmatpush1.bf16.msra.mxu0 0
      %2571 = vmatprep.subr.bf16.mxu0 0
      %2572 = vmatpush1.bf16.msra.mxu0 0
      %2573 = vmatprep.mubr.bf16.mxu0 0
      %2574 = vmatmul.mubr.bf16.gmra.mrb[0].mxu0 %v2536
      %v2575 = vpop.f32.mrb[0].mxu0
      %v2576 = vadd.f32 0.0, %v2575
      %v2577 = vpop.f32.mrb[0].mxu0
      %v2578 = vpop.f32.mrb[0].mxu0
      %v2579 = vadd.f32 0.0, %v2578
      %v2580 = vpop.f32.mrb[0].mxu0
      %2581 = vmatprep.mubr.bf16.mxu0 0
      %2582 = vmatmul.mubr.bf16.gmra.mrb[0].mxu0 %v2539
      %v2583 = vpop.f32.mrb[0].mxu0
      %v2584 = vadd.f32 0.0, %v2583
      %v2585 = vpop.f32.mrb[0].mxu0
      %v2586 = vpop.f32.mrb[0].mxu0
      %v2587 = vadd.f32 0.0, %v2586
      %v2588 = vpop.f32.mrb[0].mxu0
      %2589 = vdwg.mxu0
      %v2590 = vshrl.u32 %v793, 16
      %v2592 = vshll.u32 %v793, 16
      %v2594 = vrot.slane %v2592, 1
      %v2595 = vor.u32 %v2590, %v2594
      %v2596 = vshll.u32 %v795, 16
      %v2598 = vrot.slane %v2596, 1
      %v2599 = vsel %vm280, %v2595, %v2598
      %v2600 = vshrl.u32 %v795, 16
      %v2602 = vor.u32 %v2600, %v2598
      %v2603 = vshll.u32 %v893, 16
      %v2605 = vrot.slane %v2603, 1
      %v2606 = vsel %vm280, %v2602, %v2605
      %v2608 = vsel %vm931, %v2599, 0
      %v2611 = vsel %vm931, %v2606, 0
      %2613 = vmatprep.subr.bf16.mxu0 0
      %2614 = vmatpush1.bf16.msra.mxu0 %v1809
      %2615 = vmatprep.subr.bf16.mxu0 0
      %2616 = vmatpush1.bf16.msra.mxu0 %v1810
      %2617 = vmatprep.subr.bf16.mxu0 0
      %2618 = vmatpush1.bf16.msra.mxu0 %v1811
      %2619 = vmatprep.subr.bf16.mxu0 0
      %2620 = vmatpush1.bf16.msra.mxu0 0
      %2621 = vmatprep.subr.bf16.mxu0 0
      %2622 = vmatpush1.bf16.msra.mxu0 0
      %2623 = vmatprep.subr.bf16.mxu0 0
      %2624 = vmatpush1.bf16.msra.mxu0 0
      %2625 = vmatprep.subr.bf16.mxu0 0
      %2626 = vmatpush1.bf16.msra.mxu0 0
      %2627 = vmatprep.subr.bf16.mxu0 0
      %2628 = vmatpush1.bf16.msra.mxu0 0
      %2629 = vmatprep.subr.bf16.mxu0 0
      %2630 = vmatpush1.bf16.msra.mxu0 0
      %2631 = vmatprep.subr.bf16.mxu0 0
      %2632 = vmatpush1.bf16.msra.mxu0 0
      %2633 = vmatprep.subr.bf16.mxu0 0
      %2634 = vmatpush1.bf16.msra.mxu0 0
      %2635 = vmatprep.subr.bf16.mxu0 0
      %2636 = vmatpush1.bf16.msra.mxu0 0
      %2637 = vmatprep.subr.bf16.mxu0 0
      %2638 = vmatpush1.bf16.msra.mxu0 0
      %2639 = vmatprep.subr.bf16.mxu0 0
      %2640 = vmatpush1.bf16.msra.mxu0 0
      %2641 = vmatprep.subr.bf16.mxu0 0
      %2642 = vmatpush1.bf16.msra.mxu0 0
      %2643 = vmatprep.subr.bf16.mxu0 0
      %2644 = vmatpush1.bf16.msra.mxu0 0
      %2645 = vmatprep.mubr.bf16.mxu0 0
      %2646 = vmatmul.mubr.bf16.gmra.mrb[0].mxu0 %v2608
      %v2647 = vpop.f32.mrb[0].mxu0
      %v2648 = vadd.f32 0.0, %v2647
      %v2649 = vpop.f32.mrb[0].mxu0
      %v2650 = vpop.f32.mrb[0].mxu0
      %v2651 = vadd.f32 0.0, %v2650
      %v2652 = vpop.f32.mrb[0].mxu0
      %2653 = vmatprep.mubr.bf16.mxu0 0
      %2654 = vmatmul.mubr.bf16.gmra.mrb[0].mxu0 %v2611
      %v2655 = vpop.f32.mrb[0].mxu0
      %v2656 = vadd.f32 0.0, %v2655
      %v2657 = vpop.f32.mrb[0].mxu0
      %v2658 = vpop.f32.mrb[0].mxu0
      %v2659 = vadd.f32 0.0, %v2658
      %v2660 = vpop.f32.mrb[0].mxu0
      %2661 = vdwg.mxu0
      %v2662 = vshrl.u32 %v796, 16
      %v2664 = vshll.u32 %v796, 16
      %v2666 = vrot.slane %v2664, 1
      %v2667 = vor.u32 %v2662, %v2666
      %v2668 = vshll.u32 %v797, 16
      %v2670 = vrot.slane %v2668, 1
      %v2671 = vsel %vm280, %v2667, %v2670
      %v2672 = vshrl.u32 %v797, 16
      %v2674 = vor.u32 %v2672, %v2670
      %v2675 = vshll.u32 %v894, 16
      %v2677 = vrot.slane %v2675, 1
      %v2678 = vsel %vm280, %v2674, %v2677
      %v2680 = vsel %vm931, %v2671, 0
      %v2683 = vsel %vm931, %v2678, 0
      %2685 = vmatprep.subr.bf16.mxu0 0
      %2686 = vmatpush1.bf16.msra.mxu0 %v1809
      %2687 = vmatprep.subr.bf16.mxu0 0
      %2688 = vmatpush1.bf16.msra.mxu0 %v1810
      %2689 = vmatprep.subr.bf16.mxu0 0
      %2690 = vmatpush1.bf16.msra.mxu0 %v1811
      %2691 = vmatprep.subr.bf16.mxu0 0
      %2692 = vmatpush1.bf16.msra.mxu0 0
      %2693 = vmatprep.subr.bf16.mxu0 0
      %2694 = vmatpush1.bf16.msra.mxu0 0
      %2695 = vmatprep.subr.bf16.mxu0 0
      %2696 = vmatpush1.bf16.msra.mxu0 0
      %2697 = vmatprep.subr.bf16.mxu0 0
      %2698 = vmatpush1.bf16.msra.mxu0 0
      %2699 = vmatprep.subr.bf16.mxu0 0
      %2700 = vmatpush1.bf16.msra.mxu0 0
      %2701 = vmatprep.subr.bf16.mxu0 0
      %2702 = vmatpush1.bf16.msra.mxu0 0
      %2703 = vmatprep.subr.bf16.mxu0 0
      %2704 = vmatpush1.bf16.msra.mxu0 0
      %2705 = vmatprep.subr.bf16.mxu0 0
      %2706 = vmatpush1.bf16.msra.mxu0 0
      %2707 = vmatprep.subr.bf16.mxu0 0
      %2708 = vmatpush1.bf16.msra.mxu0 0
      %2709 = vmatprep.subr.bf16.mxu0 0
      %2710 = vmatpush1.bf16.msra.mxu0 0
      %2711 = vmatprep.subr.bf16.mxu0 0
      %2712 = vmatpush1.bf16.msra.mxu0 0
      %2713 = vmatprep.subr.bf16.mxu0 0
      %2714 = vmatpush1.bf16.msra.mxu0 0
      %2715 = vmatprep.subr.bf16.mxu0 0
      %2716 = vmatpush1.bf16.msra.mxu0 0
      %2717 = vmatprep.mubr.bf16.mxu0 0
      %2718 = vmatmul.mubr.bf16.gmra.mrb[0].mxu0 %v2680
      %v2719 = vpop.f32.mrb[0].mxu0
      %v2720 = vadd.f32 0.0, %v2719
      %v2721 = vpop.f32.mrb[0].mxu0
      %v2722 = vpop.f32.mrb[0].mxu0
      %v2723 = vadd.f32 0.0, %v2722
      %v2724 = vpop.f32.mrb[0].mxu0
      %2725 = vmatprep.mubr.bf16.mxu0 0
      %2726 = vmatmul.mubr.bf16.gmra.mrb[0].mxu0 %v2683
      %v2727 = vpop.f32.mrb[0].mxu0
      %v2728 = vadd.f32 0.0, %v2727
      %v2729 = vpop.f32.mrb[0].mxu0
      %v2730 = vpop.f32.mrb[0].mxu0
      %v2731 = vadd.f32 0.0, %v2730
      %v2732 = vpop.f32.mrb[0].mxu0
      %2733 = vdwg.mxu0
      %v2734 = vshrl.u32 %v799, 16
      %v2736 = vshll.u32 %v799, 16
      %v2738 = vrot.slane %v2736, 1
      %v2739 = vor.u32 %v2734, %v2738
      %v2740 = vshll.u32 %v801, 16
      %v2742 = vrot.slane %v2740, 1
      %v2743 = vsel %vm280, %v2739, %v2742
      %v2744 = vshrl.u32 %v801, 16
      %v2746 = vor.u32 %v2744, %v2742
      %v2747 = vshll.u32 %v896, 16
      %v2749 = vrot.slane %v2747, 1
      %v2750 = vsel %vm280, %v2746, %v2749
      %v2752 = vsel %vm931, %v2743, 0
      %v2755 = vsel %vm931, %v2750, 0
      %2757 = vmatprep.subr.bf16.mxu0 0
      %2758 = vmatpush1.bf16.msra.mxu0 %v1809
      %2759 = vmatprep.subr.bf16.mxu0 0
      %2760 = vmatpush1.bf16.msra.mxu0 %v1810
      %2761 = vmatprep.subr.bf16.mxu0 0
      %2762 = vmatpush1.bf16.msra.mxu0 %v1811
      %2763 = vmatprep.subr.bf16.mxu0 0
      %2764 = vmatpush1.bf16.msra.mxu0 0
      %2765 = vmatprep.subr.bf16.mxu0 0
      %2766 = vmatpush1.bf16.msra.mxu0 0
      %2767 = vmatprep.subr.bf16.mxu0 0
      %2768 = vmatpush1.bf16.msra.mxu0 0
      %2769 = vmatprep.subr.bf16.mxu0 0
      %2770 = vmatpush1.bf16.msra.mxu0 0
      %2771 = vmatprep.subr.bf16.mxu0 0
      %2772 = vmatpush1.bf16.msra.mxu0 0
      %2773 = vmatprep.subr.bf16.mxu0 0
      %2774 = vmatpush1.bf16.msra.mxu0 0
      %2775 = vmatprep.subr.bf16.mxu0 0
      %2776 = vmatpush1.bf16.msra.mxu0 0
      %2777 = vmatprep.subr.bf16.mxu0 0
      %2778 = vmatpush1.bf16.msra.mxu0 0
      %2779 = vmatprep.subr.bf16.mxu0 0
      %2780 = vmatpush1.bf16.msra.mxu0 0
      %2781 = vmatprep.subr.bf16.mxu0 0
      %2782 = vmatpush1.bf16.msra.mxu0 0
      %2783 = vmatprep.subr.bf16.mxu0 0
      %2784 = vmatpush1.bf16.msra.mxu0 0
      %2785 = vmatprep.subr.bf16.mxu0 0
      %2786 = vmatpush1.bf16.msra.mxu0 0
      %2787 = vmatprep.subr.bf16.mxu0 0
      %2788 = vmatpush1.bf16.msra.mxu0 0
      %2789 = vmatprep.mubr.bf16.mxu0 0
      %2790 = vmatmul.mubr.bf16.gmra.mrb[0].mxu0 %v2752
      %v2791 = vpop.f32.mrb[0].mxu0
      %v2792 = vadd.f32 0.0, %v2791
      %v2793 = vpop.f32.mrb[0].mxu0
      %v2794 = vpop.f32.mrb[0].mxu0
      %v2795 = vadd.f32 0.0, %v2794
      %v2796 = vpop.f32.mrb[0].mxu0
      %2797 = vmatprep.mubr.bf16.mxu0 0
      %2798 = vmatmul.mubr.bf16.gmra.mrb[0].mxu0 %v2755
      %v2799 = vpop.f32.mrb[0].mxu0
      %v2800 = vadd.f32 0.0, %v2799
      %v2801 = vpop.f32.mrb[0].mxu0
      %v2802 = vpop.f32.mrb[0].mxu0
      %v2803 = vadd.f32 0.0, %v2802
      %v2804 = vpop.f32.mrb[0].mxu0
      %2805 = vdwg.mxu0
      %v2806 = vshrl.u32 %v802, 16
      %v2808 = vshll.u32 %v802, 16
      %v2810 = vrot.slane %v2808, 1
      %v2811 = vor.u32 %v2806, %v2810
      %v2812 = vshll.u32 %v803, 16
      %v2814 = vrot.slane %v2812, 1
      %v2815 = vsel %vm280, %v2811, %v2814
      %v2816 = vshrl.u32 %v803, 16
      %v2818 = vor.u32 %v2816, %v2814
      %v2819 = vshll.u32 %v897, 16
      %v2821 = vrot.slane %v2819, 1
      %v2822 = vsel %vm280, %v2818, %v2821
      %v2824 = vsel %vm931, %v2815, 0
      %v2827 = vsel %vm931, %v2822, 0
      %2829 = vmatprep.subr.bf16.mxu0 0
      %2830 = vmatpush1.bf16.msra.mxu0 %v1809
      %2831 = vmatprep.subr.bf16.mxu0 0
      %2832 = vmatpush1.bf16.msra.mxu0 %v1810
      %2833 = vmatprep.subr.bf16.mxu0 0
      %2834 = vmatpush1.bf16.msra.mxu0 %v1811
      %2835 = vmatprep.subr.bf16.mxu0 0
      %2836 = vmatpush1.bf16.msra.mxu0 0
      %2837 = vmatprep.subr.bf16.mxu0 0
      %2838 = vmatpush1.bf16.msra.mxu0 0
      %2839 = vmatprep.subr.bf16.mxu0 0
      %2840 = vmatpush1.bf16.msra.mxu0 0
      %2841 = vmatprep.subr.bf16.mxu0 0
      %2842 = vmatpush1.bf16.msra.mxu0 0
      %2843 = vmatprep.subr.bf16.mxu0 0
      %2844 = vmatpush1.bf16.msra.mxu0 0
      %2845 = vmatprep.subr.bf16.mxu0 0
      %2846 = vmatpush1.bf16.msra.mxu0 0
      %2847 = vmatprep.subr.bf16.mxu0 0
      %2848 = vmatpush1.bf16.msra.mxu0 0
      %2849 = vmatprep.subr.bf16.mxu0 0
      %2850 = vmatpush1.bf16.msra.mxu0 0
      %2851 = vmatprep.subr.bf16.mxu0 0
      %2852 = vmatpush1.bf16.msra.mxu0 0
      %2853 = vmatprep.subr.bf16.mxu0 0
      %2854 = vmatpush1.bf16.msra.mxu0 0
      %2855 = vmatprep.subr.bf16.mxu0 0
      %2856 = vmatpush1.bf16.msra.mxu0 0
      %2857 = vmatprep.subr.bf16.mxu0 0
      %2858 = vmatpush1.bf16.msra.mxu0 0
      %2859 = vmatprep.subr.bf16.mxu0 0
      %2860 = vmatpush1.bf16.msra.mxu0 0
      %2861 = vmatprep.mubr.bf16.mxu0 0
      %2862 = vmatmul.mubr.bf16.gmra.mrb[0].mxu0 %v2824
      %v2863 = vpop.f32.mrb[0].mxu0
      %v2864 = vadd.f32 0.0, %v2863
      %v2865 = vpop.f32.mrb[0].mxu0
      %v2866 = vpop.f32.mrb[0].mxu0
      %v2867 = vadd.f32 0.0, %v2866
      %v2868 = vpop.f32.mrb[0].mxu0
      %2869 = vmatprep.mubr.bf16.mxu0 0
      %2870 = vmatmul.mubr.bf16.gmra.mrb[0].mxu0 %v2827
      %v2871 = vpop.f32.mrb[0].mxu0
      %v2872 = vadd.f32 0.0, %v2871
      %v2873 = vpop.f32.mrb[0].mxu0
      %v2874 = vpop.f32.mrb[0].mxu0
      %v2875 = vadd.f32 0.0, %v2874
      %v2876 = vpop.f32.mrb[0].mxu0
      %2877 = vdwg.mxu0
      %v2878 = vshrl.u32 %v805, 16
      %v2880 = vshll.u32 %v805, 16
      %v2882 = vrot.slane %v2880, 1
      %v2883 = vor.u32 %v2878, %v2882
      %v2884 = vshll.u32 %v807, 16
      %v2886 = vrot.slane %v2884, 1
      %v2887 = vsel %vm280, %v2883, %v2886
      %v2888 = vshrl.u32 %v807, 16
      %v2890 = vor.u32 %v2888, %v2886
      %v2891 = vshll.u32 %v899, 16
      %v2893 = vrot.slane %v2891, 1
      %v2894 = vsel %vm280, %v2890, %v2893
      %v2896 = vsel %vm931, %v2887, 0
      %v2899 = vsel %vm931, %v2894, 0
      %2901 = vmatprep.subr.bf16.mxu0 0
      %2902 = vmatpush1.bf16.msra.mxu0 %v1809
      %2903 = vmatprep.subr.bf16.mxu0 0
      %2904 = vmatpush1.bf16.msra.mxu0 %v1810
      %2905 = vmatprep.subr.bf16.mxu0 0
      %2906 = vmatpush1.bf16.msra.mxu0 %v1811
      %2907 = vmatprep.subr.bf16.mxu0 0
      %2908 = vmatpush1.bf16.msra.mxu0 0
      %2909 = vmatprep.subr.bf16.mxu0 0
      %2910 = vmatpush1.bf16.msra.mxu0 0
      %2911 = vmatprep.subr.bf16.mxu0 0
      %2912 = vmatpush1.bf16.msra.mxu0 0
      %2913 = vmatprep.subr.bf16.mxu0 0
      %2914 = vmatpush1.bf16.msra.mxu0 0
      %2915 = vmatprep.subr.bf16.mxu0 0
      %2916 = vmatpush1.bf16.msra.mxu0 0
      %2917 = vmatprep.subr.bf16.mxu0 0
      %2918 = vmatpush1.bf16.msra.mxu0 0
      %2919 = vmatprep.subr.bf16.mxu0 0
      %2920 = vmatpush1.bf16.msra.mxu0 0
      %2921 = vmatprep.subr.bf16.mxu0 0
      %2922 = vmatpush1.bf16.msra.mxu0 0
      %2923 = vmatprep.subr.bf16.mxu0 0
      %2924 = vmatpush1.bf16.msra.mxu0 0
      %2925 = vmatprep.subr.bf16.mxu0 0
      %2926 = vmatpush1.bf16.msra.mxu0 0
      %2927 = vmatprep.subr.bf16.mxu0 0
      %2928 = vmatpush1.bf16.msra.mxu0 0
      %2929 = vmatprep.subr.bf16.mxu0 0
      %2930 = vmatpush1.bf16.msra.mxu0 0
      %2931 = vmatprep.subr.bf16.mxu0 0
      %2932 = vmatpush1.bf16.msra.mxu0 0
      %2933 = vmatprep.mubr.bf16.mxu0 0
      %2934 = vmatmul.mubr.bf16.gmra.mrb[0].mxu0 %v2896
      %v2935 = vpop.f32.mrb[0].mxu0
      %v2936 = vadd.f32 0.0, %v2935
      %v2937 = vpop.f32.mrb[0].mxu0
      %v2938 = vpop.f32.mrb[0].mxu0
      %v2939 = vadd.f32 0.0, %v2938
      %v2940 = vpop.f32.mrb[0].mxu0
      %2941 = vmatprep.mubr.bf16.mxu0 0
      %2942 = vmatmul.mubr.bf16.gmra.mrb[0].mxu0 %v2899
      %v2943 = vpop.f32.mrb[0].mxu0
      %v2944 = vadd.f32 0.0, %v2943
      %v2945 = vpop.f32.mrb[0].mxu0
      %v2946 = vpop.f32.mrb[0].mxu0
      %v2947 = vadd.f32 0.0, %v2946
      %v2948 = vpop.f32.mrb[0].mxu0
      %2949 = vdwg.mxu0
      %3014 = vrot.lane.b32.xlu0 %v1856, 8
      %v3015 = vpop.permute.xlu0 %3014
      %3016 = vrot.lane.b32.xlu0 %v1859, 8
      %v3017 = vpop.permute.xlu0 %3016
      %3018 = vrot.lane.b32.xlu0 %v1864, 8
      %v3019 = vpop.permute.xlu0 %3018
      %3020 = vrot.lane.b32.xlu0 %v1867, 8
      %v3021 = vpop.permute.xlu0 %3020
      %3022 = vrot.lane.b32.xlu0 %v1928, 8
      %v3023 = vpop.permute.xlu0 %3022
      %3024 = vrot.lane.b32.xlu0 %v1931, 8
      %v3025 = vpop.permute.xlu0 %3024
      %3026 = vrot.lane.b32.xlu0 %v1936, 8
      %v3027 = vpop.permute.xlu0 %3026
      %3028 = vrot.lane.b32.xlu0 %v1939, 8
      %v3029 = vpop.permute.xlu0 %3028
      %3030 = vrot.lane.b32.xlu0 %v2000, 8
      %v3031 = vpop.permute.xlu0 %3030
      %3032 = vrot.lane.b32.xlu0 %v2003, 8
      %v3033 = vpop.permute.xlu0 %3032
      %3034 = vrot.lane.b32.xlu0 %v2008, 8
      %v3035 = vpop.permute.xlu0 %3034
      %3036 = vrot.lane.b32.xlu0 %v2011, 8
      %v3037 = vpop.permute.xlu0 %3036
      %3038 = vrot.lane.b32.xlu0 %v2072, 8
      %v3039 = vpop.permute.xlu0 %3038
      %3040 = vrot.lane.b32.xlu0 %v2075, 8
      %v3041 = vpop.permute.xlu0 %3040
      %3042 = vrot.lane.b32.xlu0 %v2080, 8
      %v3043 = vpop.permute.xlu0 %3042
      %3044 = vrot.lane.b32.xlu0 %v2083, 8
      %v3045 = vpop.permute.xlu0 %3044
      %3046 = vrot.lane.b32.xlu0 %v2144, 8
      %v3047 = vpop.permute.xlu0 %3046
      %3048 = vrot.lane.b32.xlu0 %v2147, 8
      %v3049 = vpop.permute.xlu0 %3048
      %3050 = vrot.lane.b32.xlu0 %v2152, 8
      %v3051 = vpop.permute.xlu0 %3050
      %3052 = vrot.lane.b32.xlu0 %v2155, 8
      %v3053 = vpop.permute.xlu0 %3052
      %3054 = vrot.lane.b32.xlu0 %v2216, 8
      %v3055 = vpop.permute.xlu0 %3054
      %3056 = vrot.lane.b32.xlu0 %v2219, 8
      %v3057 = vpop.permute.xlu0 %3056
      %3058 = vrot.lane.b32.xlu0 %v2224, 8
      %v3059 = vpop.permute.xlu0 %3058
      %3060 = vrot.lane.b32.xlu0 %v2227, 8
      %v3061 = vpop.permute.xlu0 %3060
      %3062 = vrot.lane.b32.xlu0 %v2288, 8
      %v3063 = vpop.permute.xlu0 %3062
      %3064 = vrot.lane.b32.xlu0 %v2291, 8
      %v3065 = vpop.permute.xlu0 %3064
      %3066 = vrot.lane.b32.xlu0 %v2296, 8
      %v3067 = vpop.permute.xlu0 %3066
      %3068 = vrot.lane.b32.xlu0 %v2299, 8
      %v3069 = vpop.permute.xlu0 %3068
      %3070 = vrot.lane.b32.xlu0 %v2360, 8
      %v3071 = vpop.permute.xlu0 %3070
      %3072 = vrot.lane.b32.xlu0 %v2363, 8
      %v3073 = vpop.permute.xlu0 %3072
      %3074 = vrot.lane.b32.xlu0 %v2368, 8
      %v3075 = vpop.permute.xlu0 %3074
      %3076 = vrot.lane.b32.xlu0 %v2371, 8
      %v3077 = vpop.permute.xlu0 %3076
      %3078 = vrot.lane.b32.xlu0 %v2432, 8
      %v3079 = vpop.permute.xlu0 %3078
      %3080 = vrot.lane.b32.xlu0 %v2435, 8
      %v3081 = vpop.permute.xlu0 %3080
      %3082 = vrot.lane.b32.xlu0 %v2440, 8
      %v3083 = vpop.permute.xlu0 %3082
      %3084 = vrot.lane.b32.xlu0 %v2443, 8
      %v3085 = vpop.permute.xlu0 %3084
      %3086 = vrot.lane.b32.xlu0 %v2504, 8
      %v3087 = vpop.permute.xlu0 %3086
      %3088 = vrot.lane.b32.xlu0 %v2507, 8
      %v3089 = vpop.permute.xlu0 %3088
      %3090 = vrot.lane.b32.xlu0 %v2512, 8
      %v3091 = vpop.permute.xlu0 %3090
      %3092 = vrot.lane.b32.xlu0 %v2515, 8
      %v3093 = vpop.permute.xlu0 %3092
      %3094 = vrot.lane.b32.xlu0 %v2576, 8
      %v3095 = vpop.permute.xlu0 %3094
      %3096 = vrot.lane.b32.xlu0 %v2579, 8
      %v3097 = vpop.permute.xlu0 %3096
      %3098 = vrot.lane.b32.xlu0 %v2584, 8
      %v3099 = vpop.permute.xlu0 %3098
      %3100 = vrot.lane.b32.xlu0 %v2587, 8
      %v3101 = vpop.permute.xlu0 %3100
      %3102 = vrot.lane.b32.xlu0 %v2648, 8
      %v3103 = vpop.permute.xlu0 %3102
      %3104 = vrot.lane.b32.xlu0 %v2651, 8
      %v3105 = vpop.permute.xlu0 %3104
      %3106 = vrot.lane.b32.xlu0 %v2656, 8
      %v3107 = vpop.permute.xlu0 %3106
      %3108 = vrot.lane.b32.xlu0 %v2659, 8
      %v3109 = vpop.permute.xlu0 %3108
      %3110 = vrot.lane.b32.xlu0 %v2720, 8
      %v3111 = vpop.permute.xlu0 %3110
      %3112 = vrot.lane.b32.xlu0 %v2723, 8
      %v3113 = vpop.permute.xlu0 %3112
      %3114 = vrot.lane.b32.xlu0 %v2728, 8
      %v3115 = vpop.permute.xlu0 %3114
      %3116 = vrot.lane.b32.xlu0 %v2731, 8
      %v3117 = vpop.permute.xlu0 %3116
      %3118 = vrot.lane.b32.xlu0 %v2792, 8
      %v3119 = vpop.permute.xlu0 %3118
      %3120 = vrot.lane.b32.xlu0 %v2795, 8
      %v3121 = vpop.permute.xlu0 %3120
      %3122 = vrot.lane.b32.xlu0 %v2800, 8
      %v3123 = vpop.permute.xlu0 %3122
      %3124 = vrot.lane.b32.xlu0 %v2803, 8
      %v3125 = vpop.permute.xlu0 %3124
      %3126 = vrot.lane.b32.xlu0 %v2864, 8
      %v3127 = vpop.permute.xlu0 %3126
      %3128 = vrot.lane.b32.xlu0 %v2867, 8
      %v3129 = vpop.permute.xlu0 %3128
      %3130 = vrot.lane.b32.xlu0 %v2872, 8
      %v3131 = vpop.permute.xlu0 %3130
      %3132 = vrot.lane.b32.xlu0 %v2875, 8
      %v3133 = vpop.permute.xlu0 %3132
      %3134 = vrot.lane.b32.xlu0 %v2936, 8
      %v3135 = vpop.permute.xlu0 %3134
      %3136 = vrot.lane.b32.xlu0 %v2939, 8
      %v3137 = vpop.permute.xlu0 %3136
      %3138 = vrot.lane.b32.xlu0 %v2944, 8
      %v3139 = vpop.permute.xlu0 %3138
      %3140 = vrot.lane.b32.xlu0 %v2947, 8
      %v3141 = vpop.permute.xlu0 %3140
      %v3206 = vsel %vm561, %v971, %v3015
      %v3207 = vsel %vm561, %v974, %v3017
      %v3208 = vsel %vm561, %v979, %v3019
      %v3209 = vsel %vm561, %v982, %v3021
      %v3210 = vsel %vm561, %v1024, %v3023
      %v3211 = vsel %vm561, %v1027, %v3025
      %v3212 = vsel %vm561, %v1032, %v3027
      %v3213 = vsel %vm561, %v1035, %v3029
      %v3214 = vsel %vm561, %v1077, %v3031
      %v3215 = vsel %vm561, %v1080, %v3033
      %v3216 = vsel %vm561, %v1085, %v3035
      %v3217 = vsel %vm561, %v1088, %v3037
      %v3218 = vsel %vm561, %v1130, %v3039
      %v3219 = vsel %vm561, %v1133, %v3041
      %v3220 = vsel %vm561, %v1138, %v3043
      %v3221 = vsel %vm561, %v1141, %v3045
      %v3222 = vsel %vm561, %v1183, %v3047
      %v3223 = vsel %vm561, %v1186, %v3049
      %v3224 = vsel %vm561, %v1191, %v3051
      %v3225 = vsel %vm561, %v1194, %v3053
      %v3226 = vsel %vm561, %v1236, %v3055
      %v3227 = vsel %vm561, %v1239, %v3057
      %v3228 = vsel %vm561, %v1244, %v3059
      %v3229 = vsel %vm561, %v1247, %v3061
      %v3230 = vsel %vm561, %v1289, %v3063
      %v3231 = vsel %vm561, %v1292, %v3065
      %v3232 = vsel %vm561, %v1297, %v3067
      %v3233 = vsel %vm561, %v1300, %v3069
      %v3234 = vsel %vm561, %v1342, %v3071
      %v3235 = vsel %vm561, %v1345, %v3073
      %v3236 = vsel %vm561, %v1350, %v3075
      %v3237 = vsel %vm561, %v1353, %v3077
      %v3238 = vsel %vm561, %v1395, %v3079
      %v3239 = vsel %vm561, %v1398, %v3081
      %v3240 = vsel %vm561, %v1403, %v3083
      %v3241 = vsel %vm561, %v1406, %v3085
      %v3242 = vsel %vm561, %v1448, %v3087
      %v3243 = vsel %vm561, %v1451, %v3089
      %v3244 = vsel %vm561, %v1456, %v3091
      %v3245 = vsel %vm561, %v1459, %v3093
      %v3246 = vsel %vm561, %v1501, %v3095
      %v3247 = vsel %vm561, %v1504, %v3097
      %v3248 = vsel %vm561, %v1509, %v3099
      %v3249 = vsel %vm561, %v1512, %v3101
      %v3250 = vsel %vm561, %v1554, %v3103
      %v3251 = vsel %vm561, %v1557, %v3105
      %v3252 = vsel %vm561, %v1562, %v3107
      %v3253 = vsel %vm561, %v1565, %v3109
      %v3254 = vsel %vm561, %v1607, %v3111
      %v3255 = vsel %vm561, %v1610, %v3113
      %v3256 = vsel %vm561, %v1615, %v3115
      %v3257 = vsel %vm561, %v1618, %v3117
      %v3258 = vsel %vm561, %v1660, %v3119
      %v3259 = vsel %vm561, %v1663, %v3121
      %v3260 = vsel %vm561, %v1668, %v3123
      %v3261 = vsel %vm561, %v1671, %v3125
      %v3262 = vsel %vm561, %v1713, %v3127
      %v3263 = vsel %vm561, %v1716, %v3129
      %v3264 = vsel %vm561, %v1721, %v3131
      %v3265 = vsel %vm561, %v1724, %v3133
      %v3266 = vsel %vm561, %v1766, %v3135
      %v3267 = vsel %vm561, %v1769, %v3137
      %v3268 = vsel %vm561, %v1774, %v3139
      %v3269 = vsel %vm561, %v1777, %v3141
      %v3270 = vld [vmem:[%s2] sm:$0x1]
      %v3271 = vlaneseq
      %v3272 = vshrl.u32 %v3271, 7
      %v3273 = vsub.s32 0, %v3272
      %v3274 = vrot.slane %v3270, %v3273
      %v3275 = vmul.f32 %v3206, %v3274
      %v3276 = vmul.f32 %v3207, %v3274
      %v3277 = vmul.f32 %v3208, %v3274
      %v3278 = vmul.f32 %v3209, %v3274
      %v3279 = vmul.f32 %v3210, %v3274
      %v3280 = vmul.f32 %v3211, %v3274
      %v3281 = vmul.f32 %v3212, %v3274
      %v3282 = vmul.f32 %v3213, %v3274
      %v3283 = vmul.f32 %v3214, %v3274
      %v3284 = vmul.f32 %v3215, %v3274
      %v3285 = vmul.f32 %v3216, %v3274
      %v3286 = vmul.f32 %v3217, %v3274
      %v3287 = vmul.f32 %v3218, %v3274
      %v3288 = vmul.f32 %v3219, %v3274
      %v3289 = vmul.f32 %v3220, %v3274
      %v3290 = vmul.f32 %v3221, %v3274
      %v3291 = vmul.f32 %v3222, %v3274
      %v3292 = vmul.f32 %v3223, %v3274
      %v3293 = vmul.f32 %v3224, %v3274
      %v3294 = vmul.f32 %v3225, %v3274
      %v3295 = vmul.f32 %v3226, %v3274
      %v3296 = vmul.f32 %v3227, %v3274
      %v3297 = vmul.f32 %v3228, %v3274
      %v3298 = vmul.f32 %v3229, %v3274
      %v3299 = vmul.f32 %v3230, %v3274
      %v3300 = vmul.f32 %v3231, %v3274
      %v3301 = vmul.f32 %v3232, %v3274
      %v3302 = vmul.f32 %v3233, %v3274
      %v3303 = vmul.f32 %v3234, %v3274
      %v3304 = vmul.f32 %v3235, %v3274
      %v3305 = vmul.f32 %v3236, %v3274
      %v3306 = vmul.f32 %v3237, %v3274
      %v3307 = vmul.f32 %v3238, %v3274
      %v3308 = vmul.f32 %v3239, %v3274
      %v3309 = vmul.f32 %v3240, %v3274
      %v3310 = vmul.f32 %v3241, %v3274
      %v3311 = vmul.f32 %v3242, %v3274
      %v3312 = vmul.f32 %v3243, %v3274
      %v3313 = vmul.f32 %v3244, %v3274
      %v3314 = vmul.f32 %v3245, %v3274
      %v3315 = vmul.f32 %v3246, %v3274
      %v3316 = vmul.f32 %v3247, %v3274
      %v3317 = vmul.f32 %v3248, %v3274
      %v3318 = vmul.f32 %v3249, %v3274
      %v3319 = vmul.f32 %v3250, %v3274
      %v3320 = vmul.f32 %v3251, %v3274
      %v3321 = vmul.f32 %v3252, %v3274
      %v3322 = vmul.f32 %v3253, %v3274
      %v3323 = vmul.f32 %v3254, %v3274
      %v3324 = vmul.f32 %v3255, %v3274
      %v3325 = vmul.f32 %v3256, %v3274
      %v3326 = vmul.f32 %v3257, %v3274
      %v3327 = vmul.f32 %v3258, %v3274
      %v3328 = vmul.f32 %v3259, %v3274
      %v3329 = vmul.f32 %v3260, %v3274
      %v3330 = vmul.f32 %v3261, %v3274
      %v3331 = vmul.f32 %v3262, %v3274
      %v3332 = vmul.f32 %v3263, %v3274
      %v3333 = vmul.f32 %v3264, %v3274
      %v3334 = vmul.f32 %v3265, %v3274
      %v3335 = vmul.f32 %v3266, %v3274
      %v3336 = vmul.f32 %v3267, %v3274
      %v3337 = vmul.f32 %v3268, %v3274
      %v3338 = vmul.f32 %v3269, %v3274
      %v3339 = vld [vmem:[%s2 + $0x1] sm:$0x1]
      %v3340 = vlaneseq
      %v3341 = vshrl.u32 %v3340, 7
      %v3342 = vsub.s32 0, %v3341
      %v3343 = vrot.slane %v3339, %v3342
      %v3344 = vadd.f32 %v3275, %v3343
      %v3345 = vadd.f32 %v3276, %v3343
      %v3346 = vadd.f32 %v3277, %v3343
      %v3347 = vadd.f32 %v3278, %v3343
      %v3348 = vadd.f32 %v3279, %v3343
      %v3349 = vadd.f32 %v3280, %v3343
      %v3350 = vadd.f32 %v3281, %v3343
      %v3351 = vadd.f32 %v3282, %v3343
      %v3352 = vadd.f32 %v3283, %v3343
      %v3353 = vadd.f32 %v3284, %v3343
      %v3354 = vadd.f32 %v3285, %v3343
      %v3355 = vadd.f32 %v3286, %v3343
      %v3356 = vadd.f32 %v3287, %v3343
      %v3357 = vadd.f32 %v3288, %v3343
      %v3358 = vadd.f32 %v3289, %v3343
      %v3359 = vadd.f32 %v3290, %v3343
      %v3360 = vadd.f32 %v3291, %v3343
      %v3361 = vadd.f32 %v3292, %v3343
      %v3362 = vadd.f32 %v3293, %v3343
      %v3363 = vadd.f32 %v3294, %v3343
      %v3364 = vadd.f32 %v3295, %v3343
      %v3365 = vadd.f32 %v3296, %v3343
      %v3366 = vadd.f32 %v3297, %v3343
      %v3367 = vadd.f32 %v3298, %v3343
      %v3368 = vadd.f32 %v3299, %v3343
      %v3369 = vadd.f32 %v3300, %v3343
      %v3370 = vadd.f32 %v3301, %v3343
      %v3371 = vadd.f32 %v3302, %v3343
      %v3372 = vadd.f32 %v3303, %v3343
      %v3373 = vadd.f32 %v3304, %v3343
      %v3374 = vadd.f32 %v3305, %v3343
      %v3375 = vadd.f32 %v3306, %v3343
      %v3376 = vadd.f32 %v3307, %v3343
      %v3377 = vadd.f32 %v3308, %v3343
      %v3378 = vadd.f32 %v3309, %v3343
      %v3379 = vadd.f32 %v3310, %v3343
      %v3380 = vadd.f32 %v3311, %v3343
      %v3381 = vadd.f32 %v3312, %v3343
      %v3382 = vadd.f32 %v3313, %v3343
      %v3383 = vadd.f32 %v3314, %v3343
      %v3384 = vadd.f32 %v3315, %v3343
      %v3385 = vadd.f32 %v3316, %v3343
      %v3386 = vadd.f32 %v3317, %v3343
      %v3387 = vadd.f32 %v3318, %v3343
      %v3388 = vadd.f32 %v3319, %v3343
      %v3389 = vadd.f32 %v3320, %v3343
      %v3390 = vadd.f32 %v3321, %v3343
      %v3391 = vadd.f32 %v3322, %v3343
      %v3392 = vadd.f32 %v3323, %v3343
      %v3393 = vadd.f32 %v3324, %v3343
      %v3394 = vadd.f32 %v3325, %v3343
      %v3395 = vadd.f32 %v3326, %v3343
      %v3396 = vadd.f32 %v3327, %v3343
      %v3397 = vadd.f32 %v3328, %v3343
      %v3398 = vadd.f32 %v3329, %v3343
      %v3399 = vadd.f32 %v3330, %v3343
      %v3400 = vadd.f32 %v3331, %v3343
      %v3401 = vadd.f32 %v3332, %v3343
      %v3402 = vadd.f32 %v3333, %v3343
      %v3403 = vadd.f32 %v3334, %v3343
      %v3404 = vadd.f32 %v3335, %v3343
      %v3405 = vadd.f32 %v3336, %v3343
      %v3406 = vadd.f32 %v3337, %v3343
      %v3407 = vadd.f32 %v3338, %v3343
      %v3408 = vmax.f32 %v3344, 0.0
      %v3409 = vmax.f32 %v3345, 0.0
      %v3410 = vmax.f32 %v3346, 0.0
      %v3411 = vmax.f32 %v3347, 0.0
      %v3412 = vmax.f32 %v3348, 0.0
      %v3413 = vmax.f32 %v3349, 0.0
      %v3414 = vmax.f32 %v3350, 0.0
      %v3415 = vmax.f32 %v3351, 0.0
      %v3416 = vmax.f32 %v3352, 0.0
      %v3417 = vmax.f32 %v3353, 0.0
      %v3418 = vmax.f32 %v3354, 0.0
      %v3419 = vmax.f32 %v3355, 0.0
      %v3420 = vmax.f32 %v3356, 0.0
      %v3421 = vmax.f32 %v3357, 0.0
      %v3422 = vmax.f32 %v3358, 0.0
      %v3423 = vmax.f32 %v3359, 0.0
      %v3424 = vmax.f32 %v3360, 0.0
      %v3425 = vmax.f32 %v3361, 0.0
      %v3426 = vmax.f32 %v3362, 0.0
      %v3427 = vmax.f32 %v3363, 0.0
      %v3428 = vmax.f32 %v3364, 0.0
      %v3429 = vmax.f32 %v3365, 0.0
      %v3430 = vmax.f32 %v3366, 0.0
      %v3431 = vmax.f32 %v3367, 0.0
      %v3432 = vmax.f32 %v3368, 0.0
      %v3433 = vmax.f32 %v3369, 0.0
      %v3434 = vmax.f32 %v3370, 0.0
      %v3435 = vmax.f32 %v3371, 0.0
      %v3436 = vmax.f32 %v3372, 0.0
      %v3437 = vmax.f32 %v3373, 0.0
      %v3438 = vmax.f32 %v3374, 0.0
      %v3439 = vmax.f32 %v3375, 0.0
      %v3440 = vmax.f32 %v3376, 0.0
      %v3441 = vmax.f32 %v3377, 0.0
      %v3442 = vmax.f32 %v3378, 0.0
      %v3443 = vmax.f32 %v3379, 0.0
      %v3444 = vmax.f32 %v3380, 0.0
      %v3445 = vmax.f32 %v3381, 0.0
      %v3446 = vmax.f32 %v3382, 0.0
      %v3447 = vmax.f32 %v3383, 0.0
      %v3448 = vmax.f32 %v3384, 0.0
      %v3449 = vmax.f32 %v3385, 0.0
      %v3450 = vmax.f32 %v3386, 0.0
      %v3451 = vmax.f32 %v3387, 0.0
      %v3452 = vmax.f32 %v3388, 0.0
      %v3453 = vmax.f32 %v3389, 0.0
      %v3454 = vmax.f32 %v3390, 0.0
      %v3455 = vmax.f32 %v3391, 0.0
      %v3456 = vmax.f32 %v3392, 0.0
      %v3457 = vmax.f32 %v3393, 0.0
      %v3458 = vmax.f32 %v3394, 0.0
      %v3459 = vmax.f32 %v3395, 0.0
      %v3460 = vmax.f32 %v3396, 0.0
      %v3461 = vmax.f32 %v3397, 0.0
      %v3462 = vmax.f32 %v3398, 0.0
      %v3463 = vmax.f32 %v3399, 0.0
      %v3464 = vmax.f32 %v3400, 0.0
      %v3465 = vmax.f32 %v3401, 0.0
      %v3466 = vmax.f32 %v3402, 0.0
      %v3467 = vmax.f32 %v3403, 0.0
      %v3468 = vmax.f32 %v3404, 0.0
      %v3469 = vmax.f32 %v3405, 0.0
      %v3470 = vmax.f32 %v3406, 0.0
      %v3471 = vmax.f32 %v3407, 0.0
      %3472 = vst.msk [vmem:[%s194] sm:$0xff] %vm708, %v3408
      %3473 = vst.msk [vmem:[%s194 + $0x8] sm:$0xff] %vm708, %v3409
      %3474 = vst.msk [vmem:[%s194 + $0x10] sm:$0xff] %vm708, %v3410
      %3475 = vst.msk [vmem:[%s194 + $0x18] sm:$0xff] %vm708, %v3411
      %3476 = vst.msk [vmem:[%s194 + $0x20] sm:$0xff] %vm708, %v3412
      %3477 = vst.msk [vmem:[%s194 + $0x28] sm:$0xff] %vm708, %v3413
      %3478 = vst.msk [vmem:[%s194 + $0x30] sm:$0xff] %vm708, %v3414
      %3479 = vst.msk [vmem:[%s194 + $0x38] sm:$0xff] %vm708, %v3415
      %3480 = vst.msk [vmem:[%s194 + $0x40] sm:$0xff] %vm708, %v3416
      %3481 = vst.msk [vmem:[%s194 + $0x48] sm:$0xff] %vm708, %v3417
      %3482 = vst.msk [vmem:[%s194 + $0x50] sm:$0xff] %vm708, %v3418
      %3483 = vst.msk [vmem:[%s194 + $0x58] sm:$0xff] %vm708, %v3419
      %3484 = vst.msk [vmem:[%s194 + $0x60] sm:$0xff] %vm708, %v3420
      %3485 = vst.msk [vmem:[%s194 + $0x68] sm:$0xff] %vm708, %v3421
      %3486 = vst.msk [vmem:[%s194 + $0x70] sm:$0xff] %vm708, %v3422
      %3487 = vst.msk [vmem:[%s194 + $0x78] sm:$0xff] %vm708, %v3423
      %3488 = vst.msk [vmem:[%s194 + $0x80] sm:$0xff] %vm708, %v3424
      %3489 = vst.msk [vmem:[%s194 + $0x88] sm:$0xff] %vm708, %v3425
      %3490 = vst.msk [vmem:[%s194 + $0x90] sm:$0xff] %vm708, %v3426
      %3491 = vst.msk [vmem:[%s194 + $0x98] sm:$0xff] %vm708, %v3427
      %3492 = vst.msk [vmem:[%s194 + $0xa0] sm:$0xff] %vm708, %v3428
      %3493 = vst.msk [vmem:[%s194 + $0xa8] sm:$0xff] %vm708, %v3429
      %3494 = vst.msk [vmem:[%s194 + $0xb0] sm:$0xff] %vm708, %v3430
      %3495 = vst.msk [vmem:[%s194 + $0xb8] sm:$0xff] %vm708, %v3431
      %3496 = vst.msk [vmem:[%s194 + $0xc0] sm:$0xff] %vm708, %v3432
      %3497 = vst.msk [vmem:[%s194 + $0xc8] sm:$0xff] %vm708, %v3433
      %3498 = vst.msk [vmem:[%s194 + $0xd0] sm:$0xff] %vm708, %v3434
      %3499 = vst.msk [vmem:[%s194 + $0xd8] sm:$0xff] %vm708, %v3435
      %3500 = vst.msk [vmem:[%s194 + $0xe0] sm:$0xff] %vm708, %v3436
      %3501 = vst.msk [vmem:[%s194 + $0xe8] sm:$0xff] %vm708, %v3437
      %3502 = vst.msk [vmem:[%s194 + $0xf0] sm:$0xff] %vm708, %v3438
      %3503 = vst.msk [vmem:[%s194 + $0xf8] sm:$0xff] %vm708, %v3439
      %3504 = vst.msk [vmem:[%s194 + $0x100] sm:$0xff] %vm708, %v3440
      %3505 = vst.msk [vmem:[%s194 + $0x108] sm:$0xff] %vm708, %v3441
      %3506 = vst.msk [vmem:[%s194 + $0x110] sm:$0xff] %vm708, %v3442
      %3507 = vst.msk [vmem:[%s194 + $0x118] sm:$0xff] %vm708, %v3443
      %3508 = vst.msk [vmem:[%s194 + $0x120] sm:$0xff] %vm708, %v3444
      %3509 = vst.msk [vmem:[%s194 + $0x128] sm:$0xff] %vm708, %v3445
      %3510 = vst.msk [vmem:[%s194 + $0x130] sm:$0xff] %vm708, %v3446
      %3511 = vst.msk [vmem:[%s194 + $0x138] sm:$0xff] %vm708, %v3447
      %3512 = vst.msk [vmem:[%s194 + $0x140] sm:$0xff] %vm708, %v3448
      %3513 = vst.msk [vmem:[%s194 + $0x148] sm:$0xff] %vm708, %v3449
      %3514 = vst.msk [vmem:[%s194 + $0x150] sm:$0xff] %vm708, %v3450
      %3515 = vst.msk [vmem:[%s194 + $0x158] sm:$0xff] %vm708, %v3451
      %3516 = vst.msk [vmem:[%s194 + $0x160] sm:$0xff] %vm708, %v3452
      %3517 = vst.msk [vmem:[%s194 + $0x168] sm:$0xff] %vm708, %v3453
      %3518 = vst.msk [vmem:[%s194 + $0x170] sm:$0xff] %vm708, %v3454
      %3519 = vst.msk [vmem:[%s194 + $0x178] sm:$0xff] %vm708, %v3455
      %3520 = vst.msk [vmem:[%s194 + $0x180] sm:$0xff] %vm708, %v3456
      %3521 = vst.msk [vmem:[%s194 + $0x188] sm:$0xff] %vm708, %v3457
      %3522 = vst.msk [vmem:[%s194 + $0x190] sm:$0xff] %vm708, %v3458
      %3523 = vst.msk [vmem:[%s194 + $0x198] sm:$0xff] %vm708, %v3459
      %3524 = vst.msk [vmem:[%s194 + $0x1a0] sm:$0xff] %vm708, %v3460
      %3525 = vst.msk [vmem:[%s194 + $0x1a8] sm:$0xff] %vm708, %v3461
      %3526 = vst.msk [vmem:[%s194 + $0x1b0] sm:$0xff] %vm708, %v3462
      %3527 = vst.msk [vmem:[%s194 + $0x1b8] sm:$0xff] %vm708, %v3463
      %3528 = vst.msk [vmem:[%s194 + $0x1c0] sm:$0xff] %vm708, %v3464
      %3529 = vst.msk [vmem:[%s194 + $0x1c8] sm:$0xff] %vm708, %v3465
      %3530 = vst.msk [vmem:[%s194 + $0x1d0] sm:$0xff] %vm708, %v3466
      %3531 = vst.msk [vmem:[%s194 + $0x1d8] sm:$0xff] %vm708, %v3467
      %3532 = vst.msk [vmem:[%s194 + $0x1e0] sm:$0xff] %vm708, %v3468
      %3533 = vst.msk [vmem:[%s194 + $0x1e8] sm:$0xff] %vm708, %v3469
      %3534 = vst.msk [vmem:[%s194 + $0x1f0] sm:$0xff] %vm708, %v3470
      %3535 = vst.msk [vmem:[%s194 + $0x1f8] sm:$0xff] %vm708, %v3471
      %s3536 = smul.u32 16, %s19
      %p3537 = scmp.lt.s32.totalorder %s18, 1
      %s3538 = scalar_select %p3537, %s18, 1
      %p3539 = scmp.lt.s32.totalorder %s3536, 63
      %s3540 = scalar_select %p3539, %s3536, 63
      %s3541 = smul.addr %s3540, 4
      %s3542 = smul.addr %s3538, 256
      %s3543 = sadd.s32 %s3541, %s3542
      %s3544 = smul.addr %s3543, 8
      %s3545 = scalar_lea.vmem %s3, %s3544
      // Predicated region
      $region33: #{unet_forward.11} parent=31 // pred_check
        %p3546 = pneg %p114
      $region34: #{unet_forward.11} parent=31 // pred_check_branch
        %3548 = sbr.rel (%p3546) target = $region36
      $region35: #{unet_forward.11} parent=31 // pred_region
        %s3549 = smul.u32 16, %s19
      $region36: #{unet_forward.11} parent=31 // pred_fallthru
        _
    $region32: #{unet_forward.11} parent=5 // pred_fallthru
      _
    %p3550 = scmp.le.s32.totalorder 2, %s9
    // Predicated region
    $region37: #{unet_forward.11} parent=5 // pred_check
      %p3551 = pneg %p3550
    $region38: #{unet_forward.11} parent=5 // pred_check_branch
      %3553 = sbr.rel (%p3551) target = $region40
    $region39: #{unet_forward.11} parent=5 // pred_region
      %s3554 = ssub.s32 %s9, 2
      // Predicated region
      $region41: #{unet_forward.11} parent=39 // pred_check
        %p3555 = pneg %p120
      $region42: #{unet_forward.11} parent=39 // pred_check_branch
        %3557 = sbr.rel (%p3555) target = $region44
      $region43: #{unet_forward.11} parent=39 // pred_region
        %s3558 = smul.u32 16, %s21
        %p3559 = scmp.lt.s32.totalorder %s20, 1
        %s3560 = scalar_select %p3559, %s20, 1
        %p3561 = scmp.lt.s32.totalorder %s3558, 63
        %s3562 = scalar_select %p3561, %s3558, 63
        %s3563 = smul.addr %s3562, 4
        %s3564 = smul.addr %s3560, 256
        %s3565 = sadd.s32 %s3563, %s3564
        %s3566 = smul.addr %s3565, 8
        %s3567 = scalar_lea.vmem %s3, %s3566
      $region44: #{unet_forward.11} parent=39 // pred_fallthru
        _
    $region40: #{unet_forward.11} parent=5 // pred_fallthru
      _
  $region6: #{unet_forward.11} parent=0 // loop_footer
    %s13 = sadd.s32 1, %s9
  $region7: #{unet_forward.11} parent=0 // loop_footer_branch
    %8 = sbr.rel target = $region3
  $region8: #{unet_forward.11} parent=0 // loop_exit
    _

</llo_original>
